<compile_context>
chip_gen: v7x
topology: tpu7x:2x2x1
jax: 0.10.0
libtpu: 0.0.40
codegen_flags: <defaults>
</compile_context>

<pallas_src>
import functools

import jax
import jax.numpy as jnp
from jax import lax
from jax.experimental import pallas as pl
from jax.experimental.pallas import tpu as pltpu


def _lstm_generate_kernel(start_ref, emb_wih_ref, w_hh_t_ref, w_fc_t_ref,
                          b_fc_ref, out_ref, h_scr, c_scr, tok_scr,
                          *, hidden_dim, vocab, limit):
    H = hidden_dim
    V = vocab

    # h0 = c0 = 0 (PyTorch `hidden=None`)
    h_scr[...] = jnp.zeros_like(h_scr)
    c_scr[...] = jnp.zeros_like(c_scr)
    tok_scr[0] = start_ref[0]
    out_ref[0] = start_ref[0]

    # Hoisted once and reused by the argmax of every step (JAX does not CSE
    # broadcast_in_dim, so keeping it in the loop re-materializes it).
    col_idx = lax.broadcasted_iota(jnp.int32, (1, V), 1)

    def step(tok):
        # Fused embedding + W_ih matmul + (b_ih + b_hh): single row gather.
        xg = emb_wih_ref[tok]                                   # (1, 4H) i|f|o|g

        gates = xg + jnp.dot(h_scr[...], w_hh_t_ref[...],
                             preferred_element_type=jnp.float32)  # (1, 4H)

        # One sigmoid over (1, 3H) and one tanh over (1, H).
        sig = jax.nn.sigmoid(gates[:, :3 * H])
        g_g = jnp.tanh(gates[:, 3 * H:])
        i_g = sig[:, 0:H]
        f_g = sig[:, H:2 * H]
        o_g = sig[:, 2 * H:3 * H]

        c_new = f_g * c_scr[...] + i_g * g_g
        h_new = o_g * jnp.tanh(c_new)
        c_scr[...] = c_new
        h_scr[...] = h_new

        logits = (jnp.dot(h_new, w_fc_t_ref[...],
                          preferred_element_type=jnp.float32)
                  + b_fc_ref[...])                               # (1, V)

        # argmax over vocab (first max index, deterministic)
        m = jnp.max(logits)
        tok_new = jnp.min(jnp.where(logits == m, col_idx, V)).astype(jnp.int32)
        tok_scr[0] = tok_new

    # Fully unrolled generation loop (limit is small).
    for t in range(limit - 1):
        tok = tok_scr[0]
        if t == 0:
            # First generated token is always computed (matches the PyTorch
            # while-loop, which runs at least once even if start == 0).
            step(tok)
        else:
            # Skip all compute once EOS (token 0) has been generated.
            pl.when(tok != 0)(functools.partial(step, tok))
        out_ref[t + 1] = tok_scr[0]


def lstm_generate(start_token, params, *, hidden_dim, vocab, limit):
    emb, w_ih, w_hh, b_ih, b_hh, w_fc, b_fc = params
    H = hidden_dim
    V = vocab

    # Column permutation: PyTorch gate order (i, f, g, o) -> (i, f, o, g)
    # so sigmoid gates are contiguous and tanh gate is the trailing block.
    perm = jnp.concatenate([
        jnp.arange(0, H), jnp.arange(H, 2 * H),
        jnp.arange(3 * H, 4 * H), jnp.arange(2 * H, 3 * H)])

    w_ih_t = jnp.transpose(w_ih)[:, perm].astype(jnp.float32)   # (H, 4H)
    w_hh_t = jnp.transpose(w_hh)[:, perm].astype(jnp.float32)   # (H, 4H)
    b = (b_ih + b_hh)[perm].reshape(1, -1).astype(jnp.float32)  # (1, 4H)

    # Fold embedding + input matmul + bias: (V, 1, 4H) table gathered by tok.
    # (Leading axis is the gather axis; the (1, 4H) trailing block keeps the
    # dynamic index off the tiled sublane/lane dims for robust lowering.)
    emb_wih = (jnp.dot(emb.astype(jnp.float32), w_ih_t) + b
               ).reshape(V, 1, 4 * H).astype(jnp.float32)

    w_fc_t = jnp.transpose(w_fc).astype(jnp.float32)            # (H, V)
    b_fc2 = b_fc.reshape(1, -1).astype(jnp.float32)             # (1, V)

    start_arr = jnp.asarray([start_token], dtype=jnp.int32)

    kernel = functools.partial(_lstm_generate_kernel,
                               hidden_dim=H, vocab=V, limit=limit)

    vmem = pl.BlockSpec(memory_space=pltpu.MemorySpace.VMEM)
    smem = pl.BlockSpec(memory_space=pltpu.MemorySpace.SMEM)

    tokens = pl.pallas_call(
        kernel,
        out_shape=jax.ShapeDtypeStruct((limit,), jnp.int32),
        in_specs=[smem, vmem, vmem, vmem, vmem],
        out_specs=smem,
        scratch_shapes=[
            pltpu.VMEM((1, H), jnp.float32),    # h
            pltpu.VMEM((1, H), jnp.float32),    # c
            pltpu.SMEM((1,), jnp.int32),        # current token
        ],
        compiler_params=pltpu.CompilerParams(
            vmem_limit_bytes=32 * 1024 * 1024),
    )(start_arr, emb_wih, w_hh_t, w_fc_t, b_fc2)
    return tokens


def init_params(key, vocab, hidden_dim):
    """Deterministic parameter init matching the PyTorch module's shapes."""
    k_emb, k_ih, k_hh, k_bih, k_bhh, k_fc, k_bfc = jax.random.split(key, 7)
    scale = 1.0 / jnp.sqrt(hidden_dim)
    emb = jax.random.normal(k_emb, (vocab, hidden_dim), jnp.float32)
    emb = emb.at[1].set(0.0)  # padding_idx=1 -> zero row
    w_ih = jax.random.uniform(k_ih, (4 * hidden_dim, hidden_dim), jnp.float32,
                              -scale, scale)
    w_hh = jax.random.uniform(k_hh, (4 * hidden_dim, hidden_dim), jnp.float32,
                              -scale, scale)
    b_ih = jax.random.uniform(k_bih, (4 * hidden_dim,), jnp.float32, -scale, scale)
    b_hh = jax.random.uniform(k_bhh, (4 * hidden_dim,), jnp.float32, -scale, scale)
    w_fc = jax.random.uniform(k_fc, (vocab, hidden_dim), jnp.float32, -scale, scale)
    b_fc = jax.random.uniform(k_bfc, (vocab,), jnp.float32, -scale, scale)
    return emb, w_ih, w_hh, b_ih, b_hh, w_fc, b_fc


if __name__ == "__main__":
    VOCAB = 256       # one_hot_size (multiple of 128 -> lane-dense logits)
    HIDDEN = 128      # hidden_dim (module default; vreg-aligned gate slices)
    LIMIT = 16        # generation limit
    START = 3         # starting token id

    params = init_params(jax.random.PRNGKey(0), VOCAB, HIDDEN)

    tokens = lstm_generate(START, params, hidden_dim=HIDDEN, vocab=VOCAB,
                           limit=LIMIT)
    tokens = jax.block_until_ready(tokens)

    # Reproduce the Python-side early-stop semantics of `forward`:
    # break after appending a token equal to 0, or when len(res) >= limit.
    toks = list(map(int, tokens))
    res = [toks[0]]
    for t in toks[1:]:
        res.append(t)
        if t == 0:
            break

    assert 1 <= len(res) <= LIMIT
    # TODO(synk): `criterion` (packed-sequence training loss) not implemented;
    # only the autoregressive `forward` path is kernelized.
    print("KERNEL_OK")
</pallas_src>

<mosaic_0001>
module attributes {stable_mosaic.version = 11 : i64} {
  func.func @_lstm_generate_kernel(%arg0: memref<1xi32, #tpu.memory_space<smem>>, %arg1: memref<256x1x512xf32, #tpu.memory_space<vmem>>, %arg2: memref<128x512xf32, #tpu.memory_space<vmem>>, %arg3: memref<128x256xf32, #tpu.memory_space<vmem>>, %arg4: memref<1x256xf32, #tpu.memory_space<vmem>>, %arg5: memref<16xi32, #tpu.memory_space<smem>>, %arg6: memref<1x128xf32, #tpu.memory_space<vmem>>, %arg7: memref<1x128xf32, #tpu.memory_space<vmem>>, %arg8: memref<1xi32, #tpu.memory_space<smem>>) attributes {dimension_semantics = [], scalar_prefetch = 0 : i64, scratch_operands = 3 : i64, tpu.core_type = #tpu.core_type<tc>} {
    %cst = arith.constant 0.000000e+00 : f32
    %0 = vector.broadcast %cst : f32 to vector<1x128xf32>
    %c0 = arith.constant 0 : index
    %c0_0 = arith.constant 0 : index
    %1 = vector.load %arg6[%c0, %c0_0] : memref<1x128xf32, #tpu.memory_space<vmem>>, vector<1x128xf32>
    tpu.vector_store %arg6[%c0, %c0_0], %0 {strides = array<i32>} : memref<1x128xf32, #tpu.memory_space<vmem>>, vector<1x128xf32>,
    %cst_1 = arith.constant 0.000000e+00 : f32
    %2 = vector.broadcast %cst_1 : f32 to vector<1x128xf32>
    %c0_2 = arith.constant 0 : index
    %c0_3 = arith.constant 0 : index
    %3 = vector.load %arg7[%c0_2, %c0_3] : memref<1x128xf32, #tpu.memory_space<vmem>>, vector<1x128xf32>
    tpu.vector_store %arg7[%c0_2, %c0_3], %2 {strides = array<i32>} : memref<1x128xf32, #tpu.memory_space<vmem>>, vector<1x128xf32>,
    %c0_4 = arith.constant 0 : index
    %4 = memref.load %arg0[%c0_4] : memref<1xi32, #tpu.memory_space<smem>>
    %c0_5 = arith.constant 0 : index
    %5 = memref.load %arg8[%c0_5] : memref<1xi32, #tpu.memory_space<smem>>
    memref.store %4, %arg8[%c0_5] : memref<1xi32, #tpu.memory_space<smem>>
    %c0_6 = arith.constant 0 : index
    %6 = memref.load %arg0[%c0_6] : memref<1xi32, #tpu.memory_space<smem>>
    %c0_7 = arith.constant 0 : index
    %7 = memref.load %arg5[%c0_7] : memref<16xi32, #tpu.memory_space<smem>>
    memref.store %6, %arg5[%c0_7] : memref<16xi32, #tpu.memory_space<smem>>
    %8 = tpu.iota {dimensions = array<i32: 1>} : vector<1x256xi32>
    %c0_8 = arith.constant 0 : index
    %9 = memref.load %arg8[%c0_8] : memref<1xi32, #tpu.memory_space<smem>>
    %10 = arith.index_cast %9 : i32 to index
    %c0_9 = arith.constant 0 : index
    %c0_10 = arith.constant 0 : index
    %11 = vector.load %arg1[%10, %c0_9, %c0_10] : memref<256x1x512xf32, #tpu.memory_space<vmem>>, vector<1x1x512xf32>
    %12 = vector.shape_cast %11 : vector<1x1x512xf32> to vector<1x512xf32>
    %c0_11 = arith.constant 0 : index
    %c0_12 = arith.constant 0 : index
    %13 = vector.load %arg6[%c0_11, %c0_12] : memref<1x128xf32, #tpu.memory_space<vmem>>, vector<1x128xf32>
    %c0_13 = arith.constant 0 : index
    %c0_14 = arith.constant 0 : index
    %14 = vector.load %arg2[%c0_13, %c0_14] : memref<128x512xf32, #tpu.memory_space<vmem>>, vector<128x512xf32>
    %cst_15 = arith.constant dense<0.000000e+00> : vector<1x512xf32>
    %15 = tpu.matmul %13, %14, %cst_15 {dimension_numbers = #tpu.dot_dimension_numbers<[1], [0], [0], [1], [0, 0, 1, 1], [], []>} : vector<1x128xf32>, vector<128x512xf32>, vector<1x512xf32> -> vector<1x512xf32>
    %16 = arith.addf %12, %15 : vector<1x512xf32>
    %17 = vector.extract_strided_slice %16 {offsets = [0, 0], sizes = [1, 384], strides = [1, 1]} : vector<1x512xf32> to vector<1x384xf32>
    %18 = arith.negf %17 : vector<1x384xf32>
    %19 = math.exp %18 : vector<1x384xf32>
    %cst_16 = arith.constant 1.000000e+00 : f32
    %20 = vector.broadcast %cst_16 : f32 to vector<1x384xf32>
    %21 = arith.addf %20, %19 : vector<1x384xf32>
    %22 = arith.divf %20, %21 : vector<1x384xf32>
    %23 = vector.extract_strided_slice %16 {offsets = [0, 384], sizes = [1, 128], strides = [1, 1]} : vector<1x512xf32> to vector<1x128xf32>
    %24 = math.tanh %23 : vector<1x128xf32>
    %25 = vector.extract_strided_slice %22 {offsets = [0, 0], sizes = [1, 128], strides = [1, 1]} : vector<1x384xf32> to vector<1x128xf32>
    %26 = vector.extract_strided_slice %22 {offsets = [0, 128], sizes = [1, 128], strides = [1, 1]} : vector<1x384xf32> to vector<1x128xf32>
    %27 = vector.extract_strided_slice %22 {offsets = [0, 256], sizes = [1, 128], strides = [1, 1]} : vector<1x384xf32> to vector<1x128xf32>
    %c0_17 = arith.constant 0 : index
    %c0_18 = arith.constant 0 : index
    %28 = vector.load %arg7[%c0_17, %c0_18] : memref<1x128xf32, #tpu.memory_space<vmem>>, vector<1x128xf32>
    %29 = arith.mulf %26, %28 : vector<1x128xf32>
    %30 = arith.mulf %25, %24 : vector<1x128xf32>
    %31 = arith.addf %29, %30 : vector<1x128xf32>
    %32 = math.tanh %31 : vector<1x128xf32>
    %33 = arith.mulf %27, %32 : vector<1x128xf32>
    %c0_19 = arith.constant 0 : index
    %c0_20 = arith.constant 0 : index
    %34 = vector.load %arg7[%c0_19, %c0_20] : memref<1x128xf32, #tpu.memory_space<vmem>>, vector<1x128xf32>
    tpu.vector_store %arg7[%c0_19, %c0_20], %31 {strides = array<i32>} : memref<1x128xf32, #tpu.memory_space<vmem>>, vector<1x128xf32>,
    %c0_21 = arith.constant 0 : index
    %c0_22 = arith.constant 0 : index
    %35 = vector.load %arg6[%c0_21, %c0_22] : memref<1x128xf32, #tpu.memory_space<vmem>>, vector<1x128xf32>
    tpu.vector_store %arg6[%c0_21, %c0_22], %33 {strides = array<i32>} : memref<1x128xf32, #tpu.memory_space<vmem>>, vector<1x128xf32>,
    %c0_23 = arith.constant 0 : index
    %c0_24 = arith.constant 0 : index
    %36 = vector.load %arg3[%c0_23, %c0_24] : memref<128x256xf32, #tpu.memory_space<vmem>>, vector<128x256xf32>
    %cst_25 = arith.constant dense<0.000000e+00> : vector<1x256xf32>
    %37 = tpu.matmul %33, %36, %cst_25 {dimension_numbers = #tpu.dot_dimension_numbers<[1], [0], [0], [1], [0, 0, 1, 1], [], []>} : vector<1x128xf32>, vector<128x256xf32>, vector<1x256xf32> -> vector<1x256xf32>
    %c0_26 = arith.constant 0 : index
    %c0_27 = arith.constant 0 : index
    %38 = vector.load %arg4[%c0_26, %c0_27] : memref<1x256xf32, #tpu.memory_space<vmem>>, vector<1x256xf32>
    %39 = arith.addf %37, %38 : vector<1x256xf32>
    %40 = vector.shape_cast %39 : vector<1x256xf32> to vector<1x1x256xf32>
    %cst_28 = arith.constant dense<0xFF800000> : vector<1xf32>
    %41 = vector.multi_reduction <maximumf>, %40, %cst_28 [1, 2] : vector<1x1x256xf32> to vector<1xf32>
    %42 = vector.shape_cast %41 : vector<1xf32> to vector<1x1x1xf32>
    %43 = vector.extract %42[0, 0, 0] : f32 from vector<1x1x1xf32>
    %44 = vector.broadcast %43 : f32 to vector<1x256xf32>
    %45 = arith.cmpf oeq, %39, %44 : vector<1x256xf32>
    %c256_i32 = arith.constant 256 : i32
    %46 = vector.broadcast %c256_i32 : i32 to vector<1x256xi32>
    %47 = arith.select %45, %8, %46 : vector<1x256xi1>, vector<1x256xi32>
    %48 = vector.shape_cast %47 : vector<1x256xi32> to vector<1x1x256xi32>
    %cst_29 = arith.constant dense<2147483647> : vector<1xi32>
    %49 = vector.multi_reduction <minsi>, %48, %cst_29 [1, 2] : vector<1x1x256xi32> to vector<1xi32>
    %50 = vector.shape_cast %49 : vector<1xi32> to vector<1x1x1xi32>
    %51 = vector.extract %50[0, 0, 0] : i32 from vector<1x1x1xi32>
    %c0_30 = arith.constant 0 : index
    %52 = memref.load %arg8[%c0_30] : memref<1xi32, #tpu.memory_space<smem>>
    memref.store %51, %arg8[%c0_30] : memref<1xi32, #tpu.memory_space<smem>>
    %c0_31 = arith.constant 0 : index
    %53 = memref.load %arg8[%c0_31] : memref<1xi32, #tpu.memory_space<smem>>
    %c1 = arith.constant 1 : index
    %54 = memref.load %arg5[%c1] : memref<16xi32, #tpu.memory_space<smem>>
    memref.store %53, %arg5[%c1] : memref<16xi32, #tpu.memory_space<smem>>
    %c0_32 = arith.constant 0 : index
    %55 = memref.load %arg8[%c0_32] : memref<1xi32, #tpu.memory_space<smem>>
    %c0_i32 = arith.constant 0 : i32
    %56 = arith.cmpi ne, %55, %c0_i32 : i32
    %57 = arith.extui %56 : i1 to i32
    %c0_i32_33 = arith.constant 0 : i32
    %58 = arith.cmpi ne, %57, %c0_i32_33 : i32
    scf.if %58 {
      %139 = arith.index_cast %55 : i32 to index
      %c0_87 = arith.constant 0 : index
      %c0_88 = arith.constant 0 : index
      %140 = vector.load %arg1[%139, %c0_87, %c0_88] : memref<256x1x512xf32, #tpu.memory_space<vmem>>, vector<1x1x512xf32>
      %141 = vector.shape_cast %140 : vector<1x1x512xf32> to vector<1x512xf32>
      %c0_89 = arith.constant 0 : index
      %c0_90 = arith.constant 0 : index
      %142 = vector.load %arg6[%c0_89, %c0_90] : memref<1x128xf32, #tpu.memory_space<vmem>>, vector<1x128xf32>
      %c0_91 = arith.constant 0 : index
      %c0_92 = arith.constant 0 : index
      %143 = vector.load %arg2[%c0_91, %c0_92] : memref<128x512xf32, #tpu.memory_space<vmem>>, vector<128x512xf32>
      %cst_93 = arith.constant dense<0.000000e+00> : vector<1x512xf32>
      %144 = tpu.matmul %142, %143, %cst_93 {dimension_numbers = #tpu.dot_dimension_numbers<[1], [0], [0], [1], [0, 0, 1, 1], [], []>} : vector<1x128xf32>, vector<128x512xf32>, vector<1x512xf32> -> vector<1x512xf32>
      %145 = arith.addf %141, %144 : vector<1x512xf32>
      %146 = vector.extract_strided_slice %145 {offsets = [0, 0], sizes = [1, 384], strides = [1, 1]} : vector<1x512xf32> to vector<1x384xf32>
      %147 = arith.negf %146 : vector<1x384xf32>
      %148 = math.exp %147 : vector<1x384xf32>
      %cst_94 = arith.constant 1.000000e+00 : f32
      %149 = vector.broadcast %cst_94 : f32 to vector<1x384xf32>
      %150 = arith.addf %149, %148 : vector<1x384xf32>
      %151 = arith.divf %149, %150 : vector<1x384xf32>
      %152 = vector.extract_strided_slice %145 {offsets = [0, 384], sizes = [1, 128], strides = [1, 1]} : vector<1x512xf32> to vector<1x128xf32>
      %153 = math.tanh %152 : vector<1x128xf32>
      %154 = vector.extract_strided_slice %151 {offsets = [0, 0], sizes = [1, 128], strides = [1, 1]} : vector<1x384xf32> to vector<1x128xf32>
      %155 = vector.extract_strided_slice %151 {offsets = [0, 128], sizes = [1, 128], strides = [1, 1]} : vector<1x384xf32> to vector<1x128xf32>
      %156 = vector.extract_strided_slice %151 {offsets = [0, 256], sizes = [1, 128], strides = [1, 1]} : vector<1x384xf32> to vector<1x128xf32>
      %c0_95 = arith.constant 0 : index
      %c0_96 = arith.constant 0 : index
      %157 = vector.load %arg7[%c0_95, %c0_96] : memref<1x128xf32, #tpu.memory_space<vmem>>, vector<1x128xf32>
      %158 = arith.mulf %155, %157 : vector<1x128xf32>
      %159 = arith.mulf %154, %153 : vector<1x128xf32>
      %160 = arith.addf %158, %159 : vector<1x128xf32>
      %161 = math.tanh %160 : vector<1x128xf32>
      %162 = arith.mulf %156, %161 : vector<1x128xf32>
      %c0_97 = arith.constant 0 : index
      %c0_98 = arith.constant 0 : index
      %163 = vector.load %arg7[%c0_97, %c0_98] : memref<1x128xf32, #tpu.memory_space<vmem>>, vector<1x128xf32>
      tpu.vector_store %arg7[%c0_97, %c0_98], %160 {strides = array<i32>} : memref<1x128xf32, #tpu.memory_space<vmem>>, vector<1x128xf32>,
      %c0_99 = arith.constant 0 : index
      %c0_100 = arith.constant 0 : index
      %164 = vector.load %arg6[%c0_99, %c0_100] : memref<1x128xf32, #tpu.memory_space<vmem>>, vector<1x128xf32>
      tpu.vector_store %arg6[%c0_99, %c0_100], %162 {strides = array<i32>} : memref<1x128xf32, #tpu.memory_space<vmem>>, vector<1x128xf32>,
      %c0_101 = arith.constant 0 : index
      %c0_102 = arith.constant 0 : index
      %165 = vector.load %arg3[%c0_101, %c0_102] : memref<128x256xf32, #tpu.memory_space<vmem>>, vector<128x256xf32>
      %cst_103 = arith.constant dense<0.000000e+00> : vector<1x256xf32>
      %166 = tpu.matmul %162, %165, %cst_103 {dimension_numbers = #tpu.dot_dimension_numbers<[1], [0], [0], [1], [0, 0, 1, 1], [], []>} : vector<1x128xf32>, vector<128x256xf32>, vector<1x256xf32> -> vector<1x256xf32>
      %c0_104 = arith.constant 0 : index
      %c0_105 = arith.constant 0 : index
      %167 = vector.load %arg4[%c0_104, %c0_105] : memref<1x256xf32, #tpu.memory_space<vmem>>, vector<1x256xf32>
      %168 = arith.addf %166, %167 : vector<1x256xf32>
      %169 = vector.shape_cast %168 : vector<1x256xf32> to vector<1x1x256xf32>
      %cst_106 = arith.constant dense<0xFF800000> : vector<1xf32>
      %170 = vector.multi_reduction <maximumf>, %169, %cst_106 [1, 2] : vector<1x1x256xf32> to vector<1xf32>
      %171 = vector.shape_cast %170 : vector<1xf32> to vector<1x1x1xf32>
      %172 = vector.extract %171[0, 0, 0] : f32 from vector<1x1x1xf32>
      %173 = vector.broadcast %172 : f32 to vector<1x256xf32>
      %174 = arith.cmpf oeq, %168, %173 : vector<1x256xf32>
      %c256_i32_107 = arith.constant 256 : i32
      %175 = vector.broadcast %c256_i32_107 : i32 to vector<1x256xi32>
      %176 = arith.select %174, %8, %175 : vector<1x256xi1>, vector<1x256xi32>
      %177 = vector.shape_cast %176 : vector<1x256xi32> to vector<1x1x256xi32>
      %cst_108 = arith.constant dense<2147483647> : vector<1xi32>
      %178 = vector.multi_reduction <minsi>, %177, %cst_108 [1, 2] : vector<1x1x256xi32> to vector<1xi32>
      %179 = vector.shape_cast %178 : vector<1xi32> to vector<1x1x1xi32>
      %180 = vector.extract %179[0, 0, 0] : i32 from vector<1x1x1xi32>
      %c0_109 = arith.constant 0 : index
      %181 = memref.load %arg8[%c0_109] : memref<1xi32, #tpu.memory_space<smem>>
      memref.store %180, %arg8[%c0_109] : memref<1xi32, #tpu.memory_space<smem>>
    } else {
    }
    %c0_34 = arith.constant 0 : index
    %59 = memref.load %arg8[%c0_34] : memref<1xi32, #tpu.memory_space<smem>>
    %c2 = arith.constant 2 : index
    %60 = memref.load %arg5[%c2] : memref<16xi32, #tpu.memory_space<smem>>
    memref.store %59, %arg5[%c2] : memref<16xi32, #tpu.memory_space<smem>>
    %c0_35 = arith.constant 0 : index
    %61 = memref.load %arg8[%c0_35] : memref<1xi32, #tpu.memory_space<smem>>
    %c0_i32_36 = arith.constant 0 : i32
    %62 = arith.cmpi ne, %61, %c0_i32_36 : i32
    %63 = arith.extui %62 : i1 to i32
    %c0_i32_37 = arith.constant 0 : i32
    %64 = arith.cmpi ne, %63, %c0_i32_37 : i32
    scf.if %64 {
      %139 = arith.index_cast %61 : i32 to index
      %c0_87 = arith.constant 0 : index
      %c0_88 = arith.constant 0 : index
      %140 = vector.load %arg1[%139, %c0_87, %c0_88] : memref<256x1x512xf32, #tpu.memory_space<vmem>>, vector<1x1x512xf32>
      %141 = vector.shape_cast %140 : vector<1x1x512xf32> to vector<1x512xf32>
      %c0_89 = arith.constant 0 : index
      %c0_90 = arith.constant 0 : index
      %142 = vector.load %arg6[%c0_89, %c0_90] : memref<1x128xf32, #tpu.memory_space<vmem>>, vector<1x128xf32>
      %c0_91 = arith.constant 0 : index
      %c0_92 = arith.constant 0 : index
      %143 = vector.load %arg2[%c0_91, %c0_92] : memref<128x512xf32, #tpu.memory_space<vmem>>, vector<128x512xf32>
      %cst_93 = arith.constant dense<0.000000e+00> : vector<1x512xf32>
      %144 = tpu.matmul %142, %143, %cst_93 {dimension_numbers = #tpu.dot_dimension_numbers<[1], [0], [0], [1], [0, 0, 1, 1], [], []>} : vector<1x128xf32>, vector<128x512xf32>, vector<1x512xf32> -> vector<1x512xf32>
      %145 = arith.addf %141, %144 : vector<1x512xf32>
      %146 = vector.extract_strided_slice %145 {offsets = [0, 0], sizes = [1, 384], strides = [1, 1]} : vector<1x512xf32> to vector<1x384xf32>
      %147 = arith.negf %146 : vector<1x384xf32>
      %148 = math.exp %147 : vector<1x384xf32>
      %cst_94 = arith.constant 1.000000e+00 : f32
      %149 = vector.broadcast %cst_94 : f32 to vector<1x384xf32>
      %150 = arith.addf %149, %148 : vector<1x384xf32>
      %151 = arith.divf %149, %150 : vector<1x384xf32>
      %152 = vector.extract_strided_slice %145 {offsets = [0, 384], sizes = [1, 128], strides = [1, 1]} : vector<1x512xf32> to vector<1x128xf32>
      %153 = math.tanh %152 : vector<1x128xf32>
      %154 = vector.extract_strided_slice %151 {offsets = [0, 0], sizes = [1, 128], strides = [1, 1]} : vector<1x384xf32> to vector<1x128xf32>
      %155 = vector.extract_strided_slice %151 {offsets = [0, 128], sizes = [1, 128], strides = [1, 1]} : vector<1x384xf32> to vector<1x128xf32>
      %156 = vector.extract_strided_slice %151 {offsets = [0, 256], sizes = [1, 128], strides = [1, 1]} : vector<1x384xf32> to vector<1x128xf32>
      %c0_95 = arith.constant 0 : index
      %c0_96 = arith.constant 0 : index
      %157 = vector.load %arg7[%c0_95, %c0_96] : memref<1x128xf32, #tpu.memory_space<vmem>>, vector<1x128xf32>
      %158 = arith.mulf %155, %157 : vector<1x128xf32>
      %159 = arith.mulf %154, %153 : vector<1x128xf32>
      %160 = arith.addf %158, %159 : vector<1x128xf32>
      %161 = math.tanh %160 : vector<1x128xf32>
      %162 = arith.mulf %156, %161 : vector<1x128xf32>
      %c0_97 = arith.constant 0 : index
      %c0_98 = arith.constant 0 : index
      %163 = vector.load %arg7[%c0_97, %c0_98] : memref<1x128xf32, #tpu.memory_space<vmem>>, vector<1x128xf32>
      tpu.vector_store %arg7[%c0_97, %c0_98], %160 {strides = array<i32>} : memref<1x128xf32, #tpu.memory_space<vmem>>, vector<1x128xf32>,
      %c0_99 = arith.constant 0 : index
      %c0_100 = arith.constant 0 : index
      %164 = vector.load %arg6[%c0_99, %c0_100] : memref<1x128xf32, #tpu.memory_space<vmem>>, vector<1x128xf32>
      tpu.vector_store %arg6[%c0_99, %c0_100], %162 {strides = array<i32>} : memref<1x128xf32, #tpu.memory_space<vmem>>, vector<1x128xf32>,
      %c0_101 = arith.constant 0 : index
      %c0_102 = arith.constant 0 : index
      %165 = vector.load %arg3[%c0_101, %c0_102] : memref<128x256xf32, #tpu.memory_space<vmem>>, vector<128x256xf32>
      %cst_103 = arith.constant dense<0.000000e+00> : vector<1x256xf32>
      %166 = tpu.matmul %162, %165, %cst_103 {dimension_numbers = #tpu.dot_dimension_numbers<[1], [0], [0], [1], [0, 0, 1, 1], [], []>} : vector<1x128xf32>, vector<128x256xf32>, vector<1x256xf32> -> vector<1x256xf32>
      %c0_104 = arith.constant 0 : index
      %c0_105 = arith.constant 0 : index
      %167 = vector.load %arg4[%c0_104, %c0_105] : memref<1x256xf32, #tpu.memory_space<vmem>>, vector<1x256xf32>
      %168 = arith.addf %166, %167 : vector<1x256xf32>
      %169 = vector.shape_cast %168 : vector<1x256xf32> to vector<1x1x256xf32>
      %cst_106 = arith.constant dense<0xFF800000> : vector<1xf32>
      %170 = vector.multi_reduction <maximumf>, %169, %cst_106 [1, 2] : vector<1x1x256xf32> to vector<1xf32>
      %171 = vector.shape_cast %170 : vector<1xf32> to vector<1x1x1xf32>
      %172 = vector.extract %171[0, 0, 0] : f32 from vector<1x1x1xf32>
      %173 = vector.broadcast %172 : f32 to vector<1x256xf32>
      %174 = arith.cmpf oeq, %168, %173 : vector<1x256xf32>
      %c256_i32_107 = arith.constant 256 : i32
      %175 = vector.broadcast %c256_i32_107 : i32 to vector<1x256xi32>
      %176 = arith.select %174, %8, %175 : vector<1x256xi1>, vector<1x256xi32>
      %177 = vector.shape_cast %176 : vector<1x256xi32> to vector<1x1x256xi32>
      %cst_108 = arith.constant dense<2147483647> : vector<1xi32>
      %178 = vector.multi_reduction <minsi>, %177, %cst_108 [1, 2] : vector<1x1x256xi32> to vector<1xi32>
      %179 = vector.shape_cast %178 : vector<1xi32> to vector<1x1x1xi32>
      %180 = vector.extract %179[0, 0, 0] : i32 from vector<1x1x1xi32>
      %c0_109 = arith.constant 0 : index
      %181 = memref.load %arg8[%c0_109] : memref<1xi32, #tpu.memory_space<smem>>
      memref.store %180, %arg8[%c0_109] : memref<1xi32, #tpu.memory_space<smem>>
    } else {
    }
    %c0_38 = arith.constant 0 : index
    %65 = memref.load %arg8[%c0_38] : memref<1xi32, #tpu.memory_space<smem>>
    %c3 = arith.constant 3 : index
    %66 = memref.load %arg5[%c3] : memref<16xi32, #tpu.memory_space<smem>>
    memref.store %65, %arg5[%c3] : memref<16xi32, #tpu.memory_space<smem>>
    %c0_39 = arith.constant 0 : index
    %67 = memref.load %arg8[%c0_39] : memref<1xi32, #tpu.memory_space<smem>>
    %c0_i32_40 = arith.constant 0 : i32
    %68 = arith.cmpi ne, %67, %c0_i32_40 : i32
    %69 = arith.extui %68 : i1 to i32
    %c0_i32_41 = arith.constant 0 : i32
    %70 = arith.cmpi ne, %69, %c0_i32_41 : i32
    scf.if %70 {
      %139 = arith.index_cast %67 : i32 to index
      %c0_87 = arith.constant 0 : index
      %c0_88 = arith.constant 0 : index
      %140 = vector.load %arg1[%139, %c0_87, %c0_88] : memref<256x1x512xf32, #tpu.memory_space<vmem>>, vector<1x1x512xf32>
      %141 = vector.shape_cast %140 : vector<1x1x512xf32> to vector<1x512xf32>
      %c0_89 = arith.constant 0 : index
      %c0_90 = arith.constant 0 : index
      %142 = vector.load %arg6[%c0_89, %c0_90] : memref<1x128xf32, #tpu.memory_space<vmem>>, vector<1x128xf32>
      %c0_91 = arith.constant 0 : index
      %c0_92 = arith.constant 0 : index
      %143 = vector.load %arg2[%c0_91, %c0_92] : memref<128x512xf32, #tpu.memory_space<vmem>>, vector<128x512xf32>
      %cst_93 = arith.constant dense<0.000000e+00> : vector<1x512xf32>
      %144 = tpu.matmul %142, %143, %cst_93 {dimension_numbers = #tpu.dot_dimension_numbers<[1], [0], [0], [1], [0, 0, 1, 1], [], []>} : vector<1x128xf32>, vector<128x512xf32>, vector<1x512xf32> -> vector<1x512xf32>
      %145 = arith.addf %141, %144 : vector<1x512xf32>
      %146 = vector.extract_strided_slice %145 {offsets = [0, 0], sizes = [1, 384], strides = [1, 1]} : vector<1x512xf32> to vector<1x384xf32>
      %147 = arith.negf %146 : vector<1x384xf32>
      %148 = math.exp %147 : vector<1x384xf32>
      %cst_94 = arith.constant 1.000000e+00 : f32
      %149 = vector.broadcast %cst_94 : f32 to vector<1x384xf32>
      %150 = arith.addf %149, %148 : vector<1x384xf32>
      %151 = arith.divf %149, %150 : vector<1x384xf32>
      %152 = vector.extract_strided_slice %145 {offsets = [0, 384], sizes = [1, 128], strides = [1, 1]} : vector<1x512xf32> to vector<1x128xf32>
      %153 = math.tanh %152 : vector<1x128xf32>
      %154 = vector.extract_strided_slice %151 {offsets = [0, 0], sizes = [1, 128], strides = [1, 1]} : vector<1x384xf32> to vector<1x128xf32>
      %155 = vector.extract_strided_slice %151 {offsets = [0, 128], sizes = [1, 128], strides = [1, 1]} : vector<1x384xf32> to vector<1x128xf32>
      %156 = vector.extract_strided_slice %151 {offsets = [0, 256], sizes = [1, 128], strides = [1, 1]} : vector<1x384xf32> to vector<1x128xf32>
      %c0_95 = arith.constant 0 : index
      %c0_96 = arith.constant 0 : index
      %157 = vector.load %arg7[%c0_95, %c0_96] : memref<1x128xf32, #tpu.memory_space<vmem>>, vector<1x128xf32>
      %158 = arith.mulf %155, %157 : vector<1x128xf32>
      %159 = arith.mulf %154, %153 : vector<1x128xf32>
      %160 = arith.addf %158, %159 : vector<1x128xf32>
      %161 = math.tanh %160 : vector<1x128xf32>
      %162 = arith.mulf %156, %161 : vector<1x128xf32>
      %c0_97 = arith.constant 0 : index
      %c0_98 = arith.constant 0 : index
      %163 = vector.load %arg7[%c0_97, %c0_98] : memref<1x128xf32, #tpu.memory_space<vmem>>, vector<1x128xf32>
      tpu.vector_store %arg7[%c0_97, %c0_98], %160 {strides = array<i32>} : memref<1x128xf32, #tpu.memory_space<vmem>>, vector<1x128xf32>,
      %c0_99 = arith.constant 0 : index
      %c0_100 = arith.constant 0 : index
      %164 = vector.load %arg6[%c0_99, %c0_100] : memref<1x128xf32, #tpu.memory_space<vmem>>, vector<1x128xf32>
      tpu.vector_store %arg6[%c0_99, %c0_100], %162 {strides = array<i32>} : memref<1x128xf32, #tpu.memory_space<vmem>>, vector<1x128xf32>,
      %c0_101 = arith.constant 0 : index
      %c0_102 = arith.constant 0 : index
      %165 = vector.load %arg3[%c0_101, %c0_102] : memref<128x256xf32, #tpu.memory_space<vmem>>, vector<128x256xf32>
      %cst_103 = arith.constant dense<0.000000e+00> : vector<1x256xf32>
      %166 = tpu.matmul %162, %165, %cst_103 {dimension_numbers = #tpu.dot_dimension_numbers<[1], [0], [0], [1], [0, 0, 1, 1], [], []>} : vector<1x128xf32>, vector<128x256xf32>, vector<1x256xf32> -> vector<1x256xf32>
      %c0_104 = arith.constant 0 : index
      %c0_105 = arith.constant 0 : index
      %167 = vector.load %arg4[%c0_104, %c0_105] : memref<1x256xf32, #tpu.memory_space<vmem>>, vector<1x256xf32>
      %168 = arith.addf %166, %167 : vector<1x256xf32>
      %169 = vector.shape_cast %168 : vector<1x256xf32> to vector<1x1x256xf32>
      %cst_106 = arith.constant dense<0xFF800000> : vector<1xf32>
      %170 = vector.multi_reduction <maximumf>, %169, %cst_106 [1, 2] : vector<1x1x256xf32> to vector<1xf32>
      %171 = vector.shape_cast %170 : vector<1xf32> to vector<1x1x1xf32>
      %172 = vector.extract %171[0, 0, 0] : f32 from vector<1x1x1xf32>
      %173 = vector.broadcast %172 : f32 to vector<1x256xf32>
      %174 = arith.cmpf oeq, %168, %173 : vector<1x256xf32>
      %c256_i32_107 = arith.constant 256 : i32
      %175 = vector.broadcast %c256_i32_107 : i32 to vector<1x256xi32>
      %176 = arith.select %174, %8, %175 : vector<1x256xi1>, vector<1x256xi32>
      %177 = vector.shape_cast %176 : vector<1x256xi32> to vector<1x1x256xi32>
      %cst_108 = arith.constant dense<2147483647> : vector<1xi32>
      %178 = vector.multi_reduction <minsi>, %177, %cst_108 [1, 2] : vector<1x1x256xi32> to vector<1xi32>
      %179 = vector.shape_cast %178 : vector<1xi32> to vector<1x1x1xi32>
      %180 = vector.extract %179[0, 0, 0] : i32 from vector<1x1x1xi32>
      %c0_109 = arith.constant 0 : index
      %181 = memref.load %arg8[%c0_109] : memref<1xi32, #tpu.memory_space<smem>>
      memref.store %180, %arg8[%c0_109] : memref<1xi32, #tpu.memory_space<smem>>
    } else {
    }
    %c0_42 = arith.constant 0 : index
    %71 = memref.load %arg8[%c0_42] : memref<1xi32, #tpu.memory_space<smem>>
    %c4 = arith.constant 4 : index
    %72 = memref.load %arg5[%c4] : memref<16xi32, #tpu.memory_space<smem>>
    memref.store %71, %arg5[%c4] : memref<16xi32, #tpu.memory_space<smem>>
    %c0_43 = arith.constant 0 : index
    %73 = memref.load %arg8[%c0_43] : memref<1xi32, #tpu.memory_space<smem>>
    %c0_i32_44 = arith.constant 0 : i32
    %74 = arith.cmpi ne, %73, %c0_i32_44 : i32
    %75 = arith.extui %74 : i1 to i32
    %c0_i32_45 = arith.constant 0 : i32
    %76 = arith.cmpi ne, %75, %c0_i32_45 : i32
    scf.if %76 {
      %139 = arith.index_cast %73 : i32 to index
      %c0_87 = arith.constant 0 : index
      %c0_88 = arith.constant 0 : index
      %140 = vector.load %arg1[%139, %c0_87, %c0_88] : memref<256x1x512xf32, #tpu.memory_space<vmem>>, vector<1x1x512xf32>
      %141 = vector.shape_cast %140 : vector<1x1x512xf32> to vector<1x512xf32>
      %c0_89 = arith.constant 0 : index
      %c0_90 = arith.constant 0 : index
      %142 = vector.load %arg6[%c0_89, %c0_90] : memref<1x128xf32, #tpu.memory_space<vmem>>, vector<1x128xf32>
      %c0_91 = arith.constant 0 : index
      %c0_92 = arith.constant 0 : index
      %143 = vector.load %arg2[%c0_91, %c0_92] : memref<128x512xf32, #tpu.memory_space<vmem>>, vector<128x512xf32>
      %cst_93 = arith.constant dense<0.000000e+00> : vector<1x512xf32>
      %144 = tpu.matmul %142, %143, %cst_93 {dimension_numbers = #tpu.dot_dimension_numbers<[1], [0], [0], [1], [0, 0, 1, 1], [], []>} : vector<1x128xf32>, vector<128x512xf32>, vector<1x512xf32> -> vector<1x512xf32>
      %145 = arith.addf %141, %144 : vector<1x512xf32>
      %146 = vector.extract_strided_slice %145 {offsets = [0, 0], sizes = [1, 384], strides = [1, 1]} : vector<1x512xf32> to vector<1x384xf32>
      %147 = arith.negf %146 : vector<1x384xf32>
      %148 = math.exp %147 : vector<1x384xf32>
      %cst_94 = arith.constant 1.000000e+00 : f32
      %149 = vector.broadcast %cst_94 : f32 to vector<1x384xf32>
      %150 = arith.addf %149, %148 : vector<1x384xf32>
      %151 = arith.divf %149, %150 : vector<1x384xf32>
      %152 = vector.extract_strided_slice %145 {offsets = [0, 384], sizes = [1, 128], strides = [1, 1]} : vector<1x512xf32> to vector<1x128xf32>
      %153 = math.tanh %152 : vector<1x128xf32>
      %154 = vector.extract_strided_slice %151 {offsets = [0, 0], sizes = [1, 128], strides = [1, 1]} : vector<1x384xf32> to vector<1x128xf32>
      %155 = vector.extract_strided_slice %151 {offsets = [0, 128], sizes = [1, 128], strides = [1, 1]} : vector<1x384xf32> to vector<1x128xf32>
      %156 = vector.extract_strided_slice %151 {offsets = [0, 256], sizes = [1, 128], strides = [1, 1]} : vector<1x384xf32> to vector<1x128xf32>
      %c0_95 = arith.constant 0 : index
      %c0_96 = arith.constant 0 : index
      %157 = vector.load %arg7[%c0_95, %c0_96] : memref<1x128xf32, #tpu.memory_space<vmem>>, vector<1x128xf32>
      %158 = arith.mulf %155, %157 : vector<1x128xf32>
      %159 = arith.mulf %154, %153 : vector<1x128xf32>
      %160 = arith.addf %158, %159 : vector<1x128xf32>
      %161 = math.tanh %160 : vector<1x128xf32>
      %162 = arith.mulf %156, %161 : vector<1x128xf32>
      %c0_97 = arith.constant 0 : index
      %c0_98 = arith.constant 0 : index
      %163 = vector.load %arg7[%c0_97, %c0_98] : memref<1x128xf32, #tpu.memory_space<vmem>>, vector<1x128xf32>
      tpu.vector_store %arg7[%c0_97, %c0_98], %160 {strides = array<i32>} : memref<1x128xf32, #tpu.memory_space<vmem>>, vector<1x128xf32>,
      %c0_99 = arith.constant 0 : index
      %c0_100 = arith.constant 0 : index
      %164 = vector.load %arg6[%c0_99, %c0_100] : memref<1x128xf32, #tpu.memory_space<vmem>>, vector<1x128xf32>
      tpu.vector_store %arg6[%c0_99, %c0_100], %162 {strides = array<i32>} : memref<1x128xf32, #tpu.memory_space<vmem>>, vector<1x128xf32>,
      %c0_101 = arith.constant 0 : index
      %c0_102 = arith.constant 0 : index
      %165 = vector.load %arg3[%c0_101, %c0_102] : memref<128x256xf32, #tpu.memory_space<vmem>>, vector<128x256xf32>
      %cst_103 = arith.constant dense<0.000000e+00> : vector<1x256xf32>
      %166 = tpu.matmul %162, %165, %cst_103 {dimension_numbers = #tpu.dot_dimension_numbers<[1], [0], [0], [1], [0, 0, 1, 1], [], []>} : vector<1x128xf32>, vector<128x256xf32>, vector<1x256xf32> -> vector<1x256xf32>
      %c0_104 = arith.constant 0 : index
      %c0_105 = arith.constant 0 : index
      %167 = vector.load %arg4[%c0_104, %c0_105] : memref<1x256xf32, #tpu.memory_space<vmem>>, vector<1x256xf32>
      %168 = arith.addf %166, %167 : vector<1x256xf32>
      %169 = vector.shape_cast %168 : vector<1x256xf32> to vector<1x1x256xf32>
      %cst_106 = arith.constant dense<0xFF800000> : vector<1xf32>
      %170 = vector.multi_reduction <maximumf>, %169, %cst_106 [1, 2] : vector<1x1x256xf32> to vector<1xf32>
      %171 = vector.shape_cast %170 : vector<1xf32> to vector<1x1x1xf32>
      %172 = vector.extract %171[0, 0, 0] : f32 from vector<1x1x1xf32>
      %173 = vector.broadcast %172 : f32 to vector<1x256xf32>
      %174 = arith.cmpf oeq, %168, %173 : vector<1x256xf32>
      %c256_i32_107 = arith.constant 256 : i32
      %175 = vector.broadcast %c256_i32_107 : i32 to vector<1x256xi32>
      %176 = arith.select %174, %8, %175 : vector<1x256xi1>, vector<1x256xi32>
      %177 = vector.shape_cast %176 : vector<1x256xi32> to vector<1x1x256xi32>
      %cst_108 = arith.constant dense<2147483647> : vector<1xi32>
      %178 = vector.multi_reduction <minsi>, %177, %cst_108 [1, 2] : vector<1x1x256xi32> to vector<1xi32>
      %179 = vector.shape_cast %178 : vector<1xi32> to vector<1x1x1xi32>
      %180 = vector.extract %179[0, 0, 0] : i32 from vector<1x1x1xi32>
      %c0_109 = arith.constant 0 : index
      %181 = memref.load %arg8[%c0_109] : memref<1xi32, #tpu.memory_space<smem>>
      memref.store %180, %arg8[%c0_109] : memref<1xi32, #tpu.memory_space<smem>>
    } else {
    }
    %c0_46 = arith.constant 0 : index
    %77 = memref.load %arg8[%c0_46] : memref<1xi32, #tpu.memory_space<smem>>
    %c5 = arith.constant 5 : index
    %78 = memref.load %arg5[%c5] : memref<16xi32, #tpu.memory_space<smem>>
    memref.store %77, %arg5[%c5] : memref<16xi32, #tpu.memory_space<smem>>
    %c0_47 = arith.constant 0 : index
    %79 = memref.load %arg8[%c0_47] : memref<1xi32, #tpu.memory_space<smem>>
    %c0_i32_48 = arith.constant 0 : i32
    %80 = arith.cmpi ne, %79, %c0_i32_48 : i32
    %81 = arith.extui %80 : i1 to i32
    %c0_i32_49 = arith.constant 0 : i32
    %82 = arith.cmpi ne, %81, %c0_i32_49 : i32
    scf.if %82 {
      %139 = arith.index_cast %79 : i32 to index
      %c0_87 = arith.constant 0 : index
      %c0_88 = arith.constant 0 : index
      %140 = vector.load %arg1[%139, %c0_87, %c0_88] : memref<256x1x512xf32, #tpu.memory_space<vmem>>, vector<1x1x512xf32>
      %141 = vector.shape_cast %140 : vector<1x1x512xf32> to vector<1x512xf32>
      %c0_89 = arith.constant 0 : index
      %c0_90 = arith.constant 0 : index
      %142 = vector.load %arg6[%c0_89, %c0_90] : memref<1x128xf32, #tpu.memory_space<vmem>>, vector<1x128xf32>
      %c0_91 = arith.constant 0 : index
      %c0_92 = arith.constant 0 : index
      %143 = vector.load %arg2[%c0_91, %c0_92] : memref<128x512xf32, #tpu.memory_space<vmem>>, vector<128x512xf32>
      %cst_93 = arith.constant dense<0.000000e+00> : vector<1x512xf32>
      %144 = tpu.matmul %142, %143, %cst_93 {dimension_numbers = #tpu.dot_dimension_numbers<[1], [0], [0], [1], [0, 0, 1, 1], [], []>} : vector<1x128xf32>, vector<128x512xf32>, vector<1x512xf32> -> vector<1x512xf32>
      %145 = arith.addf %141, %144 : vector<1x512xf32>
      %146 = vector.extract_strided_slice %145 {offsets = [0, 0], sizes = [1, 384], strides = [1, 1]} : vector<1x512xf32> to vector<1x384xf32>
      %147 = arith.negf %146 : vector<1x384xf32>
      %148 = math.exp %147 : vector<1x384xf32>
      %cst_94 = arith.constant 1.000000e+00 : f32
      %149 = vector.broadcast %cst_94 : f32 to vector<1x384xf32>
      %150 = arith.addf %149, %148 : vector<1x384xf32>
      %151 = arith.divf %149, %150 : vector<1x384xf32>
      %152 = vector.extract_strided_slice %145 {offsets = [0, 384], sizes = [1, 128], strides = [1, 1]} : vector<1x512xf32> to vector<1x128xf32>
      %153 = math.tanh %152 : vector<1x128xf32>
      %154 = vector.extract_strided_slice %151 {offsets = [0, 0], sizes = [1, 128], strides = [1, 1]} : vector<1x384xf32> to vector<1x128xf32>
      %155 = vector.extract_strided_slice %151 {offsets = [0, 128], sizes = [1, 128], strides = [1, 1]} : vector<1x384xf32> to vector<1x128xf32>
      %156 = vector.extract_strided_slice %151 {offsets = [0, 256], sizes = [1, 128], strides = [1, 1]} : vector<1x384xf32> to vector<1x128xf32>
      %c0_95 = arith.constant 0 : index
      %c0_96 = arith.constant 0 : index
      %157 = vector.load %arg7[%c0_95, %c0_96] : memref<1x128xf32, #tpu.memory_space<vmem>>, vector<1x128xf32>
      %158 = arith.mulf %155, %157 : vector<1x128xf32>
      %159 = arith.mulf %154, %153 : vector<1x128xf32>
      %160 = arith.addf %158, %159 : vector<1x128xf32>
      %161 = math.tanh %160 : vector<1x128xf32>
      %162 = arith.mulf %156, %161 : vector<1x128xf32>
      %c0_97 = arith.constant 0 : index
      %c0_98 = arith.constant 0 : index
      %163 = vector.load %arg7[%c0_97, %c0_98] : memref<1x128xf32, #tpu.memory_space<vmem>>, vector<1x128xf32>
      tpu.vector_store %arg7[%c0_97, %c0_98], %160 {strides = array<i32>} : memref<1x128xf32, #tpu.memory_space<vmem>>, vector<1x128xf32>,
      %c0_99 = arith.constant 0 : index
      %c0_100 = arith.constant 0 : index
      %164 = vector.load %arg6[%c0_99, %c0_100] : memref<1x128xf32, #tpu.memory_space<vmem>>, vector<1x128xf32>
      tpu.vector_store %arg6[%c0_99, %c0_100], %162 {strides = array<i32>} : memref<1x128xf32, #tpu.memory_space<vmem>>, vector<1x128xf32>,
      %c0_101 = arith.constant 0 : index
      %c0_102 = arith.constant 0 : index
      %165 = vector.load %arg3[%c0_101, %c0_102] : memref<128x256xf32, #tpu.memory_space<vmem>>, vector<128x256xf32>
      %cst_103 = arith.constant dense<0.000000e+00> : vector<1x256xf32>
      %166 = tpu.matmul %162, %165, %cst_103 {dimension_numbers = #tpu.dot_dimension_numbers<[1], [0], [0], [1], [0, 0, 1, 1], [], []>} : vector<1x128xf32>, vector<128x256xf32>, vector<1x256xf32> -> vector<1x256xf32>
      %c0_104 = arith.constant 0 : index
      %c0_105 = arith.constant 0 : index
      %167 = vector.load %arg4[%c0_104, %c0_105] : memref<1x256xf32, #tpu.memory_space<vmem>>, vector<1x256xf32>
      %168 = arith.addf %166, %167 : vector<1x256xf32>
      %169 = vector.shape_cast %168 : vector<1x256xf32> to vector<1x1x256xf32>
      %cst_106 = arith.constant dense<0xFF800000> : vector<1xf32>
      %170 = vector.multi_reduction <maximumf>, %169, %cst_106 [1, 2] : vector<1x1x256xf32> to vector<1xf32>
      %171 = vector.shape_cast %170 : vector<1xf32> to vector<1x1x1xf32>
      %172 = vector.extract %171[0, 0, 0] : f32 from vector<1x1x1xf32>
      %173 = vector.broadcast %172 : f32 to vector<1x256xf32>
      %174 = arith.cmpf oeq, %168, %173 : vector<1x256xf32>
      %c256_i32_107 = arith.constant 256 : i32
      %175 = vector.broadcast %c256_i32_107 : i32 to vector<1x256xi32>
      %176 = arith.select %174, %8, %175 : vector<1x256xi1>, vector<1x256xi32>
      %177 = vector.shape_cast %176 : vector<1x256xi32> to vector<1x1x256xi32>
      %cst_108 = arith.constant dense<2147483647> : vector<1xi32>
      %178 = vector.multi_reduction <minsi>, %177, %cst_108 [1, 2] : vector<1x1x256xi32> to vector<1xi32>
      %179 = vector.shape_cast %178 : vector<1xi32> to vector<1x1x1xi32>
      %180 = vector.extract %179[0, 0, 0] : i32 from vector<1x1x1xi32>
      %c0_109 = arith.constant 0 : index
      %181 = memref.load %arg8[%c0_109] : memref<1xi32, #tpu.memory_space<smem>>
      memref.store %180, %arg8[%c0_109] : memref<1xi32, #tpu.memory_space<smem>>
    } else {
    }
    %c0_50 = arith.constant 0 : index
    %83 = memref.load %arg8[%c0_50] : memref<1xi32, #tpu.memory_space<smem>>
    %c6 = arith.constant 6 : index
    %84 = memref.load %arg5[%c6] : memref<16xi32, #tpu.memory_space<smem>>
    memref.store %83, %arg5[%c6] : memref<16xi32, #tpu.memory_space<smem>>
    %c0_51 = arith.constant 0 : index
    %85 = memref.load %arg8[%c0_51] : memref<1xi32, #tpu.memory_space<smem>>
    %c0_i32_52 = arith.constant 0 : i32
    %86 = arith.cmpi ne, %85, %c0_i32_52 : i32
    %87 = arith.extui %86 : i1 to i32
    %c0_i32_53 = arith.constant 0 : i32
    %88 = arith.cmpi ne, %87, %c0_i32_53 : i32
    scf.if %88 {
      %139 = arith.index_cast %85 : i32 to index
      %c0_87 = arith.constant 0 : index
      %c0_88 = arith.constant 0 : index
      %140 = vector.load %arg1[%139, %c0_87, %c0_88] : memref<256x1x512xf32, #tpu.memory_space<vmem>>, vector<1x1x512xf32>
      %141 = vector.shape_cast %140 : vector<1x1x512xf32> to vector<1x512xf32>
      %c0_89 = arith.constant 0 : index
      %c0_90 = arith.constant 0 : index
      %142 = vector.load %arg6[%c0_89, %c0_90] : memref<1x128xf32, #tpu.memory_space<vmem>>, vector<1x128xf32>
      %c0_91 = arith.constant 0 : index
      %c0_92 = arith.constant 0 : index
      %143 = vector.load %arg2[%c0_91, %c0_92] : memref<128x512xf32, #tpu.memory_space<vmem>>, vector<128x512xf32>
      %cst_93 = arith.constant dense<0.000000e+00> : vector<1x512xf32>
      %144 = tpu.matmul %142, %143, %cst_93 {dimension_numbers = #tpu.dot_dimension_numbers<[1], [0], [0], [1], [0, 0, 1, 1], [], []>} : vector<1x128xf32>, vector<128x512xf32>, vector<1x512xf32> -> vector<1x512xf32>
      %145 = arith.addf %141, %144 : vector<1x512xf32>
      %146 = vector.extract_strided_slice %145 {offsets = [0, 0], sizes = [1, 384], strides = [1, 1]} : vector<1x512xf32> to vector<1x384xf32>
      %147 = arith.negf %146 : vector<1x384xf32>
      %148 = math.exp %147 : vector<1x384xf32>
      %cst_94 = arith.constant 1.000000e+00 : f32
      %149 = vector.broadcast %cst_94 : f32 to vector<1x384xf32>
      %150 = arith.addf %149, %148 : vector<1x384xf32>
      %151 = arith.divf %149, %150 : vector<1x384xf32>
      %152 = vector.extract_strided_slice %145 {offsets = [0, 384], sizes = [1, 128], strides = [1, 1]} : vector<1x512xf32> to vector<1x128xf32>
      %153 = math.tanh %152 : vector<1x128xf32>
      %154 = vector.extract_strided_slice %151 {offsets = [0, 0], sizes = [1, 128], strides = [1, 1]} : vector<1x384xf32> to vector<1x128xf32>
      %155 = vector.extract_strided_slice %151 {offsets = [0, 128], sizes = [1, 128], strides = [1, 1]} : vector<1x384xf32> to vector<1x128xf32>
      %156 = vector.extract_strided_slice %151 {offsets = [0, 256], sizes = [1, 128], strides = [1, 1]} : vector<1x384xf32> to vector<1x128xf32>
      %c0_95 = arith.constant 0 : index
      %c0_96 = arith.constant 0 : index
      %157 = vector.load %arg7[%c0_95, %c0_96] : memref<1x128xf32, #tpu.memory_space<vmem>>, vector<1x128xf32>
      %158 = arith.mulf %155, %157 : vector<1x128xf32>
      %159 = arith.mulf %154, %153 : vector<1x128xf32>
      %160 = arith.addf %158, %159 : vector<1x128xf32>
      %161 = math.tanh %160 : vector<1x128xf32>
      %162 = arith.mulf %156, %161 : vector<1x128xf32>
      %c0_97 = arith.constant 0 : index
      %c0_98 = arith.constant 0 : index
      %163 = vector.load %arg7[%c0_97, %c0_98] : memref<1x128xf32, #tpu.memory_space<vmem>>, vector<1x128xf32>
      tpu.vector_store %arg7[%c0_97, %c0_98], %160 {strides = array<i32>} : memref<1x128xf32, #tpu.memory_space<vmem>>, vector<1x128xf32>,
      %c0_99 = arith.constant 0 : index
      %c0_100 = arith.constant 0 : index
      %164 = vector.load %arg6[%c0_99, %c0_100] : memref<1x128xf32, #tpu.memory_space<vmem>>, vector<1x128xf32>
      tpu.vector_store %arg6[%c0_99, %c0_100], %162 {strides = array<i32>} : memref<1x128xf32, #tpu.memory_space<vmem>>, vector<1x128xf32>,
      %c0_101 = arith.constant 0 : index
      %c0_102 = arith.constant 0 : index
      %165 = vector.load %arg3[%c0_101, %c0_102] : memref<128x256xf32, #tpu.memory_space<vmem>>, vector<128x256xf32>
      %cst_103 = arith.constant dense<0.000000e+00> : vector<1x256xf32>
      %166 = tpu.matmul %162, %165, %cst_103 {dimension_numbers = #tpu.dot_dimension_numbers<[1], [0], [0], [1], [0, 0, 1, 1], [], []>} : vector<1x128xf32>, vector<128x256xf32>, vector<1x256xf32> -> vector<1x256xf32>
      %c0_104 = arith.constant 0 : index
      %c0_105 = arith.constant 0 : index
      %167 = vector.load %arg4[%c0_104, %c0_105] : memref<1x256xf32, #tpu.memory_space<vmem>>, vector<1x256xf32>
      %168 = arith.addf %166, %167 : vector<1x256xf32>
      %169 = vector.shape_cast %168 : vector<1x256xf32> to vector<1x1x256xf32>
      %cst_106 = arith.constant dense<0xFF800000> : vector<1xf32>
      %170 = vector.multi_reduction <maximumf>, %169, %cst_106 [1, 2] : vector<1x1x256xf32> to vector<1xf32>
      %171 = vector.shape_cast %170 : vector<1xf32> to vector<1x1x1xf32>
      %172 = vector.extract %171[0, 0, 0] : f32 from vector<1x1x1xf32>
      %173 = vector.broadcast %172 : f32 to vector<1x256xf32>
      %174 = arith.cmpf oeq, %168, %173 : vector<1x256xf32>
      %c256_i32_107 = arith.constant 256 : i32
      %175 = vector.broadcast %c256_i32_107 : i32 to vector<1x256xi32>
      %176 = arith.select %174, %8, %175 : vector<1x256xi1>, vector<1x256xi32>
      %177 = vector.shape_cast %176 : vector<1x256xi32> to vector<1x1x256xi32>
      %cst_108 = arith.constant dense<2147483647> : vector<1xi32>
      %178 = vector.multi_reduction <minsi>, %177, %cst_108 [1, 2] : vector<1x1x256xi32> to vector<1xi32>
      %179 = vector.shape_cast %178 : vector<1xi32> to vector<1x1x1xi32>
      %180 = vector.extract %179[0, 0, 0] : i32 from vector<1x1x1xi32>
      %c0_109 = arith.constant 0 : index
      %181 = memref.load %arg8[%c0_109] : memref<1xi32, #tpu.memory_space<smem>>
      memref.store %180, %arg8[%c0_109] : memref<1xi32, #tpu.memory_space<smem>>
    } else {
    }
    %c0_54 = arith.constant 0 : index
    %89 = memref.load %arg8[%c0_54] : memref<1xi32, #tpu.memory_space<smem>>
    %c7 = arith.constant 7 : index
    %90 = memref.load %arg5[%c7] : memref<16xi32, #tpu.memory_space<smem>>
    memref.store %89, %arg5[%c7] : memref<16xi32, #tpu.memory_space<smem>>
    %c0_55 = arith.constant 0 : index
    %91 = memref.load %arg8[%c0_55] : memref<1xi32, #tpu.memory_space<smem>>
    %c0_i32_56 = arith.constant 0 : i32
    %92 = arith.cmpi ne, %91, %c0_i32_56 : i32
    %93 = arith.extui %92 : i1 to i32
    %c0_i32_57 = arith.constant 0 : i32
    %94 = arith.cmpi ne, %93, %c0_i32_57 : i32
    scf.if %94 {
      %139 = arith.index_cast %91 : i32 to index
      %c0_87 = arith.constant 0 : index
      %c0_88 = arith.constant 0 : index
      %140 = vector.load %arg1[%139, %c0_87, %c0_88] : memref<256x1x512xf32, #tpu.memory_space<vmem>>, vector<1x1x512xf32>
      %141 = vector.shape_cast %140 : vector<1x1x512xf32> to vector<1x512xf32>
      %c0_89 = arith.constant 0 : index
      %c0_90 = arith.constant 0 : index
      %142 = vector.load %arg6[%c0_89, %c0_90] : memref<1x128xf32, #tpu.memory_space<vmem>>, vector<1x128xf32>
      %c0_91 = arith.constant 0 : index
      %c0_92 = arith.constant 0 : index
      %143 = vector.load %arg2[%c0_91, %c0_92] : memref<128x512xf32, #tpu.memory_space<vmem>>, vector<128x512xf32>
      %cst_93 = arith.constant dense<0.000000e+00> : vector<1x512xf32>
      %144 = tpu.matmul %142, %143, %cst_93 {dimension_numbers = #tpu.dot_dimension_numbers<[1], [0], [0], [1], [0, 0, 1, 1], [], []>} : vector<1x128xf32>, vector<128x512xf32>, vector<1x512xf32> -> vector<1x512xf32>
      %145 = arith.addf %141, %144 : vector<1x512xf32>
      %146 = vector.extract_strided_slice %145 {offsets = [0, 0], sizes = [1, 384], strides = [1, 1]} : vector<1x512xf32> to vector<1x384xf32>
      %147 = arith.negf %146 : vector<1x384xf32>
      %148 = math.exp %147 : vector<1x384xf32>
      %cst_94 = arith.constant 1.000000e+00 : f32
      %149 = vector.broadcast %cst_94 : f32 to vector<1x384xf32>
      %150 = arith.addf %149, %148 : vector<1x384xf32>
      %151 = arith.divf %149, %150 : vector<1x384xf32>
      %152 = vector.extract_strided_slice %145 {offsets = [0, 384], sizes = [1, 128], strides = [1, 1]} : vector<1x512xf32> to vector<1x128xf32>
      %153 = math.tanh %152 : vector<1x128xf32>
      %154 = vector.extract_strided_slice %151 {offsets = [0, 0], sizes = [1, 128], strides = [1, 1]} : vector<1x384xf32> to vector<1x128xf32>
      %155 = vector.extract_strided_slice %151 {offsets = [0, 128], sizes = [1, 128], strides = [1, 1]} : vector<1x384xf32> to vector<1x128xf32>
      %156 = vector.extract_strided_slice %151 {offsets = [0, 256], sizes = [1, 128], strides = [1, 1]} : vector<1x384xf32> to vector<1x128xf32>
      %c0_95 = arith.constant 0 : index
      %c0_96 = arith.constant 0 : index
      %157 = vector.load %arg7[%c0_95, %c0_96] : memref<1x128xf32, #tpu.memory_space<vmem>>, vector<1x128xf32>
      %158 = arith.mulf %155, %157 : vector<1x128xf32>
      %159 = arith.mulf %154, %153 : vector<1x128xf32>
      %160 = arith.addf %158, %159 : vector<1x128xf32>
      %161 = math.tanh %160 : vector<1x128xf32>
      %162 = arith.mulf %156, %161 : vector<1x128xf32>
      %c0_97 = arith.constant 0 : index
      %c0_98 = arith.constant 0 : index
      %163 = vector.load %arg7[%c0_97, %c0_98] : memref<1x128xf32, #tpu.memory_space<vmem>>, vector<1x128xf32>
      tpu.vector_store %arg7[%c0_97, %c0_98], %160 {strides = array<i32>} : memref<1x128xf32, #tpu.memory_space<vmem>>, vector<1x128xf32>,
      %c0_99 = arith.constant 0 : index
      %c0_100 = arith.constant 0 : index
      %164 = vector.load %arg6[%c0_99, %c0_100] : memref<1x128xf32, #tpu.memory_space<vmem>>, vector<1x128xf32>
      tpu.vector_store %arg6[%c0_99, %c0_100], %162 {strides = array<i32>} : memref<1x128xf32, #tpu.memory_space<vmem>>, vector<1x128xf32>,
      %c0_101 = arith.constant 0 : index
      %c0_102 = arith.constant 0 : index
      %165 = vector.load %arg3[%c0_101, %c0_102] : memref<128x256xf32, #tpu.memory_space<vmem>>, vector<128x256xf32>
      %cst_103 = arith.constant dense<0.000000e+00> : vector<1x256xf32>
      %166 = tpu.matmul %162, %165, %cst_103 {dimension_numbers = #tpu.dot_dimension_numbers<[1], [0], [0], [1], [0, 0, 1, 1], [], []>} : vector<1x128xf32>, vector<128x256xf32>, vector<1x256xf32> -> vector<1x256xf32>
      %c0_104 = arith.constant 0 : index
      %c0_105 = arith.constant 0 : index
      %167 = vector.load %arg4[%c0_104, %c0_105] : memref<1x256xf32, #tpu.memory_space<vmem>>, vector<1x256xf32>
      %168 = arith.addf %166, %167 : vector<1x256xf32>
      %169 = vector.shape_cast %168 : vector<1x256xf32> to vector<1x1x256xf32>
      %cst_106 = arith.constant dense<0xFF800000> : vector<1xf32>
      %170 = vector.multi_reduction <maximumf>, %169, %cst_106 [1, 2] : vector<1x1x256xf32> to vector<1xf32>
      %171 = vector.shape_cast %170 : vector<1xf32> to vector<1x1x1xf32>
      %172 = vector.extract %171[0, 0, 0] : f32 from vector<1x1x1xf32>
      %173 = vector.broadcast %172 : f32 to vector<1x256xf32>
      %174 = arith.cmpf oeq, %168, %173 : vector<1x256xf32>
      %c256_i32_107 = arith.constant 256 : i32
      %175 = vector.broadcast %c256_i32_107 : i32 to vector<1x256xi32>
      %176 = arith.select %174, %8, %175 : vector<1x256xi1>, vector<1x256xi32>
      %177 = vector.shape_cast %176 : vector<1x256xi32> to vector<1x1x256xi32>
      %cst_108 = arith.constant dense<2147483647> : vector<1xi32>
      %178 = vector.multi_reduction <minsi>, %177, %cst_108 [1, 2] : vector<1x1x256xi32> to vector<1xi32>
      %179 = vector.shape_cast %178 : vector<1xi32> to vector<1x1x1xi32>
      %180 = vector.extract %179[0, 0, 0] : i32 from vector<1x1x1xi32>
      %c0_109 = arith.constant 0 : index
      %181 = memref.load %arg8[%c0_109] : memref<1xi32, #tpu.memory_space<smem>>
      memref.store %180, %arg8[%c0_109] : memref<1xi32, #tpu.memory_space<smem>>
    } else {
    }
    %c0_58 = arith.constant 0 : index
    %95 = memref.load %arg8[%c0_58] : memref<1xi32, #tpu.memory_space<smem>>
    %c8 = arith.constant 8 : index
    %96 = memref.load %arg5[%c8] : memref<16xi32, #tpu.memory_space<smem>>
    memref.store %95, %arg5[%c8] : memref<16xi32, #tpu.memory_space<smem>>
    %c0_59 = arith.constant 0 : index
    %97 = memref.load %arg8[%c0_59] : memref<1xi32, #tpu.memory_space<smem>>
    %c0_i32_60 = arith.constant 0 : i32
    %98 = arith.cmpi ne, %97, %c0_i32_60 : i32
    %99 = arith.extui %98 : i1 to i32
    %c0_i32_61 = arith.constant 0 : i32
    %100 = arith.cmpi ne, %99, %c0_i32_61 : i32
    scf.if %100 {
      %139 = arith.index_cast %97 : i32 to index
      %c0_87 = arith.constant 0 : index
      %c0_88 = arith.constant 0 : index
      %140 = vector.load %arg1[%139, %c0_87, %c0_88] : memref<256x1x512xf32, #tpu.memory_space<vmem>>, vector<1x1x512xf32>
      %141 = vector.shape_cast %140 : vector<1x1x512xf32> to vector<1x512xf32>
      %c0_89 = arith.constant 0 : index
      %c0_90 = arith.constant 0 : index
      %142 = vector.load %arg6[%c0_89, %c0_90] : memref<1x128xf32, #tpu.memory_space<vmem>>, vector<1x128xf32>
      %c0_91 = arith.constant 0 : index
      %c0_92 = arith.constant 0 : index
      %143 = vector.load %arg2[%c0_91, %c0_92] : memref<128x512xf32, #tpu.memory_space<vmem>>, vector<128x512xf32>
      %cst_93 = arith.constant dense<0.000000e+00> : vector<1x512xf32>
      %144 = tpu.matmul %142, %143, %cst_93 {dimension_numbers = #tpu.dot_dimension_numbers<[1], [0], [0], [1], [0, 0, 1, 1], [], []>} : vector<1x128xf32>, vector<128x512xf32>, vector<1x512xf32> -> vector<1x512xf32>
      %145 = arith.addf %141, %144 : vector<1x512xf32>
      %146 = vector.extract_strided_slice %145 {offsets = [0, 0], sizes = [1, 384], strides = [1, 1]} : vector<1x512xf32> to vector<1x384xf32>
      %147 = arith.negf %146 : vector<1x384xf32>
      %148 = math.exp %147 : vector<1x384xf32>
      %cst_94 = arith.constant 1.000000e+00 : f32
      %149 = vector.broadcast %cst_94 : f32 to vector<1x384xf32>
      %150 = arith.addf %149, %148 : vector<1x384xf32>
      %151 = arith.divf %149, %150 : vector<1x384xf32>
      %152 = vector.extract_strided_slice %145 {offsets = [0, 384], sizes = [1, 128], strides = [1, 1]} : vector<1x512xf32> to vector<1x128xf32>
      %153 = math.tanh %152 : vector<1x128xf32>
      %154 = vector.extract_strided_slice %151 {offsets = [0, 0], sizes = [1, 128], strides = [1, 1]} : vector<1x384xf32> to vector<1x128xf32>
      %155 = vector.extract_strided_slice %151 {offsets = [0, 128], sizes = [1, 128], strides = [1, 1]} : vector<1x384xf32> to vector<1x128xf32>
      %156 = vector.extract_strided_slice %151 {offsets = [0, 256], sizes = [1, 128], strides = [1, 1]} : vector<1x384xf32> to vector<1x128xf32>
      %c0_95 = arith.constant 0 : index
      %c0_96 = arith.constant 0 : index
      %157 = vector.load %arg7[%c0_95, %c0_96] : memref<1x128xf32, #tpu.memory_space<vmem>>, vector<1x128xf32>
      %158 = arith.mulf %155, %157 : vector<1x128xf32>
      %159 = arith.mulf %154, %153 : vector<1x128xf32>
      %160 = arith.addf %158, %159 : vector<1x128xf32>
      %161 = math.tanh %160 : vector<1x128xf32>
      %162 = arith.mulf %156, %161 : vector<1x128xf32>
      %c0_97 = arith.constant 0 : index
      %c0_98 = arith.constant 0 : index
      %163 = vector.load %arg7[%c0_97, %c0_98] : memref<1x128xf32, #tpu.memory_space<vmem>>, vector<1x128xf32>
      tpu.vector_store %arg7[%c0_97, %c0_98], %160 {strides = array<i32>} : memref<1x128xf32, #tpu.memory_space<vmem>>, vector<1x128xf32>,
      %c0_99 = arith.constant 0 : index
      %c0_100 = arith.constant 0 : index
      %164 = vector.load %arg6[%c0_99, %c0_100] : memref<1x128xf32, #tpu.memory_space<vmem>>, vector<1x128xf32>
      tpu.vector_store %arg6[%c0_99, %c0_100], %162 {strides = array<i32>} : memref<1x128xf32, #tpu.memory_space<vmem>>, vector<1x128xf32>,
      %c0_101 = arith.constant 0 : index
      %c0_102 = arith.constant 0 : index
      %165 = vector.load %arg3[%c0_101, %c0_102] : memref<128x256xf32, #tpu.memory_space<vmem>>, vector<128x256xf32>
      %cst_103 = arith.constant dense<0.000000e+00> : vector<1x256xf32>
      %166 = tpu.matmul %162, %165, %cst_103 {dimension_numbers = #tpu.dot_dimension_numbers<[1], [0], [0], [1], [0, 0, 1, 1], [], []>} : vector<1x128xf32>, vector<128x256xf32>, vector<1x256xf32> -> vector<1x256xf32>
      %c0_104 = arith.constant 0 : index
      %c0_105 = arith.constant 0 : index
      %167 = vector.load %arg4[%c0_104, %c0_105] : memref<1x256xf32, #tpu.memory_space<vmem>>, vector<1x256xf32>
      %168 = arith.addf %166, %167 : vector<1x256xf32>
      %169 = vector.shape_cast %168 : vector<1x256xf32> to vector<1x1x256xf32>
      %cst_106 = arith.constant dense<0xFF800000> : vector<1xf32>
      %170 = vector.multi_reduction <maximumf>, %169, %cst_106 [1, 2] : vector<1x1x256xf32> to vector<1xf32>
      %171 = vector.shape_cast %170 : vector<1xf32> to vector<1x1x1xf32>
      %172 = vector.extract %171[0, 0, 0] : f32 from vector<1x1x1xf32>
      %173 = vector.broadcast %172 : f32 to vector<1x256xf32>
      %174 = arith.cmpf oeq, %168, %173 : vector<1x256xf32>
      %c256_i32_107 = arith.constant 256 : i32
      %175 = vector.broadcast %c256_i32_107 : i32 to vector<1x256xi32>
      %176 = arith.select %174, %8, %175 : vector<1x256xi1>, vector<1x256xi32>
      %177 = vector.shape_cast %176 : vector<1x256xi32> to vector<1x1x256xi32>
      %cst_108 = arith.constant dense<2147483647> : vector<1xi32>
      %178 = vector.multi_reduction <minsi>, %177, %cst_108 [1, 2] : vector<1x1x256xi32> to vector<1xi32>
      %179 = vector.shape_cast %178 : vector<1xi32> to vector<1x1x1xi32>
      %180 = vector.extract %179[0, 0, 0] : i32 from vector<1x1x1xi32>
      %c0_109 = arith.constant 0 : index
      %181 = memref.load %arg8[%c0_109] : memref<1xi32, #tpu.memory_space<smem>>
      memref.store %180, %arg8[%c0_109] : memref<1xi32, #tpu.memory_space<smem>>
    } else {
    }
    %c0_62 = arith.constant 0 : index
    %101 = memref.load %arg8[%c0_62] : memref<1xi32, #tpu.memory_space<smem>>
    %c9 = arith.constant 9 : index
    %102 = memref.load %arg5[%c9] : memref<16xi32, #tpu.memory_space<smem>>
    memref.store %101, %arg5[%c9] : memref<16xi32, #tpu.memory_space<smem>>
    %c0_63 = arith.constant 0 : index
    %103 = memref.load %arg8[%c0_63] : memref<1xi32, #tpu.memory_space<smem>>
    %c0_i32_64 = arith.constant 0 : i32
    %104 = arith.cmpi ne, %103, %c0_i32_64 : i32
    %105 = arith.extui %104 : i1 to i32
    %c0_i32_65 = arith.constant 0 : i32
    %106 = arith.cmpi ne, %105, %c0_i32_65 : i32
    scf.if %106 {
      %139 = arith.index_cast %103 : i32 to index
      %c0_87 = arith.constant 0 : index
      %c0_88 = arith.constant 0 : index
      %140 = vector.load %arg1[%139, %c0_87, %c0_88] : memref<256x1x512xf32, #tpu.memory_space<vmem>>, vector<1x1x512xf32>
      %141 = vector.shape_cast %140 : vector<1x1x512xf32> to vector<1x512xf32>
      %c0_89 = arith.constant 0 : index
      %c0_90 = arith.constant 0 : index
      %142 = vector.load %arg6[%c0_89, %c0_90] : memref<1x128xf32, #tpu.memory_space<vmem>>, vector<1x128xf32>
      %c0_91 = arith.constant 0 : index
      %c0_92 = arith.constant 0 : index
      %143 = vector.load %arg2[%c0_91, %c0_92] : memref<128x512xf32, #tpu.memory_space<vmem>>, vector<128x512xf32>
      %cst_93 = arith.constant dense<0.000000e+00> : vector<1x512xf32>
      %144 = tpu.matmul %142, %143, %cst_93 {dimension_numbers = #tpu.dot_dimension_numbers<[1], [0], [0], [1], [0, 0, 1, 1], [], []>} : vector<1x128xf32>, vector<128x512xf32>, vector<1x512xf32> -> vector<1x512xf32>
      %145 = arith.addf %141, %144 : vector<1x512xf32>
      %146 = vector.extract_strided_slice %145 {offsets = [0, 0], sizes = [1, 384], strides = [1, 1]} : vector<1x512xf32> to vector<1x384xf32>
      %147 = arith.negf %146 : vector<1x384xf32>
      %148 = math.exp %147 : vector<1x384xf32>
      %cst_94 = arith.constant 1.000000e+00 : f32
      %149 = vector.broadcast %cst_94 : f32 to vector<1x384xf32>
      %150 = arith.addf %149, %148 : vector<1x384xf32>
      %151 = arith.divf %149, %150 : vector<1x384xf32>
      %152 = vector.extract_strided_slice %145 {offsets = [0, 384], sizes = [1, 128], strides = [1, 1]} : vector<1x512xf32> to vector<1x128xf32>
      %153 = math.tanh %152 : vector<1x128xf32>
      %154 = vector.extract_strided_slice %151 {offsets = [0, 0], sizes = [1, 128], strides = [1, 1]} : vector<1x384xf32> to vector<1x128xf32>
      %155 = vector.extract_strided_slice %151 {offsets = [0, 128], sizes = [1, 128], strides = [1, 1]} : vector<1x384xf32> to vector<1x128xf32>
      %156 = vector.extract_strided_slice %151 {offsets = [0, 256], sizes = [1, 128], strides = [1, 1]} : vector<1x384xf32> to vector<1x128xf32>
      %c0_95 = arith.constant 0 : index
      %c0_96 = arith.constant 0 : index
      %157 = vector.load %arg7[%c0_95, %c0_96] : memref<1x128xf32, #tpu.memory_space<vmem>>, vector<1x128xf32>
      %158 = arith.mulf %155, %157 : vector<1x128xf32>
      %159 = arith.mulf %154, %153 : vector<1x128xf32>
      %160 = arith.addf %158, %159 : vector<1x128xf32>
      %161 = math.tanh %160 : vector<1x128xf32>
      %162 = arith.mulf %156, %161 : vector<1x128xf32>
      %c0_97 = arith.constant 0 : index
      %c0_98 = arith.constant 0 : index
      %163 = vector.load %arg7[%c0_97, %c0_98] : memref<1x128xf32, #tpu.memory_space<vmem>>, vector<1x128xf32>
      tpu.vector_store %arg7[%c0_97, %c0_98], %160 {strides = array<i32>} : memref<1x128xf32, #tpu.memory_space<vmem>>, vector<1x128xf32>,
      %c0_99 = arith.constant 0 : index
      %c0_100 = arith.constant 0 : index
      %164 = vector.load %arg6[%c0_99, %c0_100] : memref<1x128xf32, #tpu.memory_space<vmem>>, vector<1x128xf32>
      tpu.vector_store %arg6[%c0_99, %c0_100], %162 {strides = array<i32>} : memref<1x128xf32, #tpu.memory_space<vmem>>, vector<1x128xf32>,
      %c0_101 = arith.constant 0 : index
      %c0_102 = arith.constant 0 : index
      %165 = vector.load %arg3[%c0_101, %c0_102] : memref<128x256xf32, #tpu.memory_space<vmem>>, vector<128x256xf32>
      %cst_103 = arith.constant dense<0.000000e+00> : vector<1x256xf32>
      %166 = tpu.matmul %162, %165, %cst_103 {dimension_numbers = #tpu.dot_dimension_numbers<[1], [0], [0], [1], [0, 0, 1, 1], [], []>} : vector<1x128xf32>, vector<128x256xf32>, vector<1x256xf32> -> vector<1x256xf32>
      %c0_104 = arith.constant 0 : index
      %c0_105 = arith.constant 0 : index
      %167 = vector.load %arg4[%c0_104, %c0_105] : memref<1x256xf32, #tpu.memory_space<vmem>>, vector<1x256xf32>
      %168 = arith.addf %166, %167 : vector<1x256xf32>
      %169 = vector.shape_cast %168 : vector<1x256xf32> to vector<1x1x256xf32>
      %cst_106 = arith.constant dense<0xFF800000> : vector<1xf32>
      %170 = vector.multi_reduction <maximumf>, %169, %cst_106 [1, 2] : vector<1x1x256xf32> to vector<1xf32>
      %171 = vector.shape_cast %170 : vector<1xf32> to vector<1x1x1xf32>
      %172 = vector.extract %171[0, 0, 0] : f32 from vector<1x1x1xf32>
      %173 = vector.broadcast %172 : f32 to vector<1x256xf32>
      %174 = arith.cmpf oeq, %168, %173 : vector<1x256xf32>
      %c256_i32_107 = arith.constant 256 : i32
      %175 = vector.broadcast %c256_i32_107 : i32 to vector<1x256xi32>
      %176 = arith.select %174, %8, %175 : vector<1x256xi1>, vector<1x256xi32>
      %177 = vector.shape_cast %176 : vector<1x256xi32> to vector<1x1x256xi32>
      %cst_108 = arith.constant dense<2147483647> : vector<1xi32>
      %178 = vector.multi_reduction <minsi>, %177, %cst_108 [1, 2] : vector<1x1x256xi32> to vector<1xi32>
      %179 = vector.shape_cast %178 : vector<1xi32> to vector<1x1x1xi32>
      %180 = vector.extract %179[0, 0, 0] : i32 from vector<1x1x1xi32>
      %c0_109 = arith.constant 0 : index
      %181 = memref.load %arg8[%c0_109] : memref<1xi32, #tpu.memory_space<smem>>
      memref.store %180, %arg8[%c0_109] : memref<1xi32, #tpu.memory_space<smem>>
    } else {
    }
    %c0_66 = arith.constant 0 : index
    %107 = memref.load %arg8[%c0_66] : memref<1xi32, #tpu.memory_space<smem>>
    %c10 = arith.constant 10 : index
    %108 = memref.load %arg5[%c10] : memref<16xi32, #tpu.memory_space<smem>>
    memref.store %107, %arg5[%c10] : memref<16xi32, #tpu.memory_space<smem>>
    %c0_67 = arith.constant 0 : index
    %109 = memref.load %arg8[%c0_67] : memref<1xi32, #tpu.memory_space<smem>>
    %c0_i32_68 = arith.constant 0 : i32
    %110 = arith.cmpi ne, %109, %c0_i32_68 : i32
    %111 = arith.extui %110 : i1 to i32
    %c0_i32_69 = arith.constant 0 : i32
    %112 = arith.cmpi ne, %111, %c0_i32_69 : i32
    scf.if %112 {
      %139 = arith.index_cast %109 : i32 to index
      %c0_87 = arith.constant 0 : index
      %c0_88 = arith.constant 0 : index
      %140 = vector.load %arg1[%139, %c0_87, %c0_88] : memref<256x1x512xf32, #tpu.memory_space<vmem>>, vector<1x1x512xf32>
      %141 = vector.shape_cast %140 : vector<1x1x512xf32> to vector<1x512xf32>
      %c0_89 = arith.constant 0 : index
      %c0_90 = arith.constant 0 : index
      %142 = vector.load %arg6[%c0_89, %c0_90] : memref<1x128xf32, #tpu.memory_space<vmem>>, vector<1x128xf32>
      %c0_91 = arith.constant 0 : index
      %c0_92 = arith.constant 0 : index
      %143 = vector.load %arg2[%c0_91, %c0_92] : memref<128x512xf32, #tpu.memory_space<vmem>>, vector<128x512xf32>
      %cst_93 = arith.constant dense<0.000000e+00> : vector<1x512xf32>
      %144 = tpu.matmul %142, %143, %cst_93 {dimension_numbers = #tpu.dot_dimension_numbers<[1], [0], [0], [1], [0, 0, 1, 1], [], []>} : vector<1x128xf32>, vector<128x512xf32>, vector<1x512xf32> -> vector<1x512xf32>
      %145 = arith.addf %141, %144 : vector<1x512xf32>
      %146 = vector.extract_strided_slice %145 {offsets = [0, 0], sizes = [1, 384], strides = [1, 1]} : vector<1x512xf32> to vector<1x384xf32>
      %147 = arith.negf %146 : vector<1x384xf32>
      %148 = math.exp %147 : vector<1x384xf32>
      %cst_94 = arith.constant 1.000000e+00 : f32
      %149 = vector.broadcast %cst_94 : f32 to vector<1x384xf32>
      %150 = arith.addf %149, %148 : vector<1x384xf32>
      %151 = arith.divf %149, %150 : vector<1x384xf32>
      %152 = vector.extract_strided_slice %145 {offsets = [0, 384], sizes = [1, 128], strides = [1, 1]} : vector<1x512xf32> to vector<1x128xf32>
      %153 = math.tanh %152 : vector<1x128xf32>
      %154 = vector.extract_strided_slice %151 {offsets = [0, 0], sizes = [1, 128], strides = [1, 1]} : vector<1x384xf32> to vector<1x128xf32>
      %155 = vector.extract_strided_slice %151 {offsets = [0, 128], sizes = [1, 128], strides = [1, 1]} : vector<1x384xf32> to vector<1x128xf32>
      %156 = vector.extract_strided_slice %151 {offsets = [0, 256], sizes = [1, 128], strides = [1, 1]} : vector<1x384xf32> to vector<1x128xf32>
      %c0_95 = arith.constant 0 : index
      %c0_96 = arith.constant 0 : index
      %157 = vector.load %arg7[%c0_95, %c0_96] : memref<1x128xf32, #tpu.memory_space<vmem>>, vector<1x128xf32>
      %158 = arith.mulf %155, %157 : vector<1x128xf32>
      %159 = arith.mulf %154, %153 : vector<1x128xf32>
      %160 = arith.addf %158, %159 : vector<1x128xf32>
      %161 = math.tanh %160 : vector<1x128xf32>
      %162 = arith.mulf %156, %161 : vector<1x128xf32>
      %c0_97 = arith.constant 0 : index
      %c0_98 = arith.constant 0 : index
      %163 = vector.load %arg7[%c0_97, %c0_98] : memref<1x128xf32, #tpu.memory_space<vmem>>, vector<1x128xf32>
      tpu.vector_store %arg7[%c0_97, %c0_98], %160 {strides = array<i32>} : memref<1x128xf32, #tpu.memory_space<vmem>>, vector<1x128xf32>,
      %c0_99 = arith.constant 0 : index
      %c0_100 = arith.constant 0 : index
      %164 = vector.load %arg6[%c0_99, %c0_100] : memref<1x128xf32, #tpu.memory_space<vmem>>, vector<1x128xf32>
      tpu.vector_store %arg6[%c0_99, %c0_100], %162 {strides = array<i32>} : memref<1x128xf32, #tpu.memory_space<vmem>>, vector<1x128xf32>,
      %c0_101 = arith.constant 0 : index
      %c0_102 = arith.constant 0 : index
      %165 = vector.load %arg3[%c0_101, %c0_102] : memref<128x256xf32, #tpu.memory_space<vmem>>, vector<128x256xf32>
      %cst_103 = arith.constant dense<0.000000e+00> : vector<1x256xf32>
      %166 = tpu.matmul %162, %165, %cst_103 {dimension_numbers = #tpu.dot_dimension_numbers<[1], [0], [0], [1], [0, 0, 1, 1], [], []>} : vector<1x128xf32>, vector<128x256xf32>, vector<1x256xf32> -> vector<1x256xf32>
      %c0_104 = arith.constant 0 : index
      %c0_105 = arith.constant 0 : index
      %167 = vector.load %arg4[%c0_104, %c0_105] : memref<1x256xf32, #tpu.memory_space<vmem>>, vector<1x256xf32>
      %168 = arith.addf %166, %167 : vector<1x256xf32>
      %169 = vector.shape_cast %168 : vector<1x256xf32> to vector<1x1x256xf32>
      %cst_106 = arith.constant dense<0xFF800000> : vector<1xf32>
      %170 = vector.multi_reduction <maximumf>, %169, %cst_106 [1, 2] : vector<1x1x256xf32> to vector<1xf32>
      %171 = vector.shape_cast %170 : vector<1xf32> to vector<1x1x1xf32>
      %172 = vector.extract %171[0, 0, 0] : f32 from vector<1x1x1xf32>
      %173 = vector.broadcast %172 : f32 to vector<1x256xf32>
      %174 = arith.cmpf oeq, %168, %173 : vector<1x256xf32>
      %c256_i32_107 = arith.constant 256 : i32
      %175 = vector.broadcast %c256_i32_107 : i32 to vector<1x256xi32>
      %176 = arith.select %174, %8, %175 : vector<1x256xi1>, vector<1x256xi32>
      %177 = vector.shape_cast %176 : vector<1x256xi32> to vector<1x1x256xi32>
      %cst_108 = arith.constant dense<2147483647> : vector<1xi32>
      %178 = vector.multi_reduction <minsi>, %177, %cst_108 [1, 2] : vector<1x1x256xi32> to vector<1xi32>
      %179 = vector.shape_cast %178 : vector<1xi32> to vector<1x1x1xi32>
      %180 = vector.extract %179[0, 0, 0] : i32 from vector<1x1x1xi32>
      %c0_109 = arith.constant 0 : index
      %181 = memref.load %arg8[%c0_109] : memref<1xi32, #tpu.memory_space<smem>>
      memref.store %180, %arg8[%c0_109] : memref<1xi32, #tpu.memory_space<smem>>
    } else {
    }
    %c0_70 = arith.constant 0 : index
    %113 = memref.load %arg8[%c0_70] : memref<1xi32, #tpu.memory_space<smem>>
    %c11 = arith.constant 11 : index
    %114 = memref.load %arg5[%c11] : memref<16xi32, #tpu.memory_space<smem>>
    memref.store %113, %arg5[%c11] : memref<16xi32, #tpu.memory_space<smem>>
    %c0_71 = arith.constant 0 : index
    %115 = memref.load %arg8[%c0_71] : memref<1xi32, #tpu.memory_space<smem>>
    %c0_i32_72 = arith.constant 0 : i32
    %116 = arith.cmpi ne, %115, %c0_i32_72 : i32
    %117 = arith.extui %116 : i1 to i32
    %c0_i32_73 = arith.constant 0 : i32
    %118 = arith.cmpi ne, %117, %c0_i32_73 : i32
    scf.if %118 {
      %139 = arith.index_cast %115 : i32 to index
      %c0_87 = arith.constant 0 : index
      %c0_88 = arith.constant 0 : index
      %140 = vector.load %arg1[%139, %c0_87, %c0_88] : memref<256x1x512xf32, #tpu.memory_space<vmem>>, vector<1x1x512xf32>
      %141 = vector.shape_cast %140 : vector<1x1x512xf32> to vector<1x512xf32>
      %c0_89 = arith.constant 0 : index
      %c0_90 = arith.constant 0 : index
      %142 = vector.load %arg6[%c0_89, %c0_90] : memref<1x128xf32, #tpu.memory_space<vmem>>, vector<1x128xf32>
      %c0_91 = arith.constant 0 : index
      %c0_92 = arith.constant 0 : index
      %143 = vector.load %arg2[%c0_91, %c0_92] : memref<128x512xf32, #tpu.memory_space<vmem>>, vector<128x512xf32>
      %cst_93 = arith.constant dense<0.000000e+00> : vector<1x512xf32>
      %144 = tpu.matmul %142, %143, %cst_93 {dimension_numbers = #tpu.dot_dimension_numbers<[1], [0], [0], [1], [0, 0, 1, 1], [], []>} : vector<1x128xf32>, vector<128x512xf32>, vector<1x512xf32> -> vector<1x512xf32>
      %145 = arith.addf %141, %144 : vector<1x512xf32>
      %146 = vector.extract_strided_slice %145 {offsets = [0, 0], sizes = [1, 384], strides = [1, 1]} : vector<1x512xf32> to vector<1x384xf32>
      %147 = arith.negf %146 : vector<1x384xf32>
      %148 = math.exp %147 : vector<1x384xf32>
      %cst_94 = arith.constant 1.000000e+00 : f32
      %149 = vector.broadcast %cst_94 : f32 to vector<1x384xf32>
      %150 = arith.addf %149, %148 : vector<1x384xf32>
      %151 = arith.divf %149, %150 : vector<1x384xf32>
      %152 = vector.extract_strided_slice %145 {offsets = [0, 384], sizes = [1, 128], strides = [1, 1]} : vector<1x512xf32> to vector<1x128xf32>
      %153 = math.tanh %152 : vector<1x128xf32>
      %154 = vector.extract_strided_slice %151 {offsets = [0, 0], sizes = [1, 128], strides = [1, 1]} : vector<1x384xf32> to vector<1x128xf32>
      %155 = vector.extract_strided_slice %151 {offsets = [0, 128], sizes = [1, 128], strides = [1, 1]} : vector<1x384xf32> to vector<1x128xf32>
      %156 = vector.extract_strided_slice %151 {offsets = [0, 256], sizes = [1, 128], strides = [1, 1]} : vector<1x384xf32> to vector<1x128xf32>
      %c0_95 = arith.constant 0 : index
      %c0_96 = arith.constant 0 : index
      %157 = vector.load %arg7[%c0_95, %c0_96] : memref<1x128xf32, #tpu.memory_space<vmem>>, vector<1x128xf32>
      %158 = arith.mulf %155, %157 : vector<1x128xf32>
      %159 = arith.mulf %154, %153 : vector<1x128xf32>
      %160 = arith.addf %158, %159 : vector<1x128xf32>
      %161 = math.tanh %160 : vector<1x128xf32>
      %162 = arith.mulf %156, %161 : vector<1x128xf32>
      %c0_97 = arith.constant 0 : index
      %c0_98 = arith.constant 0 : index
      %163 = vector.load %arg7[%c0_97, %c0_98] : memref<1x128xf32, #tpu.memory_space<vmem>>, vector<1x128xf32>
      tpu.vector_store %arg7[%c0_97, %c0_98], %160 {strides = array<i32>} : memref<1x128xf32, #tpu.memory_space<vmem>>, vector<1x128xf32>,
      %c0_99 = arith.constant 0 : index
      %c0_100 = arith.constant 0 : index
      %164 = vector.load %arg6[%c0_99, %c0_100] : memref<1x128xf32, #tpu.memory_space<vmem>>, vector<1x128xf32>
      tpu.vector_store %arg6[%c0_99, %c0_100], %162 {strides = array<i32>} : memref<1x128xf32, #tpu.memory_space<vmem>>, vector<1x128xf32>,
      %c0_101 = arith.constant 0 : index
      %c0_102 = arith.constant 0 : index
      %165 = vector.load %arg3[%c0_101, %c0_102] : memref<128x256xf32, #tpu.memory_space<vmem>>, vector<128x256xf32>
      %cst_103 = arith.constant dense<0.000000e+00> : vector<1x256xf32>
      %166 = tpu.matmul %162, %165, %cst_103 {dimension_numbers = #tpu.dot_dimension_numbers<[1], [0], [0], [1], [0, 0, 1, 1], [], []>} : vector<1x128xf32>, vector<128x256xf32>, vector<1x256xf32> -> vector<1x256xf32>
      %c0_104 = arith.constant 0 : index
      %c0_105 = arith.constant 0 : index
      %167 = vector.load %arg4[%c0_104, %c0_105] : memref<1x256xf32, #tpu.memory_space<vmem>>, vector<1x256xf32>
      %168 = arith.addf %166, %167 : vector<1x256xf32>
      %169 = vector.shape_cast %168 : vector<1x256xf32> to vector<1x1x256xf32>
      %cst_106 = arith.constant dense<0xFF800000> : vector<1xf32>
      %170 = vector.multi_reduction <maximumf>, %169, %cst_106 [1, 2] : vector<1x1x256xf32> to vector<1xf32>
      %171 = vector.shape_cast %170 : vector<1xf32> to vector<1x1x1xf32>
      %172 = vector.extract %171[0, 0, 0] : f32 from vector<1x1x1xf32>
      %173 = vector.broadcast %172 : f32 to vector<1x256xf32>
      %174 = arith.cmpf oeq, %168, %173 : vector<1x256xf32>
      %c256_i32_107 = arith.constant 256 : i32
      %175 = vector.broadcast %c256_i32_107 : i32 to vector<1x256xi32>
      %176 = arith.select %174, %8, %175 : vector<1x256xi1>, vector<1x256xi32>
      %177 = vector.shape_cast %176 : vector<1x256xi32> to vector<1x1x256xi32>
      %cst_108 = arith.constant dense<2147483647> : vector<1xi32>
      %178 = vector.multi_reduction <minsi>, %177, %cst_108 [1, 2] : vector<1x1x256xi32> to vector<1xi32>
      %179 = vector.shape_cast %178 : vector<1xi32> to vector<1x1x1xi32>
      %180 = vector.extract %179[0, 0, 0] : i32 from vector<1x1x1xi32>
      %c0_109 = arith.constant 0 : index
      %181 = memref.load %arg8[%c0_109] : memref<1xi32, #tpu.memory_space<smem>>
      memref.store %180, %arg8[%c0_109] : memref<1xi32, #tpu.memory_space<smem>>
    } else {
    }
    %c0_74 = arith.constant 0 : index
    %119 = memref.load %arg8[%c0_74] : memref<1xi32, #tpu.memory_space<smem>>
    %c12 = arith.constant 12 : index
    %120 = memref.load %arg5[%c12] : memref<16xi32, #tpu.memory_space<smem>>
    memref.store %119, %arg5[%c12] : memref<16xi32, #tpu.memory_space<smem>>
    %c0_75 = arith.constant 0 : index
    %121 = memref.load %arg8[%c0_75] : memref<1xi32, #tpu.memory_space<smem>>
    %c0_i32_76 = arith.constant 0 : i32
    %122 = arith.cmpi ne, %121, %c0_i32_76 : i32
    %123 = arith.extui %122 : i1 to i32
    %c0_i32_77 = arith.constant 0 : i32
    %124 = arith.cmpi ne, %123, %c0_i32_77 : i32
    scf.if %124 {
      %139 = arith.index_cast %121 : i32 to index
      %c0_87 = arith.constant 0 : index
      %c0_88 = arith.constant 0 : index
      %140 = vector.load %arg1[%139, %c0_87, %c0_88] : memref<256x1x512xf32, #tpu.memory_space<vmem>>, vector<1x1x512xf32>
      %141 = vector.shape_cast %140 : vector<1x1x512xf32> to vector<1x512xf32>
      %c0_89 = arith.constant 0 : index
      %c0_90 = arith.constant 0 : index
      %142 = vector.load %arg6[%c0_89, %c0_90] : memref<1x128xf32, #tpu.memory_space<vmem>>, vector<1x128xf32>
      %c0_91 = arith.constant 0 : index
      %c0_92 = arith.constant 0 : index
      %143 = vector.load %arg2[%c0_91, %c0_92] : memref<128x512xf32, #tpu.memory_space<vmem>>, vector<128x512xf32>
      %cst_93 = arith.constant dense<0.000000e+00> : vector<1x512xf32>
      %144 = tpu.matmul %142, %143, %cst_93 {dimension_numbers = #tpu.dot_dimension_numbers<[1], [0], [0], [1], [0, 0, 1, 1], [], []>} : vector<1x128xf32>, vector<128x512xf32>, vector<1x512xf32> -> vector<1x512xf32>
      %145 = arith.addf %141, %144 : vector<1x512xf32>
      %146 = vector.extract_strided_slice %145 {offsets = [0, 0], sizes = [1, 384], strides = [1, 1]} : vector<1x512xf32> to vector<1x384xf32>
      %147 = arith.negf %146 : vector<1x384xf32>
      %148 = math.exp %147 : vector<1x384xf32>
      %cst_94 = arith.constant 1.000000e+00 : f32
      %149 = vector.broadcast %cst_94 : f32 to vector<1x384xf32>
      %150 = arith.addf %149, %148 : vector<1x384xf32>
      %151 = arith.divf %149, %150 : vector<1x384xf32>
      %152 = vector.extract_strided_slice %145 {offsets = [0, 384], sizes = [1, 128], strides = [1, 1]} : vector<1x512xf32> to vector<1x128xf32>
      %153 = math.tanh %152 : vector<1x128xf32>
      %154 = vector.extract_strided_slice %151 {offsets = [0, 0], sizes = [1, 128], strides = [1, 1]} : vector<1x384xf32> to vector<1x128xf32>
      %155 = vector.extract_strided_slice %151 {offsets = [0, 128], sizes = [1, 128], strides = [1, 1]} : vector<1x384xf32> to vector<1x128xf32>
      %156 = vector.extract_strided_slice %151 {offsets = [0, 256], sizes = [1, 128], strides = [1, 1]} : vector<1x384xf32> to vector<1x128xf32>
      %c0_95 = arith.constant 0 : index
      %c0_96 = arith.constant 0 : index
      %157 = vector.load %arg7[%c0_95, %c0_96] : memref<1x128xf32, #tpu.memory_space<vmem>>, vector<1x128xf32>
      %158 = arith.mulf %155, %157 : vector<1x128xf32>
      %159 = arith.mulf %154, %153 : vector<1x128xf32>
      %160 = arith.addf %158, %159 : vector<1x128xf32>
      %161 = math.tanh %160 : vector<1x128xf32>
      %162 = arith.mulf %156, %161 : vector<1x128xf32>
      %c0_97 = arith.constant 0 : index
      %c0_98 = arith.constant 0 : index
      %163 = vector.load %arg7[%c0_97, %c0_98] : memref<1x128xf32, #tpu.memory_space<vmem>>, vector<1x128xf32>
      tpu.vector_store %arg7[%c0_97, %c0_98], %160 {strides = array<i32>} : memref<1x128xf32, #tpu.memory_space<vmem>>, vector<1x128xf32>,
      %c0_99 = arith.constant 0 : index
      %c0_100 = arith.constant 0 : index
      %164 = vector.load %arg6[%c0_99, %c0_100] : memref<1x128xf32, #tpu.memory_space<vmem>>, vector<1x128xf32>
      tpu.vector_store %arg6[%c0_99, %c0_100], %162 {strides = array<i32>} : memref<1x128xf32, #tpu.memory_space<vmem>>, vector<1x128xf32>,
      %c0_101 = arith.constant 0 : index
      %c0_102 = arith.constant 0 : index
      %165 = vector.load %arg3[%c0_101, %c0_102] : memref<128x256xf32, #tpu.memory_space<vmem>>, vector<128x256xf32>
      %cst_103 = arith.constant dense<0.000000e+00> : vector<1x256xf32>
      %166 = tpu.matmul %162, %165, %cst_103 {dimension_numbers = #tpu.dot_dimension_numbers<[1], [0], [0], [1], [0, 0, 1, 1], [], []>} : vector<1x128xf32>, vector<128x256xf32>, vector<1x256xf32> -> vector<1x256xf32>
      %c0_104 = arith.constant 0 : index
      %c0_105 = arith.constant 0 : index
      %167 = vector.load %arg4[%c0_104, %c0_105] : memref<1x256xf32, #tpu.memory_space<vmem>>, vector<1x256xf32>
      %168 = arith.addf %166, %167 : vector<1x256xf32>
      %169 = vector.shape_cast %168 : vector<1x256xf32> to vector<1x1x256xf32>
      %cst_106 = arith.constant dense<0xFF800000> : vector<1xf32>
      %170 = vector.multi_reduction <maximumf>, %169, %cst_106 [1, 2] : vector<1x1x256xf32> to vector<1xf32>
      %171 = vector.shape_cast %170 : vector<1xf32> to vector<1x1x1xf32>
      %172 = vector.extract %171[0, 0, 0] : f32 from vector<1x1x1xf32>
      %173 = vector.broadcast %172 : f32 to vector<1x256xf32>
      %174 = arith.cmpf oeq, %168, %173 : vector<1x256xf32>
      %c256_i32_107 = arith.constant 256 : i32
      %175 = vector.broadcast %c256_i32_107 : i32 to vector<1x256xi32>
      %176 = arith.select %174, %8, %175 : vector<1x256xi1>, vector<1x256xi32>
      %177 = vector.shape_cast %176 : vector<1x256xi32> to vector<1x1x256xi32>
      %cst_108 = arith.constant dense<2147483647> : vector<1xi32>
      %178 = vector.multi_reduction <minsi>, %177, %cst_108 [1, 2] : vector<1x1x256xi32> to vector<1xi32>
      %179 = vector.shape_cast %178 : vector<1xi32> to vector<1x1x1xi32>
      %180 = vector.extract %179[0, 0, 0] : i32 from vector<1x1x1xi32>
      %c0_109 = arith.constant 0 : index
      %181 = memref.load %arg8[%c0_109] : memref<1xi32, #tpu.memory_space<smem>>
      memref.store %180, %arg8[%c0_109] : memref<1xi32, #tpu.memory_space<smem>>
    } else {
    }
    %c0_78 = arith.constant 0 : index
    %125 = memref.load %arg8[%c0_78] : memref<1xi32, #tpu.memory_space<smem>>
    %c13 = arith.constant 13 : index
    %126 = memref.load %arg5[%c13] : memref<16xi32, #tpu.memory_space<smem>>
    memref.store %125, %arg5[%c13] : memref<16xi32, #tpu.memory_space<smem>>
    %c0_79 = arith.constant 0 : index
    %127 = memref.load %arg8[%c0_79] : memref<1xi32, #tpu.memory_space<smem>>
    %c0_i32_80 = arith.constant 0 : i32
    %128 = arith.cmpi ne, %127, %c0_i32_80 : i32
    %129 = arith.extui %128 : i1 to i32
    %c0_i32_81 = arith.constant 0 : i32
    %130 = arith.cmpi ne, %129, %c0_i32_81 : i32
    scf.if %130 {
      %139 = arith.index_cast %127 : i32 to index
      %c0_87 = arith.constant 0 : index
      %c0_88 = arith.constant 0 : index
      %140 = vector.load %arg1[%139, %c0_87, %c0_88] : memref<256x1x512xf32, #tpu.memory_space<vmem>>, vector<1x1x512xf32>
      %141 = vector.shape_cast %140 : vector<1x1x512xf32> to vector<1x512xf32>
      %c0_89 = arith.constant 0 : index
      %c0_90 = arith.constant 0 : index
      %142 = vector.load %arg6[%c0_89, %c0_90] : memref<1x128xf32, #tpu.memory_space<vmem>>, vector<1x128xf32>
      %c0_91 = arith.constant 0 : index
      %c0_92 = arith.constant 0 : index
      %143 = vector.load %arg2[%c0_91, %c0_92] : memref<128x512xf32, #tpu.memory_space<vmem>>, vector<128x512xf32>
      %cst_93 = arith.constant dense<0.000000e+00> : vector<1x512xf32>
      %144 = tpu.matmul %142, %143, %cst_93 {dimension_numbers = #tpu.dot_dimension_numbers<[1], [0], [0], [1], [0, 0, 1, 1], [], []>} : vector<1x128xf32>, vector<128x512xf32>, vector<1x512xf32> -> vector<1x512xf32>
      %145 = arith.addf %141, %144 : vector<1x512xf32>
      %146 = vector.extract_strided_slice %145 {offsets = [0, 0], sizes = [1, 384], strides = [1, 1]} : vector<1x512xf32> to vector<1x384xf32>
      %147 = arith.negf %146 : vector<1x384xf32>
      %148 = math.exp %147 : vector<1x384xf32>
      %cst_94 = arith.constant 1.000000e+00 : f32
      %149 = vector.broadcast %cst_94 : f32 to vector<1x384xf32>
      %150 = arith.addf %149, %148 : vector<1x384xf32>
      %151 = arith.divf %149, %150 : vector<1x384xf32>
      %152 = vector.extract_strided_slice %145 {offsets = [0, 384], sizes = [1, 128], strides = [1, 1]} : vector<1x512xf32> to vector<1x128xf32>
      %153 = math.tanh %152 : vector<1x128xf32>
      %154 = vector.extract_strided_slice %151 {offsets = [0, 0], sizes = [1, 128], strides = [1, 1]} : vector<1x384xf32> to vector<1x128xf32>
      %155 = vector.extract_strided_slice %151 {offsets = [0, 128], sizes = [1, 128], strides = [1, 1]} : vector<1x384xf32> to vector<1x128xf32>
      %156 = vector.extract_strided_slice %151 {offsets = [0, 256], sizes = [1, 128], strides = [1, 1]} : vector<1x384xf32> to vector<1x128xf32>
      %c0_95 = arith.constant 0 : index
      %c0_96 = arith.constant 0 : index
      %157 = vector.load %arg7[%c0_95, %c0_96] : memref<1x128xf32, #tpu.memory_space<vmem>>, vector<1x128xf32>
      %158 = arith.mulf %155, %157 : vector<1x128xf32>
      %159 = arith.mulf %154, %153 : vector<1x128xf32>
      %160 = arith.addf %158, %159 : vector<1x128xf32>
      %161 = math.tanh %160 : vector<1x128xf32>
      %162 = arith.mulf %156, %161 : vector<1x128xf32>
      %c0_97 = arith.constant 0 : index
      %c0_98 = arith.constant 0 : index
      %163 = vector.load %arg7[%c0_97, %c0_98] : memref<1x128xf32, #tpu.memory_space<vmem>>, vector<1x128xf32>
      tpu.vector_store %arg7[%c0_97, %c0_98], %160 {strides = array<i32>} : memref<1x128xf32, #tpu.memory_space<vmem>>, vector<1x128xf32>,
      %c0_99 = arith.constant 0 : index
      %c0_100 = arith.constant 0 : index
      %164 = vector.load %arg6[%c0_99, %c0_100] : memref<1x128xf32, #tpu.memory_space<vmem>>, vector<1x128xf32>
      tpu.vector_store %arg6[%c0_99, %c0_100], %162 {strides = array<i32>} : memref<1x128xf32, #tpu.memory_space<vmem>>, vector<1x128xf32>,
      %c0_101 = arith.constant 0 : index
      %c0_102 = arith.constant 0 : index
      %165 = vector.load %arg3[%c0_101, %c0_102] : memref<128x256xf32, #tpu.memory_space<vmem>>, vector<128x256xf32>
      %cst_103 = arith.constant dense<0.000000e+00> : vector<1x256xf32>
      %166 = tpu.matmul %162, %165, %cst_103 {dimension_numbers = #tpu.dot_dimension_numbers<[1], [0], [0], [1], [0, 0, 1, 1], [], []>} : vector<1x128xf32>, vector<128x256xf32>, vector<1x256xf32> -> vector<1x256xf32>
      %c0_104 = arith.constant 0 : index
      %c0_105 = arith.constant 0 : index
      %167 = vector.load %arg4[%c0_104, %c0_105] : memref<1x256xf32, #tpu.memory_space<vmem>>, vector<1x256xf32>
      %168 = arith.addf %166, %167 : vector<1x256xf32>
      %169 = vector.shape_cast %168 : vector<1x256xf32> to vector<1x1x256xf32>
      %cst_106 = arith.constant dense<0xFF800000> : vector<1xf32>
      %170 = vector.multi_reduction <maximumf>, %169, %cst_106 [1, 2] : vector<1x1x256xf32> to vector<1xf32>
      %171 = vector.shape_cast %170 : vector<1xf32> to vector<1x1x1xf32>
      %172 = vector.extract %171[0, 0, 0] : f32 from vector<1x1x1xf32>
      %173 = vector.broadcast %172 : f32 to vector<1x256xf32>
      %174 = arith.cmpf oeq, %168, %173 : vector<1x256xf32>
      %c256_i32_107 = arith.constant 256 : i32
      %175 = vector.broadcast %c256_i32_107 : i32 to vector<1x256xi32>
      %176 = arith.select %174, %8, %175 : vector<1x256xi1>, vector<1x256xi32>
      %177 = vector.shape_cast %176 : vector<1x256xi32> to vector<1x1x256xi32>
      %cst_108 = arith.constant dense<2147483647> : vector<1xi32>
      %178 = vector.multi_reduction <minsi>, %177, %cst_108 [1, 2] : vector<1x1x256xi32> to vector<1xi32>
      %179 = vector.shape_cast %178 : vector<1xi32> to vector<1x1x1xi32>
      %180 = vector.extract %179[0, 0, 0] : i32 from vector<1x1x1xi32>
      %c0_109 = arith.constant 0 : index
      %181 = memref.load %arg8[%c0_109] : memref<1xi32, #tpu.memory_space<smem>>
      memref.store %180, %arg8[%c0_109] : memref<1xi32, #tpu.memory_space<smem>>
    } else {
    }
    %c0_82 = arith.constant 0 : index
    %131 = memref.load %arg8[%c0_82] : memref<1xi32, #tpu.memory_space<smem>>
    %c14 = arith.constant 14 : index
    %132 = memref.load %arg5[%c14] : memref<16xi32, #tpu.memory_space<smem>>
    memref.store %131, %arg5[%c14] : memref<16xi32, #tpu.memory_space<smem>>
    %c0_83 = arith.constant 0 : index
    %133 = memref.load %arg8[%c0_83] : memref<1xi32, #tpu.memory_space<smem>>
    %c0_i32_84 = arith.constant 0 : i32
    %134 = arith.cmpi ne, %133, %c0_i32_84 : i32
    %135 = arith.extui %134 : i1 to i32
    %c0_i32_85 = arith.constant 0 : i32
    %136 = arith.cmpi ne, %135, %c0_i32_85 : i32
    scf.if %136 {
      %139 = arith.index_cast %133 : i32 to index
      %c0_87 = arith.constant 0 : index
      %c0_88 = arith.constant 0 : index
      %140 = vector.load %arg1[%139, %c0_87, %c0_88] : memref<256x1x512xf32, #tpu.memory_space<vmem>>, vector<1x1x512xf32>
      %141 = vector.shape_cast %140 : vector<1x1x512xf32> to vector<1x512xf32>
      %c0_89 = arith.constant 0 : index
      %c0_90 = arith.constant 0 : index
      %142 = vector.load %arg6[%c0_89, %c0_90] : memref<1x128xf32, #tpu.memory_space<vmem>>, vector<1x128xf32>
      %c0_91 = arith.constant 0 : index
      %c0_92 = arith.constant 0 : index
      %143 = vector.load %arg2[%c0_91, %c0_92] : memref<128x512xf32, #tpu.memory_space<vmem>>, vector<128x512xf32>
      %cst_93 = arith.constant dense<0.000000e+00> : vector<1x512xf32>
      %144 = tpu.matmul %142, %143, %cst_93 {dimension_numbers = #tpu.dot_dimension_numbers<[1], [0], [0], [1], [0, 0, 1, 1], [], []>} : vector<1x128xf32>, vector<128x512xf32>, vector<1x512xf32> -> vector<1x512xf32>
      %145 = arith.addf %141, %144 : vector<1x512xf32>
      %146 = vector.extract_strided_slice %145 {offsets = [0, 0], sizes = [1, 384], strides = [1, 1]} : vector<1x512xf32> to vector<1x384xf32>
      %147 = arith.negf %146 : vector<1x384xf32>
      %148 = math.exp %147 : vector<1x384xf32>
      %cst_94 = arith.constant 1.000000e+00 : f32
      %149 = vector.broadcast %cst_94 : f32 to vector<1x384xf32>
      %150 = arith.addf %149, %148 : vector<1x384xf32>
      %151 = arith.divf %149, %150 : vector<1x384xf32>
      %152 = vector.extract_strided_slice %145 {offsets = [0, 384], sizes = [1, 128], strides = [1, 1]} : vector<1x512xf32> to vector<1x128xf32>
      %153 = math.tanh %152 : vector<1x128xf32>
      %154 = vector.extract_strided_slice %151 {offsets = [0, 0], sizes = [1, 128], strides = [1, 1]} : vector<1x384xf32> to vector<1x128xf32>
      %155 = vector.extract_strided_slice %151 {offsets = [0, 128], sizes = [1, 128], strides = [1, 1]} : vector<1x384xf32> to vector<1x128xf32>
      %156 = vector.extract_strided_slice %151 {offsets = [0, 256], sizes = [1, 128], strides = [1, 1]} : vector<1x384xf32> to vector<1x128xf32>
      %c0_95 = arith.constant 0 : index
      %c0_96 = arith.constant 0 : index
      %157 = vector.load %arg7[%c0_95, %c0_96] : memref<1x128xf32, #tpu.memory_space<vmem>>, vector<1x128xf32>
      %158 = arith.mulf %155, %157 : vector<1x128xf32>
      %159 = arith.mulf %154, %153 : vector<1x128xf32>
      %160 = arith.addf %158, %159 : vector<1x128xf32>
      %161 = math.tanh %160 : vector<1x128xf32>
      %162 = arith.mulf %156, %161 : vector<1x128xf32>
      %c0_97 = arith.constant 0 : index
      %c0_98 = arith.constant 0 : index
      %163 = vector.load %arg7[%c0_97, %c0_98] : memref<1x128xf32, #tpu.memory_space<vmem>>, vector<1x128xf32>
      tpu.vector_store %arg7[%c0_97, %c0_98], %160 {strides = array<i32>} : memref<1x128xf32, #tpu.memory_space<vmem>>, vector<1x128xf32>,
      %c0_99 = arith.constant 0 : index
      %c0_100 = arith.constant 0 : index
      %164 = vector.load %arg6[%c0_99, %c0_100] : memref<1x128xf32, #tpu.memory_space<vmem>>, vector<1x128xf32>
      tpu.vector_store %arg6[%c0_99, %c0_100], %162 {strides = array<i32>} : memref<1x128xf32, #tpu.memory_space<vmem>>, vector<1x128xf32>,
      %c0_101 = arith.constant 0 : index
      %c0_102 = arith.constant 0 : index
      %165 = vector.load %arg3[%c0_101, %c0_102] : memref<128x256xf32, #tpu.memory_space<vmem>>, vector<128x256xf32>
      %cst_103 = arith.constant dense<0.000000e+00> : vector<1x256xf32>
      %166 = tpu.matmul %162, %165, %cst_103 {dimension_numbers = #tpu.dot_dimension_numbers<[1], [0], [0], [1], [0, 0, 1, 1], [], []>} : vector<1x128xf32>, vector<128x256xf32>, vector<1x256xf32> -> vector<1x256xf32>
      %c0_104 = arith.constant 0 : index
      %c0_105 = arith.constant 0 : index
      %167 = vector.load %arg4[%c0_104, %c0_105] : memref<1x256xf32, #tpu.memory_space<vmem>>, vector<1x256xf32>
      %168 = arith.addf %166, %167 : vector<1x256xf32>
      %169 = vector.shape_cast %168 : vector<1x256xf32> to vector<1x1x256xf32>
      %cst_106 = arith.constant dense<0xFF800000> : vector<1xf32>
      %170 = vector.multi_reduction <maximumf>, %169, %cst_106 [1, 2] : vector<1x1x256xf32> to vector<1xf32>
      %171 = vector.shape_cast %170 : vector<1xf32> to vector<1x1x1xf32>
      %172 = vector.extract %171[0, 0, 0] : f32 from vector<1x1x1xf32>
      %173 = vector.broadcast %172 : f32 to vector<1x256xf32>
      %174 = arith.cmpf oeq, %168, %173 : vector<1x256xf32>
      %c256_i32_107 = arith.constant 256 : i32
      %175 = vector.broadcast %c256_i32_107 : i32 to vector<1x256xi32>
      %176 = arith.select %174, %8, %175 : vector<1x256xi1>, vector<1x256xi32>
      %177 = vector.shape_cast %176 : vector<1x256xi32> to vector<1x1x256xi32>
      %cst_108 = arith.constant dense<2147483647> : vector<1xi32>
      %178 = vector.multi_reduction <minsi>, %177, %cst_108 [1, 2] : vector<1x1x256xi32> to vector<1xi32>
      %179 = vector.shape_cast %178 : vector<1xi32> to vector<1x1x1xi32>
      %180 = vector.extract %179[0, 0, 0] : i32 from vector<1x1x1xi32>
      %c0_109 = arith.constant 0 : index
      %181 = memref.load %arg8[%c0_109] : memref<1xi32, #tpu.memory_space<smem>>
      memref.store %180, %arg8[%c0_109] : memref<1xi32, #tpu.memory_space<smem>>
    } else {
    }
    %c0_86 = arith.constant 0 : index
    %137 = memref.load %arg8[%c0_86] : memref<1xi32, #tpu.memory_space<smem>>
    %c15 = arith.constant 15 : index
    %138 = memref.load %arg5[%c15] : memref<16xi32, #tpu.memory_space<smem>>
    memref.store %137, %arg5[%c15] : memref<16xi32, #tpu.memory_space<smem>>
    return
  }
}

</mosaic_0001>

<llo_original>
// kernel: tpu_custom_call.1
$region0: #{tpu_custom_call.1}
  #allocation0 [shape = 'u32[]', space=smem, size = 0x4, offset = 0x4, fixed_abs, tag = 'smem constant byte address 0x4 - core index']
  #allocation1 [shape = 'u32[144,128]{1,0:T(1,128)}', space=vmem, size = 0x12000, scoped, tag = 'internal scratch']
  #allocation2 [shape = 'f32[1,128]{1,0:T(1,128)}', space=vmem, size = 0x200, scoped, tag = 'scratch operand']
  #allocation3 [shape = 'f32[1,128]{1,0:T(1,128)}', space=vmem, size = 0x200, scoped, tag = 'scratch operand']
  #allocation4 [shape = 's32[1]{0:T(128)}', space=smem, size = 0x200, scoped, tag = 'scratch operand']
  #allocation5 [shape = 's32[1]{0:T(128)S(6)}', space=smem, size = 0x200, scoped, tag = 'scoped memory for tpu_custom_call.1']
  %s0 = inlined_call_operand.<no memory space> [shape: s32[1], index: 0, kind: input, shape index: {}]
  %s1 = inlined_call_operand.hbm [shape: f32[256,1,512], index: 1, kind: input, shape index: {}]
  %s2 = inlined_call_operand.hbm [shape: f32[128,512], index: 2, kind: input, shape index: {}]
  %s3 = inlined_call_operand.hbm [shape: f32[128,256], index: 3, kind: input, shape index: {}]
  %s4 = inlined_call_operand.vmem [shape: f32[1,256], index: 4, kind: input, shape index: {}]
  %s5 = inlined_call_operand.hbm [shape: s32[16], index: 5, kind: output, shape index: {}]
  %s6 = sld [smem:[#allocation0]]
  $region98: #{tpu_custom_call.1} parent=0
    _
  %s8 = ssub.s32 1, %s6
  %s9 = scalar_select 0, %s8, %s6
  %10 = sst [smem:[#allocation5]] %s0
  $region1: #{tpu_custom_call.1} parent=0
    #allocation6 [shape = 'u8[524288]{0}', space=vmem, size = 0x80000, scoped, tag = 'input window, operand 1, single buffered']
    #allocation7 [shape = 's32[1]{0}', space=sflag, size = 0x4, scoped, tag = 'scoped memory for tpu_custom_call.1']
    #allocation8 [shape = 's32[1]{0}', space=sflag, size = 0x4, scoped, tag = 'scoped memory for tpu_custom_call.1']
    #allocation9 [shape = 'u8[262144]{0}', space=vmem, size = 0x40000, scoped, tag = 'input window, operand 2, single buffered']
    #allocation10 [shape = 's32[1]{0}', space=sflag, size = 0x4, scoped, tag = 'scoped memory for tpu_custom_call.1']
    #allocation11 [shape = 'u8[131072]{0}', space=vmem, size = 0x20000, scoped, tag = 'input window, operand 3, single buffered']
    #allocation12 [shape = 'u8[512]{0}', space=smem, size = 0x200, scoped, tag = 'output window, operand 0, single buffered']
    %11 = vsyncpa [#allocation7], 0
    %12 = vsyncpa [#allocation10], 0
    %13 = vsyncpa [#allocation8], 0
    // Predicated region
    $region2: #{tpu_custom_call.1} parent=1 // pred_check
      _
    $region3: #{tpu_custom_call.1} parent=1 // pred_check_branch
      %15 = sbr.rel (0) target = $region5
    $region4: #{tpu_custom_call.1} parent=1 // pred_region
      _
    $region5: #{tpu_custom_call.1} parent=1 // pred_fallthru
      _
    // Predicated region
    $region6: #{tpu_custom_call.1} parent=1 // pred_check
      _
    $region7: #{tpu_custom_call.1} parent=1 // pred_check_branch
      %17 = sbr.rel (0) target = $region9
    $region8: #{tpu_custom_call.1} parent=1 // pred_region
      %s19 = ssub.s32 16384, 16384
      %20 = vsyncadd [#allocation7], %s19
      %s21 = sshll.u32 [#allocation6], 4
      %s22 = int_to_ptr.vmem [resolvable:$true] %s21
      %27 = dma.hbm_to_vmem [thread:$0]  %s1, 16384, %s22, [#allocation7], 64, 64, 4
    $region9: #{tpu_custom_call.1} parent=1 // pred_fallthru
      _
    // Predicated region
    $region10: #{tpu_custom_call.1} parent=1 // pred_check
      _
    $region11: #{tpu_custom_call.1} parent=1 // pred_check_branch
      %29 = sbr.rel (0) target = $region13
    $region12: #{tpu_custom_call.1} parent=1 // pred_region
      %s31 = ssub.s32 8192, 8192
      %32 = vsyncadd [#allocation10], %s31
      %s33 = sshll.u32 [#allocation9], 4
      %s34 = int_to_ptr.vmem [resolvable:$true] %s33
      %39 = dma.hbm_to_vmem [thread:$0]  %s2, 8192, %s34, [#allocation10], 512, 512, 32
    $region13: #{tpu_custom_call.1} parent=1 // pred_fallthru
      _
    // Predicated region
    $region14: #{tpu_custom_call.1} parent=1 // pred_check
      _
    $region15: #{tpu_custom_call.1} parent=1 // pred_check_branch
      %41 = sbr.rel (0) target = $region17
    $region16: #{tpu_custom_call.1} parent=1 // pred_region
      %s43 = ssub.s32 4096, 4096
      %44 = vsyncadd [#allocation10], %s43
      %s45 = sshll.u32 [#allocation11], 4
      %s46 = int_to_ptr.vmem [resolvable:$true] %s45
      %51 = dma.hbm_to_vmem [thread:$0]  %s3, 4096, %s46, [#allocation10], 256, 256, 16
    $region17: #{tpu_custom_call.1} parent=1 // pred_fallthru
      _
    // Predicated region
    $region18: #{tpu_custom_call.1} parent=1 // pred_check
      _
    $region19: #{tpu_custom_call.1} parent=1 // pred_check_branch
      %53 = sbr.rel (0) target = $region21
    $region20: #{tpu_custom_call.1} parent=1 // pred_region
      _
    $region21: #{tpu_custom_call.1} parent=1 // pred_fallthru
      _
    // Predicated region
    $region22: #{tpu_custom_call.1} parent=1 // pred_check
      _
    $region23: #{tpu_custom_call.1} parent=1 // pred_check_branch
      %55 = sbr.rel (0) target = $region25
    $region24: #{tpu_custom_call.1} parent=1 // pred_region
      %56 = dma.done [#allocation7], 16384
    $region25: #{tpu_custom_call.1} parent=1 // pred_fallthru
      _
    // Predicated region
    $region26: #{tpu_custom_call.1} parent=1 // pred_check
      _
    $region27: #{tpu_custom_call.1} parent=1 // pred_check_branch
      %58 = sbr.rel (0) target = $region29
    $region28: #{tpu_custom_call.1} parent=1 // pred_region
      %59 = dma.done [#allocation10], 8192
    $region29: #{tpu_custom_call.1} parent=1 // pred_fallthru
      _
    // Predicated region
    $region30: #{tpu_custom_call.1} parent=1 // pred_check
      _
    $region31: #{tpu_custom_call.1} parent=1 // pred_check_branch
      %61 = sbr.rel (0) target = $region33
    $region32: #{tpu_custom_call.1} parent=1 // pred_region
      %62 = dma.done [#allocation10], 4096
    $region33: #{tpu_custom_call.1} parent=1 // pred_fallthru
      _
    %63 = vst [vmem:[#allocation2] sm:$0x1] 0.0
    %64 = vst [vmem:[#allocation3] sm:$0x1] 0.0
    %s65 = sld [smem:[#allocation5]]
    %s66 = scalar_lea.smem [#allocation4], 0
    %67 = sst [smem:[%s66]] %s65
    %s68 = sld [smem:[#allocation5]]
    %s69 = scalar_lea.smem [#allocation12], 0
    %70 = sst [smem:[%s69]] %s68
    %v71 = vlaneseq
    %v72 = vand.u32 %v71, 127
    %v73 = vadd.s32 %v72, 128
    %s74 = sld [smem:[#allocation4]]
    %s75 = smul.u32 %s74, 4
    %s76 = scalar_lea.vmem [#allocation6], %s75
    %v77 = vld [vmem:[%s76] sm:$0xf]
    %v78 = vld [vmem:[#allocation2] sm:$0x1]
    %v79 = vld [vmem:[#allocation9] sm:$0xff]
    %v80 = vld [vmem:[#allocation9 + $0x8] sm:$0xff]
    %v81 = vld [vmem:[#allocation9 + $0x10] sm:$0xff]
    %v82 = vld [vmem:[#allocation9 + $0x18] sm:$0xff]
    %v83 = vld [vmem:[#allocation9 + $0x20] sm:$0xff]
    %v84 = vld [vmem:[#allocation9 + $0x28] sm:$0xff]
    %v85 = vld [vmem:[#allocation9 + $0x30] sm:$0xff]
    %v86 = vld [vmem:[#allocation9 + $0x38] sm:$0xff]
    %v87 = vld [vmem:[#allocation9 + $0x40] sm:$0xff]
    %v88 = vld [vmem:[#allocation9 + $0x48] sm:$0xff]
    %v89 = vld [vmem:[#allocation9 + $0x50] sm:$0xff]
    %v90 = vld [vmem:[#allocation9 + $0x58] sm:$0xff]
    %v91 = vld [vmem:[#allocation9 + $0x60] sm:$0xff]
    %v92 = vld [vmem:[#allocation9 + $0x68] sm:$0xff]
    %v93 = vld [vmem:[#allocation9 + $0x70] sm:$0xff]
    %v94 = vld [vmem:[#allocation9 + $0x78] sm:$0xff]
    %v95 = vld [vmem:[#allocation9 + $0x80] sm:$0xff]
    %v96 = vld [vmem:[#allocation9 + $0x88] sm:$0xff]
    %v97 = vld [vmem:[#allocation9 + $0x90] sm:$0xff]
    %v98 = vld [vmem:[#allocation9 + $0x98] sm:$0xff]
    %v99 = vld [vmem:[#allocation9 + $0xa0] sm:$0xff]
    %v100 = vld [vmem:[#allocation9 + $0xa8] sm:$0xff]
    %v101 = vld [vmem:[#allocation9 + $0xb0] sm:$0xff]
    %v102 = vld [vmem:[#allocation9 + $0xb8] sm:$0xff]
    %v103 = vld [vmem:[#allocation9 + $0xc0] sm:$0xff]
    %v104 = vld [vmem:[#allocation9 + $0xc8] sm:$0xff]
    %v105 = vld [vmem:[#allocation9 + $0xd0] sm:$0xff]
    %v106 = vld [vmem:[#allocation9 + $0xd8] sm:$0xff]
    %v107 = vld [vmem:[#allocation9 + $0xe0] sm:$0xff]
    %v108 = vld [vmem:[#allocation9 + $0xe8] sm:$0xff]
    %v109 = vld [vmem:[#allocation9 + $0xf0] sm:$0xff]
    %v110 = vld [vmem:[#allocation9 + $0xf8] sm:$0xff]
    %v111 = vld [vmem:[#allocation9 + $0x100] sm:$0xff]
    %v112 = vld [vmem:[#allocation9 + $0x108] sm:$0xff]
    %v113 = vld [vmem:[#allocation9 + $0x110] sm:$0xff]
    %v114 = vld [vmem:[#allocation9 + $0x118] sm:$0xff]
    %v115 = vld [vmem:[#allocation9 + $0x120] sm:$0xff]
    %v116 = vld [vmem:[#allocation9 + $0x128] sm:$0xff]
    %v117 = vld [vmem:[#allocation9 + $0x130] sm:$0xff]
    %v118 = vld [vmem:[#allocation9 + $0x138] sm:$0xff]
    %v119 = vld [vmem:[#allocation9 + $0x140] sm:$0xff]
    %v120 = vld [vmem:[#allocation9 + $0x148] sm:$0xff]
    %v121 = vld [vmem:[#allocation9 + $0x150] sm:$0xff]
    %v122 = vld [vmem:[#allocation9 + $0x158] sm:$0xff]
    %v123 = vld [vmem:[#allocation9 + $0x160] sm:$0xff]
    %v124 = vld [vmem:[#allocation9 + $0x168] sm:$0xff]
    %v125 = vld [vmem:[#allocation9 + $0x170] sm:$0xff]
    %v126 = vld [vmem:[#allocation9 + $0x178] sm:$0xff]
    %v127 = vld [vmem:[#allocation9 + $0x180] sm:$0xff]
    %v128 = vld [vmem:[#allocation9 + $0x188] sm:$0xff]
    %v129 = vld [vmem:[#allocation9 + $0x190] sm:$0xff]
    %v130 = vld [vmem:[#allocation9 + $0x198] sm:$0xff]
    %v131 = vld [vmem:[#allocation9 + $0x1a0] sm:$0xff]
    %v132 = vld [vmem:[#allocation9 + $0x1a8] sm:$0xff]
    %v133 = vld [vmem:[#allocation9 + $0x1b0] sm:$0xff]
    %v134 = vld [vmem:[#allocation9 + $0x1b8] sm:$0xff]
    %v135 = vld [vmem:[#allocation9 + $0x1c0] sm:$0xff]
    %v136 = vld [vmem:[#allocation9 + $0x1c8] sm:$0xff]
    %v137 = vld [vmem:[#allocation9 + $0x1d0] sm:$0xff]
    %v138 = vld [vmem:[#allocation9 + $0x1d8] sm:$0xff]
    %v139 = vld [vmem:[#allocation9 + $0x1e0] sm:$0xff]
    %v140 = vld [vmem:[#allocation9 + $0x1e8] sm:$0xff]
    %v141 = vld [vmem:[#allocation9 + $0x1f0] sm:$0xff]
    %v142 = vld [vmem:[#allocation9 + $0x1f8] sm:$0xff]
    %143 = vmatprep.subr.mxu0 %v80
    %144 = vmatpush1.msra.mxu0 %v79
    %145 = vmatprep.subr.mxu0 %v84
    %146 = vmatpush1.msra.mxu0 %v83
    %147 = vmatprep.subr.mxu0 %v88
    %148 = vmatpush1.msra.mxu0 %v87
    %149 = vmatprep.subr.mxu0 %v92
    %150 = vmatpush1.msra.mxu0 %v91
    %151 = vmatprep.subr.mxu0 %v96
    %152 = vmatpush1.msra.mxu0 %v95
    %153 = vmatprep.subr.mxu0 %v100
    %154 = vmatpush1.msra.mxu0 %v99
    %155 = vmatprep.subr.mxu0 %v104
    %156 = vmatpush1.msra.mxu0 %v103
    %157 = vmatprep.subr.mxu0 %v108
    %158 = vmatpush1.msra.mxu0 %v107
    %159 = vmatprep.subr.mxu0 %v112
    %160 = vmatpush1.msra.mxu0 %v111
    %161 = vmatprep.subr.mxu0 %v116
    %162 = vmatpush1.msra.mxu0 %v115
    %163 = vmatprep.subr.mxu0 %v120
    %164 = vmatpush1.msra.mxu0 %v119
    %165 = vmatprep.subr.mxu0 %v124
    %166 = vmatpush1.msra.mxu0 %v123
    %167 = vmatprep.subr.mxu0 %v128
    %168 = vmatpush1.msra.mxu0 %v127
    %169 = vmatprep.subr.mxu0 %v132
    %170 = vmatpush1.msra.mxu0 %v131
    %171 = vmatprep.subr.mxu0 %v136
    %172 = vmatpush1.msra.mxu0 %v135
    %173 = vmatprep.subr.mxu0 %v140
    %174 = vmatpush1.msra.mxu0 %v139
    %175 = vmatprep.subr.mxu0 0.0
    %176 = vmatpush1.msra.mxu0 0.0
    %177 = vmatprep.subr.mxu0 0.0
    %178 = vmatpush1.msra.mxu0 0.0
    %179 = vmatprep.subr.mxu0 0.0
    %180 = vmatpush1.msra.mxu0 0.0
    %181 = vmatprep.subr.mxu0 0.0
    %182 = vmatpush1.msra.mxu0 0.0
    %183 = vmatprep.subr.mxu0 0.0
    %184 = vmatpush1.msra.mxu0 0.0
    %185 = vmatprep.subr.mxu0 0.0
    %186 = vmatpush1.msra.mxu0 0.0
    %187 = vmatprep.subr.mxu0 0.0
    %188 = vmatpush1.msra.mxu0 0.0
    %189 = vmatprep.subr.mxu0 0.0
    %190 = vmatpush1.msra.mxu0 0.0
    %191 = vmatprep.subr.mxu0 0.0
    %192 = vmatpush1.msra.mxu0 0.0
    %193 = vmatprep.subr.mxu0 0.0
    %194 = vmatpush1.msra.mxu0 0.0
    %195 = vmatprep.subr.mxu0 0.0
    %196 = vmatpush1.msra.mxu0 0.0
    %197 = vmatprep.subr.mxu0 0.0
    %198 = vmatpush1.msra.mxu0 0.0
    %199 = vmatprep.subr.mxu0 0.0
    %200 = vmatpush1.msra.mxu0 0.0
    %201 = vmatprep.subr.mxu0 0.0
    %202 = vmatpush1.msra.mxu0 0.0
    %203 = vmatprep.subr.mxu0 0.0
    %204 = vmatpush1.msra.mxu0 0.0
    %205 = vmatprep.subr.mxu0 0.0
    %206 = vmatpush1.msra.mxu0 0.0
    %207 = vmatprep.mubr.f32.mxu0 0.0
    %208 = vmatmul.mubr.f32.gmra.mrb[0].mxu0 %v78
    %v209 = vpop.f32.mrb[0].mxu0
    %v210 = vadd.f32 0.0, %v209
    %v211 = vpop.f32.mrb[0].mxu0
    %v212 = vadd.f32 0.0, %v211
    %213 = vdwg.mxu0
    %214 = vmatprep.subr.mxu0 %v82
    %215 = vmatpush1.msra.mxu0 %v81
    %216 = vmatprep.subr.mxu0 %v86
    %217 = vmatpush1.msra.mxu0 %v85
    %218 = vmatprep.subr.mxu0 %v90
    %219 = vmatpush1.msra.mxu0 %v89
    %220 = vmatprep.subr.mxu0 %v94
    %221 = vmatpush1.msra.mxu0 %v93
    %222 = vmatprep.subr.mxu0 %v98
    %223 = vmatpush1.msra.mxu0 %v97
    %224 = vmatprep.subr.mxu0 %v102
    %225 = vmatpush1.msra.mxu0 %v101
    %226 = vmatprep.subr.mxu0 %v106
    %227 = vmatpush1.msra.mxu0 %v105
    %228 = vmatprep.subr.mxu0 %v110
    %229 = vmatpush1.msra.mxu0 %v109
    %230 = vmatprep.subr.mxu0 %v114
    %231 = vmatpush1.msra.mxu0 %v113
    %232 = vmatprep.subr.mxu0 %v118
    %233 = vmatpush1.msra.mxu0 %v117
    %234 = vmatprep.subr.mxu0 %v122
    %235 = vmatpush1.msra.mxu0 %v121
    %236 = vmatprep.subr.mxu0 %v126
    %237 = vmatpush1.msra.mxu0 %v125
    %238 = vmatprep.subr.mxu0 %v130
    %239 = vmatpush1.msra.mxu0 %v129
    %240 = vmatprep.subr.mxu0 %v134
    %241 = vmatpush1.msra.mxu0 %v133
    %242 = vmatprep.subr.mxu0 %v138
    %243 = vmatpush1.msra.mxu0 %v137
    %244 = vmatprep.subr.mxu0 %v142
    %245 = vmatpush1.msra.mxu0 %v141
    %246 = vmatprep.subr.mxu0 0.0
    %247 = vmatpush1.msra.mxu0 0.0
    %248 = vmatprep.subr.mxu0 0.0
    %249 = vmatpush1.msra.mxu0 0.0
    %250 = vmatprep.subr.mxu0 0.0
    %251 = vmatpush1.msra.mxu0 0.0
    %252 = vmatprep.subr.mxu0 0.0
    %253 = vmatpush1.msra.mxu0 0.0
    %254 = vmatprep.subr.mxu0 0.0
    %255 = vmatpush1.msra.mxu0 0.0
    %256 = vmatprep.subr.mxu0 0.0
    %257 = vmatpush1.msra.mxu0 0.0
    %258 = vmatprep.subr.mxu0 0.0
    %259 = vmatpush1.msra.mxu0 0.0
    %260 = vmatprep.subr.mxu0 0.0
    %261 = vmatpush1.msra.mxu0 0.0
    %262 = vmatprep.subr.mxu0 0.0
    %263 = vmatpush1.msra.mxu0 0.0
    %264 = vmatprep.subr.mxu0 0.0
    %265 = vmatpush1.msra.mxu0 0.0
    %266 = vmatprep.subr.mxu0 0.0
    %267 = vmatpush1.msra.mxu0 0.0
    %268 = vmatprep.subr.mxu0 0.0
    %269 = vmatpush1.msra.mxu0 0.0
    %270 = vmatprep.subr.mxu0 0.0
    %271 = vmatpush1.msra.mxu0 0.0
    %272 = vmatprep.subr.mxu0 0.0
    %273 = vmatpush1.msra.mxu0 0.0
    %274 = vmatprep.subr.mxu0 0.0
    %275 = vmatpush1.msra.mxu0 0.0
    %276 = vmatprep.subr.mxu0 0.0
    %277 = vmatpush1.msra.mxu0 0.0
    %278 = vmatprep.mubr.f32.mxu0 0.0
    %279 = vmatmul.mubr.f32.gmra.mrb[0].mxu0 %v78
    %v280 = vpop.f32.mrb[0].mxu0
    %v281 = vadd.f32 0.0, %v280
    %v282 = vpop.f32.mrb[0].mxu0
    %v283 = vadd.f32 0.0, %v282
    %284 = vdwg.mxu0
    %v289 = vcombine.low %v210, %v212
    %v290 = vcombine.low %v281, %v283
    %v292 = vunpack.c.l.s4 1966171168
    %v293 = vunpack.c.0.s8 %v292
    %v294 = vlaneseq
    %v295 = vshrl.u32 %v294, 7
    %v296 = vsub.s32 %v293, %v295
    %v297 = vrot.slane %v289, %v296
    %v299 = vunpack.c.l.s4 1966171168
    %v300 = vunpack.c.0.s8 %v299
    %v301 = vlaneseq
    %v302 = vshrl.u32 %v301, 7
    %v303 = vsub.s32 %v300, %v302
    %v304 = vrot.slane %v290, %v303
    %v305 = vcombine.low %v297, %v304
    %v307 = vunpack.c.l.s4 1966171168
    %v308 = vunpack.c.0.s8 %v307
    %v309 = vlaneseq
    %v310 = vshrl.u32 %v309, 7
    %v311 = vsub.s32 %v308, %v310
    %v312 = vrot.slane %v305, %v311
    %v314 = vadd.f32 %v77, %v312
    %v315 = vxor.u32 %v314, 2147483648
    %v316 = vmul.f32 %v315, 1.442695
    %v317 = vpow.pop %v316
    %v318 = vadd.f32 %v317, 1.0
    %v319 = vrcp.pop %v318
    %v320 = vmul.f32 1.0, %v319
    %v322 = vrot.slane %v314, 3
    %v324 = vtanh.pop %v322
    %v325 = vld [vmem:[#allocation3] sm:$0x1]
    %v327 = vrot.slane %v320, 1
    %v329 = vmul.f32 %v327, %v325
    %v330 = vmul.f32 %v320, %v324
    %v331 = vadd.f32 %v329, %v330
    %v332 = vtanh.pop %v331
    %v333 = vrot.slane %v320, 2
    %v335 = vmul.f32 %v333, %v332
    %336 = vst [vmem:[#allocation3] sm:$0x1] %v331
    %337 = vst [vmem:[#allocation2] sm:$0x1] %v335
    %v338 = vld [vmem:[#allocation11] sm:$0xff]
    %v339 = vld [vmem:[#allocation11 + $0x8] sm:$0xff]
    %v340 = vld [vmem:[#allocation11 + $0x10] sm:$0xff]
    %v341 = vld [vmem:[#allocation11 + $0x18] sm:$0xff]
    %v342 = vld [vmem:[#allocation11 + $0x20] sm:$0xff]
    %v343 = vld [vmem:[#allocation11 + $0x28] sm:$0xff]
    %v344 = vld [vmem:[#allocation11 + $0x30] sm:$0xff]
    %v345 = vld [vmem:[#allocation11 + $0x38] sm:$0xff]
    %v346 = vld [vmem:[#allocation11 + $0x40] sm:$0xff]
    %v347 = vld [vmem:[#allocation11 + $0x48] sm:$0xff]
    %v348 = vld [vmem:[#allocation11 + $0x50] sm:$0xff]
    %v349 = vld [vmem:[#allocation11 + $0x58] sm:$0xff]
    %v350 = vld [vmem:[#allocation11 + $0x60] sm:$0xff]
    %v351 = vld [vmem:[#allocation11 + $0x68] sm:$0xff]
    %v352 = vld [vmem:[#allocation11 + $0x70] sm:$0xff]
    %v353 = vld [vmem:[#allocation11 + $0x78] sm:$0xff]
    %v354 = vld [vmem:[#allocation11 + $0x80] sm:$0xff]
    %v355 = vld [vmem:[#allocation11 + $0x88] sm:$0xff]
    %v356 = vld [vmem:[#allocation11 + $0x90] sm:$0xff]
    %v357 = vld [vmem:[#allocation11 + $0x98] sm:$0xff]
    %v358 = vld [vmem:[#allocation11 + $0xa0] sm:$0xff]
    %v359 = vld [vmem:[#allocation11 + $0xa8] sm:$0xff]
    %v360 = vld [vmem:[#allocation11 + $0xb0] sm:$0xff]
    %v361 = vld [vmem:[#allocation11 + $0xb8] sm:$0xff]
    %v362 = vld [vmem:[#allocation11 + $0xc0] sm:$0xff]
    %v363 = vld [vmem:[#allocation11 + $0xc8] sm:$0xff]
    %v364 = vld [vmem:[#allocation11 + $0xd0] sm:$0xff]
    %v365 = vld [vmem:[#allocation11 + $0xd8] sm:$0xff]
    %v366 = vld [vmem:[#allocation11 + $0xe0] sm:$0xff]
    %v367 = vld [vmem:[#allocation11 + $0xe8] sm:$0xff]
    %v368 = vld [vmem:[#allocation11 + $0xf0] sm:$0xff]
    %v369 = vld [vmem:[#allocation11 + $0xf8] sm:$0xff]
    %v370 = vld [vmem:[%s4] sm:$0x3]
    %v372 = vlaneseq
    %v373 = vshrl.u32 %v372, 7
    %v374 = vsub.s32 0, %v373
    %v375 = vrot.slane %v370, %v374
    %v376 = vlaneseq
    %v377 = vshrl.u32 %v376, 7
    %v378 = vsub.s32 1, %v377
    %v379 = vrot.slane %v370, %v378
    %382 = vmatprep.subr.mxu0 %v339
    %383 = vmatpush1.msra.mxu0 %v338
    %384 = vmatprep.subr.mxu0 %v341
    %385 = vmatpush1.msra.mxu0 %v340
    %386 = vmatprep.subr.mxu0 %v343
    %387 = vmatpush1.msra.mxu0 %v342
    %388 = vmatprep.subr.mxu0 %v345
    %389 = vmatpush1.msra.mxu0 %v344
    %390 = vmatprep.subr.mxu0 %v347
    %391 = vmatpush1.msra.mxu0 %v346
    %392 = vmatprep.subr.mxu0 %v349
    %393 = vmatpush1.msra.mxu0 %v348
    %394 = vmatprep.subr.mxu0 %v351
    %395 = vmatpush1.msra.mxu0 %v350
    %396 = vmatprep.subr.mxu0 %v353
    %397 = vmatpush1.msra.mxu0 %v352
    %398 = vmatprep.subr.mxu0 %v355
    %399 = vmatpush1.msra.mxu0 %v354
    %400 = vmatprep.subr.mxu0 %v357
    %401 = vmatpush1.msra.mxu0 %v356
    %402 = vmatprep.subr.mxu0 %v359
    %403 = vmatpush1.msra.mxu0 %v358
    %404 = vmatprep.subr.mxu0 %v361
    %405 = vmatpush1.msra.mxu0 %v360
    %406 = vmatprep.subr.mxu0 %v363
    %407 = vmatpush1.msra.mxu0 %v362
    %408 = vmatprep.subr.mxu0 %v365
    %409 = vmatpush1.msra.mxu0 %v364
    %410 = vmatprep.subr.mxu0 %v367
    %411 = vmatpush1.msra.mxu0 %v366
    %412 = vmatprep.subr.mxu0 %v369
    %413 = vmatpush1.msra.mxu0 %v368
    %414 = vmatprep.subr.mxu0 0.0
    %415 = vmatpush1.msra.mxu0 0.0
    %416 = vmatprep.subr.mxu0 0.0
    %417 = vmatpush1.msra.mxu0 0.0
    %418 = vmatprep.subr.mxu0 0.0
    %419 = vmatpush1.msra.mxu0 0.0
    %420 = vmatprep.subr.mxu0 0.0
    %421 = vmatpush1.msra.mxu0 0.0
    %422 = vmatprep.subr.mxu0 0.0
    %423 = vmatpush1.msra.mxu0 0.0
    %424 = vmatprep.subr.mxu0 0.0
    %425 = vmatpush1.msra.mxu0 0.0
    %426 = vmatprep.subr.mxu0 0.0
    %427 = vmatpush1.msra.mxu0 0.0
    %428 = vmatprep.subr.mxu0 0.0
    %429 = vmatpush1.msra.mxu0 0.0
    %430 = vmatprep.subr.mxu0 0.0
    %431 = vmatpush1.msra.mxu0 0.0
    %432 = vmatprep.subr.mxu0 0.0
    %433 = vmatpush1.msra.mxu0 0.0
    %434 = vmatprep.subr.mxu0 0.0
    %435 = vmatpush1.msra.mxu0 0.0
    %436 = vmatprep.subr.mxu0 0.0
    %437 = vmatpush1.msra.mxu0 0.0
    %438 = vmatprep.subr.mxu0 0.0
    %439 = vmatpush1.msra.mxu0 0.0
    %440 = vmatprep.subr.mxu0 0.0
    %441 = vmatpush1.msra.mxu0 0.0
    %442 = vmatprep.subr.mxu0 0.0
    %443 = vmatpush1.msra.mxu0 0.0
    %444 = vmatprep.subr.mxu0 0.0
    %445 = vmatpush1.msra.mxu0 0.0
    %446 = vmatprep.mubr.f32.mxu0 0.0
    %447 = vmatmul.mubr.f32.gmra.mrb[0].mxu0 %v335
    %v448 = vpop.f32.mrb[0].mxu0
    %v449 = vadd.f32 %v375, %v448
    %v450 = vpop.f32.mrb[0].mxu0
    %v451 = vadd.f32 %v379, %v450
    %452 = vdwg.mxu0
    %vm453 = vcmask 1040384
    %v454 = vsel %vm453, %v449, -inf
    %v455 = vsel %vm453, %v451, -inf
    %v456 = vmax.f32 %v454, %v455
    %457 = vmax.xlane.f32.xlu0 %v456
    %v458 = vpop.xlane.xlu0 %457
    %v459 = vrot.slane %v458, 4
    %v460 = vmax.f32 %v458, %v459
    %v461 = vrot.slane %v460, 2
    %v462 = vmax.f32 %v460, %v461
    %v463 = vrot.slane %v462, 1
    %v464 = vmax.f32 %v462, %v463
    %s465 = vtos %v464
    %v466 = vstv %s465
    %vm467 = vcmp.eq.f32.partialorder %v449, %v466
    %vm468 = vcmp.eq.f32.partialorder %v451, %v466
    %v469 = vsel %vm467, %v72, 256
    %v470 = vsel %vm468, %v73, 256
    %v471 = vsel %vm453, %v469, 2147483647
    %v472 = vsel %vm453, %v470, 2147483647
    %vm473 = vcmp.lt.s32.totalorder %v471, %v472
    %v474 = vsel %vm473, %v471, %v472
    %v475 = vand.u32 %v474, 65535
    %v476 = vshra.s32 %v474, 16
    %v477 = vcvt.s32.f32 %v475
    %v478 = vcvt.s32.f32 %v476
    %479 = vmin.xlane.f32.xlu0 %v478
    %v480 = vpop.xlane.xlu0 %479
    %vm481 = vcmp.eq.f32.partialorder %v478, %v480
    %v482 = vsel %vm481, %v477, inf
    %483 = vmin.xlane.f32.xlu0 %v482
    %v484 = vpop.xlane.xlu0 %483
    %v485 = vcvt.f32.s32 %v484
    %v486 = vcvt.f32.s32 %v480
    %v487 = vshll.u32 %v486, 16
    %v488 = vadd.s32 %v487, %v485
    %v489 = vrot.slane %v488, 4
    %vm490 = vcmp.lt.s32.totalorder %v488, %v489
    %v491 = vsel %vm490, %v488, %v489
    %v492 = vrot.slane %v491, 2
    %vm493 = vcmp.lt.s32.totalorder %v491, %v492
    %v494 = vsel %vm493, %v491, %v492
    %v495 = vrot.slane %v494, 1
    %vm496 = vcmp.lt.s32.totalorder %v494, %v495
    %v497 = vsel %vm496, %v494, %v495
    %s498 = vtos %v497
    %499 = sst [smem:[%s66]] %s498
    %s500 = sld [smem:[#allocation4]]
    %s501 = scalar_lea.smem [#allocation12], 1
    %502 = sst [smem:[%s501]] %s500
    %s503 = sld [smem:[#allocation4]]
    %p504 = scmp.ne.s32.totalorder %s503, 0
    // Predicated region
    $region34: #{tpu_custom_call.1} parent=1 // pred_check
      %p505 = pneg %p504
    $region35: #{tpu_custom_call.1} parent=1 // pred_check_branch
      %507 = sbr.rel (%p505) target = $region37
    $region36: #{tpu_custom_call.1} parent=1 // pred_region
      %s508 = smul.u32 %s503, 4
      %s509 = scalar_lea.vmem [#allocation6], %s508
      %v510 = vld [vmem:[%s509] sm:$0xf]
      %v511 = vld [vmem:[#allocation2] sm:$0x1]
      %v512 = vld [vmem:[#allocation9] sm:$0xff]
      %v513 = vld [vmem:[#allocation9 + $0x8] sm:$0xff]
      %v514 = vld [vmem:[#allocation9 + $0x10] sm:$0xff]
      %v515 = vld [vmem:[#allocation9 + $0x18] sm:$0xff]
      %v516 = vld [vmem:[#allocation9 + $0x20] sm:$0xff]
      %v517 = vld [vmem:[#allocation9 + $0x28] sm:$0xff]
      %v518 = vld [vmem:[#allocation9 + $0x30] sm:$0xff]
      %v519 = vld [vmem:[#allocation9 + $0x38] sm:$0xff]
      %v520 = vld [vmem:[#allocation9 + $0x40] sm:$0xff]
      %v521 = vld [vmem:[#allocation9 + $0x48] sm:$0xff]
      %v522 = vld [vmem:[#allocation9 + $0x50] sm:$0xff]
      %v523 = vld [vmem:[#allocation9 + $0x58] sm:$0xff]
      %v524 = vld [vmem:[#allocation9 + $0x60] sm:$0xff]
      %v525 = vld [vmem:[#allocation9 + $0x68] sm:$0xff]
      %v526 = vld [vmem:[#allocation9 + $0x70] sm:$0xff]
      %v527 = vld [vmem:[#allocation9 + $0x78] sm:$0xff]
      %v528 = vld [vmem:[#allocation9 + $0x80] sm:$0xff]
      %v529 = vld [vmem:[#allocation9 + $0x88] sm:$0xff]
      %v530 = vld [vmem:[#allocation9 + $0x90] sm:$0xff]
      %v531 = vld [vmem:[#allocation9 + $0x98] sm:$0xff]
      %v532 = vld [vmem:[#allocation9 + $0xa0] sm:$0xff]
      %v533 = vld [vmem:[#allocation9 + $0xa8] sm:$0xff]
      %v534 = vld [vmem:[#allocation9 + $0xb0] sm:$0xff]
      %v535 = vld [vmem:[#allocation9 + $0xb8] sm:$0xff]
      %v536 = vld [vmem:[#allocation9 + $0xc0] sm:$0xff]
      %v537 = vld [vmem:[#allocation9 + $0xc8] sm:$0xff]
      %v538 = vld [vmem:[#allocation9 + $0xd0] sm:$0xff]
      %v539 = vld [vmem:[#allocation9 + $0xd8] sm:$0xff]
      %v540 = vld [vmem:[#allocation9 + $0xe0] sm:$0xff]
      %v541 = vld [vmem:[#allocation9 + $0xe8] sm:$0xff]
      %v542 = vld [vmem:[#allocation9 + $0xf0] sm:$0xff]
      %v543 = vld [vmem:[#allocation9 + $0xf8] sm:$0xff]
      %v544 = vld [vmem:[#allocation9 + $0x100] sm:$0xff]
      %v545 = vld [vmem:[#allocation9 + $0x108] sm:$0xff]
      %v546 = vld [vmem:[#allocation9 + $0x110] sm:$0xff]
      %v547 = vld [vmem:[#allocation9 + $0x118] sm:$0xff]
      %v548 = vld [vmem:[#allocation9 + $0x120] sm:$0xff]
      %v549 = vld [vmem:[#allocation9 + $0x128] sm:$0xff]
      %v550 = vld [vmem:[#allocation9 + $0x130] sm:$0xff]
      %v551 = vld [vmem:[#allocation9 + $0x138] sm:$0xff]
      %v552 = vld [vmem:[#allocation9 + $0x140] sm:$0xff]
      %v553 = vld [vmem:[#allocation9 + $0x148] sm:$0xff]
      %v554 = vld [vmem:[#allocation9 + $0x150] sm:$0xff]
      %v555 = vld [vmem:[#allocation9 + $0x158] sm:$0xff]
      %v556 = vld [vmem:[#allocation9 + $0x160] sm:$0xff]
      %v557 = vld [vmem:[#allocation9 + $0x168] sm:$0xff]
      %v558 = vld [vmem:[#allocation9 + $0x170] sm:$0xff]
      %v559 = vld [vmem:[#allocation9 + $0x178] sm:$0xff]
      %v560 = vld [vmem:[#allocation9 + $0x180] sm:$0xff]
      %v561 = vld [vmem:[#allocation9 + $0x188] sm:$0xff]
      %v562 = vld [vmem:[#allocation9 + $0x190] sm:$0xff]
      %v563 = vld [vmem:[#allocation9 + $0x198] sm:$0xff]
      %v564 = vld [vmem:[#allocation9 + $0x1a0] sm:$0xff]
      %v565 = vld [vmem:[#allocation9 + $0x1a8] sm:$0xff]
      %v566 = vld [vmem:[#allocation9 + $0x1b0] sm:$0xff]
      %v567 = vld [vmem:[#allocation9 + $0x1b8] sm:$0xff]
      %v568 = vld [vmem:[#allocation9 + $0x1c0] sm:$0xff]
      %v569 = vld [vmem:[#allocation9 + $0x1c8] sm:$0xff]
      %v570 = vld [vmem:[#allocation9 + $0x1d0] sm:$0xff]
      %v571 = vld [vmem:[#allocation9 + $0x1d8] sm:$0xff]
      %v572 = vld [vmem:[#allocation9 + $0x1e0] sm:$0xff]
      %v573 = vld [vmem:[#allocation9 + $0x1e8] sm:$0xff]
      %v574 = vld [vmem:[#allocation9 + $0x1f0] sm:$0xff]
      %v575 = vld [vmem:[#allocation9 + $0x1f8] sm:$0xff]
      %576 = vmatprep.subr.mxu0 %v513
      %577 = vmatpush1.msra.mxu0 %v512
      %578 = vmatprep.subr.mxu0 %v517
      %579 = vmatpush1.msra.mxu0 %v516
      %580 = vmatprep.subr.mxu0 %v521
      %581 = vmatpush1.msra.mxu0 %v520
      %582 = vmatprep.subr.mxu0 %v525
      %583 = vmatpush1.msra.mxu0 %v524
      %584 = vmatprep.subr.mxu0 %v529
      %585 = vmatpush1.msra.mxu0 %v528
      %586 = vmatprep.subr.mxu0 %v533
      %587 = vmatpush1.msra.mxu0 %v532
      %588 = vmatprep.subr.mxu0 %v537
      %589 = vmatpush1.msra.mxu0 %v536
      %590 = vmatprep.subr.mxu0 %v541
      %591 = vmatpush1.msra.mxu0 %v540
      %592 = vmatprep.subr.mxu0 %v545
      %593 = vmatpush1.msra.mxu0 %v544
      %594 = vmatprep.subr.mxu0 %v549
      %595 = vmatpush1.msra.mxu0 %v548
      %596 = vmatprep.subr.mxu0 %v553
      %597 = vmatpush1.msra.mxu0 %v552
      %598 = vmatprep.subr.mxu0 %v557
      %599 = vmatpush1.msra.mxu0 %v556
      %600 = vmatprep.subr.mxu0 %v561
      %601 = vmatpush1.msra.mxu0 %v560
      %602 = vmatprep.subr.mxu0 %v565
      %603 = vmatpush1.msra.mxu0 %v564
      %604 = vmatprep.subr.mxu0 %v569
      %605 = vmatpush1.msra.mxu0 %v568
      %606 = vmatprep.subr.mxu0 %v573
      %607 = vmatpush1.msra.mxu0 %v572
      %608 = vmatprep.subr.mxu0 0.0
      %609 = vmatpush1.msra.mxu0 0.0
      %610 = vmatprep.subr.mxu0 0.0
      %611 = vmatpush1.msra.mxu0 0.0
      %612 = vmatprep.subr.mxu0 0.0
      %613 = vmatpush1.msra.mxu0 0.0
      %614 = vmatprep.subr.mxu0 0.0
      %615 = vmatpush1.msra.mxu0 0.0
      %616 = vmatprep.subr.mxu0 0.0
      %617 = vmatpush1.msra.mxu0 0.0
      %618 = vmatprep.subr.mxu0 0.0
      %619 = vmatpush1.msra.mxu0 0.0
      %620 = vmatprep.subr.mxu0 0.0
      %621 = vmatpush1.msra.mxu0 0.0
      %622 = vmatprep.subr.mxu0 0.0
      %623 = vmatpush1.msra.mxu0 0.0
      %624 = vmatprep.subr.mxu0 0.0
      %625 = vmatpush1.msra.mxu0 0.0
      %626 = vmatprep.subr.mxu0 0.0
      %627 = vmatpush1.msra.mxu0 0.0
      %628 = vmatprep.subr.mxu0 0.0
      %629 = vmatpush1.msra.mxu0 0.0
      %630 = vmatprep.subr.mxu0 0.0
      %631 = vmatpush1.msra.mxu0 0.0
      %632 = vmatprep.subr.mxu0 0.0
      %633 = vmatpush1.msra.mxu0 0.0
      %634 = vmatprep.subr.mxu0 0.0
      %635 = vmatpush1.msra.mxu0 0.0
      %636 = vmatprep.subr.mxu0 0.0
      %637 = vmatpush1.msra.mxu0 0.0
      %638 = vmatprep.subr.mxu0 0.0
      %639 = vmatpush1.msra.mxu0 0.0
      %640 = vmatprep.mubr.f32.mxu0 0.0
      %641 = vmatmul.mubr.f32.gmra.mrb[0].mxu0 %v511
      %v642 = vpop.f32.mrb[0].mxu0
      %v643 = vadd.f32 0.0, %v642
      %v644 = vpop.f32.mrb[0].mxu0
      %v645 = vadd.f32 0.0, %v644
      %646 = vdwg.mxu0
      %647 = vmatprep.subr.mxu0 %v515
      %648 = vmatpush1.msra.mxu0 %v514
      %649 = vmatprep.subr.mxu0 %v519
      %650 = vmatpush1.msra.mxu0 %v518
      %651 = vmatprep.subr.mxu0 %v523
      %652 = vmatpush1.msra.mxu0 %v522
      %653 = vmatprep.subr.mxu0 %v527
      %654 = vmatpush1.msra.mxu0 %v526
      %655 = vmatprep.subr.mxu0 %v531
      %656 = vmatpush1.msra.mxu0 %v530
      %657 = vmatprep.subr.mxu0 %v535
      %658 = vmatpush1.msra.mxu0 %v534
      %659 = vmatprep.subr.mxu0 %v539
      %660 = vmatpush1.msra.mxu0 %v538
      %661 = vmatprep.subr.mxu0 %v543
      %662 = vmatpush1.msra.mxu0 %v542
      %663 = vmatprep.subr.mxu0 %v547
      %664 = vmatpush1.msra.mxu0 %v546
      %665 = vmatprep.subr.mxu0 %v551
      %666 = vmatpush1.msra.mxu0 %v550
      %667 = vmatprep.subr.mxu0 %v555
      %668 = vmatpush1.msra.mxu0 %v554
      %669 = vmatprep.subr.mxu0 %v559
      %670 = vmatpush1.msra.mxu0 %v558
      %671 = vmatprep.subr.mxu0 %v563
      %672 = vmatpush1.msra.mxu0 %v562
      %673 = vmatprep.subr.mxu0 %v567
      %674 = vmatpush1.msra.mxu0 %v566
      %675 = vmatprep.subr.mxu0 %v571
      %676 = vmatpush1.msra.mxu0 %v570
      %677 = vmatprep.subr.mxu0 %v575
      %678 = vmatpush1.msra.mxu0 %v574
      %679 = vmatprep.subr.mxu0 0.0
      %680 = vmatpush1.msra.mxu0 0.0
      %681 = vmatprep.subr.mxu0 0.0
      %682 = vmatpush1.msra.mxu0 0.0
      %683 = vmatprep.subr.mxu0 0.0
      %684 = vmatpush1.msra.mxu0 0.0
      %685 = vmatprep.subr.mxu0 0.0
      %686 = vmatpush1.msra.mxu0 0.0
      %687 = vmatprep.subr.mxu0 0.0
      %688 = vmatpush1.msra.mxu0 0.0
      %689 = vmatprep.subr.mxu0 0.0
      %690 = vmatpush1.msra.mxu0 0.0
      %691 = vmatprep.subr.mxu0 0.0
      %692 = vmatpush1.msra.mxu0 0.0
      %693 = vmatprep.subr.mxu0 0.0
      %694 = vmatpush1.msra.mxu0 0.0
      %695 = vmatprep.subr.mxu0 0.0
      %696 = vmatpush1.msra.mxu0 0.0
      %697 = vmatprep.subr.mxu0 0.0
      %698 = vmatpush1.msra.mxu0 0.0
      %699 = vmatprep.subr.mxu0 0.0
      %700 = vmatpush1.msra.mxu0 0.0
      %701 = vmatprep.subr.mxu0 0.0
      %702 = vmatpush1.msra.mxu0 0.0
      %703 = vmatprep.subr.mxu0 0.0
      %704 = vmatpush1.msra.mxu0 0.0
      %705 = vmatprep.subr.mxu0 0.0
      %706 = vmatpush1.msra.mxu0 0.0
      %707 = vmatprep.subr.mxu0 0.0
      %708 = vmatpush1.msra.mxu0 0.0
      %709 = vmatprep.subr.mxu0 0.0
      %710 = vmatpush1.msra.mxu0 0.0
      %711 = vmatprep.mubr.f32.mxu0 0.0
      %712 = vmatmul.mubr.f32.gmra.mrb[0].mxu0 %v511
      %v713 = vpop.f32.mrb[0].mxu0
      %v714 = vadd.f32 0.0, %v713
      %v715 = vpop.f32.mrb[0].mxu0
      %v716 = vadd.f32 0.0, %v715
      %717 = vdwg.mxu0
      %v722 = vcombine.low %v643, %v645
      %v723 = vcombine.low %v714, %v716
      %v725 = vunpack.c.l.s4 1966171168
      %v726 = vunpack.c.0.s8 %v725
      %v727 = vlaneseq
      %v728 = vshrl.u32 %v727, 7
      %v729 = vsub.s32 %v726, %v728
      %v730 = vrot.slane %v722, %v729
      %v732 = vunpack.c.l.s4 1966171168
      %v733 = vunpack.c.0.s8 %v732
      %v734 = vlaneseq
      %v735 = vshrl.u32 %v734, 7
      %v736 = vsub.s32 %v733, %v735
      %v737 = vrot.slane %v723, %v736
      %v738 = vcombine.low %v730, %v737
      %v740 = vunpack.c.l.s4 1966171168
      %v741 = vunpack.c.0.s8 %v740
      %v742 = vlaneseq
      %v743 = vshrl.u32 %v742, 7
      %v744 = vsub.s32 %v741, %v743
      %v745 = vrot.slane %v738, %v744
      %v747 = vadd.f32 %v510, %v745
      %v748 = vxor.u32 %v747, 2147483648
      %v749 = vmul.f32 %v748, 1.442695
      %v750 = vpow.pop %v749
      %v751 = vadd.f32 %v750, 1.0
      %v752 = vrcp.pop %v751
      %v753 = vmul.f32 1.0, %v752
      %v755 = vrot.slane %v747, 3
      %v757 = vtanh.pop %v755
      %v758 = vld [vmem:[#allocation3] sm:$0x1]
      %v760 = vrot.slane %v753, 1
      %v762 = vmul.f32 %v760, %v758
      %v763 = vmul.f32 %v753, %v757
      %v764 = vadd.f32 %v762, %v763
      %v765 = vtanh.pop %v764
      %v766 = vrot.slane %v753, 2
      %v768 = vmul.f32 %v766, %v765
      %769 = vst [vmem:[#allocation3] sm:$0x1] %v764
      %770 = vst [vmem:[#allocation2] sm:$0x1] %v768
      %v771 = vld [vmem:[#allocation11] sm:$0xff]
      %v772 = vld [vmem:[#allocation11 + $0x8] sm:$0xff]
      %v773 = vld [vmem:[#allocation11 + $0x10] sm:$0xff]
      %v774 = vld [vmem:[#allocation11 + $0x18] sm:$0xff]
      %v775 = vld [vmem:[#allocation11 + $0x20] sm:$0xff]
      %v776 = vld [vmem:[#allocation11 + $0x28] sm:$0xff]
      %v777 = vld [vmem:[#allocation11 + $0x30] sm:$0xff]
      %v778 = vld [vmem:[#allocation11 + $0x38] sm:$0xff]
      %v779 = vld [vmem:[#allocation11 + $0x40] sm:$0xff]
      %v780 = vld [vmem:[#allocation11 + $0x48] sm:$0xff]
      %v781 = vld [vmem:[#allocation11 + $0x50] sm:$0xff]
      %v782 = vld [vmem:[#allocation11 + $0x58] sm:$0xff]
      %v783 = vld [vmem:[#allocation11 + $0x60] sm:$0xff]
      %v784 = vld [vmem:[#allocation11 + $0x68] sm:$0xff]
      %v785 = vld [vmem:[#allocation11 + $0x70] sm:$0xff]
      %v786 = vld [vmem:[#allocation11 + $0x78] sm:$0xff]
      %v787 = vld [vmem:[#allocation11 + $0x80] sm:$0xff]
      %v788 = vld [vmem:[#allocation11 + $0x88] sm:$0xff]
      %v789 = vld [vmem:[#allocation11 + $0x90] sm:$0xff]
      %v790 = vld [vmem:[#allocation11 + $0x98] sm:$0xff]
      %v791 = vld [vmem:[#allocation11 + $0xa0] sm:$0xff]
      %v792 = vld [vmem:[#allocation11 + $0xa8] sm:$0xff]
      %v793 = vld [vmem:[#allocation11 + $0xb0] sm:$0xff]
      %v794 = vld [vmem:[#allocation11 + $0xb8] sm:$0xff]
      %v795 = vld [vmem:[#allocation11 + $0xc0] sm:$0xff]
      %v796 = vld [vmem:[#allocation11 + $0xc8] sm:$0xff]
      %v797 = vld [vmem:[#allocation11 + $0xd0] sm:$0xff]
      %v798 = vld [vmem:[#allocation11 + $0xd8] sm:$0xff]
      %v799 = vld [vmem:[#allocation11 + $0xe0] sm:$0xff]
      %v800 = vld [vmem:[#allocation11 + $0xe8] sm:$0xff]
      %v801 = vld [vmem:[#allocation11 + $0xf0] sm:$0xff]
      %v802 = vld [vmem:[#allocation11 + $0xf8] sm:$0xff]
      %v803 = vld [vmem:[%s4] sm:$0x3]
      %v805 = vlaneseq
      %v806 = vshrl.u32 %v805, 7
      %v807 = vsub.s32 0, %v806
      %v808 = vrot.slane %v803, %v807
      %v809 = vlaneseq
      %v810 = vshrl.u32 %v809, 7
      %v811 = vsub.s32 1, %v810
      %v812 = vrot.slane %v803, %v811
      %815 = vmatprep.subr.mxu0 %v772
      %816 = vmatpush1.msra.mxu0 %v771
      %817 = vmatprep.subr.mxu0 %v774
      %818 = vmatpush1.msra.mxu0 %v773
      %819 = vmatprep.subr.mxu0 %v776
      %820 = vmatpush1.msra.mxu0 %v775
      %821 = vmatprep.subr.mxu0 %v778
      %822 = vmatpush1.msra.mxu0 %v777
      %823 = vmatprep.subr.mxu0 %v780
      %824 = vmatpush1.msra.mxu0 %v779
      %825 = vmatprep.subr.mxu0 %v782
      %826 = vmatpush1.msra.mxu0 %v781
      %827 = vmatprep.subr.mxu0 %v784
      %828 = vmatpush1.msra.mxu0 %v783
      %829 = vmatprep.subr.mxu0 %v786
      %830 = vmatpush1.msra.mxu0 %v785
      %831 = vmatprep.subr.mxu0 %v788
      %832 = vmatpush1.msra.mxu0 %v787
      %833 = vmatprep.subr.mxu0 %v790
      %834 = vmatpush1.msra.mxu0 %v789
      %835 = vmatprep.subr.mxu0 %v792
      %836 = vmatpush1.msra.mxu0 %v791
      %837 = vmatprep.subr.mxu0 %v794
      %838 = vmatpush1.msra.mxu0 %v793
      %839 = vmatprep.subr.mxu0 %v796
      %840 = vmatpush1.msra.mxu0 %v795
      %841 = vmatprep.subr.mxu0 %v798
      %842 = vmatpush1.msra.mxu0 %v797
      %843 = vmatprep.subr.mxu0 %v800
      %844 = vmatpush1.msra.mxu0 %v799
      %845 = vmatprep.subr.mxu0 %v802
      %846 = vmatpush1.msra.mxu0 %v801
      %847 = vmatprep.subr.mxu0 0.0
      %848 = vmatpush1.msra.mxu0 0.0
      %849 = vmatprep.subr.mxu0 0.0
      %850 = vmatpush1.msra.mxu0 0.0
      %851 = vmatprep.subr.mxu0 0.0
      %852 = vmatpush1.msra.mxu0 0.0
      %853 = vmatprep.subr.mxu0 0.0
      %854 = vmatpush1.msra.mxu0 0.0
      %855 = vmatprep.subr.mxu0 0.0
      %856 = vmatpush1.msra.mxu0 0.0
      %857 = vmatprep.subr.mxu0 0.0
      %858 = vmatpush1.msra.mxu0 0.0
      %859 = vmatprep.subr.mxu0 0.0
      %860 = vmatpush1.msra.mxu0 0.0
      %861 = vmatprep.subr.mxu0 0.0
      %862 = vmatpush1.msra.mxu0 0.0
      %863 = vmatprep.subr.mxu0 0.0
      %864 = vmatpush1.msra.mxu0 0.0
      %865 = vmatprep.subr.mxu0 0.0
      %866 = vmatpush1.msra.mxu0 0.0
      %867 = vmatprep.subr.mxu0 0.0
      %868 = vmatpush1.msra.mxu0 0.0
      %869 = vmatprep.subr.mxu0 0.0
      %870 = vmatpush1.msra.mxu0 0.0
      %871 = vmatprep.subr.mxu0 0.0
      %872 = vmatpush1.msra.mxu0 0.0
      %873 = vmatprep.subr.mxu0 0.0
      %874 = vmatpush1.msra.mxu0 0.0
      %875 = vmatprep.subr.mxu0 0.0
      %876 = vmatpush1.msra.mxu0 0.0
      %877 = vmatprep.subr.mxu0 0.0
      %878 = vmatpush1.msra.mxu0 0.0
      %879 = vmatprep.mubr.f32.mxu0 0.0
      %880 = vmatmul.mubr.f32.gmra.mrb[0].mxu0 %v768
      %v881 = vpop.f32.mrb[0].mxu0
      %v882 = vadd.f32 %v808, %v881
      %v883 = vpop.f32.mrb[0].mxu0
      %v884 = vadd.f32 %v812, %v883
      %885 = vdwg.mxu0
      %v886 = vsel %vm453, %v882, -inf
      %v887 = vsel %vm453, %v884, -inf
      %v888 = vmax.f32 %v886, %v887
      %889 = vmax.xlane.f32.xlu0 %v888
      %v890 = vpop.xlane.xlu0 %889
      %v891 = vrot.slane %v890, 4
      %v892 = vmax.f32 %v890, %v891
      %v893 = vrot.slane %v892, 2
      %v894 = vmax.f32 %v892, %v893
      %v895 = vrot.slane %v894, 1
      %v896 = vmax.f32 %v894, %v895
      %s897 = vtos %v896
      %v898 = vstv %s897
      %vm899 = vcmp.eq.f32.partialorder %v882, %v898
      %vm900 = vcmp.eq.f32.partialorder %v884, %v898
      %v901 = vsel %vm899, %v72, 256
      %v902 = vsel %vm900, %v73, 256
      %v903 = vsel %vm453, %v901, 2147483647
      %v904 = vsel %vm453, %v902, 2147483647
      %vm905 = vcmp.lt.s32.totalorder %v903, %v904
      %v906 = vsel %vm905, %v903, %v904
      %v907 = vand.u32 %v906, 65535
      %v908 = vshra.s32 %v906, 16
      %v909 = vcvt.s32.f32 %v907
      %v910 = vcvt.s32.f32 %v908
      %911 = vmin.xlane.f32.xlu0 %v910
      %v912 = vpop.xlane.xlu0 %911
      %vm913 = vcmp.eq.f32.partialorder %v910, %v912
      %v914 = vsel %vm913, %v909, inf
      %915 = vmin.xlane.f32.xlu0 %v914
      %v916 = vpop.xlane.xlu0 %915
      %v917 = vcvt.f32.s32 %v916
      %v918 = vcvt.f32.s32 %v912
      %v919 = vshll.u32 %v918, 16
      %v920 = vadd.s32 %v919, %v917
      %v921 = vrot.slane %v920, 4
      %vm922 = vcmp.lt.s32.totalorder %v920, %v921
      %v923 = vsel %vm922, %v920, %v921
      %v924 = vrot.slane %v923, 2
      %vm925 = vcmp.lt.s32.totalorder %v923, %v924
      %v926 = vsel %vm925, %v923, %v924
      %v927 = vrot.slane %v926, 1
      %vm928 = vcmp.lt.s32.totalorder %v926, %v927
      %v929 = vsel %vm928, %v926, %v927
      %s930 = vtos %v929
      %931 = sst [smem:[%s66]] %s930
    $region37: #{tpu_custom_call.1} parent=1 // pred_fallthru
      _
    %s932 = sld [smem:[#allocation4]]
    %s933 = scalar_lea.smem [#allocation12], 2
    %934 = sst [smem:[%s933]] %s932
    %s935 = sld [smem:[#allocation4]]
    %p936 = scmp.ne.s32.totalorder %s935, 0
    // Predicated region
    $region38: #{tpu_custom_call.1} parent=1 // pred_check
      %p937 = pneg %p936
    $region39: #{tpu_custom_call.1} parent=1 // pred_check_branch
      %939 = sbr.rel (%p937) target = $region41
    $region40: #{tpu_custom_call.1} parent=1 // pred_region
      %s940 = smul.u32 %s935, 4
      %s941 = scalar_lea.vmem [#allocation6], %s940
      %v942 = vld [vmem:[%s941] sm:$0xf]
      %v943 = vld [vmem:[#allocation2] sm:$0x1]
      %v944 = vld [vmem:[#allocation9] sm:$0xff]
      %v945 = vld [vmem:[#allocation9 + $0x8] sm:$0xff]
      %v946 = vld [vmem:[#allocation9 + $0x10] sm:$0xff]
      %v947 = vld [vmem:[#allocation9 + $0x18] sm:$0xff]
      %v948 = vld [vmem:[#allocation9 + $0x20] sm:$0xff]
      %v949 = vld [vmem:[#allocation9 + $0x28] sm:$0xff]
      %v950 = vld [vmem:[#allocation9 + $0x30] sm:$0xff]
      %v951 = vld [vmem:[#allocation9 + $0x38] sm:$0xff]
      %v952 = vld [vmem:[#allocation9 + $0x40] sm:$0xff]
      %v953 = vld [vmem:[#allocation9 + $0x48] sm:$0xff]
      %v954 = vld [vmem:[#allocation9 + $0x50] sm:$0xff]
      %v955 = vld [vmem:[#allocation9 + $0x58] sm:$0xff]
      %v956 = vld [vmem:[#allocation9 + $0x60] sm:$0xff]
      %v957 = vld [vmem:[#allocation9 + $0x68] sm:$0xff]
      %v958 = vld [vmem:[#allocation9 + $0x70] sm:$0xff]
      %v959 = vld [vmem:[#allocation9 + $0x78] sm:$0xff]
      %v960 = vld [vmem:[#allocation9 + $0x80] sm:$0xff]
      %v961 = vld [vmem:[#allocation9 + $0x88] sm:$0xff]
      %v962 = vld [vmem:[#allocation9 + $0x90] sm:$0xff]
      %v963 = vld [vmem:[#allocation9 + $0x98] sm:$0xff]
      %v964 = vld [vmem:[#allocation9 + $0xa0] sm:$0xff]
      %v965 = vld [vmem:[#allocation9 + $0xa8] sm:$0xff]
      %v966 = vld [vmem:[#allocation9 + $0xb0] sm:$0xff]
      %v967 = vld [vmem:[#allocation9 + $0xb8] sm:$0xff]
      %v968 = vld [vmem:[#allocation9 + $0xc0] sm:$0xff]
      %v969 = vld [vmem:[#allocation9 + $0xc8] sm:$0xff]
      %v970 = vld [vmem:[#allocation9 + $0xd0] sm:$0xff]
      %v971 = vld [vmem:[#allocation9 + $0xd8] sm:$0xff]
      %v972 = vld [vmem:[#allocation9 + $0xe0] sm:$0xff]
      %v973 = vld [vmem:[#allocation9 + $0xe8] sm:$0xff]
      %v974 = vld [vmem:[#allocation9 + $0xf0] sm:$0xff]
      %v975 = vld [vmem:[#allocation9 + $0xf8] sm:$0xff]
      %v976 = vld [vmem:[#allocation9 + $0x100] sm:$0xff]
      %v977 = vld [vmem:[#allocation9 + $0x108] sm:$0xff]
      %v978 = vld [vmem:[#allocation9 + $0x110] sm:$0xff]
      %v979 = vld [vmem:[#allocation9 + $0x118] sm:$0xff]
      %v980 = vld [vmem:[#allocation9 + $0x120] sm:$0xff]
      %v981 = vld [vmem:[#allocation9 + $0x128] sm:$0xff]
      %v982 = vld [vmem:[#allocation9 + $0x130] sm:$0xff]
      %v983 = vld [vmem:[#allocation9 + $0x138] sm:$0xff]
      %v984 = vld [vmem:[#allocation9 + $0x140] sm:$0xff]
      %v985 = vld [vmem:[#allocation9 + $0x148] sm:$0xff]
      %v986 = vld [vmem:[#allocation9 + $0x150] sm:$0xff]
      %v987 = vld [vmem:[#allocation9 + $0x158] sm:$0xff]
      %v988 = vld [vmem:[#allocation9 + $0x160] sm:$0xff]
      %v989 = vld [vmem:[#allocation9 + $0x168] sm:$0xff]
      %v990 = vld [vmem:[#allocation9 + $0x170] sm:$0xff]
      %v991 = vld [vmem:[#allocation9 + $0x178] sm:$0xff]
      %v992 = vld [vmem:[#allocation9 + $0x180] sm:$0xff]
      %v993 = vld [vmem:[#allocation9 + $0x188] sm:$0xff]
      %v994 = vld [vmem:[#allocation9 + $0x190] sm:$0xff]
      %v995 = vld [vmem:[#allocation9 + $0x198] sm:$0xff]
      %v996 = vld [vmem:[#allocation9 + $0x1a0] sm:$0xff]
      %v997 = vld [vmem:[#allocation9 + $0x1a8] sm:$0xff]
      %v998 = vld [vmem:[#allocation9 + $0x1b0] sm:$0xff]
      %v999 = vld [vmem:[#allocation9 + $0x1b8] sm:$0xff]
      %v1000 = vld [vmem:[#allocation9 + $0x1c0] sm:$0xff]
      %v1001 = vld [vmem:[#allocation9 + $0x1c8] sm:$0xff]
      %v1002 = vld [vmem:[#allocation9 + $0x1d0] sm:$0xff]
      %v1003 = vld [vmem:[#allocation9 + $0x1d8] sm:$0xff]
      %v1004 = vld [vmem:[#allocation9 + $0x1e0] sm:$0xff]
      %v1005 = vld [vmem:[#allocation9 + $0x1e8] sm:$0xff]
      %v1006 = vld [vmem:[#allocation9 + $0x1f0] sm:$0xff]
      %v1007 = vld [vmem:[#allocation9 + $0x1f8] sm:$0xff]
      %1008 = vmatprep.subr.mxu0 %v945
      %1009 = vmatpush1.msra.mxu0 %v944
      %1010 = vmatprep.subr.mxu0 %v949
      %1011 = vmatpush1.msra.mxu0 %v948
      %1012 = vmatprep.subr.mxu0 %v953
      %1013 = vmatpush1.msra.mxu0 %v952
      %1014 = vmatprep.subr.mxu0 %v957
      %1015 = vmatpush1.msra.mxu0 %v956
      %1016 = vmatprep.subr.mxu0 %v961
      %1017 = vmatpush1.msra.mxu0 %v960
      %1018 = vmatprep.subr.mxu0 %v965
      %1019 = vmatpush1.msra.mxu0 %v964
      %1020 = vmatprep.subr.mxu0 %v969
      %1021 = vmatpush1.msra.mxu0 %v968
      %1022 = vmatprep.subr.mxu0 %v973
      %1023 = vmatpush1.msra.mxu0 %v972
      %1024 = vmatprep.subr.mxu0 %v977
      %1025 = vmatpush1.msra.mxu0 %v976
      %1026 = vmatprep.subr.mxu0 %v981
      %1027 = vmatpush1.msra.mxu0 %v980
      %1028 = vmatprep.subr.mxu0 %v985
      %1029 = vmatpush1.msra.mxu0 %v984
      %1030 = vmatprep.subr.mxu0 %v989
      %1031 = vmatpush1.msra.mxu0 %v988
      %1032 = vmatprep.subr.mxu0 %v993
      %1033 = vmatpush1.msra.mxu0 %v992
      %1034 = vmatprep.subr.mxu0 %v997
      %1035 = vmatpush1.msra.mxu0 %v996
      %1036 = vmatprep.subr.mxu0 %v1001
      %1037 = vmatpush1.msra.mxu0 %v1000
      %1038 = vmatprep.subr.mxu0 %v1005
      %1039 = vmatpush1.msra.mxu0 %v1004
      %1040 = vmatprep.subr.mxu0 0.0
      %1041 = vmatpush1.msra.mxu0 0.0
      %1042 = vmatprep.subr.mxu0 0.0
      %1043 = vmatpush1.msra.mxu0 0.0
      %1044 = vmatprep.subr.mxu0 0.0
      %1045 = vmatpush1.msra.mxu0 0.0
      %1046 = vmatprep.subr.mxu0 0.0
      %1047 = vmatpush1.msra.mxu0 0.0
      %1048 = vmatprep.subr.mxu0 0.0
      %1049 = vmatpush1.msra.mxu0 0.0
      %1050 = vmatprep.subr.mxu0 0.0
      %1051 = vmatpush1.msra.mxu0 0.0
      %1052 = vmatprep.subr.mxu0 0.0
      %1053 = vmatpush1.msra.mxu0 0.0
      %1054 = vmatprep.subr.mxu0 0.0
      %1055 = vmatpush1.msra.mxu0 0.0
      %1056 = vmatprep.subr.mxu0 0.0
      %1057 = vmatpush1.msra.mxu0 0.0
      %1058 = vmatprep.subr.mxu0 0.0
      %1059 = vmatpush1.msra.mxu0 0.0
      %1060 = vmatprep.subr.mxu0 0.0
      %1061 = vmatpush1.msra.mxu0 0.0
      %1062 = vmatprep.subr.mxu0 0.0
      %1063 = vmatpush1.msra.mxu0 0.0
      %1064 = vmatprep.subr.mxu0 0.0
      %1065 = vmatpush1.msra.mxu0 0.0
      %1066 = vmatprep.subr.mxu0 0.0
      %1067 = vmatpush1.msra.mxu0 0.0
      %1068 = vmatprep.subr.mxu0 0.0
      %1069 = vmatpush1.msra.mxu0 0.0
      %1070 = vmatprep.subr.mxu0 0.0
      %1071 = vmatpush1.msra.mxu0 0.0
      %1072 = vmatprep.mubr.f32.mxu0 0.0
      %1073 = vmatmul.mubr.f32.gmra.mrb[0].mxu0 %v943
      %v1074 = vpop.f32.mrb[0].mxu0
      %v1075 = vadd.f32 0.0, %v1074
      %v1076 = vpop.f32.mrb[0].mxu0
      %v1077 = vadd.f32 0.0, %v1076
      %1078 = vdwg.mxu0
      %1079 = vmatprep.subr.mxu0 %v947
      %1080 = vmatpush1.msra.mxu0 %v946
      %1081 = vmatprep.subr.mxu0 %v951
      %1082 = vmatpush1.msra.mxu0 %v950
      %1083 = vmatprep.subr.mxu0 %v955
      %1084 = vmatpush1.msra.mxu0 %v954
      %1085 = vmatprep.subr.mxu0 %v959
      %1086 = vmatpush1.msra.mxu0 %v958
      %1087 = vmatprep.subr.mxu0 %v963
      %1088 = vmatpush1.msra.mxu0 %v962
      %1089 = vmatprep.subr.mxu0 %v967
      %1090 = vmatpush1.msra.mxu0 %v966
      %1091 = vmatprep.subr.mxu0 %v971
      %1092 = vmatpush1.msra.mxu0 %v970
      %1093 = vmatprep.subr.mxu0 %v975
      %1094 = vmatpush1.msra.mxu0 %v974
      %1095 = vmatprep.subr.mxu0 %v979
      %1096 = vmatpush1.msra.mxu0 %v978
      %1097 = vmatprep.subr.mxu0 %v983
      %1098 = vmatpush1.msra.mxu0 %v982
      %1099 = vmatprep.subr.mxu0 %v987
      %1100 = vmatpush1.msra.mxu0 %v986
      %1101 = vmatprep.subr.mxu0 %v991
      %1102 = vmatpush1.msra.mxu0 %v990
      %1103 = vmatprep.subr.mxu0 %v995
      %1104 = vmatpush1.msra.mxu0 %v994
      %1105 = vmatprep.subr.mxu0 %v999
      %1106 = vmatpush1.msra.mxu0 %v998
      %1107 = vmatprep.subr.mxu0 %v1003
      %1108 = vmatpush1.msra.mxu0 %v1002
      %1109 = vmatprep.subr.mxu0 %v1007
      %1110 = vmatpush1.msra.mxu0 %v1006
      %1111 = vmatprep.subr.mxu0 0.0
      %1112 = vmatpush1.msra.mxu0 0.0
      %1113 = vmatprep.subr.mxu0 0.0
      %1114 = vmatpush1.msra.mxu0 0.0
      %1115 = vmatprep.subr.mxu0 0.0
      %1116 = vmatpush1.msra.mxu0 0.0
      %1117 = vmatprep.subr.mxu0 0.0
      %1118 = vmatpush1.msra.mxu0 0.0
      %1119 = vmatprep.subr.mxu0 0.0
      %1120 = vmatpush1.msra.mxu0 0.0
      %1121 = vmatprep.subr.mxu0 0.0
      %1122 = vmatpush1.msra.mxu0 0.0
      %1123 = vmatprep.subr.mxu0 0.0
      %1124 = vmatpush1.msra.mxu0 0.0
      %1125 = vmatprep.subr.mxu0 0.0
      %1126 = vmatpush1.msra.mxu0 0.0
      %1127 = vmatprep.subr.mxu0 0.0
      %1128 = vmatpush1.msra.mxu0 0.0
      %1129 = vmatprep.subr.mxu0 0.0
      %1130 = vmatpush1.msra.mxu0 0.0
      %1131 = vmatprep.subr.mxu0 0.0
      %1132 = vmatpush1.msra.mxu0 0.0
      %1133 = vmatprep.subr.mxu0 0.0
      %1134 = vmatpush1.msra.mxu0 0.0
      %1135 = vmatprep.subr.mxu0 0.0
      %1136 = vmatpush1.msra.mxu0 0.0
      %1137 = vmatprep.subr.mxu0 0.0
      %1138 = vmatpush1.msra.mxu0 0.0
      %1139 = vmatprep.subr.mxu0 0.0
      %1140 = vmatpush1.msra.mxu0 0.0
      %1141 = vmatprep.subr.mxu0 0.0
      %1142 = vmatpush1.msra.mxu0 0.0
      %1143 = vmatprep.mubr.f32.mxu0 0.0
      %1144 = vmatmul.mubr.f32.gmra.mrb[0].mxu0 %v943
      %v1145 = vpop.f32.mrb[0].mxu0
      %v1146 = vadd.f32 0.0, %v1145
      %v1147 = vpop.f32.mrb[0].mxu0
      %v1148 = vadd.f32 0.0, %v1147
      %1149 = vdwg.mxu0
      %v1154 = vcombine.low %v1075, %v1077
      %v1155 = vcombine.low %v1146, %v1148
      %v1157 = vunpack.c.l.s4 1966171168
      %v1158 = vunpack.c.0.s8 %v1157
      %v1159 = vlaneseq
      %v1160 = vshrl.u32 %v1159, 7
      %v1161 = vsub.s32 %v1158, %v1160
      %v1162 = vrot.slane %v1154, %v1161
      %v1164 = vunpack.c.l.s4 1966171168
      %v1165 = vunpack.c.0.s8 %v1164
      %v1166 = vlaneseq
      %v1167 = vshrl.u32 %v1166, 7
      %v1168 = vsub.s32 %v1165, %v1167
      %v1169 = vrot.slane %v1155, %v1168
      %v1170 = vcombine.low %v1162, %v1169
      %v1172 = vunpack.c.l.s4 1966171168
      %v1173 = vunpack.c.0.s8 %v1172
      %v1174 = vlaneseq
      %v1175 = vshrl.u32 %v1174, 7
      %v1176 = vsub.s32 %v1173, %v1175
      %v1177 = vrot.slane %v1170, %v1176
      %v1179 = vadd.f32 %v942, %v1177
      %v1180 = vxor.u32 %v1179, 2147483648
      %v1181 = vmul.f32 %v1180, 1.442695
      %v1182 = vpow.pop %v1181
      %v1183 = vadd.f32 %v1182, 1.0
      %v1184 = vrcp.pop %v1183
      %v1185 = vmul.f32 1.0, %v1184
      %v1187 = vrot.slane %v1179, 3
      %v1189 = vtanh.pop %v1187
      %v1190 = vld [vmem:[#allocation3] sm:$0x1]
      %v1192 = vrot.slane %v1185, 1
      %v1194 = vmul.f32 %v1192, %v1190
      %v1195 = vmul.f32 %v1185, %v1189
      %v1196 = vadd.f32 %v1194, %v1195
      %v1197 = vtanh.pop %v1196
      %v1198 = vrot.slane %v1185, 2
      %v1200 = vmul.f32 %v1198, %v1197
      %1201 = vst [vmem:[#allocation3] sm:$0x1] %v1196
      %1202 = vst [vmem:[#allocation2] sm:$0x1] %v1200
      %v1203 = vld [vmem:[#allocation11] sm:$0xff]
      %v1204 = vld [vmem:[#allocation11 + $0x8] sm:$0xff]
      %v1205 = vld [vmem:[#allocation11 + $0x10] sm:$0xff]
      %v1206 = vld [vmem:[#allocation11 + $0x18] sm:$0xff]
      %v1207 = vld [vmem:[#allocation11 + $0x20] sm:$0xff]
      %v1208 = vld [vmem:[#allocation11 + $0x28] sm:$0xff]
      %v1209 = vld [vmem:[#allocation11 + $0x30] sm:$0xff]
      %v1210 = vld [vmem:[#allocation11 + $0x38] sm:$0xff]
      %v1211 = vld [vmem:[#allocation11 + $0x40] sm:$0xff]
      %v1212 = vld [vmem:[#allocation11 + $0x48] sm:$0xff]
      %v1213 = vld [vmem:[#allocation11 + $0x50] sm:$0xff]
      %v1214 = vld [vmem:[#allocation11 + $0x58] sm:$0xff]
      %v1215 = vld [vmem:[#allocation11 + $0x60] sm:$0xff]
      %v1216 = vld [vmem:[#allocation11 + $0x68] sm:$0xff]
      %v1217 = vld [vmem:[#allocation11 + $0x70] sm:$0xff]
      %v1218 = vld [vmem:[#allocation11 + $0x78] sm:$0xff]
      %v1219 = vld [vmem:[#allocation11 + $0x80] sm:$0xff]
      %v1220 = vld [vmem:[#allocation11 + $0x88] sm:$0xff]
      %v1221 = vld [vmem:[#allocation11 + $0x90] sm:$0xff]
      %v1222 = vld [vmem:[#allocation11 + $0x98] sm:$0xff]
      %v1223 = vld [vmem:[#allocation11 + $0xa0] sm:$0xff]
      %v1224 = vld [vmem:[#allocation11 + $0xa8] sm:$0xff]
      %v1225 = vld [vmem:[#allocation11 + $0xb0] sm:$0xff]
      %v1226 = vld [vmem:[#allocation11 + $0xb8] sm:$0xff]
      %v1227 = vld [vmem:[#allocation11 + $0xc0] sm:$0xff]
      %v1228 = vld [vmem:[#allocation11 + $0xc8] sm:$0xff]
      %v1229 = vld [vmem:[#allocation11 + $0xd0] sm:$0xff]
      %v1230 = vld [vmem:[#allocation11 + $0xd8] sm:$0xff]
      %v1231 = vld [vmem:[#allocation11 + $0xe0] sm:$0xff]
      %v1232 = vld [vmem:[#allocation11 + $0xe8] sm:$0xff]
      %v1233 = vld [vmem:[#allocation11 + $0xf0] sm:$0xff]
      %v1234 = vld [vmem:[#allocation11 + $0xf8] sm:$0xff]
      %v1235 = vld [vmem:[%s4] sm:$0x3]
      %v1237 = vlaneseq
      %v1238 = vshrl.u32 %v1237, 7
      %v1239 = vsub.s32 0, %v1238
      %v1240 = vrot.slane %v1235, %v1239
      %v1241 = vlaneseq
      %v1242 = vshrl.u32 %v1241, 7
      %v1243 = vsub.s32 1, %v1242
      %v1244 = vrot.slane %v1235, %v1243
      %1247 = vmatprep.subr.mxu0 %v1204
      %1248 = vmatpush1.msra.mxu0 %v1203
      %1249 = vmatprep.subr.mxu0 %v1206
      %1250 = vmatpush1.msra.mxu0 %v1205
      %1251 = vmatprep.subr.mxu0 %v1208
      %1252 = vmatpush1.msra.mxu0 %v1207
      %1253 = vmatprep.subr.mxu0 %v1210
      %1254 = vmatpush1.msra.mxu0 %v1209
      %1255 = vmatprep.subr.mxu0 %v1212
      %1256 = vmatpush1.msra.mxu0 %v1211
      %1257 = vmatprep.subr.mxu0 %v1214
      %1258 = vmatpush1.msra.mxu0 %v1213
      %1259 = vmatprep.subr.mxu0 %v1216
      %1260 = vmatpush1.msra.mxu0 %v1215
      %1261 = vmatprep.subr.mxu0 %v1218
      %1262 = vmatpush1.msra.mxu0 %v1217
      %1263 = vmatprep.subr.mxu0 %v1220
      %1264 = vmatpush1.msra.mxu0 %v1219
      %1265 = vmatprep.subr.mxu0 %v1222
      %1266 = vmatpush1.msra.mxu0 %v1221
      %1267 = vmatprep.subr.mxu0 %v1224
      %1268 = vmatpush1.msra.mxu0 %v1223
      %1269 = vmatprep.subr.mxu0 %v1226
      %1270 = vmatpush1.msra.mxu0 %v1225
      %1271 = vmatprep.subr.mxu0 %v1228
      %1272 = vmatpush1.msra.mxu0 %v1227
      %1273 = vmatprep.subr.mxu0 %v1230
      %1274 = vmatpush1.msra.mxu0 %v1229
      %1275 = vmatprep.subr.mxu0 %v1232
      %1276 = vmatpush1.msra.mxu0 %v1231
      %1277 = vmatprep.subr.mxu0 %v1234
      %1278 = vmatpush1.msra.mxu0 %v1233
      %1279 = vmatprep.subr.mxu0 0.0
      %1280 = vmatpush1.msra.mxu0 0.0
      %1281 = vmatprep.subr.mxu0 0.0
      %1282 = vmatpush1.msra.mxu0 0.0
      %1283 = vmatprep.subr.mxu0 0.0
      %1284 = vmatpush1.msra.mxu0 0.0
      %1285 = vmatprep.subr.mxu0 0.0
      %1286 = vmatpush1.msra.mxu0 0.0
      %1287 = vmatprep.subr.mxu0 0.0
      %1288 = vmatpush1.msra.mxu0 0.0
      %1289 = vmatprep.subr.mxu0 0.0
      %1290 = vmatpush1.msra.mxu0 0.0
      %1291 = vmatprep.subr.mxu0 0.0
      %1292 = vmatpush1.msra.mxu0 0.0
      %1293 = vmatprep.subr.mxu0 0.0
      %1294 = vmatpush1.msra.mxu0 0.0
      %1295 = vmatprep.subr.mxu0 0.0
      %1296 = vmatpush1.msra.mxu0 0.0
      %1297 = vmatprep.subr.mxu0 0.0
      %1298 = vmatpush1.msra.mxu0 0.0
      %1299 = vmatprep.subr.mxu0 0.0
      %1300 = vmatpush1.msra.mxu0 0.0
      %1301 = vmatprep.subr.mxu0 0.0
      %1302 = vmatpush1.msra.mxu0 0.0
      %1303 = vmatprep.subr.mxu0 0.0
      %1304 = vmatpush1.msra.mxu0 0.0
      %1305 = vmatprep.subr.mxu0 0.0
      %1306 = vmatpush1.msra.mxu0 0.0
      %1307 = vmatprep.subr.mxu0 0.0
      %1308 = vmatpush1.msra.mxu0 0.0
      %1309 = vmatprep.subr.mxu0 0.0
      %1310 = vmatpush1.msra.mxu0 0.0
      %1311 = vmatprep.mubr.f32.mxu0 0.0
      %1312 = vmatmul.mubr.f32.gmra.mrb[0].mxu0 %v1200
      %v1313 = vpop.f32.mrb[0].mxu0
      %v1314 = vadd.f32 %v1240, %v1313
      %v1315 = vpop.f32.mrb[0].mxu0
      %v1316 = vadd.f32 %v1244, %v1315
      %1317 = vdwg.mxu0
      %v1318 = vsel %vm453, %v1314, -inf
      %v1319 = vsel %vm453, %v1316, -inf
      %v1320 = vmax.f32 %v1318, %v1319
      %1321 = vmax.xlane.f32.xlu0 %v1320
      %v1322 = vpop.xlane.xlu0 %1321
      %v1323 = vrot.slane %v1322, 4
      %v1324 = vmax.f32 %v1322, %v1323
      %v1325 = vrot.slane %v1324, 2
      %v1326 = vmax.f32 %v1324, %v1325
      %v1327 = vrot.slane %v1326, 1
      %v1328 = vmax.f32 %v1326, %v1327
      %s1329 = vtos %v1328
      %v1330 = vstv %s1329
      %vm1331 = vcmp.eq.f32.partialorder %v1314, %v1330
      %vm1332 = vcmp.eq.f32.partialorder %v1316, %v1330
      %v1333 = vsel %vm1331, %v72, 256
      %v1334 = vsel %vm1332, %v73, 256
      %v1335 = vsel %vm453, %v1333, 2147483647
      %v1336 = vsel %vm453, %v1334, 2147483647
      %vm1337 = vcmp.lt.s32.totalorder %v1335, %v1336
      %v1338 = vsel %vm1337, %v1335, %v1336
      %v1339 = vand.u32 %v1338, 65535
      %v1340 = vshra.s32 %v1338, 16
      %v1341 = vcvt.s32.f32 %v1339
      %v1342 = vcvt.s32.f32 %v1340
      %1343 = vmin.xlane.f32.xlu0 %v1342
      %v1344 = vpop.xlane.xlu0 %1343
      %vm1345 = vcmp.eq.f32.partialorder %v1342, %v1344
      %v1346 = vsel %vm1345, %v1341, inf
      %1347 = vmin.xlane.f32.xlu0 %v1346
      %v1348 = vpop.xlane.xlu0 %1347
      %v1349 = vcvt.f32.s32 %v1348
      %v1350 = vcvt.f32.s32 %v1344
      %v1351 = vshll.u32 %v1350, 16
      %v1352 = vadd.s32 %v1351, %v1349
      %v1353 = vrot.slane %v1352, 4
      %vm1354 = vcmp.lt.s32.totalorder %v1352, %v1353
      %v1355 = vsel %vm1354, %v1352, %v1353
      %v1356 = vrot.slane %v1355, 2
      %vm1357 = vcmp.lt.s32.totalorder %v1355, %v1356
      %v1358 = vsel %vm1357, %v1355, %v1356
      %v1359 = vrot.slane %v1358, 1
      %vm1360 = vcmp.lt.s32.totalorder %v1358, %v1359
      %v1361 = vsel %vm1360, %v1358, %v1359
      %s1362 = vtos %v1361
      %1363 = sst [smem:[%s66]] %s1362
    $region41: #{tpu_custom_call.1} parent=1 // pred_fallthru
      _
    %s1364 = sld [smem:[#allocation4]]
    %s1365 = scalar_lea.smem [#allocation12], 3
    %1366 = sst [smem:[%s1365]] %s1364
    %s1367 = sld [smem:[#allocation4]]
    %p1368 = scmp.ne.s32.totalorder %s1367, 0
    // Predicated region
    $region42: #{tpu_custom_call.1} parent=1 // pred_check
      %p1369 = pneg %p1368
    $region43: #{tpu_custom_call.1} parent=1 // pred_check_branch
      %1371 = sbr.rel (%p1369) target = $region45
    $region44: #{tpu_custom_call.1} parent=1 // pred_region
      %s1372 = smul.u32 %s1367, 4
      %s1373 = scalar_lea.vmem [#allocation6], %s1372
      %v1374 = vld [vmem:[%s1373] sm:$0xf]
      %v1375 = vld [vmem:[#allocation2] sm:$0x1]
      %v1376 = vld [vmem:[#allocation9] sm:$0xff]
      %v1377 = vld [vmem:[#allocation9 + $0x8] sm:$0xff]
      %v1378 = vld [vmem:[#allocation9 + $0x10] sm:$0xff]
      %v1379 = vld [vmem:[#allocation9 + $0x18] sm:$0xff]
      %v1380 = vld [vmem:[#allocation9 + $0x20] sm:$0xff]
      %v1381 = vld [vmem:[#allocation9 + $0x28] sm:$0xff]
      %v1382 = vld [vmem:[#allocation9 + $0x30] sm:$0xff]
      %v1383 = vld [vmem:[#allocation9 + $0x38] sm:$0xff]
      %v1384 = vld [vmem:[#allocation9 + $0x40] sm:$0xff]
      %v1385 = vld [vmem:[#allocation9 + $0x48] sm:$0xff]
      %v1386 = vld [vmem:[#allocation9 + $0x50] sm:$0xff]
      %v1387 = vld [vmem:[#allocation9 + $0x58] sm:$0xff]
      %v1388 = vld [vmem:[#allocation9 + $0x60] sm:$0xff]
      %v1389 = vld [vmem:[#allocation9 + $0x68] sm:$0xff]
      %v1390 = vld [vmem:[#allocation9 + $0x70] sm:$0xff]
      %v1391 = vld [vmem:[#allocation9 + $0x78] sm:$0xff]
      %v1392 = vld [vmem:[#allocation9 + $0x80] sm:$0xff]
      %v1393 = vld [vmem:[#allocation9 + $0x88] sm:$0xff]
      %v1394 = vld [vmem:[#allocation9 + $0x90] sm:$0xff]
      %v1395 = vld [vmem:[#allocation9 + $0x98] sm:$0xff]
      %v1396 = vld [vmem:[#allocation9 + $0xa0] sm:$0xff]
      %v1397 = vld [vmem:[#allocation9 + $0xa8] sm:$0xff]
      %v1398 = vld [vmem:[#allocation9 + $0xb0] sm:$0xff]
      %v1399 = vld [vmem:[#allocation9 + $0xb8] sm:$0xff]
      %v1400 = vld [vmem:[#allocation9 + $0xc0] sm:$0xff]
      %v1401 = vld [vmem:[#allocation9 + $0xc8] sm:$0xff]
      %v1402 = vld [vmem:[#allocation9 + $0xd0] sm:$0xff]
      %v1403 = vld [vmem:[#allocation9 + $0xd8] sm:$0xff]
      %v1404 = vld [vmem:[#allocation9 + $0xe0] sm:$0xff]
      %v1405 = vld [vmem:[#allocation9 + $0xe8] sm:$0xff]
      %v1406 = vld [vmem:[#allocation9 + $0xf0] sm:$0xff]
      %v1407 = vld [vmem:[#allocation9 + $0xf8] sm:$0xff]
      %v1408 = vld [vmem:[#allocation9 + $0x100] sm:$0xff]
      %v1409 = vld [vmem:[#allocation9 + $0x108] sm:$0xff]
      %v1410 = vld [vmem:[#allocation9 + $0x110] sm:$0xff]
      %v1411 = vld [vmem:[#allocation9 + $0x118] sm:$0xff]
      %v1412 = vld [vmem:[#allocation9 + $0x120] sm:$0xff]
      %v1413 = vld [vmem:[#allocation9 + $0x128] sm:$0xff]
      %v1414 = vld [vmem:[#allocation9 + $0x130] sm:$0xff]
      %v1415 = vld [vmem:[#allocation9 + $0x138] sm:$0xff]
      %v1416 = vld [vmem:[#allocation9 + $0x140] sm:$0xff]
      %v1417 = vld [vmem:[#allocation9 + $0x148] sm:$0xff]
      %v1418 = vld [vmem:[#allocation9 + $0x150] sm:$0xff]
      %v1419 = vld [vmem:[#allocation9 + $0x158] sm:$0xff]
      %v1420 = vld [vmem:[#allocation9 + $0x160] sm:$0xff]
      %v1421 = vld [vmem:[#allocation9 + $0x168] sm:$0xff]
      %v1422 = vld [vmem:[#allocation9 + $0x170] sm:$0xff]
      %v1423 = vld [vmem:[#allocation9 + $0x178] sm:$0xff]
      %v1424 = vld [vmem:[#allocation9 + $0x180] sm:$0xff]
      %v1425 = vld [vmem:[#allocation9 + $0x188] sm:$0xff]
      %v1426 = vld [vmem:[#allocation9 + $0x190] sm:$0xff]
      %v1427 = vld [vmem:[#allocation9 + $0x198] sm:$0xff]
      %v1428 = vld [vmem:[#allocation9 + $0x1a0] sm:$0xff]
      %v1429 = vld [vmem:[#allocation9 + $0x1a8] sm:$0xff]
      %v1430 = vld [vmem:[#allocation9 + $0x1b0] sm:$0xff]
      %v1431 = vld [vmem:[#allocation9 + $0x1b8] sm:$0xff]
      %v1432 = vld [vmem:[#allocation9 + $0x1c0] sm:$0xff]
      %v1433 = vld [vmem:[#allocation9 + $0x1c8] sm:$0xff]
      %v1434 = vld [vmem:[#allocation9 + $0x1d0] sm:$0xff]
      %v1435 = vld [vmem:[#allocation9 + $0x1d8] sm:$0xff]
      %v1436 = vld [vmem:[#allocation9 + $0x1e0] sm:$0xff]
      %v1437 = vld [vmem:[#allocation9 + $0x1e8] sm:$0xff]
      %v1438 = vld [vmem:[#allocation9 + $0x1f0] sm:$0xff]
      %v1439 = vld [vmem:[#allocation9 + $0x1f8] sm:$0xff]
      %1440 = vmatprep.subr.mxu0 %v1377
      %1441 = vmatpush1.msra.mxu0 %v1376
      %1442 = vmatprep.subr.mxu0 %v1381
      %1443 = vmatpush1.msra.mxu0 %v1380
      %1444 = vmatprep.subr.mxu0 %v1385
      %1445 = vmatpush1.msra.mxu0 %v1384
      %1446 = vmatprep.subr.mxu0 %v1389
      %1447 = vmatpush1.msra.mxu0 %v1388
      %1448 = vmatprep.subr.mxu0 %v1393
      %1449 = vmatpush1.msra.mxu0 %v1392
      %1450 = vmatprep.subr.mxu0 %v1397
      %1451 = vmatpush1.msra.mxu0 %v1396
      %1452 = vmatprep.subr.mxu0 %v1401
      %1453 = vmatpush1.msra.mxu0 %v1400
      %1454 = vmatprep.subr.mxu0 %v1405
      %1455 = vmatpush1.msra.mxu0 %v1404
      %1456 = vmatprep.subr.mxu0 %v1409
      %1457 = vmatpush1.msra.mxu0 %v1408
      %1458 = vmatprep.subr.mxu0 %v1413
      %1459 = vmatpush1.msra.mxu0 %v1412
      %1460 = vmatprep.subr.mxu0 %v1417
      %1461 = vmatpush1.msra.mxu0 %v1416
      %1462 = vmatprep.subr.mxu0 %v1421
      %1463 = vmatpush1.msra.mxu0 %v1420
      %1464 = vmatprep.subr.mxu0 %v1425
      %1465 = vmatpush1.msra.mxu0 %v1424
      %1466 = vmatprep.subr.mxu0 %v1429
      %1467 = vmatpush1.msra.mxu0 %v1428
      %1468 = vmatprep.subr.mxu0 %v1433
      %1469 = vmatpush1.msra.mxu0 %v1432
      %1470 = vmatprep.subr.mxu0 %v1437
      %1471 = vmatpush1.msra.mxu0 %v1436
      %1472 = vmatprep.subr.mxu0 0.0
      %1473 = vmatpush1.msra.mxu0 0.0
      %1474 = vmatprep.subr.mxu0 0.0
      %1475 = vmatpush1.msra.mxu0 0.0
      %1476 = vmatprep.subr.mxu0 0.0
      %1477 = vmatpush1.msra.mxu0 0.0
      %1478 = vmatprep.subr.mxu0 0.0
      %1479 = vmatpush1.msra.mxu0 0.0
      %1480 = vmatprep.subr.mxu0 0.0
      %1481 = vmatpush1.msra.mxu0 0.0
      %1482 = vmatprep.subr.mxu0 0.0
      %1483 = vmatpush1.msra.mxu0 0.0
      %1484 = vmatprep.subr.mxu0 0.0
      %1485 = vmatpush1.msra.mxu0 0.0
      %1486 = vmatprep.subr.mxu0 0.0
      %1487 = vmatpush1.msra.mxu0 0.0
      %1488 = vmatprep.subr.mxu0 0.0
      %1489 = vmatpush1.msra.mxu0 0.0
      %1490 = vmatprep.subr.mxu0 0.0
      %1491 = vmatpush1.msra.mxu0 0.0
      %1492 = vmatprep.subr.mxu0 0.0
      %1493 = vmatpush1.msra.mxu0 0.0
      %1494 = vmatprep.subr.mxu0 0.0
      %1495 = vmatpush1.msra.mxu0 0.0
      %1496 = vmatprep.subr.mxu0 0.0
      %1497 = vmatpush1.msra.mxu0 0.0
      %1498 = vmatprep.subr.mxu0 0.0
      %1499 = vmatpush1.msra.mxu0 0.0
      %1500 = vmatprep.subr.mxu0 0.0
      %1501 = vmatpush1.msra.mxu0 0.0
      %1502 = vmatprep.subr.mxu0 0.0
      %1503 = vmatpush1.msra.mxu0 0.0
      %1504 = vmatprep.mubr.f32.mxu0 0.0
      %1505 = vmatmul.mubr.f32.gmra.mrb[0].mxu0 %v1375
      %v1506 = vpop.f32.mrb[0].mxu0
      %v1507 = vadd.f32 0.0, %v1506
      %v1508 = vpop.f32.mrb[0].mxu0
      %v1509 = vadd.f32 0.0, %v1508
      %1510 = vdwg.mxu0
      %1511 = vmatprep.subr.mxu0 %v1379
      %1512 = vmatpush1.msra.mxu0 %v1378
      %1513 = vmatprep.subr.mxu0 %v1383
      %1514 = vmatpush1.msra.mxu0 %v1382
      %1515 = vmatprep.subr.mxu0 %v1387
      %1516 = vmatpush1.msra.mxu0 %v1386
      %1517 = vmatprep.subr.mxu0 %v1391
      %1518 = vmatpush1.msra.mxu0 %v1390
      %1519 = vmatprep.subr.mxu0 %v1395
      %1520 = vmatpush1.msra.mxu0 %v1394
      %1521 = vmatprep.subr.mxu0 %v1399
      %1522 = vmatpush1.msra.mxu0 %v1398
      %1523 = vmatprep.subr.mxu0 %v1403
      %1524 = vmatpush1.msra.mxu0 %v1402
      %1525 = vmatprep.subr.mxu0 %v1407
      %1526 = vmatpush1.msra.mxu0 %v1406
      %1527 = vmatprep.subr.mxu0 %v1411
      %1528 = vmatpush1.msra.mxu0 %v1410
      %1529 = vmatprep.subr.mxu0 %v1415
      %1530 = vmatpush1.msra.mxu0 %v1414
      %1531 = vmatprep.subr.mxu0 %v1419
      %1532 = vmatpush1.msra.mxu0 %v1418
      %1533 = vmatprep.subr.mxu0 %v1423
      %1534 = vmatpush1.msra.mxu0 %v1422
      %1535 = vmatprep.subr.mxu0 %v1427
      %1536 = vmatpush1.msra.mxu0 %v1426
      %1537 = vmatprep.subr.mxu0 %v1431
      %1538 = vmatpush1.msra.mxu0 %v1430
      %1539 = vmatprep.subr.mxu0 %v1435
      %1540 = vmatpush1.msra.mxu0 %v1434
      %1541 = vmatprep.subr.mxu0 %v1439
      %1542 = vmatpush1.msra.mxu0 %v1438
      %1543 = vmatprep.subr.mxu0 0.0
      %1544 = vmatpush1.msra.mxu0 0.0
      %1545 = vmatprep.subr.mxu0 0.0
      %1546 = vmatpush1.msra.mxu0 0.0
      %1547 = vmatprep.subr.mxu0 0.0
      %1548 = vmatpush1.msra.mxu0 0.0
      %1549 = vmatprep.subr.mxu0 0.0
      %1550 = vmatpush1.msra.mxu0 0.0
      %1551 = vmatprep.subr.mxu0 0.0
      %1552 = vmatpush1.msra.mxu0 0.0
      %1553 = vmatprep.subr.mxu0 0.0
      %1554 = vmatpush1.msra.mxu0 0.0
      %1555 = vmatprep.subr.mxu0 0.0
      %1556 = vmatpush1.msra.mxu0 0.0
      %1557 = vmatprep.subr.mxu0 0.0
      %1558 = vmatpush1.msra.mxu0 0.0
      %1559 = vmatprep.subr.mxu0 0.0
      %1560 = vmatpush1.msra.mxu0 0.0
      %1561 = vmatprep.subr.mxu0 0.0
      %1562 = vmatpush1.msra.mxu0 0.0
      %1563 = vmatprep.subr.mxu0 0.0
      %1564 = vmatpush1.msra.mxu0 0.0
      %1565 = vmatprep.subr.mxu0 0.0
      %1566 = vmatpush1.msra.mxu0 0.0
      %1567 = vmatprep.subr.mxu0 0.0
      %1568 = vmatpush1.msra.mxu0 0.0
      %1569 = vmatprep.subr.mxu0 0.0
      %1570 = vmatpush1.msra.mxu0 0.0
      %1571 = vmatprep.subr.mxu0 0.0
      %1572 = vmatpush1.msra.mxu0 0.0
      %1573 = vmatprep.subr.mxu0 0.0
      %1574 = vmatpush1.msra.mxu0 0.0
      %1575 = vmatprep.mubr.f32.mxu0 0.0
      %1576 = vmatmul.mubr.f32.gmra.mrb[0].mxu0 %v1375
      %v1577 = vpop.f32.mrb[0].mxu0
      %v1578 = vadd.f32 0.0, %v1577
      %v1579 = vpop.f32.mrb[0].mxu0
      %v1580 = vadd.f32 0.0, %v1579
      %1581 = vdwg.mxu0
      %v1586 = vcombine.low %v1507, %v1509
      %v1587 = vcombine.low %v1578, %v1580
      %v1589 = vunpack.c.l.s4 1966171168
      %v1590 = vunpack.c.0.s8 %v1589
      %v1591 = vlaneseq
      %v1592 = vshrl.u32 %v1591, 7
      %v1593 = vsub.s32 %v1590, %v1592
      %v1594 = vrot.slane %v1586, %v1593
      %v1596 = vunpack.c.l.s4 1966171168
      %v1597 = vunpack.c.0.s8 %v1596
      %v1598 = vlaneseq
      %v1599 = vshrl.u32 %v1598, 7
      %v1600 = vsub.s32 %v1597, %v1599
      %v1601 = vrot.slane %v1587, %v1600
      %v1602 = vcombine.low %v1594, %v1601
      %v1604 = vunpack.c.l.s4 1966171168
      %v1605 = vunpack.c.0.s8 %v1604
      %v1606 = vlaneseq
      %v1607 = vshrl.u32 %v1606, 7
      %v1608 = vsub.s32 %v1605, %v1607
      %v1609 = vrot.slane %v1602, %v1608
      %v1611 = vadd.f32 %v1374, %v1609
      %v1612 = vxor.u32 %v1611, 2147483648
      %v1613 = vmul.f32 %v1612, 1.442695
      %v1614 = vpow.pop %v1613
      %v1615 = vadd.f32 %v1614, 1.0
      %v1616 = vrcp.pop %v1615
      %v1617 = vmul.f32 1.0, %v1616
      %v1619 = vrot.slane %v1611, 3
      %v1621 = vtanh.pop %v1619
      %v1622 = vld [vmem:[#allocation3] sm:$0x1]
      %v1624 = vrot.slane %v1617, 1
      %v1626 = vmul.f32 %v1624, %v1622
      %v1627 = vmul.f32 %v1617, %v1621
      %v1628 = vadd.f32 %v1626, %v1627
      %v1629 = vtanh.pop %v1628
      %v1630 = vrot.slane %v1617, 2
      %v1632 = vmul.f32 %v1630, %v1629
      %1633 = vst [vmem:[#allocation3] sm:$0x1] %v1628
      %1634 = vst [vmem:[#allocation2] sm:$0x1] %v1632
      %v1635 = vld [vmem:[#allocation11] sm:$0xff]
      %v1636 = vld [vmem:[#allocation11 + $0x8] sm:$0xff]
      %v1637 = vld [vmem:[#allocation11 + $0x10] sm:$0xff]
      %v1638 = vld [vmem:[#allocation11 + $0x18] sm:$0xff]
      %v1639 = vld [vmem:[#allocation11 + $0x20] sm:$0xff]
      %v1640 = vld [vmem:[#allocation11 + $0x28] sm:$0xff]
      %v1641 = vld [vmem:[#allocation11 + $0x30] sm:$0xff]
      %v1642 = vld [vmem:[#allocation11 + $0x38] sm:$0xff]
      %v1643 = vld [vmem:[#allocation11 + $0x40] sm:$0xff]
      %v1644 = vld [vmem:[#allocation11 + $0x48] sm:$0xff]
      %v1645 = vld [vmem:[#allocation11 + $0x50] sm:$0xff]
      %v1646 = vld [vmem:[#allocation11 + $0x58] sm:$0xff]
      %v1647 = vld [vmem:[#allocation11 + $0x60] sm:$0xff]
      %v1648 = vld [vmem:[#allocation11 + $0x68] sm:$0xff]
      %v1649 = vld [vmem:[#allocation11 + $0x70] sm:$0xff]
      %v1650 = vld [vmem:[#allocation11 + $0x78] sm:$0xff]
      %v1651 = vld [vmem:[#allocation11 + $0x80] sm:$0xff]
      %v1652 = vld [vmem:[#allocation11 + $0x88] sm:$0xff]
      %v1653 = vld [vmem:[#allocation11 + $0x90] sm:$0xff]
      %v1654 = vld [vmem:[#allocation11 + $0x98] sm:$0xff]
      %v1655 = vld [vmem:[#allocation11 + $0xa0] sm:$0xff]
      %v1656 = vld [vmem:[#allocation11 + $0xa8] sm:$0xff]
      %v1657 = vld [vmem:[#allocation11 + $0xb0] sm:$0xff]
      %v1658 = vld [vmem:[#allocation11 + $0xb8] sm:$0xff]
      %v1659 = vld [vmem:[#allocation11 + $0xc0] sm:$0xff]
      %v1660 = vld [vmem:[#allocation11 + $0xc8] sm:$0xff]
      %v1661 = vld [vmem:[#allocation11 + $0xd0] sm:$0xff]
      %v1662 = vld [vmem:[#allocation11 + $0xd8] sm:$0xff]
      %v1663 = vld [vmem:[#allocation11 + $0xe0] sm:$0xff]
      %v1664 = vld [vmem:[#allocation11 + $0xe8] sm:$0xff]
      %v1665 = vld [vmem:[#allocation11 + $0xf0] sm:$0xff]
      %v1666 = vld [vmem:[#allocation11 + $0xf8] sm:$0xff]
      %v1667 = vld [vmem:[%s4] sm:$0x3]
      %v1669 = vlaneseq
      %v1670 = vshrl.u32 %v1669, 7
      %v1671 = vsub.s32 0, %v1670
      %v1672 = vrot.slane %v1667, %v1671
      %v1673 = vlaneseq
      %v1674 = vshrl.u32 %v1673, 7
      %v1675 = vsub.s32 1, %v1674
      %v1676 = vrot.slane %v1667, %v1675
      %1679 = vmatprep.subr.mxu0 %v1636
      %1680 = vmatpush1.msra.mxu0 %v1635
      %1681 = vmatprep.subr.mxu0 %v1638
      %1682 = vmatpush1.msra.mxu0 %v1637
      %1683 = vmatprep.subr.mxu0 %v1640
      %1684 = vmatpush1.msra.mxu0 %v1639
      %1685 = vmatprep.subr.mxu0 %v1642
      %1686 = vmatpush1.msra.mxu0 %v1641
      %1687 = vmatprep.subr.mxu0 %v1644
      %1688 = vmatpush1.msra.mxu0 %v1643
      %1689 = vmatprep.subr.mxu0 %v1646
      %1690 = vmatpush1.msra.mxu0 %v1645
      %1691 = vmatprep.subr.mxu0 %v1648
      %1692 = vmatpush1.msra.mxu0 %v1647
      %1693 = vmatprep.subr.mxu0 %v1650
      %1694 = vmatpush1.msra.mxu0 %v1649
      %1695 = vmatprep.subr.mxu0 %v1652
      %1696 = vmatpush1.msra.mxu0 %v1651
      %1697 = vmatprep.subr.mxu0 %v1654
      %1698 = vmatpush1.msra.mxu0 %v1653
      %1699 = vmatprep.subr.mxu0 %v1656
      %1700 = vmatpush1.msra.mxu0 %v1655
      %1701 = vmatprep.subr.mxu0 %v1658
      %1702 = vmatpush1.msra.mxu0 %v1657
      %1703 = vmatprep.subr.mxu0 %v1660
      %1704 = vmatpush1.msra.mxu0 %v1659
      %1705 = vmatprep.subr.mxu0 %v1662
      %1706 = vmatpush1.msra.mxu0 %v1661
      %1707 = vmatprep.subr.mxu0 %v1664
      %1708 = vmatpush1.msra.mxu0 %v1663
      %1709 = vmatprep.subr.mxu0 %v1666
      %1710 = vmatpush1.msra.mxu0 %v1665
      %1711 = vmatprep.subr.mxu0 0.0
      %1712 = vmatpush1.msra.mxu0 0.0
      %1713 = vmatprep.subr.mxu0 0.0
      %1714 = vmatpush1.msra.mxu0 0.0
      %1715 = vmatprep.subr.mxu0 0.0
      %1716 = vmatpush1.msra.mxu0 0.0
      %1717 = vmatprep.subr.mxu0 0.0
      %1718 = vmatpush1.msra.mxu0 0.0
      %1719 = vmatprep.subr.mxu0 0.0
      %1720 = vmatpush1.msra.mxu0 0.0
      %1721 = vmatprep.subr.mxu0 0.0
      %1722 = vmatpush1.msra.mxu0 0.0
      %1723 = vmatprep.subr.mxu0 0.0
      %1724 = vmatpush1.msra.mxu0 0.0
      %1725 = vmatprep.subr.mxu0 0.0
      %1726 = vmatpush1.msra.mxu0 0.0
      %1727 = vmatprep.subr.mxu0 0.0
      %1728 = vmatpush1.msra.mxu0 0.0
      %1729 = vmatprep.subr.mxu0 0.0
      %1730 = vmatpush1.msra.mxu0 0.0
      %1731 = vmatprep.subr.mxu0 0.0
      %1732 = vmatpush1.msra.mxu0 0.0
      %1733 = vmatprep.subr.mxu0 0.0
      %1734 = vmatpush1.msra.mxu0 0.0
      %1735 = vmatprep.subr.mxu0 0.0
      %1736 = vmatpush1.msra.mxu0 0.0
      %1737 = vmatprep.subr.mxu0 0.0
      %1738 = vmatpush1.msra.mxu0 0.0
      %1739 = vmatprep.subr.mxu0 0.0
      %1740 = vmatpush1.msra.mxu0 0.0
      %1741 = vmatprep.subr.mxu0 0.0
      %1742 = vmatpush1.msra.mxu0 0.0
      %1743 = vmatprep.mubr.f32.mxu0 0.0
      %1744 = vmatmul.mubr.f32.gmra.mrb[0].mxu0 %v1632
      %v1745 = vpop.f32.mrb[0].mxu0
      %v1746 = vadd.f32 %v1672, %v1745
      %v1747 = vpop.f32.mrb[0].mxu0
      %v1748 = vadd.f32 %v1676, %v1747
      %1749 = vdwg.mxu0
      %v1750 = vsel %vm453, %v1746, -inf
      %v1751 = vsel %vm453, %v1748, -inf
      %v1752 = vmax.f32 %v1750, %v1751
      %1753 = vmax.xlane.f32.xlu0 %v1752
      %v1754 = vpop.xlane.xlu0 %1753
      %v1755 = vrot.slane %v1754, 4
      %v1756 = vmax.f32 %v1754, %v1755
      %v1757 = vrot.slane %v1756, 2
      %v1758 = vmax.f32 %v1756, %v1757
      %v1759 = vrot.slane %v1758, 1
      %v1760 = vmax.f32 %v1758, %v1759
      %s1761 = vtos %v1760
      %v1762 = vstv %s1761
      %vm1763 = vcmp.eq.f32.partialorder %v1746, %v1762
      %vm1764 = vcmp.eq.f32.partialorder %v1748, %v1762
      %v1765 = vsel %vm1763, %v72, 256
      %v1766 = vsel %vm1764, %v73, 256
      %v1767 = vsel %vm453, %v1765, 2147483647
      %v1768 = vsel %vm453, %v1766, 2147483647
      %vm1769 = vcmp.lt.s32.totalorder %v1767, %v1768
      %v1770 = vsel %vm1769, %v1767, %v1768
      %v1771 = vand.u32 %v1770, 65535
      %v1772 = vshra.s32 %v1770, 16
      %v1773 = vcvt.s32.f32 %v1771
      %v1774 = vcvt.s32.f32 %v1772
      %1775 = vmin.xlane.f32.xlu0 %v1774
      %v1776 = vpop.xlane.xlu0 %1775
      %vm1777 = vcmp.eq.f32.partialorder %v1774, %v1776
      %v1778 = vsel %vm1777, %v1773, inf
      %1779 = vmin.xlane.f32.xlu0 %v1778
      %v1780 = vpop.xlane.xlu0 %1779
      %v1781 = vcvt.f32.s32 %v1780
      %v1782 = vcvt.f32.s32 %v1776
      %v1783 = vshll.u32 %v1782, 16
      %v1784 = vadd.s32 %v1783, %v1781
      %v1785 = vrot.slane %v1784, 4
      %vm1786 = vcmp.lt.s32.totalorder %v1784, %v1785
      %v1787 = vsel %vm1786, %v1784, %v1785
      %v1788 = vrot.slane %v1787, 2
      %vm1789 = vcmp.lt.s32.totalorder %v1787, %v1788
      %v1790 = vsel %vm1789, %v1787, %v1788
      %v1791 = vrot.slane %v1790, 1
      %vm1792 = vcmp.lt.s32.totalorder %v1790, %v1791
      %v1793 = vsel %vm1792, %v1790, %v1791
      %s1794 = vtos %v1793
      %1795 = sst [smem:[%s66]] %s1794
    $region45: #{tpu_custom_call.1} parent=1 // pred_fallthru
      _
    %s1796 = sld [smem:[#allocation4]]
    %s1797 = scalar_lea.smem [#allocation12], 4
    %1798 = sst [smem:[%s1797]] %s1796
    %s1799 = sld [smem:[#allocation4]]
    %p1800 = scmp.ne.s32.totalorder %s1799, 0
    // Predicated region
    $region46: #{tpu_custom_call.1} parent=1 // pred_check
      %p1801 = pneg %p1800
    $region47: #{tpu_custom_call.1} parent=1 // pred_check_branch
      %1803 = sbr.rel (%p1801) target = $region49
    $region48: #{tpu_custom_call.1} parent=1 // pred_region
      %s1804 = smul.u32 %s1799, 4
      %s1805 = scalar_lea.vmem [#allocation6], %s1804
      %v1806 = vld [vmem:[%s1805] sm:$0xf]
      %v1807 = vld [vmem:[#allocation2] sm:$0x1]
      %v1808 = vld [vmem:[#allocation9] sm:$0xff]
      %v1809 = vld [vmem:[#allocation9 + $0x8] sm:$0xff]
      %v1810 = vld [vmem:[#allocation9 + $0x10] sm:$0xff]
      %v1811 = vld [vmem:[#allocation9 + $0x18] sm:$0xff]
      %v1812 = vld [vmem:[#allocation9 + $0x20] sm:$0xff]
      %v1813 = vld [vmem:[#allocation9 + $0x28] sm:$0xff]
      %v1814 = vld [vmem:[#allocation9 + $0x30] sm:$0xff]
      %v1815 = vld [vmem:[#allocation9 + $0x38] sm:$0xff]
      %v1816 = vld [vmem:[#allocation9 + $0x40] sm:$0xff]
      %v1817 = vld [vmem:[#allocation9 + $0x48] sm:$0xff]
      %v1818 = vld [vmem:[#allocation9 + $0x50] sm:$0xff]
      %v1819 = vld [vmem:[#allocation9 + $0x58] sm:$0xff]
      %v1820 = vld [vmem:[#allocation9 + $0x60] sm:$0xff]
      %v1821 = vld [vmem:[#allocation9 + $0x68] sm:$0xff]
      %v1822 = vld [vmem:[#allocation9 + $0x70] sm:$0xff]
      %v1823 = vld [vmem:[#allocation9 + $0x78] sm:$0xff]
      %v1824 = vld [vmem:[#allocation9 + $0x80] sm:$0xff]
      %v1825 = vld [vmem:[#allocation9 + $0x88] sm:$0xff]
      %v1826 = vld [vmem:[#allocation9 + $0x90] sm:$0xff]
      %v1827 = vld [vmem:[#allocation9 + $0x98] sm:$0xff]
      %v1828 = vld [vmem:[#allocation9 + $0xa0] sm:$0xff]
      %v1829 = vld [vmem:[#allocation9 + $0xa8] sm:$0xff]
      %v1830 = vld [vmem:[#allocation9 + $0xb0] sm:$0xff]
      %v1831 = vld [vmem:[#allocation9 + $0xb8] sm:$0xff]
      %v1832 = vld [vmem:[#allocation9 + $0xc0] sm:$0xff]
      %v1833 = vld [vmem:[#allocation9 + $0xc8] sm:$0xff]
      %v1834 = vld [vmem:[#allocation9 + $0xd0] sm:$0xff]
      %v1835 = vld [vmem:[#allocation9 + $0xd8] sm:$0xff]
      %v1836 = vld [vmem:[#allocation9 + $0xe0] sm:$0xff]
      %v1837 = vld [vmem:[#allocation9 + $0xe8] sm:$0xff]
      %v1838 = vld [vmem:[#allocation9 + $0xf0] sm:$0xff]
      %v1839 = vld [vmem:[#allocation9 + $0xf8] sm:$0xff]
      %v1840 = vld [vmem:[#allocation9 + $0x100] sm:$0xff]
      %v1841 = vld [vmem:[#allocation9 + $0x108] sm:$0xff]
      %v1842 = vld [vmem:[#allocation9 + $0x110] sm:$0xff]
      %v1843 = vld [vmem:[#allocation9 + $0x118] sm:$0xff]
      %v1844 = vld [vmem:[#allocation9 + $0x120] sm:$0xff]
      %v1845 = vld [vmem:[#allocation9 + $0x128] sm:$0xff]
      %v1846 = vld [vmem:[#allocation9 + $0x130] sm:$0xff]
      %v1847 = vld [vmem:[#allocation9 + $0x138] sm:$0xff]
      %v1848 = vld [vmem:[#allocation9 + $0x140] sm:$0xff]
      %v1849 = vld [vmem:[#allocation9 + $0x148] sm:$0xff]
      %v1850 = vld [vmem:[#allocation9 + $0x150] sm:$0xff]
      %v1851 = vld [vmem:[#allocation9 + $0x158] sm:$0xff]
      %v1852 = vld [vmem:[#allocation9 + $0x160] sm:$0xff]
      %v1853 = vld [vmem:[#allocation9 + $0x168] sm:$0xff]
      %v1854 = vld [vmem:[#allocation9 + $0x170] sm:$0xff]
      %v1855 = vld [vmem:[#allocation9 + $0x178] sm:$0xff]
      %v1856 = vld [vmem:[#allocation9 + $0x180] sm:$0xff]
      %v1857 = vld [vmem:[#allocation9 + $0x188] sm:$0xff]
      %v1858 = vld [vmem:[#allocation9 + $0x190] sm:$0xff]
      %v1859 = vld [vmem:[#allocation9 + $0x198] sm:$0xff]
      %v1860 = vld [vmem:[#allocation9 + $0x1a0] sm:$0xff]
      %v1861 = vld [vmem:[#allocation9 + $0x1a8] sm:$0xff]
      %v1862 = vld [vmem:[#allocation9 + $0x1b0] sm:$0xff]
      %v1863 = vld [vmem:[#allocation9 + $0x1b8] sm:$0xff]
      %v1864 = vld [vmem:[#allocation9 + $0x1c0] sm:$0xff]
      %v1865 = vld [vmem:[#allocation9 + $0x1c8] sm:$0xff]
      %v1866 = vld [vmem:[#allocation9 + $0x1d0] sm:$0xff]
      %v1867 = vld [vmem:[#allocation9 + $0x1d8] sm:$0xff]
      %v1868 = vld [vmem:[#allocation9 + $0x1e0] sm:$0xff]
      %v1869 = vld [vmem:[#allocation9 + $0x1e8] sm:$0xff]
      %v1870 = vld [vmem:[#allocation9 + $0x1f0] sm:$0xff]
      %v1871 = vld [vmem:[#allocation9 + $0x1f8] sm:$0xff]
      %1872 = vmatprep.subr.mxu0 %v1809
      %1873 = vmatpush1.msra.mxu0 %v1808
      %1874 = vmatprep.subr.mxu0 %v1813
      %1875 = vmatpush1.msra.mxu0 %v1812
      %1876 = vmatprep.subr.mxu0 %v1817
      %1877 = vmatpush1.msra.mxu0 %v1816
      %1878 = vmatprep.subr.mxu0 %v1821
      %1879 = vmatpush1.msra.mxu0 %v1820
      %1880 = vmatprep.subr.mxu0 %v1825
      %1881 = vmatpush1.msra.mxu0 %v1824
      %1882 = vmatprep.subr.mxu0 %v1829
      %1883 = vmatpush1.msra.mxu0 %v1828
      %1884 = vmatprep.subr.mxu0 %v1833
      %1885 = vmatpush1.msra.mxu0 %v1832
      %1886 = vmatprep.subr.mxu0 %v1837
      %1887 = vmatpush1.msra.mxu0 %v1836
      %1888 = vmatprep.subr.mxu0 %v1841
      %1889 = vmatpush1.msra.mxu0 %v1840
      %1890 = vmatprep.subr.mxu0 %v1845
      %1891 = vmatpush1.msra.mxu0 %v1844
      %1892 = vmatprep.subr.mxu0 %v1849
      %1893 = vmatpush1.msra.mxu0 %v1848
      %1894 = vmatprep.subr.mxu0 %v1853
      %1895 = vmatpush1.msra.mxu0 %v1852
      %1896 = vmatprep.subr.mxu0 %v1857
      %1897 = vmatpush1.msra.mxu0 %v1856
      %1898 = vmatprep.subr.mxu0 %v1861
      %1899 = vmatpush1.msra.mxu0 %v1860
      %1900 = vmatprep.subr.mxu0 %v1865
      %1901 = vmatpush1.msra.mxu0 %v1864
      %1902 = vmatprep.subr.mxu0 %v1869
      %1903 = vmatpush1.msra.mxu0 %v1868
      %1904 = vmatprep.subr.mxu0 0.0
      %1905 = vmatpush1.msra.mxu0 0.0
      %1906 = vmatprep.subr.mxu0 0.0
      %1907 = vmatpush1.msra.mxu0 0.0
      %1908 = vmatprep.subr.mxu0 0.0
      %1909 = vmatpush1.msra.mxu0 0.0
      %1910 = vmatprep.subr.mxu0 0.0
      %1911 = vmatpush1.msra.mxu0 0.0
      %1912 = vmatprep.subr.mxu0 0.0
      %1913 = vmatpush1.msra.mxu0 0.0
      %1914 = vmatprep.subr.mxu0 0.0
      %1915 = vmatpush1.msra.mxu0 0.0
      %1916 = vmatprep.subr.mxu0 0.0
      %1917 = vmatpush1.msra.mxu0 0.0
      %1918 = vmatprep.subr.mxu0 0.0
      %1919 = vmatpush1.msra.mxu0 0.0
      %1920 = vmatprep.subr.mxu0 0.0
      %1921 = vmatpush1.msra.mxu0 0.0
      %1922 = vmatprep.subr.mxu0 0.0
      %1923 = vmatpush1.msra.mxu0 0.0
      %1924 = vmatprep.subr.mxu0 0.0
      %1925 = vmatpush1.msra.mxu0 0.0
      %1926 = vmatprep.subr.mxu0 0.0
      %1927 = vmatpush1.msra.mxu0 0.0
      %1928 = vmatprep.subr.mxu0 0.0
      %1929 = vmatpush1.msra.mxu0 0.0
      %1930 = vmatprep.subr.mxu0 0.0
      %1931 = vmatpush1.msra.mxu0 0.0
      %1932 = vmatprep.subr.mxu0 0.0
      %1933 = vmatpush1.msra.mxu0 0.0
      %1934 = vmatprep.subr.mxu0 0.0
      %1935 = vmatpush1.msra.mxu0 0.0
      %1936 = vmatprep.mubr.f32.mxu0 0.0
      %1937 = vmatmul.mubr.f32.gmra.mrb[0].mxu0 %v1807
      %v1938 = vpop.f32.mrb[0].mxu0
      %v1939 = vadd.f32 0.0, %v1938
      %v1940 = vpop.f32.mrb[0].mxu0
      %v1941 = vadd.f32 0.0, %v1940
      %1942 = vdwg.mxu0
      %1943 = vmatprep.subr.mxu0 %v1811
      %1944 = vmatpush1.msra.mxu0 %v1810
      %1945 = vmatprep.subr.mxu0 %v1815
      %1946 = vmatpush1.msra.mxu0 %v1814
      %1947 = vmatprep.subr.mxu0 %v1819
      %1948 = vmatpush1.msra.mxu0 %v1818
      %1949 = vmatprep.subr.mxu0 %v1823
      %1950 = vmatpush1.msra.mxu0 %v1822
      %1951 = vmatprep.subr.mxu0 %v1827
      %1952 = vmatpush1.msra.mxu0 %v1826
      %1953 = vmatprep.subr.mxu0 %v1831
      %1954 = vmatpush1.msra.mxu0 %v1830
      %1955 = vmatprep.subr.mxu0 %v1835
      %1956 = vmatpush1.msra.mxu0 %v1834
      %1957 = vmatprep.subr.mxu0 %v1839
      %1958 = vmatpush1.msra.mxu0 %v1838
      %1959 = vmatprep.subr.mxu0 %v1843
      %1960 = vmatpush1.msra.mxu0 %v1842
      %1961 = vmatprep.subr.mxu0 %v1847
      %1962 = vmatpush1.msra.mxu0 %v1846
      %1963 = vmatprep.subr.mxu0 %v1851
      %1964 = vmatpush1.msra.mxu0 %v1850
      %1965 = vmatprep.subr.mxu0 %v1855
      %1966 = vmatpush1.msra.mxu0 %v1854
      %1967 = vmatprep.subr.mxu0 %v1859
      %1968 = vmatpush1.msra.mxu0 %v1858
      %1969 = vmatprep.subr.mxu0 %v1863
      %1970 = vmatpush1.msra.mxu0 %v1862
      %1971 = vmatprep.subr.mxu0 %v1867
      %1972 = vmatpush1.msra.mxu0 %v1866
      %1973 = vmatprep.subr.mxu0 %v1871
      %1974 = vmatpush1.msra.mxu0 %v1870
      %1975 = vmatprep.subr.mxu0 0.0
      %1976 = vmatpush1.msra.mxu0 0.0
      %1977 = vmatprep.subr.mxu0 0.0
      %1978 = vmatpush1.msra.mxu0 0.0
      %1979 = vmatprep.subr.mxu0 0.0
      %1980 = vmatpush1.msra.mxu0 0.0
      %1981 = vmatprep.subr.mxu0 0.0
      %1982 = vmatpush1.msra.mxu0 0.0
      %1983 = vmatprep.subr.mxu0 0.0
      %1984 = vmatpush1.msra.mxu0 0.0
      %1985 = vmatprep.subr.mxu0 0.0
      %1986 = vmatpush1.msra.mxu0 0.0
      %1987 = vmatprep.subr.mxu0 0.0
      %1988 = vmatpush1.msra.mxu0 0.0
      %1989 = vmatprep.subr.mxu0 0.0
      %1990 = vmatpush1.msra.mxu0 0.0
      %1991 = vmatprep.subr.mxu0 0.0
      %1992 = vmatpush1.msra.mxu0 0.0
      %1993 = vmatprep.subr.mxu0 0.0
      %1994 = vmatpush1.msra.mxu0 0.0
      %1995 = vmatprep.subr.mxu0 0.0
      %1996 = vmatpush1.msra.mxu0 0.0
      %1997 = vmatprep.subr.mxu0 0.0
      %1998 = vmatpush1.msra.mxu0 0.0
      %1999 = vmatprep.subr.mxu0 0.0
      %2000 = vmatpush1.msra.mxu0 0.0
      %2001 = vmatprep.subr.mxu0 0.0
      %2002 = vmatpush1.msra.mxu0 0.0
      %2003 = vmatprep.subr.mxu0 0.0
      %2004 = vmatpush1.msra.mxu0 0.0
      %2005 = vmatprep.subr.mxu0 0.0
      %2006 = vmatpush1.msra.mxu0 0.0
      %2007 = vmatprep.mubr.f32.mxu0 0.0
      %2008 = vmatmul.mubr.f32.gmra.mrb[0].mxu0 %v1807
      %v2009 = vpop.f32.mrb[0].mxu0
      %v2010 = vadd.f32 0.0, %v2009
      %v2011 = vpop.f32.mrb[0].mxu0
      %v2012 = vadd.f32 0.0, %v2011
      %2013 = vdwg.mxu0
      %v2018 = vcombine.low %v1939, %v1941
      %v2019 = vcombine.low %v2010, %v2012
      %v2021 = vunpack.c.l.s4 1966171168
      %v2022 = vunpack.c.0.s8 %v2021
      %v2023 = vlaneseq
      %v2024 = vshrl.u32 %v2023, 7
      %v2025 = vsub.s32 %v2022, %v2024
      %v2026 = vrot.slane %v2018, %v2025
      %v2028 = vunpack.c.l.s4 1966171168
      %v2029 = vunpack.c.0.s8 %v2028
      %v2030 = vlaneseq
      %v2031 = vshrl.u32 %v2030, 7
      %v2032 = vsub.s32 %v2029, %v2031
      %v2033 = vrot.slane %v2019, %v2032
      %v2034 = vcombine.low %v2026, %v2033
      %v2036 = vunpack.c.l.s4 1966171168
      %v2037 = vunpack.c.0.s8 %v2036
      %v2038 = vlaneseq
      %v2039 = vshrl.u32 %v2038, 7
      %v2040 = vsub.s32 %v2037, %v2039
      %v2041 = vrot.slane %v2034, %v2040
      %v2043 = vadd.f32 %v1806, %v2041
      %v2044 = vxor.u32 %v2043, 2147483648
      %v2045 = vmul.f32 %v2044, 1.442695
      %v2046 = vpow.pop %v2045
      %v2047 = vadd.f32 %v2046, 1.0
      %v2048 = vrcp.pop %v2047
      %v2049 = vmul.f32 1.0, %v2048
      %v2051 = vrot.slane %v2043, 3
      %v2053 = vtanh.pop %v2051
      %v2054 = vld [vmem:[#allocation3] sm:$0x1]
      %v2056 = vrot.slane %v2049, 1
      %v2058 = vmul.f32 %v2056, %v2054
      %v2059 = vmul.f32 %v2049, %v2053
      %v2060 = vadd.f32 %v2058, %v2059
      %v2061 = vtanh.pop %v2060
      %v2062 = vrot.slane %v2049, 2
      %v2064 = vmul.f32 %v2062, %v2061
      %2065 = vst [vmem:[#allocation3] sm:$0x1] %v2060
      %2066 = vst [vmem:[#allocation2] sm:$0x1] %v2064
      %v2067 = vld [vmem:[#allocation11] sm:$0xff]
      %v2068 = vld [vmem:[#allocation11 + $0x8] sm:$0xff]
      %v2069 = vld [vmem:[#allocation11 + $0x10] sm:$0xff]
      %v2070 = vld [vmem:[#allocation11 + $0x18] sm:$0xff]
      %v2071 = vld [vmem:[#allocation11 + $0x20] sm:$0xff]
      %v2072 = vld [vmem:[#allocation11 + $0x28] sm:$0xff]
      %v2073 = vld [vmem:[#allocation11 + $0x30] sm:$0xff]
      %v2074 = vld [vmem:[#allocation11 + $0x38] sm:$0xff]
      %v2075 = vld [vmem:[#allocation11 + $0x40] sm:$0xff]
      %v2076 = vld [vmem:[#allocation11 + $0x48] sm:$0xff]
      %v2077 = vld [vmem:[#allocation11 + $0x50] sm:$0xff]
      %v2078 = vld [vmem:[#allocation11 + $0x58] sm:$0xff]
      %v2079 = vld [vmem:[#allocation11 + $0x60] sm:$0xff]
      %v2080 = vld [vmem:[#allocation11 + $0x68] sm:$0xff]
      %v2081 = vld [vmem:[#allocation11 + $0x70] sm:$0xff]
      %v2082 = vld [vmem:[#allocation11 + $0x78] sm:$0xff]
      %v2083 = vld [vmem:[#allocation11 + $0x80] sm:$0xff]
      %v2084 = vld [vmem:[#allocation11 + $0x88] sm:$0xff]
      %v2085 = vld [vmem:[#allocation11 + $0x90] sm:$0xff]
      %v2086 = vld [vmem:[#allocation11 + $0x98] sm:$0xff]
      %v2087 = vld [vmem:[#allocation11 + $0xa0] sm:$0xff]
      %v2088 = vld [vmem:[#allocation11 + $0xa8] sm:$0xff]
      %v2089 = vld [vmem:[#allocation11 + $0xb0] sm:$0xff]
      %v2090 = vld [vmem:[#allocation11 + $0xb8] sm:$0xff]
      %v2091 = vld [vmem:[#allocation11 + $0xc0] sm:$0xff]
      %v2092 = vld [vmem:[#allocation11 + $0xc8] sm:$0xff]
      %v2093 = vld [vmem:[#allocation11 + $0xd0] sm:$0xff]
      %v2094 = vld [vmem:[#allocation11 + $0xd8] sm:$0xff]
      %v2095 = vld [vmem:[#allocation11 + $0xe0] sm:$0xff]
      %v2096 = vld [vmem:[#allocation11 + $0xe8] sm:$0xff]
      %v2097 = vld [vmem:[#allocation11 + $0xf0] sm:$0xff]
      %v2098 = vld [vmem:[#allocation11 + $0xf8] sm:$0xff]
      %v2099 = vld [vmem:[%s4] sm:$0x3]
      %v2101 = vlaneseq
      %v2102 = vshrl.u32 %v2101, 7
      %v2103 = vsub.s32 0, %v2102
      %v2104 = vrot.slane %v2099, %v2103
      %v2105 = vlaneseq
      %v2106 = vshrl.u32 %v2105, 7
      %v2107 = vsub.s32 1, %v2106
      %v2108 = vrot.slane %v2099, %v2107
      %2111 = vmatprep.subr.mxu0 %v2068
      %2112 = vmatpush1.msra.mxu0 %v2067
      %2113 = vmatprep.subr.mxu0 %v2070
      %2114 = vmatpush1.msra.mxu0 %v2069
      %2115 = vmatprep.subr.mxu0 %v2072
      %2116 = vmatpush1.msra.mxu0 %v2071
      %2117 = vmatprep.subr.mxu0 %v2074
      %2118 = vmatpush1.msra.mxu0 %v2073
      %2119 = vmatprep.subr.mxu0 %v2076
      %2120 = vmatpush1.msra.mxu0 %v2075
      %2121 = vmatprep.subr.mxu0 %v2078
      %2122 = vmatpush1.msra.mxu0 %v2077
      %2123 = vmatprep.subr.mxu0 %v2080
      %2124 = vmatpush1.msra.mxu0 %v2079
      %2125 = vmatprep.subr.mxu0 %v2082
      %2126 = vmatpush1.msra.mxu0 %v2081
      %2127 = vmatprep.subr.mxu0 %v2084
      %2128 = vmatpush1.msra.mxu0 %v2083
      %2129 = vmatprep.subr.mxu0 %v2086
      %2130 = vmatpush1.msra.mxu0 %v2085
      %2131 = vmatprep.subr.mxu0 %v2088
      %2132 = vmatpush1.msra.mxu0 %v2087
      %2133 = vmatprep.subr.mxu0 %v2090
      %2134 = vmatpush1.msra.mxu0 %v2089
      %2135 = vmatprep.subr.mxu0 %v2092
      %2136 = vmatpush1.msra.mxu0 %v2091
      %2137 = vmatprep.subr.mxu0 %v2094
      %2138 = vmatpush1.msra.mxu0 %v2093
      %2139 = vmatprep.subr.mxu0 %v2096
      %2140 = vmatpush1.msra.mxu0 %v2095
      %2141 = vmatprep.subr.mxu0 %v2098
      %2142 = vmatpush1.msra.mxu0 %v2097
      %2143 = vmatprep.subr.mxu0 0.0
      %2144 = vmatpush1.msra.mxu0 0.0
      %2145 = vmatprep.subr.mxu0 0.0
      %2146 = vmatpush1.msra.mxu0 0.0
      %2147 = vmatprep.subr.mxu0 0.0
      %2148 = vmatpush1.msra.mxu0 0.0
      %2149 = vmatprep.subr.mxu0 0.0
      %2150 = vmatpush1.msra.mxu0 0.0
      %2151 = vmatprep.subr.mxu0 0.0
      %2152 = vmatpush1.msra.mxu0 0.0
      %2153 = vmatprep.subr.mxu0 0.0
      %2154 = vmatpush1.msra.mxu0 0.0
      %2155 = vmatprep.subr.mxu0 0.0
      %2156 = vmatpush1.msra.mxu0 0.0
      %2157 = vmatprep.subr.mxu0 0.0
      %2158 = vmatpush1.msra.mxu0 0.0
      %2159 = vmatprep.subr.mxu0 0.0
      %2160 = vmatpush1.msra.mxu0 0.0
      %2161 = vmatprep.subr.mxu0 0.0
      %2162 = vmatpush1.msra.mxu0 0.0
      %2163 = vmatprep.subr.mxu0 0.0
      %2164 = vmatpush1.msra.mxu0 0.0
      %2165 = vmatprep.subr.mxu0 0.0
      %2166 = vmatpush1.msra.mxu0 0.0
      %2167 = vmatprep.subr.mxu0 0.0
      %2168 = vmatpush1.msra.mxu0 0.0
      %2169 = vmatprep.subr.mxu0 0.0
      %2170 = vmatpush1.msra.mxu0 0.0
      %2171 = vmatprep.subr.mxu0 0.0
      %2172 = vmatpush1.msra.mxu0 0.0
      %2173 = vmatprep.subr.mxu0 0.0
      %2174 = vmatpush1.msra.mxu0 0.0
      %2175 = vmatprep.mubr.f32.mxu0 0.0
      %2176 = vmatmul.mubr.f32.gmra.mrb[0].mxu0 %v2064
      %v2177 = vpop.f32.mrb[0].mxu0
      %v2178 = vadd.f32 %v2104, %v2177
      %v2179 = vpop.f32.mrb[0].mxu0
      %v2180 = vadd.f32 %v2108, %v2179
      %2181 = vdwg.mxu0
      %v2182 = vsel %vm453, %v2178, -inf
      %v2183 = vsel %vm453, %v2180, -inf
      %v2184 = vmax.f32 %v2182, %v2183
      %2185 = vmax.xlane.f32.xlu0 %v2184
      %v2186 = vpop.xlane.xlu0 %2185
      %v2187 = vrot.slane %v2186, 4
      %v2188 = vmax.f32 %v2186, %v2187
      %v2189 = vrot.slane %v2188, 2
      %v2190 = vmax.f32 %v2188, %v2189
      %v2191 = vrot.slane %v2190, 1
      %v2192 = vmax.f32 %v2190, %v2191
      %s2193 = vtos %v2192
      %v2194 = vstv %s2193
      %vm2195 = vcmp.eq.f32.partialorder %v2178, %v2194
      %vm2196 = vcmp.eq.f32.partialorder %v2180, %v2194
      %v2197 = vsel %vm2195, %v72, 256
      %v2198 = vsel %vm2196, %v73, 256
      %v2199 = vsel %vm453, %v2197, 2147483647
      %v2200 = vsel %vm453, %v2198, 2147483647
      %vm2201 = vcmp.lt.s32.totalorder %v2199, %v2200
      %v2202 = vsel %vm2201, %v2199, %v2200
      %v2203 = vand.u32 %v2202, 65535
      %v2204 = vshra.s32 %v2202, 16
      %v2205 = vcvt.s32.f32 %v2203
      %v2206 = vcvt.s32.f32 %v2204
      %2207 = vmin.xlane.f32.xlu0 %v2206
      %v2208 = vpop.xlane.xlu0 %2207
      %vm2209 = vcmp.eq.f32.partialorder %v2206, %v2208
      %v2210 = vsel %vm2209, %v2205, inf
      %2211 = vmin.xlane.f32.xlu0 %v2210
      %v2212 = vpop.xlane.xlu0 %2211
      %v2213 = vcvt.f32.s32 %v2212
      %v2214 = vcvt.f32.s32 %v2208
      %v2215 = vshll.u32 %v2214, 16
      %v2216 = vadd.s32 %v2215, %v2213
      %v2217 = vrot.slane %v2216, 4
      %vm2218 = vcmp.lt.s32.totalorder %v2216, %v2217
      %v2219 = vsel %vm2218, %v2216, %v2217
      %v2220 = vrot.slane %v2219, 2
      %vm2221 = vcmp.lt.s32.totalorder %v2219, %v2220
      %v2222 = vsel %vm2221, %v2219, %v2220
      %v2223 = vrot.slane %v2222, 1
      %vm2224 = vcmp.lt.s32.totalorder %v2222, %v2223
      %v2225 = vsel %vm2224, %v2222, %v2223
      %s2226 = vtos %v2225
      %2227 = sst [smem:[%s66]] %s2226
    $region49: #{tpu_custom_call.1} parent=1 // pred_fallthru
      _
    %s2228 = sld [smem:[#allocation4]]
    %s2229 = scalar_lea.smem [#allocation12], 5
    %2230 = sst [smem:[%s2229]] %s2228
    %s2231 = sld [smem:[#allocation4]]
    %p2232 = scmp.ne.s32.totalorder %s2231, 0
    // Predicated region
    $region50: #{tpu_custom_call.1} parent=1 // pred_check
      %p2233 = pneg %p2232
    $region51: #{tpu_custom_call.1} parent=1 // pred_check_branch
      %2235 = sbr.rel (%p2233) target = $region53
    $region52: #{tpu_custom_call.1} parent=1 // pred_region
      %s2236 = smul.u32 %s2231, 4
      %s2237 = scalar_lea.vmem [#allocation6], %s2236
      %v2238 = vld [vmem:[%s2237] sm:$0xf]
      %v2239 = vld [vmem:[#allocation2] sm:$0x1]
      %v2240 = vld [vmem:[#allocation9] sm:$0xff]
      %v2241 = vld [vmem:[#allocation9 + $0x8] sm:$0xff]
      %v2242 = vld [vmem:[#allocation9 + $0x10] sm:$0xff]
      %v2243 = vld [vmem:[#allocation9 + $0x18] sm:$0xff]
      %v2244 = vld [vmem:[#allocation9 + $0x20] sm:$0xff]
      %v2245 = vld [vmem:[#allocation9 + $0x28] sm:$0xff]
      %v2246 = vld [vmem:[#allocation9 + $0x30] sm:$0xff]
      %v2247 = vld [vmem:[#allocation9 + $0x38] sm:$0xff]
      %v2248 = vld [vmem:[#allocation9 + $0x40] sm:$0xff]
      %v2249 = vld [vmem:[#allocation9 + $0x48] sm:$0xff]
      %v2250 = vld [vmem:[#allocation9 + $0x50] sm:$0xff]
      %v2251 = vld [vmem:[#allocation9 + $0x58] sm:$0xff]
      %v2252 = vld [vmem:[#allocation9 + $0x60] sm:$0xff]
      %v2253 = vld [vmem:[#allocation9 + $0x68] sm:$0xff]
      %v2254 = vld [vmem:[#allocation9 + $0x70] sm:$0xff]
      %v2255 = vld [vmem:[#allocation9 + $0x78] sm:$0xff]
      %v2256 = vld [vmem:[#allocation9 + $0x80] sm:$0xff]
      %v2257 = vld [vmem:[#allocation9 + $0x88] sm:$0xff]
      %v2258 = vld [vmem:[#allocation9 + $0x90] sm:$0xff]
      %v2259 = vld [vmem:[#allocation9 + $0x98] sm:$0xff]
      %v2260 = vld [vmem:[#allocation9 + $0xa0] sm:$0xff]
      %v2261 = vld [vmem:[#allocation9 + $0xa8] sm:$0xff]
      %v2262 = vld [vmem:[#allocation9 + $0xb0] sm:$0xff]
      %v2263 = vld [vmem:[#allocation9 + $0xb8] sm:$0xff]
      %v2264 = vld [vmem:[#allocation9 + $0xc0] sm:$0xff]
      %v2265 = vld [vmem:[#allocation9 + $0xc8] sm:$0xff]
      %v2266 = vld [vmem:[#allocation9 + $0xd0] sm:$0xff]
      %v2267 = vld [vmem:[#allocation9 + $0xd8] sm:$0xff]
      %v2268 = vld [vmem:[#allocation9 + $0xe0] sm:$0xff]
      %v2269 = vld [vmem:[#allocation9 + $0xe8] sm:$0xff]
      %v2270 = vld [vmem:[#allocation9 + $0xf0] sm:$0xff]
      %v2271 = vld [vmem:[#allocation9 + $0xf8] sm:$0xff]
      %v2272 = vld [vmem:[#allocation9 + $0x100] sm:$0xff]
      %v2273 = vld [vmem:[#allocation9 + $0x108] sm:$0xff]
      %v2274 = vld [vmem:[#allocation9 + $0x110] sm:$0xff]
      %v2275 = vld [vmem:[#allocation9 + $0x118] sm:$0xff]
      %v2276 = vld [vmem:[#allocation9 + $0x120] sm:$0xff]
      %v2277 = vld [vmem:[#allocation9 + $0x128] sm:$0xff]
      %v2278 = vld [vmem:[#allocation9 + $0x130] sm:$0xff]
      %v2279 = vld [vmem:[#allocation9 + $0x138] sm:$0xff]
      %v2280 = vld [vmem:[#allocation9 + $0x140] sm:$0xff]
      %v2281 = vld [vmem:[#allocation9 + $0x148] sm:$0xff]
      %v2282 = vld [vmem:[#allocation9 + $0x150] sm:$0xff]
      %v2283 = vld [vmem:[#allocation9 + $0x158] sm:$0xff]
      %v2284 = vld [vmem:[#allocation9 + $0x160] sm:$0xff]
      %v2285 = vld [vmem:[#allocation9 + $0x168] sm:$0xff]
      %v2286 = vld [vmem:[#allocation9 + $0x170] sm:$0xff]
      %v2287 = vld [vmem:[#allocation9 + $0x178] sm:$0xff]
      %v2288 = vld [vmem:[#allocation9 + $0x180] sm:$0xff]
      %v2289 = vld [vmem:[#allocation9 + $0x188] sm:$0xff]
      %v2290 = vld [vmem:[#allocation9 + $0x190] sm:$0xff]
      %v2291 = vld [vmem:[#allocation9 + $0x198] sm:$0xff]
      %v2292 = vld [vmem:[#allocation9 + $0x1a0] sm:$0xff]
      %v2293 = vld [vmem:[#allocation9 + $0x1a8] sm:$0xff]
      %v2294 = vld [vmem:[#allocation9 + $0x1b0] sm:$0xff]
      %v2295 = vld [vmem:[#allocation9 + $0x1b8] sm:$0xff]
      %v2296 = vld [vmem:[#allocation9 + $0x1c0] sm:$0xff]
      %v2297 = vld [vmem:[#allocation9 + $0x1c8] sm:$0xff]
      %v2298 = vld [vmem:[#allocation9 + $0x1d0] sm:$0xff]
      %v2299 = vld [vmem:[#allocation9 + $0x1d8] sm:$0xff]
      %v2300 = vld [vmem:[#allocation9 + $0x1e0] sm:$0xff]
      %v2301 = vld [vmem:[#allocation9 + $0x1e8] sm:$0xff]
      %v2302 = vld [vmem:[#allocation9 + $0x1f0] sm:$0xff]
      %v2303 = vld [vmem:[#allocation9 + $0x1f8] sm:$0xff]
      %2304 = vmatprep.subr.mxu0 %v2241
      %2305 = vmatpush1.msra.mxu0 %v2240
      %2306 = vmatprep.subr.mxu0 %v2245
      %2307 = vmatpush1.msra.mxu0 %v2244
      %2308 = vmatprep.subr.mxu0 %v2249
      %2309 = vmatpush1.msra.mxu0 %v2248
      %2310 = vmatprep.subr.mxu0 %v2253
      %2311 = vmatpush1.msra.mxu0 %v2252
      %2312 = vmatprep.subr.mxu0 %v2257
      %2313 = vmatpush1.msra.mxu0 %v2256
      %2314 = vmatprep.subr.mxu0 %v2261
      %2315 = vmatpush1.msra.mxu0 %v2260
      %2316 = vmatprep.subr.mxu0 %v2265
      %2317 = vmatpush1.msra.mxu0 %v2264
      %2318 = vmatprep.subr.mxu0 %v2269
      %2319 = vmatpush1.msra.mxu0 %v2268
      %2320 = vmatprep.subr.mxu0 %v2273
      %2321 = vmatpush1.msra.mxu0 %v2272
      %2322 = vmatprep.subr.mxu0 %v2277
      %2323 = vmatpush1.msra.mxu0 %v2276
      %2324 = vmatprep.subr.mxu0 %v2281
      %2325 = vmatpush1.msra.mxu0 %v2280
      %2326 = vmatprep.subr.mxu0 %v2285
      %2327 = vmatpush1.msra.mxu0 %v2284
      %2328 = vmatprep.subr.mxu0 %v2289
      %2329 = vmatpush1.msra.mxu0 %v2288
      %2330 = vmatprep.subr.mxu0 %v2293
      %2331 = vmatpush1.msra.mxu0 %v2292
      %2332 = vmatprep.subr.mxu0 %v2297
      %2333 = vmatpush1.msra.mxu0 %v2296
      %2334 = vmatprep.subr.mxu0 %v2301
      %2335 = vmatpush1.msra.mxu0 %v2300
      %2336 = vmatprep.subr.mxu0 0.0
      %2337 = vmatpush1.msra.mxu0 0.0
      %2338 = vmatprep.subr.mxu0 0.0
      %2339 = vmatpush1.msra.mxu0 0.0
      %2340 = vmatprep.subr.mxu0 0.0
      %2341 = vmatpush1.msra.mxu0 0.0
      %2342 = vmatprep.subr.mxu0 0.0
      %2343 = vmatpush1.msra.mxu0 0.0
      %2344 = vmatprep.subr.mxu0 0.0
      %2345 = vmatpush1.msra.mxu0 0.0
      %2346 = vmatprep.subr.mxu0 0.0
      %2347 = vmatpush1.msra.mxu0 0.0
      %2348 = vmatprep.subr.mxu0 0.0
      %2349 = vmatpush1.msra.mxu0 0.0
      %2350 = vmatprep.subr.mxu0 0.0
      %2351 = vmatpush1.msra.mxu0 0.0
      %2352 = vmatprep.subr.mxu0 0.0
      %2353 = vmatpush1.msra.mxu0 0.0
      %2354 = vmatprep.subr.mxu0 0.0
      %2355 = vmatpush1.msra.mxu0 0.0
      %2356 = vmatprep.subr.mxu0 0.0
      %2357 = vmatpush1.msra.mxu0 0.0
      %2358 = vmatprep.subr.mxu0 0.0
      %2359 = vmatpush1.msra.mxu0 0.0
      %2360 = vmatprep.subr.mxu0 0.0
      %2361 = vmatpush1.msra.mxu0 0.0
      %2362 = vmatprep.subr.mxu0 0.0
      %2363 = vmatpush1.msra.mxu0 0.0
      %2364 = vmatprep.subr.mxu0 0.0
      %2365 = vmatpush1.msra.mxu0 0.0
      %2366 = vmatprep.subr.mxu0 0.0
      %2367 = vmatpush1.msra.mxu0 0.0
      %2368 = vmatprep.mubr.f32.mxu0 0.0
      %2369 = vmatmul.mubr.f32.gmra.mrb[0].mxu0 %v2239
      %v2370 = vpop.f32.mrb[0].mxu0
      %v2371 = vadd.f32 0.0, %v2370
      %v2372 = vpop.f32.mrb[0].mxu0
      %v2373 = vadd.f32 0.0, %v2372
      %2374 = vdwg.mxu0
      %2375 = vmatprep.subr.mxu0 %v2243
      %2376 = vmatpush1.msra.mxu0 %v2242
      %2377 = vmatprep.subr.mxu0 %v2247
      %2378 = vmatpush1.msra.mxu0 %v2246
      %2379 = vmatprep.subr.mxu0 %v2251
      %2380 = vmatpush1.msra.mxu0 %v2250
      %2381 = vmatprep.subr.mxu0 %v2255
      %2382 = vmatpush1.msra.mxu0 %v2254
      %2383 = vmatprep.subr.mxu0 %v2259
      %2384 = vmatpush1.msra.mxu0 %v2258
      %2385 = vmatprep.subr.mxu0 %v2263
      %2386 = vmatpush1.msra.mxu0 %v2262
      %2387 = vmatprep.subr.mxu0 %v2267
      %2388 = vmatpush1.msra.mxu0 %v2266
      %2389 = vmatprep.subr.mxu0 %v2271
      %2390 = vmatpush1.msra.mxu0 %v2270
      %2391 = vmatprep.subr.mxu0 %v2275
      %2392 = vmatpush1.msra.mxu0 %v2274
      %2393 = vmatprep.subr.mxu0 %v2279
      %2394 = vmatpush1.msra.mxu0 %v2278
      %2395 = vmatprep.subr.mxu0 %v2283
      %2396 = vmatpush1.msra.mxu0 %v2282
      %2397 = vmatprep.subr.mxu0 %v2287
      %2398 = vmatpush1.msra.mxu0 %v2286
      %2399 = vmatprep.subr.mxu0 %v2291
      %2400 = vmatpush1.msra.mxu0 %v2290
      %2401 = vmatprep.subr.mxu0 %v2295
      %2402 = vmatpush1.msra.mxu0 %v2294
      %2403 = vmatprep.subr.mxu0 %v2299
      %2404 = vmatpush1.msra.mxu0 %v2298
      %2405 = vmatprep.subr.mxu0 %v2303
      %2406 = vmatpush1.msra.mxu0 %v2302
      %2407 = vmatprep.subr.mxu0 0.0
      %2408 = vmatpush1.msra.mxu0 0.0
      %2409 = vmatprep.subr.mxu0 0.0
      %2410 = vmatpush1.msra.mxu0 0.0
      %2411 = vmatprep.subr.mxu0 0.0
      %2412 = vmatpush1.msra.mxu0 0.0
      %2413 = vmatprep.subr.mxu0 0.0
      %2414 = vmatpush1.msra.mxu0 0.0
      %2415 = vmatprep.subr.mxu0 0.0
      %2416 = vmatpush1.msra.mxu0 0.0
      %2417 = vmatprep.subr.mxu0 0.0
      %2418 = vmatpush1.msra.mxu0 0.0
      %2419 = vmatprep.subr.mxu0 0.0
      %2420 = vmatpush1.msra.mxu0 0.0
      %2421 = vmatprep.subr.mxu0 0.0
      %2422 = vmatpush1.msra.mxu0 0.0
      %2423 = vmatprep.subr.mxu0 0.0
      %2424 = vmatpush1.msra.mxu0 0.0
      %2425 = vmatprep.subr.mxu0 0.0
      %2426 = vmatpush1.msra.mxu0 0.0
      %2427 = vmatprep.subr.mxu0 0.0
      %2428 = vmatpush1.msra.mxu0 0.0
      %2429 = vmatprep.subr.mxu0 0.0
      %2430 = vmatpush1.msra.mxu0 0.0
      %2431 = vmatprep.subr.mxu0 0.0
      %2432 = vmatpush1.msra.mxu0 0.0
      %2433 = vmatprep.subr.mxu0 0.0
      %2434 = vmatpush1.msra.mxu0 0.0
      %2435 = vmatprep.subr.mxu0 0.0
      %2436 = vmatpush1.msra.mxu0 0.0
      %2437 = vmatprep.subr.mxu0 0.0
      %2438 = vmatpush1.msra.mxu0 0.0
      %2439 = vmatprep.mubr.f32.mxu0 0.0
      %2440 = vmatmul.mubr.f32.gmra.mrb[0].mxu0 %v2239
      %v2441 = vpop.f32.mrb[0].mxu0
      %v2442 = vadd.f32 0.0, %v2441
      %v2443 = vpop.f32.mrb[0].mxu0
      %v2444 = vadd.f32 0.0, %v2443
      %2445 = vdwg.mxu0
      %v2450 = vcombine.low %v2371, %v2373
      %v2451 = vcombine.low %v2442, %v2444
      %v2453 = vunpack.c.l.s4 1966171168
      %v2454 = vunpack.c.0.s8 %v2453
      %v2455 = vlaneseq
      %v2456 = vshrl.u32 %v2455, 7
      %v2457 = vsub.s32 %v2454, %v2456
      %v2458 = vrot.slane %v2450, %v2457
      %v2460 = vunpack.c.l.s4 1966171168
      %v2461 = vunpack.c.0.s8 %v2460
      %v2462 = vlaneseq
      %v2463 = vshrl.u32 %v2462, 7
      %v2464 = vsub.s32 %v2461, %v2463
      %v2465 = vrot.slane %v2451, %v2464
      %v2466 = vcombine.low %v2458, %v2465
      %v2468 = vunpack.c.l.s4 1966171168
      %v2469 = vunpack.c.0.s8 %v2468
      %v2470 = vlaneseq
      %v2471 = vshrl.u32 %v2470, 7
      %v2472 = vsub.s32 %v2469, %v2471
      %v2473 = vrot.slane %v2466, %v2472
      %v2475 = vadd.f32 %v2238, %v2473
      %v2476 = vxor.u32 %v2475, 2147483648
      %v2477 = vmul.f32 %v2476, 1.442695
      %v2478 = vpow.pop %v2477
      %v2479 = vadd.f32 %v2478, 1.0
      %v2480 = vrcp.pop %v2479
      %v2481 = vmul.f32 1.0, %v2480
      %v2483 = vrot.slane %v2475, 3
      %v2485 = vtanh.pop %v2483
      %v2486 = vld [vmem:[#allocation3] sm:$0x1]
      %v2488 = vrot.slane %v2481, 1
      %v2490 = vmul.f32 %v2488, %v2486
      %v2491 = vmul.f32 %v2481, %v2485
      %v2492 = vadd.f32 %v2490, %v2491
      %v2493 = vtanh.pop %v2492
      %v2494 = vrot.slane %v2481, 2
      %v2496 = vmul.f32 %v2494, %v2493
      %2497 = vst [vmem:[#allocation3] sm:$0x1] %v2492
      %2498 = vst [vmem:[#allocation2] sm:$0x1] %v2496
      %v2499 = vld [vmem:[#allocation11] sm:$0xff]
      %v2500 = vld [vmem:[#allocation11 + $0x8] sm:$0xff]
      %v2501 = vld [vmem:[#allocation11 + $0x10] sm:$0xff]
      %v2502 = vld [vmem:[#allocation11 + $0x18] sm:$0xff]
      %v2503 = vld [vmem:[#allocation11 + $0x20] sm:$0xff]
      %v2504 = vld [vmem:[#allocation11 + $0x28] sm:$0xff]
      %v2505 = vld [vmem:[#allocation11 + $0x30] sm:$0xff]
      %v2506 = vld [vmem:[#allocation11 + $0x38] sm:$0xff]
      %v2507 = vld [vmem:[#allocation11 + $0x40] sm:$0xff]
      %v2508 = vld [vmem:[#allocation11 + $0x48] sm:$0xff]
      %v2509 = vld [vmem:[#allocation11 + $0x50] sm:$0xff]
      %v2510 = vld [vmem:[#allocation11 + $0x58] sm:$0xff]
      %v2511 = vld [vmem:[#allocation11 + $0x60] sm:$0xff]
      %v2512 = vld [vmem:[#allocation11 + $0x68] sm:$0xff]
      %v2513 = vld [vmem:[#allocation11 + $0x70] sm:$0xff]
      %v2514 = vld [vmem:[#allocation11 + $0x78] sm:$0xff]
      %v2515 = vld [vmem:[#allocation11 + $0x80] sm:$0xff]
      %v2516 = vld [vmem:[#allocation11 + $0x88] sm:$0xff]
      %v2517 = vld [vmem:[#allocation11 + $0x90] sm:$0xff]
      %v2518 = vld [vmem:[#allocation11 + $0x98] sm:$0xff]
      %v2519 = vld [vmem:[#allocation11 + $0xa0] sm:$0xff]
      %v2520 = vld [vmem:[#allocation11 + $0xa8] sm:$0xff]
      %v2521 = vld [vmem:[#allocation11 + $0xb0] sm:$0xff]
      %v2522 = vld [vmem:[#allocation11 + $0xb8] sm:$0xff]
      %v2523 = vld [vmem:[#allocation11 + $0xc0] sm:$0xff]
      %v2524 = vld [vmem:[#allocation11 + $0xc8] sm:$0xff]
      %v2525 = vld [vmem:[#allocation11 + $0xd0] sm:$0xff]
      %v2526 = vld [vmem:[#allocation11 + $0xd8] sm:$0xff]
      %v2527 = vld [vmem:[#allocation11 + $0xe0] sm:$0xff]
      %v2528 = vld [vmem:[#allocation11 + $0xe8] sm:$0xff]
      %v2529 = vld [vmem:[#allocation11 + $0xf0] sm:$0xff]
      %v2530 = vld [vmem:[#allocation11 + $0xf8] sm:$0xff]
      %v2531 = vld [vmem:[%s4] sm:$0x3]
      %v2533 = vlaneseq
      %v2534 = vshrl.u32 %v2533, 7
      %v2535 = vsub.s32 0, %v2534
      %v2536 = vrot.slane %v2531, %v2535
      %v2537 = vlaneseq
      %v2538 = vshrl.u32 %v2537, 7
      %v2539 = vsub.s32 1, %v2538
      %v2540 = vrot.slane %v2531, %v2539
      %2543 = vmatprep.subr.mxu0 %v2500
      %2544 = vmatpush1.msra.mxu0 %v2499
      %2545 = vmatprep.subr.mxu0 %v2502
      %2546 = vmatpush1.msra.mxu0 %v2501
      %2547 = vmatprep.subr.mxu0 %v2504
      %2548 = vmatpush1.msra.mxu0 %v2503
      %2549 = vmatprep.subr.mxu0 %v2506
      %2550 = vmatpush1.msra.mxu0 %v2505
      %2551 = vmatprep.subr.mxu0 %v2508
      %2552 = vmatpush1.msra.mxu0 %v2507
      %2553 = vmatprep.subr.mxu0 %v2510
      %2554 = vmatpush1.msra.mxu0 %v2509
      %2555 = vmatprep.subr.mxu0 %v2512
      %2556 = vmatpush1.msra.mxu0 %v2511
      %2557 = vmatprep.subr.mxu0 %v2514
      %2558 = vmatpush1.msra.mxu0 %v2513
      %2559 = vmatprep.subr.mxu0 %v2516
      %2560 = vmatpush1.msra.mxu0 %v2515
      %2561 = vmatprep.subr.mxu0 %v2518
      %2562 = vmatpush1.msra.mxu0 %v2517
      %2563 = vmatprep.subr.mxu0 %v2520
      %2564 = vmatpush1.msra.mxu0 %v2519
      %2565 = vmatprep.subr.mxu0 %v2522
      %2566 = vmatpush1.msra.mxu0 %v2521
      %2567 = vmatprep.subr.mxu0 %v2524
      %2568 = vmatpush1.msra.mxu0 %v2523
      %2569 = vmatprep.subr.mxu0 %v2526
      %2570 = vmatpush1.msra.mxu0 %v2525
      %2571 = vmatprep.subr.mxu0 %v2528
      %2572 = vmatpush1.msra.mxu0 %v2527
      %2573 = vmatprep.subr.mxu0 %v2530
      %2574 = vmatpush1.msra.mxu0 %v2529
      %2575 = vmatprep.subr.mxu0 0.0
      %2576 = vmatpush1.msra.mxu0 0.0
      %2577 = vmatprep.subr.mxu0 0.0
      %2578 = vmatpush1.msra.mxu0 0.0
      %2579 = vmatprep.subr.mxu0 0.0
      %2580 = vmatpush1.msra.mxu0 0.0
      %2581 = vmatprep.subr.mxu0 0.0
      %2582 = vmatpush1.msra.mxu0 0.0
      %2583 = vmatprep.subr.mxu0 0.0
      %2584 = vmatpush1.msra.mxu0 0.0
      %2585 = vmatprep.subr.mxu0 0.0
      %2586 = vmatpush1.msra.mxu0 0.0
      %2587 = vmatprep.subr.mxu0 0.0
      %2588 = vmatpush1.msra.mxu0 0.0
      %2589 = vmatprep.subr.mxu0 0.0
      %2590 = vmatpush1.msra.mxu0 0.0
      %2591 = vmatprep.subr.mxu0 0.0
      %2592 = vmatpush1.msra.mxu0 0.0
      %2593 = vmatprep.subr.mxu0 0.0
      %2594 = vmatpush1.msra.mxu0 0.0
      %2595 = vmatprep.subr.mxu0 0.0
      %2596 = vmatpush1.msra.mxu0 0.0
      %2597 = vmatprep.subr.mxu0 0.0
      %2598 = vmatpush1.msra.mxu0 0.0
      %2599 = vmatprep.subr.mxu0 0.0
      %2600 = vmatpush1.msra.mxu0 0.0
      %2601 = vmatprep.subr.mxu0 0.0
      %2602 = vmatpush1.msra.mxu0 0.0
      %2603 = vmatprep.subr.mxu0 0.0
      %2604 = vmatpush1.msra.mxu0 0.0
      %2605 = vmatprep.subr.mxu0 0.0
      %2606 = vmatpush1.msra.mxu0 0.0
      %2607 = vmatprep.mubr.f32.mxu0 0.0
      %2608 = vmatmul.mubr.f32.gmra.mrb[0].mxu0 %v2496
      %v2609 = vpop.f32.mrb[0].mxu0
      %v2610 = vadd.f32 %v2536, %v2609
      %v2611 = vpop.f32.mrb[0].mxu0
      %v2612 = vadd.f32 %v2540, %v2611
      %2613 = vdwg.mxu0
      %v2614 = vsel %vm453, %v2610, -inf
      %v2615 = vsel %vm453, %v2612, -inf
      %v2616 = vmax.f32 %v2614, %v2615
      %2617 = vmax.xlane.f32.xlu0 %v2616
      %v2618 = vpop.xlane.xlu0 %2617
      %v2619 = vrot.slane %v2618, 4
      %v2620 = vmax.f32 %v2618, %v2619
      %v2621 = vrot.slane %v2620, 2
      %v2622 = vmax.f32 %v2620, %v2621
      %v2623 = vrot.slane %v2622, 1
      %v2624 = vmax.f32 %v2622, %v2623
      %s2625 = vtos %v2624
      %v2626 = vstv %s2625
      %vm2627 = vcmp.eq.f32.partialorder %v2610, %v2626
      %vm2628 = vcmp.eq.f32.partialorder %v2612, %v2626
      %v2629 = vsel %vm2627, %v72, 256
      %v2630 = vsel %vm2628, %v73, 256
      %v2631 = vsel %vm453, %v2629, 2147483647
      %v2632 = vsel %vm453, %v2630, 2147483647
      %vm2633 = vcmp.lt.s32.totalorder %v2631, %v2632
      %v2634 = vsel %vm2633, %v2631, %v2632
      %v2635 = vand.u32 %v2634, 65535
      %v2636 = vshra.s32 %v2634, 16
      %v2637 = vcvt.s32.f32 %v2635
      %v2638 = vcvt.s32.f32 %v2636
      %2639 = vmin.xlane.f32.xlu0 %v2638
      %v2640 = vpop.xlane.xlu0 %2639
      %vm2641 = vcmp.eq.f32.partialorder %v2638, %v2640
      %v2642 = vsel %vm2641, %v2637, inf
      %2643 = vmin.xlane.f32.xlu0 %v2642
      %v2644 = vpop.xlane.xlu0 %2643
      %v2645 = vcvt.f32.s32 %v2644
      %v2646 = vcvt.f32.s32 %v2640
      %v2647 = vshll.u32 %v2646, 16
      %v2648 = vadd.s32 %v2647, %v2645
      %v2649 = vrot.slane %v2648, 4
      %vm2650 = vcmp.lt.s32.totalorder %v2648, %v2649
      %v2651 = vsel %vm2650, %v2648, %v2649
      %v2652 = vrot.slane %v2651, 2
      %vm2653 = vcmp.lt.s32.totalorder %v2651, %v2652
      %v2654 = vsel %vm2653, %v2651, %v2652
      %v2655 = vrot.slane %v2654, 1
      %vm2656 = vcmp.lt.s32.totalorder %v2654, %v2655
      %v2657 = vsel %vm2656, %v2654, %v2655
      %s2658 = vtos %v2657
      %2659 = sst [smem:[%s66]] %s2658
    $region53: #{tpu_custom_call.1} parent=1 // pred_fallthru
      _
    %s2660 = sld [smem:[#allocation4]]
    %s2661 = scalar_lea.smem [#allocation12], 6
    %2662 = sst [smem:[%s2661]] %s2660
    %s2663 = sld [smem:[#allocation4]]
    %p2664 = scmp.ne.s32.totalorder %s2663, 0
    // Predicated region
    $region54: #{tpu_custom_call.1} parent=1 // pred_check
      %p2665 = pneg %p2664
    $region55: #{tpu_custom_call.1} parent=1 // pred_check_branch
      %2667 = sbr.rel (%p2665) target = $region57
    $region56: #{tpu_custom_call.1} parent=1 // pred_region
      %s2668 = smul.u32 %s2663, 4
      %s2669 = scalar_lea.vmem [#allocation6], %s2668
      %v2670 = vld [vmem:[%s2669] sm:$0xf]
      %v2671 = vld [vmem:[#allocation2] sm:$0x1]
      %v2672 = vld [vmem:[#allocation9] sm:$0xff]
      %v2673 = vld [vmem:[#allocation9 + $0x8] sm:$0xff]
      %v2674 = vld [vmem:[#allocation9 + $0x10] sm:$0xff]
      %v2675 = vld [vmem:[#allocation9 + $0x18] sm:$0xff]
      %v2676 = vld [vmem:[#allocation9 + $0x20] sm:$0xff]
      %v2677 = vld [vmem:[#allocation9 + $0x28] sm:$0xff]
      %v2678 = vld [vmem:[#allocation9 + $0x30] sm:$0xff]
      %v2679 = vld [vmem:[#allocation9 + $0x38] sm:$0xff]
      %v2680 = vld [vmem:[#allocation9 + $0x40] sm:$0xff]
      %v2681 = vld [vmem:[#allocation9 + $0x48] sm:$0xff]
      %v2682 = vld [vmem:[#allocation9 + $0x50] sm:$0xff]
      %v2683 = vld [vmem:[#allocation9 + $0x58] sm:$0xff]
      %v2684 = vld [vmem:[#allocation9 + $0x60] sm:$0xff]
      %v2685 = vld [vmem:[#allocation9 + $0x68] sm:$0xff]
      %v2686 = vld [vmem:[#allocation9 + $0x70] sm:$0xff]
      %v2687 = vld [vmem:[#allocation9 + $0x78] sm:$0xff]
      %v2688 = vld [vmem:[#allocation9 + $0x80] sm:$0xff]
      %v2689 = vld [vmem:[#allocation9 + $0x88] sm:$0xff]
      %v2690 = vld [vmem:[#allocation9 + $0x90] sm:$0xff]
      %v2691 = vld [vmem:[#allocation9 + $0x98] sm:$0xff]
      %v2692 = vld [vmem:[#allocation9 + $0xa0] sm:$0xff]
      %v2693 = vld [vmem:[#allocation9 + $0xa8] sm:$0xff]
      %v2694 = vld [vmem:[#allocation9 + $0xb0] sm:$0xff]
      %v2695 = vld [vmem:[#allocation9 + $0xb8] sm:$0xff]
      %v2696 = vld [vmem:[#allocation9 + $0xc0] sm:$0xff]
      %v2697 = vld [vmem:[#allocation9 + $0xc8] sm:$0xff]
      %v2698 = vld [vmem:[#allocation9 + $0xd0] sm:$0xff]
      %v2699 = vld [vmem:[#allocation9 + $0xd8] sm:$0xff]
      %v2700 = vld [vmem:[#allocation9 + $0xe0] sm:$0xff]
      %v2701 = vld [vmem:[#allocation9 + $0xe8] sm:$0xff]
      %v2702 = vld [vmem:[#allocation9 + $0xf0] sm:$0xff]
      %v2703 = vld [vmem:[#allocation9 + $0xf8] sm:$0xff]
      %v2704 = vld [vmem:[#allocation9 + $0x100] sm:$0xff]
      %v2705 = vld [vmem:[#allocation9 + $0x108] sm:$0xff]
      %v2706 = vld [vmem:[#allocation9 + $0x110] sm:$0xff]
      %v2707 = vld [vmem:[#allocation9 + $0x118] sm:$0xff]
      %v2708 = vld [vmem:[#allocation9 + $0x120] sm:$0xff]
      %v2709 = vld [vmem:[#allocation9 + $0x128] sm:$0xff]
      %v2710 = vld [vmem:[#allocation9 + $0x130] sm:$0xff]
      %v2711 = vld [vmem:[#allocation9 + $0x138] sm:$0xff]
      %v2712 = vld [vmem:[#allocation9 + $0x140] sm:$0xff]
      %v2713 = vld [vmem:[#allocation9 + $0x148] sm:$0xff]
      %v2714 = vld [vmem:[#allocation9 + $0x150] sm:$0xff]
      %v2715 = vld [vmem:[#allocation9 + $0x158] sm:$0xff]
      %v2716 = vld [vmem:[#allocation9 + $0x160] sm:$0xff]
      %v2717 = vld [vmem:[#allocation9 + $0x168] sm:$0xff]
      %v2718 = vld [vmem:[#allocation9 + $0x170] sm:$0xff]
      %v2719 = vld [vmem:[#allocation9 + $0x178] sm:$0xff]
      %v2720 = vld [vmem:[#allocation9 + $0x180] sm:$0xff]
      %v2721 = vld [vmem:[#allocation9 + $0x188] sm:$0xff]
      %v2722 = vld [vmem:[#allocation9 + $0x190] sm:$0xff]
      %v2723 = vld [vmem:[#allocation9 + $0x198] sm:$0xff]
      %v2724 = vld [vmem:[#allocation9 + $0x1a0] sm:$0xff]
      %v2725 = vld [vmem:[#allocation9 + $0x1a8] sm:$0xff]
      %v2726 = vld [vmem:[#allocation9 + $0x1b0] sm:$0xff]
      %v2727 = vld [vmem:[#allocation9 + $0x1b8] sm:$0xff]
      %v2728 = vld [vmem:[#allocation9 + $0x1c0] sm:$0xff]
      %v2729 = vld [vmem:[#allocation9 + $0x1c8] sm:$0xff]
      %v2730 = vld [vmem:[#allocation9 + $0x1d0] sm:$0xff]
      %v2731 = vld [vmem:[#allocation9 + $0x1d8] sm:$0xff]
      %v2732 = vld [vmem:[#allocation9 + $0x1e0] sm:$0xff]
      %v2733 = vld [vmem:[#allocation9 + $0x1e8] sm:$0xff]
      %v2734 = vld [vmem:[#allocation9 + $0x1f0] sm:$0xff]
      %v2735 = vld [vmem:[#allocation9 + $0x1f8] sm:$0xff]
      %2736 = vmatprep.subr.mxu0 %v2673
      %2737 = vmatpush1.msra.mxu0 %v2672
      %2738 = vmatprep.subr.mxu0 %v2677
      %2739 = vmatpush1.msra.mxu0 %v2676
      %2740 = vmatprep.subr.mxu0 %v2681
      %2741 = vmatpush1.msra.mxu0 %v2680
      %2742 = vmatprep.subr.mxu0 %v2685
      %2743 = vmatpush1.msra.mxu0 %v2684
      %2744 = vmatprep.subr.mxu0 %v2689
      %2745 = vmatpush1.msra.mxu0 %v2688
      %2746 = vmatprep.subr.mxu0 %v2693
      %2747 = vmatpush1.msra.mxu0 %v2692
      %2748 = vmatprep.subr.mxu0 %v2697
      %2749 = vmatpush1.msra.mxu0 %v2696
      %2750 = vmatprep.subr.mxu0 %v2701
      %2751 = vmatpush1.msra.mxu0 %v2700
      %2752 = vmatprep.subr.mxu0 %v2705
      %2753 = vmatpush1.msra.mxu0 %v2704
      %2754 = vmatprep.subr.mxu0 %v2709
      %2755 = vmatpush1.msra.mxu0 %v2708
      %2756 = vmatprep.subr.mxu0 %v2713
      %2757 = vmatpush1.msra.mxu0 %v2712
      %2758 = vmatprep.subr.mxu0 %v2717
      %2759 = vmatpush1.msra.mxu0 %v2716
      %2760 = vmatprep.subr.mxu0 %v2721
      %2761 = vmatpush1.msra.mxu0 %v2720
      %2762 = vmatprep.subr.mxu0 %v2725
      %2763 = vmatpush1.msra.mxu0 %v2724
      %2764 = vmatprep.subr.mxu0 %v2729
      %2765 = vmatpush1.msra.mxu0 %v2728
      %2766 = vmatprep.subr.mxu0 %v2733
      %2767 = vmatpush1.msra.mxu0 %v2732
      %2768 = vmatprep.subr.mxu0 0.0
      %2769 = vmatpush1.msra.mxu0 0.0
      %2770 = vmatprep.subr.mxu0 0.0
      %2771 = vmatpush1.msra.mxu0 0.0
      %2772 = vmatprep.subr.mxu0 0.0
      %2773 = vmatpush1.msra.mxu0 0.0
      %2774 = vmatprep.subr.mxu0 0.0
      %2775 = vmatpush1.msra.mxu0 0.0
      %2776 = vmatprep.subr.mxu0 0.0
      %2777 = vmatpush1.msra.mxu0 0.0
      %2778 = vmatprep.subr.mxu0 0.0
      %2779 = vmatpush1.msra.mxu0 0.0
      %2780 = vmatprep.subr.mxu0 0.0
      %2781 = vmatpush1.msra.mxu0 0.0
      %2782 = vmatprep.subr.mxu0 0.0
      %2783 = vmatpush1.msra.mxu0 0.0
      %2784 = vmatprep.subr.mxu0 0.0
      %2785 = vmatpush1.msra.mxu0 0.0
      %2786 = vmatprep.subr.mxu0 0.0
      %2787 = vmatpush1.msra.mxu0 0.0
      %2788 = vmatprep.subr.mxu0 0.0
      %2789 = vmatpush1.msra.mxu0 0.0
      %2790 = vmatprep.subr.mxu0 0.0
      %2791 = vmatpush1.msra.mxu0 0.0
      %2792 = vmatprep.subr.mxu0 0.0
      %2793 = vmatpush1.msra.mxu0 0.0
      %2794 = vmatprep.subr.mxu0 0.0
      %2795 = vmatpush1.msra.mxu0 0.0
      %2796 = vmatprep.subr.mxu0 0.0
      %2797 = vmatpush1.msra.mxu0 0.0
      %2798 = vmatprep.subr.mxu0 0.0
      %2799 = vmatpush1.msra.mxu0 0.0
      %2800 = vmatprep.mubr.f32.mxu0 0.0
      %2801 = vmatmul.mubr.f32.gmra.mrb[0].mxu0 %v2671
      %v2802 = vpop.f32.mrb[0].mxu0
      %v2803 = vadd.f32 0.0, %v2802
      %v2804 = vpop.f32.mrb[0].mxu0
      %v2805 = vadd.f32 0.0, %v2804
      %2806 = vdwg.mxu0
      %2807 = vmatprep.subr.mxu0 %v2675
      %2808 = vmatpush1.msra.mxu0 %v2674
      %2809 = vmatprep.subr.mxu0 %v2679
      %2810 = vmatpush1.msra.mxu0 %v2678
      %2811 = vmatprep.subr.mxu0 %v2683
      %2812 = vmatpush1.msra.mxu0 %v2682
      %2813 = vmatprep.subr.mxu0 %v2687
      %2814 = vmatpush1.msra.mxu0 %v2686
      %2815 = vmatprep.subr.mxu0 %v2691
      %2816 = vmatpush1.msra.mxu0 %v2690
      %2817 = vmatprep.subr.mxu0 %v2695
      %2818 = vmatpush1.msra.mxu0 %v2694
      %2819 = vmatprep.subr.mxu0 %v2699
      %2820 = vmatpush1.msra.mxu0 %v2698
      %2821 = vmatprep.subr.mxu0 %v2703
      %2822 = vmatpush1.msra.mxu0 %v2702
      %2823 = vmatprep.subr.mxu0 %v2707
      %2824 = vmatpush1.msra.mxu0 %v2706
      %2825 = vmatprep.subr.mxu0 %v2711
      %2826 = vmatpush1.msra.mxu0 %v2710
      %2827 = vmatprep.subr.mxu0 %v2715
      %2828 = vmatpush1.msra.mxu0 %v2714
      %2829 = vmatprep.subr.mxu0 %v2719
      %2830 = vmatpush1.msra.mxu0 %v2718
      %2831 = vmatprep.subr.mxu0 %v2723
      %2832 = vmatpush1.msra.mxu0 %v2722
      %2833 = vmatprep.subr.mxu0 %v2727
      %2834 = vmatpush1.msra.mxu0 %v2726
      %2835 = vmatprep.subr.mxu0 %v2731
      %2836 = vmatpush1.msra.mxu0 %v2730
      %2837 = vmatprep.subr.mxu0 %v2735
      %2838 = vmatpush1.msra.mxu0 %v2734
      %2839 = vmatprep.subr.mxu0 0.0
      %2840 = vmatpush1.msra.mxu0 0.0
      %2841 = vmatprep.subr.mxu0 0.0
      %2842 = vmatpush1.msra.mxu0 0.0
      %2843 = vmatprep.subr.mxu0 0.0
      %2844 = vmatpush1.msra.mxu0 0.0
      %2845 = vmatprep.subr.mxu0 0.0
      %2846 = vmatpush1.msra.mxu0 0.0
      %2847 = vmatprep.subr.mxu0 0.0
      %2848 = vmatpush1.msra.mxu0 0.0
      %2849 = vmatprep.subr.mxu0 0.0
      %2850 = vmatpush1.msra.mxu0 0.0
      %2851 = vmatprep.subr.mxu0 0.0
      %2852 = vmatpush1.msra.mxu0 0.0
      %2853 = vmatprep.subr.mxu0 0.0
      %2854 = vmatpush1.msra.mxu0 0.0
      %2855 = vmatprep.subr.mxu0 0.0
      %2856 = vmatpush1.msra.mxu0 0.0
      %2857 = vmatprep.subr.mxu0 0.0
      %2858 = vmatpush1.msra.mxu0 0.0
      %2859 = vmatprep.subr.mxu0 0.0
      %2860 = vmatpush1.msra.mxu0 0.0
      %2861 = vmatprep.subr.mxu0 0.0
      %2862 = vmatpush1.msra.mxu0 0.0
      %2863 = vmatprep.subr.mxu0 0.0
      %2864 = vmatpush1.msra.mxu0 0.0
      %2865 = vmatprep.subr.mxu0 0.0
      %2866 = vmatpush1.msra.mxu0 0.0
      %2867 = vmatprep.subr.mxu0 0.0
      %2868 = vmatpush1.msra.mxu0 0.0
      %2869 = vmatprep.subr.mxu0 0.0
      %2870 = vmatpush1.msra.mxu0 0.0
      %2871 = vmatprep.mubr.f32.mxu0 0.0
      %2872 = vmatmul.mubr.f32.gmra.mrb[0].mxu0 %v2671
      %v2873 = vpop.f32.mrb[0].mxu0
      %v2874 = vadd.f32 0.0, %v2873
      %v2875 = vpop.f32.mrb[0].mxu0
      %v2876 = vadd.f32 0.0, %v2875
      %2877 = vdwg.mxu0
      %v2882 = vcombine.low %v2803, %v2805
      %v2883 = vcombine.low %v2874, %v2876
      %v2885 = vunpack.c.l.s4 1966171168
      %v2886 = vunpack.c.0.s8 %v2885
      %v2887 = vlaneseq
      %v2888 = vshrl.u32 %v2887, 7
      %v2889 = vsub.s32 %v2886, %v2888
      %v2890 = vrot.slane %v2882, %v2889
      %v2892 = vunpack.c.l.s4 1966171168
      %v2893 = vunpack.c.0.s8 %v2892
      %v2894 = vlaneseq
      %v2895 = vshrl.u32 %v2894, 7
      %v2896 = vsub.s32 %v2893, %v2895
      %v2897 = vrot.slane %v2883, %v2896
      %v2898 = vcombine.low %v2890, %v2897
      %v2900 = vunpack.c.l.s4 1966171168
      %v2901 = vunpack.c.0.s8 %v2900
      %v2902 = vlaneseq
      %v2903 = vshrl.u32 %v2902, 7
      %v2904 = vsub.s32 %v2901, %v2903
      %v2905 = vrot.slane %v2898, %v2904
      %v2907 = vadd.f32 %v2670, %v2905
      %v2908 = vxor.u32 %v2907, 2147483648
      %v2909 = vmul.f32 %v2908, 1.442695
      %v2910 = vpow.pop %v2909
      %v2911 = vadd.f32 %v2910, 1.0
      %v2912 = vrcp.pop %v2911
      %v2913 = vmul.f32 1.0, %v2912
      %v2915 = vrot.slane %v2907, 3
      %v2917 = vtanh.pop %v2915
      %v2918 = vld [vmem:[#allocation3] sm:$0x1]
      %v2920 = vrot.slane %v2913, 1
      %v2922 = vmul.f32 %v2920, %v2918
      %v2923 = vmul.f32 %v2913, %v2917
      %v2924 = vadd.f32 %v2922, %v2923
      %v2925 = vtanh.pop %v2924
      %v2926 = vrot.slane %v2913, 2
      %v2928 = vmul.f32 %v2926, %v2925
      %2929 = vst [vmem:[#allocation3] sm:$0x1] %v2924
      %2930 = vst [vmem:[#allocation2] sm:$0x1] %v2928
      %v2931 = vld [vmem:[#allocation11] sm:$0xff]
      %v2932 = vld [vmem:[#allocation11 + $0x8] sm:$0xff]
      %v2933 = vld [vmem:[#allocation11 + $0x10] sm:$0xff]
      %v2934 = vld [vmem:[#allocation11 + $0x18] sm:$0xff]
      %v2935 = vld [vmem:[#allocation11 + $0x20] sm:$0xff]
      %v2936 = vld [vmem:[#allocation11 + $0x28] sm:$0xff]
      %v2937 = vld [vmem:[#allocation11 + $0x30] sm:$0xff]
      %v2938 = vld [vmem:[#allocation11 + $0x38] sm:$0xff]
      %v2939 = vld [vmem:[#allocation11 + $0x40] sm:$0xff]
      %v2940 = vld [vmem:[#allocation11 + $0x48] sm:$0xff]
      %v2941 = vld [vmem:[#allocation11 + $0x50] sm:$0xff]
      %v2942 = vld [vmem:[#allocation11 + $0x58] sm:$0xff]
      %v2943 = vld [vmem:[#allocation11 + $0x60] sm:$0xff]
      %v2944 = vld [vmem:[#allocation11 + $0x68] sm:$0xff]
      %v2945 = vld [vmem:[#allocation11 + $0x70] sm:$0xff]
      %v2946 = vld [vmem:[#allocation11 + $0x78] sm:$0xff]
      %v2947 = vld [vmem:[#allocation11 + $0x80] sm:$0xff]
      %v2948 = vld [vmem:[#allocation11 + $0x88] sm:$0xff]
      %v2949 = vld [vmem:[#allocation11 + $0x90] sm:$0xff]
      %v2950 = vld [vmem:[#allocation11 + $0x98] sm:$0xff]
      %v2951 = vld [vmem:[#allocation11 + $0xa0] sm:$0xff]
      %v2952 = vld [vmem:[#allocation11 + $0xa8] sm:$0xff]
      %v2953 = vld [vmem:[#allocation11 + $0xb0] sm:$0xff]
      %v2954 = vld [vmem:[#allocation11 + $0xb8] sm:$0xff]
      %v2955 = vld [vmem:[#allocation11 + $0xc0] sm:$0xff]
      %v2956 = vld [vmem:[#allocation11 + $0xc8] sm:$0xff]
      %v2957 = vld [vmem:[#allocation11 + $0xd0] sm:$0xff]
      %v2958 = vld [vmem:[#allocation11 + $0xd8] sm:$0xff]
      %v2959 = vld [vmem:[#allocation11 + $0xe0] sm:$0xff]
      %v2960 = vld [vmem:[#allocation11 + $0xe8] sm:$0xff]
      %v2961 = vld [vmem:[#allocation11 + $0xf0] sm:$0xff]
      %v2962 = vld [vmem:[#allocation11 + $0xf8] sm:$0xff]
      %v2963 = vld [vmem:[%s4] sm:$0x3]
      %v2965 = vlaneseq
      %v2966 = vshrl.u32 %v2965, 7
      %v2967 = vsub.s32 0, %v2966
      %v2968 = vrot.slane %v2963, %v2967
      %v2969 = vlaneseq
      %v2970 = vshrl.u32 %v2969, 7
      %v2971 = vsub.s32 1, %v2970
      %v2972 = vrot.slane %v2963, %v2971
      %2975 = vmatprep.subr.mxu0 %v2932
      %2976 = vmatpush1.msra.mxu0 %v2931
      %2977 = vmatprep.subr.mxu0 %v2934
      %2978 = vmatpush1.msra.mxu0 %v2933
      %2979 = vmatprep.subr.mxu0 %v2936
      %2980 = vmatpush1.msra.mxu0 %v2935
      %2981 = vmatprep.subr.mxu0 %v2938
      %2982 = vmatpush1.msra.mxu0 %v2937
      %2983 = vmatprep.subr.mxu0 %v2940
      %2984 = vmatpush1.msra.mxu0 %v2939
      %2985 = vmatprep.subr.mxu0 %v2942
      %2986 = vmatpush1.msra.mxu0 %v2941
      %2987 = vmatprep.subr.mxu0 %v2944
      %2988 = vmatpush1.msra.mxu0 %v2943
      %2989 = vmatprep.subr.mxu0 %v2946
      %2990 = vmatpush1.msra.mxu0 %v2945
      %2991 = vmatprep.subr.mxu0 %v2948
      %2992 = vmatpush1.msra.mxu0 %v2947
      %2993 = vmatprep.subr.mxu0 %v2950
      %2994 = vmatpush1.msra.mxu0 %v2949
      %2995 = vmatprep.subr.mxu0 %v2952
      %2996 = vmatpush1.msra.mxu0 %v2951
      %2997 = vmatprep.subr.mxu0 %v2954
      %2998 = vmatpush1.msra.mxu0 %v2953
      %2999 = vmatprep.subr.mxu0 %v2956
      %3000 = vmatpush1.msra.mxu0 %v2955
      %3001 = vmatprep.subr.mxu0 %v2958
      %3002 = vmatpush1.msra.mxu0 %v2957
      %3003 = vmatprep.subr.mxu0 %v2960
      %3004 = vmatpush1.msra.mxu0 %v2959
      %3005 = vmatprep.subr.mxu0 %v2962
      %3006 = vmatpush1.msra.mxu0 %v2961
      %3007 = vmatprep.subr.mxu0 0.0
      %3008 = vmatpush1.msra.mxu0 0.0
      %3009 = vmatprep.subr.mxu0 0.0
      %3010 = vmatpush1.msra.mxu0 0.0
      %3011 = vmatprep.subr.mxu0 0.0
      %3012 = vmatpush1.msra.mxu0 0.0
      %3013 = vmatprep.subr.mxu0 0.0
      %3014 = vmatpush1.msra.mxu0 0.0
      %3015 = vmatprep.subr.mxu0 0.0
      %3016 = vmatpush1.msra.mxu0 0.0
      %3017 = vmatprep.subr.mxu0 0.0
      %3018 = vmatpush1.msra.mxu0 0.0
      %3019 = vmatprep.subr.mxu0 0.0
      %3020 = vmatpush1.msra.mxu0 0.0
      %3021 = vmatprep.subr.mxu0 0.0
      %3022 = vmatpush1.msra.mxu0 0.0
      %3023 = vmatprep.subr.mxu0 0.0
      %3024 = vmatpush1.msra.mxu0 0.0
      %3025 = vmatprep.subr.mxu0 0.0
      %3026 = vmatpush1.msra.mxu0 0.0
      %3027 = vmatprep.subr.mxu0 0.0
      %3028 = vmatpush1.msra.mxu0 0.0
      %3029 = vmatprep.subr.mxu0 0.0
      %3030 = vmatpush1.msra.mxu0 0.0
      %3031 = vmatprep.subr.mxu0 0.0
      %3032 = vmatpush1.msra.mxu0 0.0
      %3033 = vmatprep.subr.mxu0 0.0
      %3034 = vmatpush1.msra.mxu0 0.0
      %3035 = vmatprep.subr.mxu0 0.0
      %3036 = vmatpush1.msra.mxu0 0.0
      %3037 = vmatprep.subr.mxu0 0.0
      %3038 = vmatpush1.msra.mxu0 0.0
      %3039 = vmatprep.mubr.f32.mxu0 0.0
      %3040 = vmatmul.mubr.f32.gmra.mrb[0].mxu0 %v2928
      %v3041 = vpop.f32.mrb[0].mxu0
      %v3042 = vadd.f32 %v2968, %v3041
      %v3043 = vpop.f32.mrb[0].mxu0
      %v3044 = vadd.f32 %v2972, %v3043
      %3045 = vdwg.mxu0
      %v3046 = vsel %vm453, %v3042, -inf
      %v3047 = vsel %vm453, %v3044, -inf
      %v3048 = vmax.f32 %v3046, %v3047
      %3049 = vmax.xlane.f32.xlu0 %v3048
      %v3050 = vpop.xlane.xlu0 %3049
      %v3051 = vrot.slane %v3050, 4
      %v3052 = vmax.f32 %v3050, %v3051
      %v3053 = vrot.slane %v3052, 2
      %v3054 = vmax.f32 %v3052, %v3053
      %v3055 = vrot.slane %v3054, 1
      %v3056 = vmax.f32 %v3054, %v3055
      %s3057 = vtos %v3056
      %v3058 = vstv %s3057
      %vm3059 = vcmp.eq.f32.partialorder %v3042, %v3058
      %vm3060 = vcmp.eq.f32.partialorder %v3044, %v3058
      %v3061 = vsel %vm3059, %v72, 256
      %v3062 = vsel %vm3060, %v73, 256
      %v3063 = vsel %vm453, %v3061, 2147483647
      %v3064 = vsel %vm453, %v3062, 2147483647
      %vm3065 = vcmp.lt.s32.totalorder %v3063, %v3064
      %v3066 = vsel %vm3065, %v3063, %v3064
      %v3067 = vand.u32 %v3066, 65535
      %v3068 = vshra.s32 %v3066, 16
      %v3069 = vcvt.s32.f32 %v3067
      %v3070 = vcvt.s32.f32 %v3068
      %3071 = vmin.xlane.f32.xlu0 %v3070
      %v3072 = vpop.xlane.xlu0 %3071
      %vm3073 = vcmp.eq.f32.partialorder %v3070, %v3072
      %v3074 = vsel %vm3073, %v3069, inf
      %3075 = vmin.xlane.f32.xlu0 %v3074
      %v3076 = vpop.xlane.xlu0 %3075
      %v3077 = vcvt.f32.s32 %v3076
      %v3078 = vcvt.f32.s32 %v3072
      %v3079 = vshll.u32 %v3078, 16
      %v3080 = vadd.s32 %v3079, %v3077
      %v3081 = vrot.slane %v3080, 4
      %vm3082 = vcmp.lt.s32.totalorder %v3080, %v3081
      %v3083 = vsel %vm3082, %v3080, %v3081
      %v3084 = vrot.slane %v3083, 2
      %vm3085 = vcmp.lt.s32.totalorder %v3083, %v3084
      %v3086 = vsel %vm3085, %v3083, %v3084
      %v3087 = vrot.slane %v3086, 1
      %vm3088 = vcmp.lt.s32.totalorder %v3086, %v3087
      %v3089 = vsel %vm3088, %v3086, %v3087
      %s3090 = vtos %v3089
      %3091 = sst [smem:[%s66]] %s3090
    $region57: #{tpu_custom_call.1} parent=1 // pred_fallthru
      _
    %s3092 = sld [smem:[#allocation4]]
    %s3093 = scalar_lea.smem [#allocation12], 7
    %3094 = sst [smem:[%s3093]] %s3092
    %s3095 = sld [smem:[#allocation4]]
    %p3096 = scmp.ne.s32.totalorder %s3095, 0
    // Predicated region
    $region58: #{tpu_custom_call.1} parent=1 // pred_check
      %p3097 = pneg %p3096
    $region59: #{tpu_custom_call.1} parent=1 // pred_check_branch
      %3099 = sbr.rel (%p3097) target = $region61
    $region60: #{tpu_custom_call.1} parent=1 // pred_region
      %s3100 = smul.u32 %s3095, 4
      %s3101 = scalar_lea.vmem [#allocation6], %s3100
      %v3102 = vld [vmem:[%s3101] sm:$0xf]
      %v3103 = vld [vmem:[#allocation2] sm:$0x1]
      %v3104 = vld [vmem:[#allocation9] sm:$0xff]
      %v3105 = vld [vmem:[#allocation9 + $0x8] sm:$0xff]
      %v3106 = vld [vmem:[#allocation9 + $0x10] sm:$0xff]
      %v3107 = vld [vmem:[#allocation9 + $0x18] sm:$0xff]
      %v3108 = vld [vmem:[#allocation9 + $0x20] sm:$0xff]
      %v3109 = vld [vmem:[#allocation9 + $0x28] sm:$0xff]
      %v3110 = vld [vmem:[#allocation9 + $0x30] sm:$0xff]
      %v3111 = vld [vmem:[#allocation9 + $0x38] sm:$0xff]
      %v3112 = vld [vmem:[#allocation9 + $0x40] sm:$0xff]
      %v3113 = vld [vmem:[#allocation9 + $0x48] sm:$0xff]
      %v3114 = vld [vmem:[#allocation9 + $0x50] sm:$0xff]
      %v3115 = vld [vmem:[#allocation9 + $0x58] sm:$0xff]
      %v3116 = vld [vmem:[#allocation9 + $0x60] sm:$0xff]
      %v3117 = vld [vmem:[#allocation9 + $0x68] sm:$0xff]
      %v3118 = vld [vmem:[#allocation9 + $0x70] sm:$0xff]
      %v3119 = vld [vmem:[#allocation9 + $0x78] sm:$0xff]
      %v3120 = vld [vmem:[#allocation9 + $0x80] sm:$0xff]
      %v3121 = vld [vmem:[#allocation9 + $0x88] sm:$0xff]
      %v3122 = vld [vmem:[#allocation9 + $0x90] sm:$0xff]
      %v3123 = vld [vmem:[#allocation9 + $0x98] sm:$0xff]
      %v3124 = vld [vmem:[#allocation9 + $0xa0] sm:$0xff]
      %v3125 = vld [vmem:[#allocation9 + $0xa8] sm:$0xff]
      %v3126 = vld [vmem:[#allocation9 + $0xb0] sm:$0xff]
      %v3127 = vld [vmem:[#allocation9 + $0xb8] sm:$0xff]
      %v3128 = vld [vmem:[#allocation9 + $0xc0] sm:$0xff]
      %v3129 = vld [vmem:[#allocation9 + $0xc8] sm:$0xff]
      %v3130 = vld [vmem:[#allocation9 + $0xd0] sm:$0xff]
      %v3131 = vld [vmem:[#allocation9 + $0xd8] sm:$0xff]
      %v3132 = vld [vmem:[#allocation9 + $0xe0] sm:$0xff]
      %v3133 = vld [vmem:[#allocation9 + $0xe8] sm:$0xff]
      %v3134 = vld [vmem:[#allocation9 + $0xf0] sm:$0xff]
      %v3135 = vld [vmem:[#allocation9 + $0xf8] sm:$0xff]
      %v3136 = vld [vmem:[#allocation9 + $0x100] sm:$0xff]
      %v3137 = vld [vmem:[#allocation9 + $0x108] sm:$0xff]
      %v3138 = vld [vmem:[#allocation9 + $0x110] sm:$0xff]
      %v3139 = vld [vmem:[#allocation9 + $0x118] sm:$0xff]
      %v3140 = vld [vmem:[#allocation9 + $0x120] sm:$0xff]
      %v3141 = vld [vmem:[#allocation9 + $0x128] sm:$0xff]
      %v3142 = vld [vmem:[#allocation9 + $0x130] sm:$0xff]
      %v3143 = vld [vmem:[#allocation9 + $0x138] sm:$0xff]
      %v3144 = vld [vmem:[#allocation9 + $0x140] sm:$0xff]
      %v3145 = vld [vmem:[#allocation9 + $0x148] sm:$0xff]
      %v3146 = vld [vmem:[#allocation9 + $0x150] sm:$0xff]
      %v3147 = vld [vmem:[#allocation9 + $0x158] sm:$0xff]
      %v3148 = vld [vmem:[#allocation9 + $0x160] sm:$0xff]
      %v3149 = vld [vmem:[#allocation9 + $0x168] sm:$0xff]
      %v3150 = vld [vmem:[#allocation9 + $0x170] sm:$0xff]
      %v3151 = vld [vmem:[#allocation9 + $0x178] sm:$0xff]
      %v3152 = vld [vmem:[#allocation9 + $0x180] sm:$0xff]
      %v3153 = vld [vmem:[#allocation9 + $0x188] sm:$0xff]
      %v3154 = vld [vmem:[#allocation9 + $0x190] sm:$0xff]
      %v3155 = vld [vmem:[#allocation9 + $0x198] sm:$0xff]
      %v3156 = vld [vmem:[#allocation9 + $0x1a0] sm:$0xff]
      %v3157 = vld [vmem:[#allocation9 + $0x1a8] sm:$0xff]
      %v3158 = vld [vmem:[#allocation9 + $0x1b0] sm:$0xff]
      %v3159 = vld [vmem:[#allocation9 + $0x1b8] sm:$0xff]
      %v3160 = vld [vmem:[#allocation9 + $0x1c0] sm:$0xff]
      %v3161 = vld [vmem:[#allocation9 + $0x1c8] sm:$0xff]
      %v3162 = vld [vmem:[#allocation9 + $0x1d0] sm:$0xff]
      %v3163 = vld [vmem:[#allocation9 + $0x1d8] sm:$0xff]
      %v3164 = vld [vmem:[#allocation9 + $0x1e0] sm:$0xff]
      %v3165 = vld [vmem:[#allocation9 + $0x1e8] sm:$0xff]
      %v3166 = vld [vmem:[#allocation9 + $0x1f0] sm:$0xff]
      %v3167 = vld [vmem:[#allocation9 + $0x1f8] sm:$0xff]
      %3168 = vmatprep.subr.mxu0 %v3105
      %3169 = vmatpush1.msra.mxu0 %v3104
      %3170 = vmatprep.subr.mxu0 %v3109
      %3171 = vmatpush1.msra.mxu0 %v3108
      %3172 = vmatprep.subr.mxu0 %v3113
      %3173 = vmatpush1.msra.mxu0 %v3112
      %3174 = vmatprep.subr.mxu0 %v3117
      %3175 = vmatpush1.msra.mxu0 %v3116
      %3176 = vmatprep.subr.mxu0 %v3121
      %3177 = vmatpush1.msra.mxu0 %v3120
      %3178 = vmatprep.subr.mxu0 %v3125
      %3179 = vmatpush1.msra.mxu0 %v3124
      %3180 = vmatprep.subr.mxu0 %v3129
      %3181 = vmatpush1.msra.mxu0 %v3128
      %3182 = vmatprep.subr.mxu0 %v3133
      %3183 = vmatpush1.msra.mxu0 %v3132
      %3184 = vmatprep.subr.mxu0 %v3137
      %3185 = vmatpush1.msra.mxu0 %v3136
      %3186 = vmatprep.subr.mxu0 %v3141
      %3187 = vmatpush1.msra.mxu0 %v3140
      %3188 = vmatprep.subr.mxu0 %v3145
      %3189 = vmatpush1.msra.mxu0 %v3144
      %3190 = vmatprep.subr.mxu0 %v3149
      %3191 = vmatpush1.msra.mxu0 %v3148
      %3192 = vmatprep.subr.mxu0 %v3153
      %3193 = vmatpush1.msra.mxu0 %v3152
      %3194 = vmatprep.subr.mxu0 %v3157
      %3195 = vmatpush1.msra.mxu0 %v3156
      %3196 = vmatprep.subr.mxu0 %v3161
      %3197 = vmatpush1.msra.mxu0 %v3160
      %3198 = vmatprep.subr.mxu0 %v3165
      %3199 = vmatpush1.msra.mxu0 %v3164
      %3200 = vmatprep.subr.mxu0 0.0
      %3201 = vmatpush1.msra.mxu0 0.0
      %3202 = vmatprep.subr.mxu0 0.0
      %3203 = vmatpush1.msra.mxu0 0.0
      %3204 = vmatprep.subr.mxu0 0.0
      %3205 = vmatpush1.msra.mxu0 0.0
      %3206 = vmatprep.subr.mxu0 0.0
      %3207 = vmatpush1.msra.mxu0 0.0
      %3208 = vmatprep.subr.mxu0 0.0
      %3209 = vmatpush1.msra.mxu0 0.0
      %3210 = vmatprep.subr.mxu0 0.0
      %3211 = vmatpush1.msra.mxu0 0.0
      %3212 = vmatprep.subr.mxu0 0.0
      %3213 = vmatpush1.msra.mxu0 0.0
      %3214 = vmatprep.subr.mxu0 0.0
      %3215 = vmatpush1.msra.mxu0 0.0
      %3216 = vmatprep.subr.mxu0 0.0
      %3217 = vmatpush1.msra.mxu0 0.0
      %3218 = vmatprep.subr.mxu0 0.0
      %3219 = vmatpush1.msra.mxu0 0.0
      %3220 = vmatprep.subr.mxu0 0.0
      %3221 = vmatpush1.msra.mxu0 0.0
      %3222 = vmatprep.subr.mxu0 0.0
      %3223 = vmatpush1.msra.mxu0 0.0
      %3224 = vmatprep.subr.mxu0 0.0
      %3225 = vmatpush1.msra.mxu0 0.0
      %3226 = vmatprep.subr.mxu0 0.0
      %3227 = vmatpush1.msra.mxu0 0.0
      %3228 = vmatprep.subr.mxu0 0.0
      %3229 = vmatpush1.msra.mxu0 0.0
      %3230 = vmatprep.subr.mxu0 0.0
      %3231 = vmatpush1.msra.mxu0 0.0
      %3232 = vmatprep.mubr.f32.mxu0 0.0
      %3233 = vmatmul.mubr.f32.gmra.mrb[0].mxu0 %v3103
      %v3234 = vpop.f32.mrb[0].mxu0
      %v3235 = vadd.f32 0.0, %v3234
      %v3236 = vpop.f32.mrb[0].mxu0
      %v3237 = vadd.f32 0.0, %v3236
      %3238 = vdwg.mxu0
      %3239 = vmatprep.subr.mxu0 %v3107
      %3240 = vmatpush1.msra.mxu0 %v3106
      %3241 = vmatprep.subr.mxu0 %v3111
      %3242 = vmatpush1.msra.mxu0 %v3110
      %3243 = vmatprep.subr.mxu0 %v3115
      %3244 = vmatpush1.msra.mxu0 %v3114
      %3245 = vmatprep.subr.mxu0 %v3119
      %3246 = vmatpush1.msra.mxu0 %v3118
      %3247 = vmatprep.subr.mxu0 %v3123
      %3248 = vmatpush1.msra.mxu0 %v3122
      %3249 = vmatprep.subr.mxu0 %v3127
      %3250 = vmatpush1.msra.mxu0 %v3126
      %3251 = vmatprep.subr.mxu0 %v3131
      %3252 = vmatpush1.msra.mxu0 %v3130
      %3253 = vmatprep.subr.mxu0 %v3135
      %3254 = vmatpush1.msra.mxu0 %v3134
      %3255 = vmatprep.subr.mxu0 %v3139
      %3256 = vmatpush1.msra.mxu0 %v3138
      %3257 = vmatprep.subr.mxu0 %v3143
      %3258 = vmatpush1.msra.mxu0 %v3142
      %3259 = vmatprep.subr.mxu0 %v3147
      %3260 = vmatpush1.msra.mxu0 %v3146
      %3261 = vmatprep.subr.mxu0 %v3151
      %3262 = vmatpush1.msra.mxu0 %v3150
      %3263 = vmatprep.subr.mxu0 %v3155
      %3264 = vmatpush1.msra.mxu0 %v3154
      %3265 = vmatprep.subr.mxu0 %v3159
      %3266 = vmatpush1.msra.mxu0 %v3158
      %3267 = vmatprep.subr.mxu0 %v3163
      %3268 = vmatpush1.msra.mxu0 %v3162
      %3269 = vmatprep.subr.mxu0 %v3167
      %3270 = vmatpush1.msra.mxu0 %v3166
      %3271 = vmatprep.subr.mxu0 0.0
      %3272 = vmatpush1.msra.mxu0 0.0
      %3273 = vmatprep.subr.mxu0 0.0
      %3274 = vmatpush1.msra.mxu0 0.0
      %3275 = vmatprep.subr.mxu0 0.0
      %3276 = vmatpush1.msra.mxu0 0.0
      %3277 = vmatprep.subr.mxu0 0.0
      %3278 = vmatpush1.msra.mxu0 0.0
      %3279 = vmatprep.subr.mxu0 0.0
      %3280 = vmatpush1.msra.mxu0 0.0
      %3281 = vmatprep.subr.mxu0 0.0
      %3282 = vmatpush1.msra.mxu0 0.0
      %3283 = vmatprep.subr.mxu0 0.0
      %3284 = vmatpush1.msra.mxu0 0.0
      %3285 = vmatprep.subr.mxu0 0.0
      %3286 = vmatpush1.msra.mxu0 0.0
      %3287 = vmatprep.subr.mxu0 0.0
      %3288 = vmatpush1.msra.mxu0 0.0
      %3289 = vmatprep.subr.mxu0 0.0
      %3290 = vmatpush1.msra.mxu0 0.0
      %3291 = vmatprep.subr.mxu0 0.0
      %3292 = vmatpush1.msra.mxu0 0.0
      %3293 = vmatprep.subr.mxu0 0.0
      %3294 = vmatpush1.msra.mxu0 0.0
      %3295 = vmatprep.subr.mxu0 0.0
      %3296 = vmatpush1.msra.mxu0 0.0
      %3297 = vmatprep.subr.mxu0 0.0
      %3298 = vmatpush1.msra.mxu0 0.0
      %3299 = vmatprep.subr.mxu0 0.0
      %3300 = vmatpush1.msra.mxu0 0.0
      %3301 = vmatprep.subr.mxu0 0.0
      %3302 = vmatpush1.msra.mxu0 0.0
      %3303 = vmatprep.mubr.f32.mxu0 0.0
      %3304 = vmatmul.mubr.f32.gmra.mrb[0].mxu0 %v3103
      %v3305 = vpop.f32.mrb[0].mxu0
      %v3306 = vadd.f32 0.0, %v3305
      %v3307 = vpop.f32.mrb[0].mxu0
      %v3308 = vadd.f32 0.0, %v3307
      %3309 = vdwg.mxu0
      %v3314 = vcombine.low %v3235, %v3237
      %v3315 = vcombine.low %v3306, %v3308
      %v3317 = vunpack.c.l.s4 1966171168
      %v3318 = vunpack.c.0.s8 %v3317
      %v3319 = vlaneseq
      %v3320 = vshrl.u32 %v3319, 7
      %v3321 = vsub.s32 %v3318, %v3320
      %v3322 = vrot.slane %v3314, %v3321
      %v3324 = vunpack.c.l.s4 1966171168
      %v3325 = vunpack.c.0.s8 %v3324
      %v3326 = vlaneseq
      %v3327 = vshrl.u32 %v3326, 7
      %v3328 = vsub.s32 %v3325, %v3327
      %v3329 = vrot.slane %v3315, %v3328
      %v3330 = vcombine.low %v3322, %v3329
      %v3332 = vunpack.c.l.s4 1966171168
      %v3333 = vunpack.c.0.s8 %v3332
      %v3334 = vlaneseq
      %v3335 = vshrl.u32 %v3334, 7
      %v3336 = vsub.s32 %v3333, %v3335
      %v3337 = vrot.slane %v3330, %v3336
      %v3339 = vadd.f32 %v3102, %v3337
      %v3340 = vxor.u32 %v3339, 2147483648
      %v3341 = vmul.f32 %v3340, 1.442695
      %v3342 = vpow.pop %v3341
      %v3343 = vadd.f32 %v3342, 1.0
      %v3344 = vrcp.pop %v3343
      %v3345 = vmul.f32 1.0, %v3344
      %v3347 = vrot.slane %v3339, 3
      %v3349 = vtanh.pop %v3347
      %v3350 = vld [vmem:[#allocation3] sm:$0x1]
      %v3352 = vrot.slane %v3345, 1
      %v3354 = vmul.f32 %v3352, %v3350
      %v3355 = vmul.f32 %v3345, %v3349
      %v3356 = vadd.f32 %v3354, %v3355
      %v3357 = vtanh.pop %v3356
      %v3358 = vrot.slane %v3345, 2
      %v3360 = vmul.f32 %v3358, %v3357
      %3361 = vst [vmem:[#allocation3] sm:$0x1] %v3356
      %3362 = vst [vmem:[#allocation2] sm:$0x1] %v3360
      %v3363 = vld [vmem:[#allocation11] sm:$0xff]
      %v3364 = vld [vmem:[#allocation11 + $0x8] sm:$0xff]
      %v3365 = vld [vmem:[#allocation11 + $0x10] sm:$0xff]
      %v3366 = vld [vmem:[#allocation11 + $0x18] sm:$0xff]
      %v3367 = vld [vmem:[#allocation11 + $0x20] sm:$0xff]
      %v3368 = vld [vmem:[#allocation11 + $0x28] sm:$0xff]
      %v3369 = vld [vmem:[#allocation11 + $0x30] sm:$0xff]
      %v3370 = vld [vmem:[#allocation11 + $0x38] sm:$0xff]
      %v3371 = vld [vmem:[#allocation11 + $0x40] sm:$0xff]
      %v3372 = vld [vmem:[#allocation11 + $0x48] sm:$0xff]
      %v3373 = vld [vmem:[#allocation11 + $0x50] sm:$0xff]
      %v3374 = vld [vmem:[#allocation11 + $0x58] sm:$0xff]
      %v3375 = vld [vmem:[#allocation11 + $0x60] sm:$0xff]
      %v3376 = vld [vmem:[#allocation11 + $0x68] sm:$0xff]
      %v3377 = vld [vmem:[#allocation11 + $0x70] sm:$0xff]
      %v3378 = vld [vmem:[#allocation11 + $0x78] sm:$0xff]
      %v3379 = vld [vmem:[#allocation11 + $0x80] sm:$0xff]
      %v3380 = vld [vmem:[#allocation11 + $0x88] sm:$0xff]
      %v3381 = vld [vmem:[#allocation11 + $0x90] sm:$0xff]
      %v3382 = vld [vmem:[#allocation11 + $0x98] sm:$0xff]
      %v3383 = vld [vmem:[#allocation11 + $0xa0] sm:$0xff]
      %v3384 = vld [vmem:[#allocation11 + $0xa8] sm:$0xff]
      %v3385 = vld [vmem:[#allocation11 + $0xb0] sm:$0xff]
      %v3386 = vld [vmem:[#allocation11 + $0xb8] sm:$0xff]
      %v3387 = vld [vmem:[#allocation11 + $0xc0] sm:$0xff]
      %v3388 = vld [vmem:[#allocation11 + $0xc8] sm:$0xff]
      %v3389 = vld [vmem:[#allocation11 + $0xd0] sm:$0xff]
      %v3390 = vld [vmem:[#allocation11 + $0xd8] sm:$0xff]
      %v3391 = vld [vmem:[#allocation11 + $0xe0] sm:$0xff]
      %v3392 = vld [vmem:[#allocation11 + $0xe8] sm:$0xff]
      %v3393 = vld [vmem:[#allocation11 + $0xf0] sm:$0xff]
      %v3394 = vld [vmem:[#allocation11 + $0xf8] sm:$0xff]
      %v3395 = vld [vmem:[%s4] sm:$0x3]
      %v3397 = vlaneseq
      %v3398 = vshrl.u32 %v3397, 7
      %v3399 = vsub.s32 0, %v3398
      %v3400 = vrot.slane %v3395, %v3399
      %v3401 = vlaneseq
      %v3402 = vshrl.u32 %v3401, 7
      %v3403 = vsub.s32 1, %v3402
      %v3404 = vrot.slane %v3395, %v3403
      %3407 = vmatprep.subr.mxu0 %v3364
      %3408 = vmatpush1.msra.mxu0 %v3363
      %3409 = vmatprep.subr.mxu0 %v3366
      %3410 = vmatpush1.msra.mxu0 %v3365
      %3411 = vmatprep.subr.mxu0 %v3368
      %3412 = vmatpush1.msra.mxu0 %v3367
      %3413 = vmatprep.subr.mxu0 %v3370
      %3414 = vmatpush1.msra.mxu0 %v3369
      %3415 = vmatprep.subr.mxu0 %v3372
      %3416 = vmatpush1.msra.mxu0 %v3371
      %3417 = vmatprep.subr.mxu0 %v3374
      %3418 = vmatpush1.msra.mxu0 %v3373
      %3419 = vmatprep.subr.mxu0 %v3376
      %3420 = vmatpush1.msra.mxu0 %v3375
      %3421 = vmatprep.subr.mxu0 %v3378
      %3422 = vmatpush1.msra.mxu0 %v3377
      %3423 = vmatprep.subr.mxu0 %v3380
      %3424 = vmatpush1.msra.mxu0 %v3379
      %3425 = vmatprep.subr.mxu0 %v3382
      %3426 = vmatpush1.msra.mxu0 %v3381
      %3427 = vmatprep.subr.mxu0 %v3384
      %3428 = vmatpush1.msra.mxu0 %v3383
      %3429 = vmatprep.subr.mxu0 %v3386
      %3430 = vmatpush1.msra.mxu0 %v3385
      %3431 = vmatprep.subr.mxu0 %v3388
      %3432 = vmatpush1.msra.mxu0 %v3387
      %3433 = vmatprep.subr.mxu0 %v3390
      %3434 = vmatpush1.msra.mxu0 %v3389
      %3435 = vmatprep.subr.mxu0 %v3392
      %3436 = vmatpush1.msra.mxu0 %v3391
      %3437 = vmatprep.subr.mxu0 %v3394
      %3438 = vmatpush1.msra.mxu0 %v3393
      %3439 = vmatprep.subr.mxu0 0.0
      %3440 = vmatpush1.msra.mxu0 0.0
      %3441 = vmatprep.subr.mxu0 0.0
      %3442 = vmatpush1.msra.mxu0 0.0
      %3443 = vmatprep.subr.mxu0 0.0
      %3444 = vmatpush1.msra.mxu0 0.0
      %3445 = vmatprep.subr.mxu0 0.0
      %3446 = vmatpush1.msra.mxu0 0.0
      %3447 = vmatprep.subr.mxu0 0.0
      %3448 = vmatpush1.msra.mxu0 0.0
      %3449 = vmatprep.subr.mxu0 0.0
      %3450 = vmatpush1.msra.mxu0 0.0
      %3451 = vmatprep.subr.mxu0 0.0
      %3452 = vmatpush1.msra.mxu0 0.0
      %3453 = vmatprep.subr.mxu0 0.0
      %3454 = vmatpush1.msra.mxu0 0.0
      %3455 = vmatprep.subr.mxu0 0.0
      %3456 = vmatpush1.msra.mxu0 0.0
      %3457 = vmatprep.subr.mxu0 0.0
      %3458 = vmatpush1.msra.mxu0 0.0
      %3459 = vmatprep.subr.mxu0 0.0
      %3460 = vmatpush1.msra.mxu0 0.0
      %3461 = vmatprep.subr.mxu0 0.0
      %3462 = vmatpush1.msra.mxu0 0.0
      %3463 = vmatprep.subr.mxu0 0.0
      %3464 = vmatpush1.msra.mxu0 0.0
      %3465 = vmatprep.subr.mxu0 0.0
      %3466 = vmatpush1.msra.mxu0 0.0
      %3467 = vmatprep.subr.mxu0 0.0
      %3468 = vmatpush1.msra.mxu0 0.0
      %3469 = vmatprep.subr.mxu0 0.0
      %3470 = vmatpush1.msra.mxu0 0.0
      %3471 = vmatprep.mubr.f32.mxu0 0.0
      %3472 = vmatmul.mubr.f32.gmra.mrb[0].mxu0 %v3360
      %v3473 = vpop.f32.mrb[0].mxu0
      %v3474 = vadd.f32 %v3400, %v3473
      %v3475 = vpop.f32.mrb[0].mxu0
      %v3476 = vadd.f32 %v3404, %v3475
      %3477 = vdwg.mxu0
      %v3478 = vsel %vm453, %v3474, -inf
      %v3479 = vsel %vm453, %v3476, -inf
      %v3480 = vmax.f32 %v3478, %v3479
      %3481 = vmax.xlane.f32.xlu0 %v3480
      %v3482 = vpop.xlane.xlu0 %3481
      %v3483 = vrot.slane %v3482, 4
      %v3484 = vmax.f32 %v3482, %v3483
      %v3485 = vrot.slane %v3484, 2
      %v3486 = vmax.f32 %v3484, %v3485
      %v3487 = vrot.slane %v3486, 1
      %v3488 = vmax.f32 %v3486, %v3487
      %s3489 = vtos %v3488
      %v3490 = vstv %s3489
      %vm3491 = vcmp.eq.f32.partialorder %v3474, %v3490
      %vm3492 = vcmp.eq.f32.partialorder %v3476, %v3490
      %v3493 = vsel %vm3491, %v72, 256
      %v3494 = vsel %vm3492, %v73, 256
      %v3495 = vsel %vm453, %v3493, 2147483647
      %v3496 = vsel %vm453, %v3494, 2147483647
      %vm3497 = vcmp.lt.s32.totalorder %v3495, %v3496
      %v3498 = vsel %vm3497, %v3495, %v3496
      %v3499 = vand.u32 %v3498, 65535
      %v3500 = vshra.s32 %v3498, 16
      %v3501 = vcvt.s32.f32 %v3499
      %v3502 = vcvt.s32.f32 %v3500
      %3503 = vmin.xlane.f32.xlu0 %v3502
      %v3504 = vpop.xlane.xlu0 %3503
      %vm3505 = vcmp.eq.f32.partialorder %v3502, %v3504
      %v3506 = vsel %vm3505, %v3501, inf
      %3507 = vmin.xlane.f32.xlu0 %v3506
      %v3508 = vpop.xlane.xlu0 %3507
      %v3509 = vcvt.f32.s32 %v3508
      %v3510 = vcvt.f32.s32 %v3504
      %v3511 = vshll.u32 %v3510, 16
      %v3512 = vadd.s32 %v3511, %v3509
      %v3513 = vrot.slane %v3512, 4
      %vm3514 = vcmp.lt.s32.totalorder %v3512, %v3513
      %v3515 = vsel %vm3514, %v3512, %v3513
      %v3516 = vrot.slane %v3515, 2
      %vm3517 = vcmp.lt.s32.totalorder %v3515, %v3516
      %v3518 = vsel %vm3517, %v3515, %v3516
      %v3519 = vrot.slane %v3518, 1
      %vm3520 = vcmp.lt.s32.totalorder %v3518, %v3519
      %v3521 = vsel %vm3520, %v3518, %v3519
      %s3522 = vtos %v3521
      %3523 = sst [smem:[%s66]] %s3522
    $region61: #{tpu_custom_call.1} parent=1 // pred_fallthru
      _
    %s3524 = sld [smem:[#allocation4]]
    %s3525 = scalar_lea.smem [#allocation12], 8
    %3526 = sst [smem:[%s3525]] %s3524
    %s3527 = sld [smem:[#allocation4]]
    %p3528 = scmp.ne.s32.totalorder %s3527, 0
    // Predicated region
    $region62: #{tpu_custom_call.1} parent=1 // pred_check
      %p3529 = pneg %p3528
    $region63: #{tpu_custom_call.1} parent=1 // pred_check_branch
      %3531 = sbr.rel (%p3529) target = $region65
    $region64: #{tpu_custom_call.1} parent=1 // pred_region
      %s3532 = smul.u32 %s3527, 4
      %s3533 = scalar_lea.vmem [#allocation6], %s3532
      %v3534 = vld [vmem:[%s3533] sm:$0xf]
      %v3535 = vld [vmem:[#allocation2] sm:$0x1]
      %v3536 = vld [vmem:[#allocation9] sm:$0xff]
      %v3537 = vld [vmem:[#allocation9 + $0x8] sm:$0xff]
      %v3538 = vld [vmem:[#allocation9 + $0x10] sm:$0xff]
      %v3539 = vld [vmem:[#allocation9 + $0x18] sm:$0xff]
      %v3540 = vld [vmem:[#allocation9 + $0x20] sm:$0xff]
      %v3541 = vld [vmem:[#allocation9 + $0x28] sm:$0xff]
      %v3542 = vld [vmem:[#allocation9 + $0x30] sm:$0xff]
      %v3543 = vld [vmem:[#allocation9 + $0x38] sm:$0xff]
      %v3544 = vld [vmem:[#allocation9 + $0x40] sm:$0xff]
      %v3545 = vld [vmem:[#allocation9 + $0x48] sm:$0xff]
      %v3546 = vld [vmem:[#allocation9 + $0x50] sm:$0xff]
      %v3547 = vld [vmem:[#allocation9 + $0x58] sm:$0xff]
      %v3548 = vld [vmem:[#allocation9 + $0x60] sm:$0xff]
      %v3549 = vld [vmem:[#allocation9 + $0x68] sm:$0xff]
      %v3550 = vld [vmem:[#allocation9 + $0x70] sm:$0xff]
      %v3551 = vld [vmem:[#allocation9 + $0x78] sm:$0xff]
      %v3552 = vld [vmem:[#allocation9 + $0x80] sm:$0xff]
      %v3553 = vld [vmem:[#allocation9 + $0x88] sm:$0xff]
      %v3554 = vld [vmem:[#allocation9 + $0x90] sm:$0xff]
      %v3555 = vld [vmem:[#allocation9 + $0x98] sm:$0xff]
      %v3556 = vld [vmem:[#allocation9 + $0xa0] sm:$0xff]
      %v3557 = vld [vmem:[#allocation9 + $0xa8] sm:$0xff]
      %v3558 = vld [vmem:[#allocation9 + $0xb0] sm:$0xff]
      %v3559 = vld [vmem:[#allocation9 + $0xb8] sm:$0xff]
      %v3560 = vld [vmem:[#allocation9 + $0xc0] sm:$0xff]
      %v3561 = vld [vmem:[#allocation9 + $0xc8] sm:$0xff]
      %v3562 = vld [vmem:[#allocation9 + $0xd0] sm:$0xff]
      %v3563 = vld [vmem:[#allocation9 + $0xd8] sm:$0xff]
      %v3564 = vld [vmem:[#allocation9 + $0xe0] sm:$0xff]
      %v3565 = vld [vmem:[#allocation9 + $0xe8] sm:$0xff]
      %v3566 = vld [vmem:[#allocation9 + $0xf0] sm:$0xff]
      %v3567 = vld [vmem:[#allocation9 + $0xf8] sm:$0xff]
      %v3568 = vld [vmem:[#allocation9 + $0x100] sm:$0xff]
      %v3569 = vld [vmem:[#allocation9 + $0x108] sm:$0xff]
      %v3570 = vld [vmem:[#allocation9 + $0x110] sm:$0xff]
      %v3571 = vld [vmem:[#allocation9 + $0x118] sm:$0xff]
      %v3572 = vld [vmem:[#allocation9 + $0x120] sm:$0xff]
      %v3573 = vld [vmem:[#allocation9 + $0x128] sm:$0xff]
      %v3574 = vld [vmem:[#allocation9 + $0x130] sm:$0xff]
      %v3575 = vld [vmem:[#allocation9 + $0x138] sm:$0xff]
      %v3576 = vld [vmem:[#allocation9 + $0x140] sm:$0xff]
      %v3577 = vld [vmem:[#allocation9 + $0x148] sm:$0xff]
      %v3578 = vld [vmem:[#allocation9 + $0x150] sm:$0xff]
      %v3579 = vld [vmem:[#allocation9 + $0x158] sm:$0xff]
      %v3580 = vld [vmem:[#allocation9 + $0x160] sm:$0xff]
      %v3581 = vld [vmem:[#allocation9 + $0x168] sm:$0xff]
      %v3582 = vld [vmem:[#allocation9 + $0x170] sm:$0xff]
      %v3583 = vld [vmem:[#allocation9 + $0x178] sm:$0xff]
      %v3584 = vld [vmem:[#allocation9 + $0x180] sm:$0xff]
      %v3585 = vld [vmem:[#allocation9 + $0x188] sm:$0xff]
      %v3586 = vld [vmem:[#allocation9 + $0x190] sm:$0xff]
      %v3587 = vld [vmem:[#allocation9 + $0x198] sm:$0xff]
      %v3588 = vld [vmem:[#allocation9 + $0x1a0] sm:$0xff]
      %v3589 = vld [vmem:[#allocation9 + $0x1a8] sm:$0xff]
      %v3590 = vld [vmem:[#allocation9 + $0x1b0] sm:$0xff]
      %v3591 = vld [vmem:[#allocation9 + $0x1b8] sm:$0xff]
      %v3592 = vld [vmem:[#allocation9 + $0x1c0] sm:$0xff]
      %v3593 = vld [vmem:[#allocation9 + $0x1c8] sm:$0xff]
      %v3594 = vld [vmem:[#allocation9 + $0x1d0] sm:$0xff]
      %v3595 = vld [vmem:[#allocation9 + $0x1d8] sm:$0xff]
      %v3596 = vld [vmem:[#allocation9 + $0x1e0] sm:$0xff]
      %v3597 = vld [vmem:[#allocation9 + $0x1e8] sm:$0xff]
      %v3598 = vld [vmem:[#allocation9 + $0x1f0] sm:$0xff]
      %v3599 = vld [vmem:[#allocation9 + $0x1f8] sm:$0xff]
      %3600 = vmatprep.subr.mxu0 %v3537
      %3601 = vmatpush1.msra.mxu0 %v3536
      %3602 = vmatprep.subr.mxu0 %v3541
      %3603 = vmatpush1.msra.mxu0 %v3540
      %3604 = vmatprep.subr.mxu0 %v3545
      %3605 = vmatpush1.msra.mxu0 %v3544
      %3606 = vmatprep.subr.mxu0 %v3549
      %3607 = vmatpush1.msra.mxu0 %v3548
      %3608 = vmatprep.subr.mxu0 %v3553
      %3609 = vmatpush1.msra.mxu0 %v3552
      %3610 = vmatprep.subr.mxu0 %v3557
      %3611 = vmatpush1.msra.mxu0 %v3556
      %3612 = vmatprep.subr.mxu0 %v3561
      %3613 = vmatpush1.msra.mxu0 %v3560
      %3614 = vmatprep.subr.mxu0 %v3565
      %3615 = vmatpush1.msra.mxu0 %v3564
      %3616 = vmatprep.subr.mxu0 %v3569
      %3617 = vmatpush1.msra.mxu0 %v3568
      %3618 = vmatprep.subr.mxu0 %v3573
      %3619 = vmatpush1.msra.mxu0 %v3572
      %3620 = vmatprep.subr.mxu0 %v3577
      %3621 = vmatpush1.msra.mxu0 %v3576
      %3622 = vmatprep.subr.mxu0 %v3581
      %3623 = vmatpush1.msra.mxu0 %v3580
      %3624 = vmatprep.subr.mxu0 %v3585
      %3625 = vmatpush1.msra.mxu0 %v3584
      %3626 = vmatprep.subr.mxu0 %v3589
      %3627 = vmatpush1.msra.mxu0 %v3588
      %3628 = vmatprep.subr.mxu0 %v3593
      %3629 = vmatpush1.msra.mxu0 %v3592
      %3630 = vmatprep.subr.mxu0 %v3597
      %3631 = vmatpush1.msra.mxu0 %v3596
      %3632 = vmatprep.subr.mxu0 0.0
      %3633 = vmatpush1.msra.mxu0 0.0
      %3634 = vmatprep.subr.mxu0 0.0
      %3635 = vmatpush1.msra.mxu0 0.0
      %3636 = vmatprep.subr.mxu0 0.0
      %3637 = vmatpush1.msra.mxu0 0.0
      %3638 = vmatprep.subr.mxu0 0.0
      %3639 = vmatpush1.msra.mxu0 0.0
      %3640 = vmatprep.subr.mxu0 0.0
      %3641 = vmatpush1.msra.mxu0 0.0
      %3642 = vmatprep.subr.mxu0 0.0
      %3643 = vmatpush1.msra.mxu0 0.0
      %3644 = vmatprep.subr.mxu0 0.0
      %3645 = vmatpush1.msra.mxu0 0.0
      %3646 = vmatprep.subr.mxu0 0.0
      %3647 = vmatpush1.msra.mxu0 0.0
      %3648 = vmatprep.subr.mxu0 0.0
      %3649 = vmatpush1.msra.mxu0 0.0
      %3650 = vmatprep.subr.mxu0 0.0
      %3651 = vmatpush1.msra.mxu0 0.0
      %3652 = vmatprep.subr.mxu0 0.0
      %3653 = vmatpush1.msra.mxu0 0.0
      %3654 = vmatprep.subr.mxu0 0.0
      %3655 = vmatpush1.msra.mxu0 0.0
      %3656 = vmatprep.subr.mxu0 0.0
      %3657 = vmatpush1.msra.mxu0 0.0
      %3658 = vmatprep.subr.mxu0 0.0
      %3659 = vmatpush1.msra.mxu0 0.0
      %3660 = vmatprep.subr.mxu0 0.0
      %3661 = vmatpush1.msra.mxu0 0.0
      %3662 = vmatprep.subr.mxu0 0.0
      %3663 = vmatpush1.msra.mxu0 0.0
      %3664 = vmatprep.mubr.f32.mxu0 0.0
      %3665 = vmatmul.mubr.f32.gmra.mrb[0].mxu0 %v3535
      %v3666 = vpop.f32.mrb[0].mxu0
      %v3667 = vadd.f32 0.0, %v3666
      %v3668 = vpop.f32.mrb[0].mxu0
      %v3669 = vadd.f32 0.0, %v3668
      %3670 = vdwg.mxu0
      %3671 = vmatprep.subr.mxu0 %v3539
      %3672 = vmatpush1.msra.mxu0 %v3538
      %3673 = vmatprep.subr.mxu0 %v3543
      %3674 = vmatpush1.msra.mxu0 %v3542
      %3675 = vmatprep.subr.mxu0 %v3547
      %3676 = vmatpush1.msra.mxu0 %v3546
      %3677 = vmatprep.subr.mxu0 %v3551
      %3678 = vmatpush1.msra.mxu0 %v3550
      %3679 = vmatprep.subr.mxu0 %v3555
      %3680 = vmatpush1.msra.mxu0 %v3554
      %3681 = vmatprep.subr.mxu0 %v3559
      %3682 = vmatpush1.msra.mxu0 %v3558
      %3683 = vmatprep.subr.mxu0 %v3563
      %3684 = vmatpush1.msra.mxu0 %v3562
      %3685 = vmatprep.subr.mxu0 %v3567
      %3686 = vmatpush1.msra.mxu0 %v3566
      %3687 = vmatprep.subr.mxu0 %v3571
      %3688 = vmatpush1.msra.mxu0 %v3570
      %3689 = vmatprep.subr.mxu0 %v3575
      %3690 = vmatpush1.msra.mxu0 %v3574
      %3691 = vmatprep.subr.mxu0 %v3579
      %3692 = vmatpush1.msra.mxu0 %v3578
      %3693 = vmatprep.subr.mxu0 %v3583
      %3694 = vmatpush1.msra.mxu0 %v3582
      %3695 = vmatprep.subr.mxu0 %v3587
      %3696 = vmatpush1.msra.mxu0 %v3586
      %3697 = vmatprep.subr.mxu0 %v3591
      %3698 = vmatpush1.msra.mxu0 %v3590
      %3699 = vmatprep.subr.mxu0 %v3595
      %3700 = vmatpush1.msra.mxu0 %v3594
      %3701 = vmatprep.subr.mxu0 %v3599
      %3702 = vmatpush1.msra.mxu0 %v3598
      %3703 = vmatprep.subr.mxu0 0.0
      %3704 = vmatpush1.msra.mxu0 0.0
      %3705 = vmatprep.subr.mxu0 0.0
      %3706 = vmatpush1.msra.mxu0 0.0
      %3707 = vmatprep.subr.mxu0 0.0
      %3708 = vmatpush1.msra.mxu0 0.0
      %3709 = vmatprep.subr.mxu0 0.0
      %3710 = vmatpush1.msra.mxu0 0.0
      %3711 = vmatprep.subr.mxu0 0.0
      %3712 = vmatpush1.msra.mxu0 0.0
      %3713 = vmatprep.subr.mxu0 0.0
      %3714 = vmatpush1.msra.mxu0 0.0
      %3715 = vmatprep.subr.mxu0 0.0
      %3716 = vmatpush1.msra.mxu0 0.0
      %3717 = vmatprep.subr.mxu0 0.0
      %3718 = vmatpush1.msra.mxu0 0.0
      %3719 = vmatprep.subr.mxu0 0.0
      %3720 = vmatpush1.msra.mxu0 0.0
      %3721 = vmatprep.subr.mxu0 0.0
      %3722 = vmatpush1.msra.mxu0 0.0
      %3723 = vmatprep.subr.mxu0 0.0
      %3724 = vmatpush1.msra.mxu0 0.0
      %3725 = vmatprep.subr.mxu0 0.0
      %3726 = vmatpush1.msra.mxu0 0.0
      %3727 = vmatprep.subr.mxu0 0.0
      %3728 = vmatpush1.msra.mxu0 0.0
      %3729 = vmatprep.subr.mxu0 0.0
      %3730 = vmatpush1.msra.mxu0 0.0
      %3731 = vmatprep.subr.mxu0 0.0
      %3732 = vmatpush1.msra.mxu0 0.0
      %3733 = vmatprep.subr.mxu0 0.0
      %3734 = vmatpush1.msra.mxu0 0.0
      %3735 = vmatprep.mubr.f32.mxu0 0.0
      %3736 = vmatmul.mubr.f32.gmra.mrb[0].mxu0 %v3535
      %v3737 = vpop.f32.mrb[0].mxu0
      %v3738 = vadd.f32 0.0, %v3737
      %v3739 = vpop.f32.mrb[0].mxu0
      %v3740 = vadd.f32 0.0, %v3739
      %3741 = vdwg.mxu0
      %v3746 = vcombine.low %v3667, %v3669
      %v3747 = vcombine.low %v3738, %v3740
      %v3749 = vunpack.c.l.s4 1966171168
      %v3750 = vunpack.c.0.s8 %v3749
      %v3751 = vlaneseq
      %v3752 = vshrl.u32 %v3751, 7
      %v3753 = vsub.s32 %v3750, %v3752
      %v3754 = vrot.slane %v3746, %v3753
      %v3756 = vunpack.c.l.s4 1966171168
      %v3757 = vunpack.c.0.s8 %v3756
      %v3758 = vlaneseq
      %v3759 = vshrl.u32 %v3758, 7
      %v3760 = vsub.s32 %v3757, %v3759
      %v3761 = vrot.slane %v3747, %v3760
      %v3762 = vcombine.low %v3754, %v3761
      %v3764 = vunpack.c.l.s4 1966171168
      %v3765 = vunpack.c.0.s8 %v3764
      %v3766 = vlaneseq
      %v3767 = vshrl.u32 %v3766, 7
      %v3768 = vsub.s32 %v3765, %v3767
      %v3769 = vrot.slane %v3762, %v3768
      %v3771 = vadd.f32 %v3534, %v3769
      %v3772 = vxor.u32 %v3771, 2147483648
      %v3773 = vmul.f32 %v3772, 1.442695
      %v3774 = vpow.pop %v3773
      %v3775 = vadd.f32 %v3774, 1.0
      %v3776 = vrcp.pop %v3775
      %v3777 = vmul.f32 1.0, %v3776
      %v3779 = vrot.slane %v3771, 3
      %v3781 = vtanh.pop %v3779
      %v3782 = vld [vmem:[#allocation3] sm:$0x1]
      %v3784 = vrot.slane %v3777, 1
      %v3786 = vmul.f32 %v3784, %v3782
      %v3787 = vmul.f32 %v3777, %v3781
      %v3788 = vadd.f32 %v3786, %v3787
      %v3789 = vtanh.pop %v3788
      %v3790 = vrot.slane %v3777, 2
      %v3792 = vmul.f32 %v3790, %v3789
      %3793 = vst [vmem:[#allocation3] sm:$0x1] %v3788
      %3794 = vst [vmem:[#allocation2] sm:$0x1] %v3792
      %v3795 = vld [vmem:[#allocation11] sm:$0xff]
      %v3796 = vld [vmem:[#allocation11 + $0x8] sm:$0xff]
      %v3797 = vld [vmem:[#allocation11 + $0x10] sm:$0xff]
      %v3798 = vld [vmem:[#allocation11 + $0x18] sm:$0xff]
      %v3799 = vld [vmem:[#allocation11 + $0x20] sm:$0xff]
      %v3800 = vld [vmem:[#allocation11 + $0x28] sm:$0xff]
      %v3801 = vld [vmem:[#allocation11 + $0x30] sm:$0xff]
      %v3802 = vld [vmem:[#allocation11 + $0x38] sm:$0xff]
      %v3803 = vld [vmem:[#allocation11 + $0x40] sm:$0xff]
      %v3804 = vld [vmem:[#allocation11 + $0x48] sm:$0xff]
      %v3805 = vld [vmem:[#allocation11 + $0x50] sm:$0xff]
      %v3806 = vld [vmem:[#allocation11 + $0x58] sm:$0xff]
      %v3807 = vld [vmem:[#allocation11 + $0x60] sm:$0xff]
      %v3808 = vld [vmem:[#allocation11 + $0x68] sm:$0xff]
      %v3809 = vld [vmem:[#allocation11 + $0x70] sm:$0xff]
      %v3810 = vld [vmem:[#allocation11 + $0x78] sm:$0xff]
      %v3811 = vld [vmem:[#allocation11 + $0x80] sm:$0xff]
      %v3812 = vld [vmem:[#allocation11 + $0x88] sm:$0xff]
      %v3813 = vld [vmem:[#allocation11 + $0x90] sm:$0xff]
      %v3814 = vld [vmem:[#allocation11 + $0x98] sm:$0xff]
      %v3815 = vld [vmem:[#allocation11 + $0xa0] sm:$0xff]
      %v3816 = vld [vmem:[#allocation11 + $0xa8] sm:$0xff]
      %v3817 = vld [vmem:[#allocation11 + $0xb0] sm:$0xff]
      %v3818 = vld [vmem:[#allocation11 + $0xb8] sm:$0xff]
      %v3819 = vld [vmem:[#allocation11 + $0xc0] sm:$0xff]
      %v3820 = vld [vmem:[#allocation11 + $0xc8] sm:$0xff]
      %v3821 = vld [vmem:[#allocation11 + $0xd0] sm:$0xff]
      %v3822 = vld [vmem:[#allocation11 + $0xd8] sm:$0xff]
      %v3823 = vld [vmem:[#allocation11 + $0xe0] sm:$0xff]
      %v3824 = vld [vmem:[#allocation11 + $0xe8] sm:$0xff]
      %v3825 = vld [vmem:[#allocation11 + $0xf0] sm:$0xff]
      %v3826 = vld [vmem:[#allocation11 + $0xf8] sm:$0xff]
      %v3827 = vld [vmem:[%s4] sm:$0x3]
      %v3829 = vlaneseq
      %v3830 = vshrl.u32 %v3829, 7
      %v3831 = vsub.s32 0, %v3830
      %v3832 = vrot.slane %v3827, %v3831
      %v3833 = vlaneseq
      %v3834 = vshrl.u32 %v3833, 7
      %v3835 = vsub.s32 1, %v3834
      %v3836 = vrot.slane %v3827, %v3835
      %3839 = vmatprep.subr.mxu0 %v3796
      %3840 = vmatpush1.msra.mxu0 %v3795
      %3841 = vmatprep.subr.mxu0 %v3798
      %3842 = vmatpush1.msra.mxu0 %v3797
      %3843 = vmatprep.subr.mxu0 %v3800
      %3844 = vmatpush1.msra.mxu0 %v3799
      %3845 = vmatprep.subr.mxu0 %v3802
      %3846 = vmatpush1.msra.mxu0 %v3801
      %3847 = vmatprep.subr.mxu0 %v3804
      %3848 = vmatpush1.msra.mxu0 %v3803
      %3849 = vmatprep.subr.mxu0 %v3806
      %3850 = vmatpush1.msra.mxu0 %v3805
      %3851 = vmatprep.subr.mxu0 %v3808
      %3852 = vmatpush1.msra.mxu0 %v3807
      %3853 = vmatprep.subr.mxu0 %v3810
      %3854 = vmatpush1.msra.mxu0 %v3809
      %3855 = vmatprep.subr.mxu0 %v3812
      %3856 = vmatpush1.msra.mxu0 %v3811
      %3857 = vmatprep.subr.mxu0 %v3814
      %3858 = vmatpush1.msra.mxu0 %v3813
      %3859 = vmatprep.subr.mxu0 %v3816
      %3860 = vmatpush1.msra.mxu0 %v3815
      %3861 = vmatprep.subr.mxu0 %v3818
      %3862 = vmatpush1.msra.mxu0 %v3817
      %3863 = vmatprep.subr.mxu0 %v3820
      %3864 = vmatpush1.msra.mxu0 %v3819
      %3865 = vmatprep.subr.mxu0 %v3822
      %3866 = vmatpush1.msra.mxu0 %v3821
      %3867 = vmatprep.subr.mxu0 %v3824
      %3868 = vmatpush1.msra.mxu0 %v3823
      %3869 = vmatprep.subr.mxu0 %v3826
      %3870 = vmatpush1.msra.mxu0 %v3825
      %3871 = vmatprep.subr.mxu0 0.0
      %3872 = vmatpush1.msra.mxu0 0.0
      %3873 = vmatprep.subr.mxu0 0.0
      %3874 = vmatpush1.msra.mxu0 0.0
      %3875 = vmatprep.subr.mxu0 0.0
      %3876 = vmatpush1.msra.mxu0 0.0
      %3877 = vmatprep.subr.mxu0 0.0
      %3878 = vmatpush1.msra.mxu0 0.0
      %3879 = vmatprep.subr.mxu0 0.0
      %3880 = vmatpush1.msra.mxu0 0.0
      %3881 = vmatprep.subr.mxu0 0.0
      %3882 = vmatpush1.msra.mxu0 0.0
      %3883 = vmatprep.subr.mxu0 0.0
      %3884 = vmatpush1.msra.mxu0 0.0
      %3885 = vmatprep.subr.mxu0 0.0
      %3886 = vmatpush1.msra.mxu0 0.0
      %3887 = vmatprep.subr.mxu0 0.0
      %3888 = vmatpush1.msra.mxu0 0.0
      %3889 = vmatprep.subr.mxu0 0.0
      %3890 = vmatpush1.msra.mxu0 0.0
      %3891 = vmatprep.subr.mxu0 0.0
      %3892 = vmatpush1.msra.mxu0 0.0
      %3893 = vmatprep.subr.mxu0 0.0
      %3894 = vmatpush1.msra.mxu0 0.0
      %3895 = vmatprep.subr.mxu0 0.0
      %3896 = vmatpush1.msra.mxu0 0.0
      %3897 = vmatprep.subr.mxu0 0.0
      %3898 = vmatpush1.msra.mxu0 0.0
      %3899 = vmatprep.subr.mxu0 0.0
      %3900 = vmatpush1.msra.mxu0 0.0
      %3901 = vmatprep.subr.mxu0 0.0
      %3902 = vmatpush1.msra.mxu0 0.0
      %3903 = vmatprep.mubr.f32.mxu0 0.0
      %3904 = vmatmul.mubr.f32.gmra.mrb[0].mxu0 %v3792
      %v3905 = vpop.f32.mrb[0].mxu0
      %v3906 = vadd.f32 %v3832, %v3905
      %v3907 = vpop.f32.mrb[0].mxu0
      %v3908 = vadd.f32 %v3836, %v3907
      %3909 = vdwg.mxu0
      %v3910 = vsel %vm453, %v3906, -inf
      %v3911 = vsel %vm453, %v3908, -inf
      %v3912 = vmax.f32 %v3910, %v3911
      %3913 = vmax.xlane.f32.xlu0 %v3912
      %v3914 = vpop.xlane.xlu0 %3913
      %v3915 = vrot.slane %v3914, 4
      %v3916 = vmax.f32 %v3914, %v3915
      %v3917 = vrot.slane %v3916, 2
      %v3918 = vmax.f32 %v3916, %v3917
      %v3919 = vrot.slane %v3918, 1
      %v3920 = vmax.f32 %v3918, %v3919
      %s3921 = vtos %v3920
      %v3922 = vstv %s3921
      %vm3923 = vcmp.eq.f32.partialorder %v3906, %v3922
      %vm3924 = vcmp.eq.f32.partialorder %v3908, %v3922
      %v3925 = vsel %vm3923, %v72, 256
      %v3926 = vsel %vm3924, %v73, 256
      %v3927 = vsel %vm453, %v3925, 2147483647
      %v3928 = vsel %vm453, %v3926, 2147483647
      %vm3929 = vcmp.lt.s32.totalorder %v3927, %v3928
      %v3930 = vsel %vm3929, %v3927, %v3928
      %v3931 = vand.u32 %v3930, 65535
      %v3932 = vshra.s32 %v3930, 16
      %v3933 = vcvt.s32.f32 %v3931
      %v3934 = vcvt.s32.f32 %v3932
      %3935 = vmin.xlane.f32.xlu0 %v3934
      %v3936 = vpop.xlane.xlu0 %3935
      %vm3937 = vcmp.eq.f32.partialorder %v3934, %v3936
      %v3938 = vsel %vm3937, %v3933, inf
      %3939 = vmin.xlane.f32.xlu0 %v3938
      %v3940 = vpop.xlane.xlu0 %3939
      %v3941 = vcvt.f32.s32 %v3940
      %v3942 = vcvt.f32.s32 %v3936
      %v3943 = vshll.u32 %v3942, 16
      %v3944 = vadd.s32 %v3943, %v3941
      %v3945 = vrot.slane %v3944, 4
      %vm3946 = vcmp.lt.s32.totalorder %v3944, %v3945
      %v3947 = vsel %vm3946, %v3944, %v3945
      %v3948 = vrot.slane %v3947, 2
      %vm3949 = vcmp.lt.s32.totalorder %v3947, %v3948
      %v3950 = vsel %vm3949, %v3947, %v3948
      %v3951 = vrot.slane %v3950, 1
      %vm3952 = vcmp.lt.s32.totalorder %v3950, %v3951
      %v3953 = vsel %vm3952, %v3950, %v3951
      %s3954 = vtos %v3953
      %3955 = sst [smem:[%s66]] %s3954
    $region65: #{tpu_custom_call.1} parent=1 // pred_fallthru
      _
    %s3956 = sld [smem:[#allocation4]]
    %s3957 = scalar_lea.smem [#allocation12], 9
    %3958 = sst [smem:[%s3957]] %s3956
    %s3959 = sld [smem:[#allocation4]]
    %p3960 = scmp.ne.s32.totalorder %s3959, 0
    // Predicated region
    $region66: #{tpu_custom_call.1} parent=1 // pred_check
      %p3961 = pneg %p3960
    $region67: #{tpu_custom_call.1} parent=1 // pred_check_branch
      %3963 = sbr.rel (%p3961) target = $region69
    $region68: #{tpu_custom_call.1} parent=1 // pred_region
      %s3964 = smul.u32 %s3959, 4
      %s3965 = scalar_lea.vmem [#allocation6], %s3964
      %v3966 = vld [vmem:[%s3965] sm:$0xf]
      %v3967 = vld [vmem:[#allocation2] sm:$0x1]
      %v3968 = vld [vmem:[#allocation9] sm:$0xff]
      %v3969 = vld [vmem:[#allocation9 + $0x8] sm:$0xff]
      %v3970 = vld [vmem:[#allocation9 + $0x10] sm:$0xff]
      %v3971 = vld [vmem:[#allocation9 + $0x18] sm:$0xff]
      %v3972 = vld [vmem:[#allocation9 + $0x20] sm:$0xff]
      %v3973 = vld [vmem:[#allocation9 + $0x28] sm:$0xff]
      %v3974 = vld [vmem:[#allocation9 + $0x30] sm:$0xff]
      %v3975 = vld [vmem:[#allocation9 + $0x38] sm:$0xff]
      %v3976 = vld [vmem:[#allocation9 + $0x40] sm:$0xff]
      %v3977 = vld [vmem:[#allocation9 + $0x48] sm:$0xff]
      %v3978 = vld [vmem:[#allocation9 + $0x50] sm:$0xff]
      %v3979 = vld [vmem:[#allocation9 + $0x58] sm:$0xff]
      %v3980 = vld [vmem:[#allocation9 + $0x60] sm:$0xff]
      %v3981 = vld [vmem:[#allocation9 + $0x68] sm:$0xff]
      %v3982 = vld [vmem:[#allocation9 + $0x70] sm:$0xff]
      %v3983 = vld [vmem:[#allocation9 + $0x78] sm:$0xff]
      %v3984 = vld [vmem:[#allocation9 + $0x80] sm:$0xff]
      %v3985 = vld [vmem:[#allocation9 + $0x88] sm:$0xff]
      %v3986 = vld [vmem:[#allocation9 + $0x90] sm:$0xff]
      %v3987 = vld [vmem:[#allocation9 + $0x98] sm:$0xff]
      %v3988 = vld [vmem:[#allocation9 + $0xa0] sm:$0xff]
      %v3989 = vld [vmem:[#allocation9 + $0xa8] sm:$0xff]
      %v3990 = vld [vmem:[#allocation9 + $0xb0] sm:$0xff]
      %v3991 = vld [vmem:[#allocation9 + $0xb8] sm:$0xff]
      %v3992 = vld [vmem:[#allocation9 + $0xc0] sm:$0xff]
      %v3993 = vld [vmem:[#allocation9 + $0xc8] sm:$0xff]
      %v3994 = vld [vmem:[#allocation9 + $0xd0] sm:$0xff]
      %v3995 = vld [vmem:[#allocation9 + $0xd8] sm:$0xff]
      %v3996 = vld [vmem:[#allocation9 + $0xe0] sm:$0xff]
      %v3997 = vld [vmem:[#allocation9 + $0xe8] sm:$0xff]
      %v3998 = vld [vmem:[#allocation9 + $0xf0] sm:$0xff]
      %v3999 = vld [vmem:[#allocation9 + $0xf8] sm:$0xff]
      %v4000 = vld [vmem:[#allocation9 + $0x100] sm:$0xff]
      %v4001 = vld [vmem:[#allocation9 + $0x108] sm:$0xff]
      %v4002 = vld [vmem:[#allocation9 + $0x110] sm:$0xff]
      %v4003 = vld [vmem:[#allocation9 + $0x118] sm:$0xff]
      %v4004 = vld [vmem:[#allocation9 + $0x120] sm:$0xff]
      %v4005 = vld [vmem:[#allocation9 + $0x128] sm:$0xff]
      %v4006 = vld [vmem:[#allocation9 + $0x130] sm:$0xff]
      %v4007 = vld [vmem:[#allocation9 + $0x138] sm:$0xff]
      %v4008 = vld [vmem:[#allocation9 + $0x140] sm:$0xff]
      %v4009 = vld [vmem:[#allocation9 + $0x148] sm:$0xff]
      %v4010 = vld [vmem:[#allocation9 + $0x150] sm:$0xff]
      %v4011 = vld [vmem:[#allocation9 + $0x158] sm:$0xff]
      %v4012 = vld [vmem:[#allocation9 + $0x160] sm:$0xff]
      %v4013 = vld [vmem:[#allocation9 + $0x168] sm:$0xff]
      %v4014 = vld [vmem:[#allocation9 + $0x170] sm:$0xff]
      %v4015 = vld [vmem:[#allocation9 + $0x178] sm:$0xff]
      %v4016 = vld [vmem:[#allocation9 + $0x180] sm:$0xff]
      %v4017 = vld [vmem:[#allocation9 + $0x188] sm:$0xff]
      %v4018 = vld [vmem:[#allocation9 + $0x190] sm:$0xff]
      %v4019 = vld [vmem:[#allocation9 + $0x198] sm:$0xff]
      %v4020 = vld [vmem:[#allocation9 + $0x1a0] sm:$0xff]
      %v4021 = vld [vmem:[#allocation9 + $0x1a8] sm:$0xff]
      %v4022 = vld [vmem:[#allocation9 + $0x1b0] sm:$0xff]
      %v4023 = vld [vmem:[#allocation9 + $0x1b8] sm:$0xff]
      %v4024 = vld [vmem:[#allocation9 + $0x1c0] sm:$0xff]
      %v4025 = vld [vmem:[#allocation9 + $0x1c8] sm:$0xff]
      %v4026 = vld [vmem:[#allocation9 + $0x1d0] sm:$0xff]
      %v4027 = vld [vmem:[#allocation9 + $0x1d8] sm:$0xff]
      %v4028 = vld [vmem:[#allocation9 + $0x1e0] sm:$0xff]
      %v4029 = vld [vmem:[#allocation9 + $0x1e8] sm:$0xff]
      %v4030 = vld [vmem:[#allocation9 + $0x1f0] sm:$0xff]
      %v4031 = vld [vmem:[#allocation9 + $0x1f8] sm:$0xff]
      %4032 = vmatprep.subr.mxu0 %v3969
      %4033 = vmatpush1.msra.mxu0 %v3968
      %4034 = vmatprep.subr.mxu0 %v3973
      %4035 = vmatpush1.msra.mxu0 %v3972
      %4036 = vmatprep.subr.mxu0 %v3977
      %4037 = vmatpush1.msra.mxu0 %v3976
      %4038 = vmatprep.subr.mxu0 %v3981
      %4039 = vmatpush1.msra.mxu0 %v3980
      %4040 = vmatprep.subr.mxu0 %v3985
      %4041 = vmatpush1.msra.mxu0 %v3984
      %4042 = vmatprep.subr.mxu0 %v3989
      %4043 = vmatpush1.msra.mxu0 %v3988
      %4044 = vmatprep.subr.mxu0 %v3993
      %4045 = vmatpush1.msra.mxu0 %v3992
      %4046 = vmatprep.subr.mxu0 %v3997
      %4047 = vmatpush1.msra.mxu0 %v3996
      %4048 = vmatprep.subr.mxu0 %v4001
      %4049 = vmatpush1.msra.mxu0 %v4000
      %4050 = vmatprep.subr.mxu0 %v4005
      %4051 = vmatpush1.msra.mxu0 %v4004
      %4052 = vmatprep.subr.mxu0 %v4009
      %4053 = vmatpush1.msra.mxu0 %v4008
      %4054 = vmatprep.subr.mxu0 %v4013
      %4055 = vmatpush1.msra.mxu0 %v4012
      %4056 = vmatprep.subr.mxu0 %v4017
      %4057 = vmatpush1.msra.mxu0 %v4016
      %4058 = vmatprep.subr.mxu0 %v4021
      %4059 = vmatpush1.msra.mxu0 %v4020
      %4060 = vmatprep.subr.mxu0 %v4025
      %4061 = vmatpush1.msra.mxu0 %v4024
      %4062 = vmatprep.subr.mxu0 %v4029
      %4063 = vmatpush1.msra.mxu0 %v4028
      %4064 = vmatprep.subr.mxu0 0.0
      %4065 = vmatpush1.msra.mxu0 0.0
      %4066 = vmatprep.subr.mxu0 0.0
      %4067 = vmatpush1.msra.mxu0 0.0
      %4068 = vmatprep.subr.mxu0 0.0
      %4069 = vmatpush1.msra.mxu0 0.0
      %4070 = vmatprep.subr.mxu0 0.0
      %4071 = vmatpush1.msra.mxu0 0.0
      %4072 = vmatprep.subr.mxu0 0.0
      %4073 = vmatpush1.msra.mxu0 0.0
      %4074 = vmatprep.subr.mxu0 0.0
      %4075 = vmatpush1.msra.mxu0 0.0
      %4076 = vmatprep.subr.mxu0 0.0
      %4077 = vmatpush1.msra.mxu0 0.0
      %4078 = vmatprep.subr.mxu0 0.0
      %4079 = vmatpush1.msra.mxu0 0.0
      %4080 = vmatprep.subr.mxu0 0.0
      %4081 = vmatpush1.msra.mxu0 0.0
      %4082 = vmatprep.subr.mxu0 0.0
      %4083 = vmatpush1.msra.mxu0 0.0
      %4084 = vmatprep.subr.mxu0 0.0
      %4085 = vmatpush1.msra.mxu0 0.0
      %4086 = vmatprep.subr.mxu0 0.0
      %4087 = vmatpush1.msra.mxu0 0.0
      %4088 = vmatprep.subr.mxu0 0.0
      %4089 = vmatpush1.msra.mxu0 0.0
      %4090 = vmatprep.subr.mxu0 0.0
      %4091 = vmatpush1.msra.mxu0 0.0
      %4092 = vmatprep.subr.mxu0 0.0
      %4093 = vmatpush1.msra.mxu0 0.0
      %4094 = vmatprep.subr.mxu0 0.0
      %4095 = vmatpush1.msra.mxu0 0.0
      %4096 = vmatprep.mubr.f32.mxu0 0.0
      %4097 = vmatmul.mubr.f32.gmra.mrb[0].mxu0 %v3967
      %v4098 = vpop.f32.mrb[0].mxu0
      %v4099 = vadd.f32 0.0, %v4098
      %v4100 = vpop.f32.mrb[0].mxu0
      %v4101 = vadd.f32 0.0, %v4100
      %4102 = vdwg.mxu0
      %4103 = vmatprep.subr.mxu0 %v3971
      %4104 = vmatpush1.msra.mxu0 %v3970
      %4105 = vmatprep.subr.mxu0 %v3975
      %4106 = vmatpush1.msra.mxu0 %v3974
      %4107 = vmatprep.subr.mxu0 %v3979
      %4108 = vmatpush1.msra.mxu0 %v3978
      %4109 = vmatprep.subr.mxu0 %v3983
      %4110 = vmatpush1.msra.mxu0 %v3982
      %4111 = vmatprep.subr.mxu0 %v3987
      %4112 = vmatpush1.msra.mxu0 %v3986
      %4113 = vmatprep.subr.mxu0 %v3991
      %4114 = vmatpush1.msra.mxu0 %v3990
      %4115 = vmatprep.subr.mxu0 %v3995
      %4116 = vmatpush1.msra.mxu0 %v3994
      %4117 = vmatprep.subr.mxu0 %v3999
      %4118 = vmatpush1.msra.mxu0 %v3998
      %4119 = vmatprep.subr.mxu0 %v4003
      %4120 = vmatpush1.msra.mxu0 %v4002
      %4121 = vmatprep.subr.mxu0 %v4007
      %4122 = vmatpush1.msra.mxu0 %v4006
      %4123 = vmatprep.subr.mxu0 %v4011
      %4124 = vmatpush1.msra.mxu0 %v4010
      %4125 = vmatprep.subr.mxu0 %v4015
      %4126 = vmatpush1.msra.mxu0 %v4014
      %4127 = vmatprep.subr.mxu0 %v4019
      %4128 = vmatpush1.msra.mxu0 %v4018
      %4129 = vmatprep.subr.mxu0 %v4023
      %4130 = vmatpush1.msra.mxu0 %v4022
      %4131 = vmatprep.subr.mxu0 %v4027
      %4132 = vmatpush1.msra.mxu0 %v4026
      %4133 = vmatprep.subr.mxu0 %v4031
      %4134 = vmatpush1.msra.mxu0 %v4030
      %4135 = vmatprep.subr.mxu0 0.0
      %4136 = vmatpush1.msra.mxu0 0.0
      %4137 = vmatprep.subr.mxu0 0.0
      %4138 = vmatpush1.msra.mxu0 0.0
      %4139 = vmatprep.subr.mxu0 0.0
      %4140 = vmatpush1.msra.mxu0 0.0
      %4141 = vmatprep.subr.mxu0 0.0
      %4142 = vmatpush1.msra.mxu0 0.0
      %4143 = vmatprep.subr.mxu0 0.0
      %4144 = vmatpush1.msra.mxu0 0.0
      %4145 = vmatprep.subr.mxu0 0.0
      %4146 = vmatpush1.msra.mxu0 0.0
      %4147 = vmatprep.subr.mxu0 0.0
      %4148 = vmatpush1.msra.mxu0 0.0
      %4149 = vmatprep.subr.mxu0 0.0
      %4150 = vmatpush1.msra.mxu0 0.0
      %4151 = vmatprep.subr.mxu0 0.0
      %4152 = vmatpush1.msra.mxu0 0.0
      %4153 = vmatprep.subr.mxu0 0.0
      %4154 = vmatpush1.msra.mxu0 0.0
      %4155 = vmatprep.subr.mxu0 0.0
      %4156 = vmatpush1.msra.mxu0 0.0
      %4157 = vmatprep.subr.mxu0 0.0
      %4158 = vmatpush1.msra.mxu0 0.0
      %4159 = vmatprep.subr.mxu0 0.0
      %4160 = vmatpush1.msra.mxu0 0.0
      %4161 = vmatprep.subr.mxu0 0.0
      %4162 = vmatpush1.msra.mxu0 0.0
      %4163 = vmatprep.subr.mxu0 0.0
      %4164 = vmatpush1.msra.mxu0 0.0
      %4165 = vmatprep.subr.mxu0 0.0
      %4166 = vmatpush1.msra.mxu0 0.0
      %4167 = vmatprep.mubr.f32.mxu0 0.0
      %4168 = vmatmul.mubr.f32.gmra.mrb[0].mxu0 %v3967
      %v4169 = vpop.f32.mrb[0].mxu0
      %v4170 = vadd.f32 0.0, %v4169
      %v4171 = vpop.f32.mrb[0].mxu0
      %v4172 = vadd.f32 0.0, %v4171
      %4173 = vdwg.mxu0
      %v4178 = vcombine.low %v4099, %v4101
      %v4179 = vcombine.low %v4170, %v4172
      %v4181 = vunpack.c.l.s4 1966171168
      %v4182 = vunpack.c.0.s8 %v4181
      %v4183 = vlaneseq
      %v4184 = vshrl.u32 %v4183, 7
      %v4185 = vsub.s32 %v4182, %v4184
      %v4186 = vrot.slane %v4178, %v4185
      %v4188 = vunpack.c.l.s4 1966171168
      %v4189 = vunpack.c.0.s8 %v4188
      %v4190 = vlaneseq
      %v4191 = vshrl.u32 %v4190, 7
      %v4192 = vsub.s32 %v4189, %v4191
      %v4193 = vrot.slane %v4179, %v4192
      %v4194 = vcombine.low %v4186, %v4193
      %v4196 = vunpack.c.l.s4 1966171168
      %v4197 = vunpack.c.0.s8 %v4196
      %v4198 = vlaneseq
      %v4199 = vshrl.u32 %v4198, 7
      %v4200 = vsub.s32 %v4197, %v4199
      %v4201 = vrot.slane %v4194, %v4200
      %v4203 = vadd.f32 %v3966, %v4201
      %v4204 = vxor.u32 %v4203, 2147483648
      %v4205 = vmul.f32 %v4204, 1.442695
      %v4206 = vpow.pop %v4205
      %v4207 = vadd.f32 %v4206, 1.0
      %v4208 = vrcp.pop %v4207
      %v4209 = vmul.f32 1.0, %v4208
      %v4211 = vrot.slane %v4203, 3
      %v4213 = vtanh.pop %v4211
      %v4214 = vld [vmem:[#allocation3] sm:$0x1]
      %v4216 = vrot.slane %v4209, 1
      %v4218 = vmul.f32 %v4216, %v4214
      %v4219 = vmul.f32 %v4209, %v4213
      %v4220 = vadd.f32 %v4218, %v4219
      %v4221 = vtanh.pop %v4220
      %v4222 = vrot.slane %v4209, 2
      %v4224 = vmul.f32 %v4222, %v4221
      %4225 = vst [vmem:[#allocation3] sm:$0x1] %v4220
      %4226 = vst [vmem:[#allocation2] sm:$0x1] %v4224
      %v4227 = vld [vmem:[#allocation11] sm:$0xff]
      %v4228 = vld [vmem:[#allocation11 + $0x8] sm:$0xff]
      %v4229 = vld [vmem:[#allocation11 + $0x10] sm:$0xff]
      %v4230 = vld [vmem:[#allocation11 + $0x18] sm:$0xff]
      %v4231 = vld [vmem:[#allocation11 + $0x20] sm:$0xff]
      %v4232 = vld [vmem:[#allocation11 + $0x28] sm:$0xff]
      %v4233 = vld [vmem:[#allocation11 + $0x30] sm:$0xff]
      %v4234 = vld [vmem:[#allocation11 + $0x38] sm:$0xff]
      %v4235 = vld [vmem:[#allocation11 + $0x40] sm:$0xff]
      %v4236 = vld [vmem:[#allocation11 + $0x48] sm:$0xff]
      %v4237 = vld [vmem:[#allocation11 + $0x50] sm:$0xff]
      %v4238 = vld [vmem:[#allocation11 + $0x58] sm:$0xff]
      %v4239 = vld [vmem:[#allocation11 + $0x60] sm:$0xff]
      %v4240 = vld [vmem:[#allocation11 + $0x68] sm:$0xff]
      %v4241 = vld [vmem:[#allocation11 + $0x70] sm:$0xff]
      %v4242 = vld [vmem:[#allocation11 + $0x78] sm:$0xff]
      %v4243 = vld [vmem:[#allocation11 + $0x80] sm:$0xff]
      %v4244 = vld [vmem:[#allocation11 + $0x88] sm:$0xff]
      %v4245 = vld [vmem:[#allocation11 + $0x90] sm:$0xff]
      %v4246 = vld [vmem:[#allocation11 + $0x98] sm:$0xff]
      %v4247 = vld [vmem:[#allocation11 + $0xa0] sm:$0xff]
      %v4248 = vld [vmem:[#allocation11 + $0xa8] sm:$0xff]
      %v4249 = vld [vmem:[#allocation11 + $0xb0] sm:$0xff]
      %v4250 = vld [vmem:[#allocation11 + $0xb8] sm:$0xff]
      %v4251 = vld [vmem:[#allocation11 + $0xc0] sm:$0xff]
      %v4252 = vld [vmem:[#allocation11 + $0xc8] sm:$0xff]
      %v4253 = vld [vmem:[#allocation11 + $0xd0] sm:$0xff]
      %v4254 = vld [vmem:[#allocation11 + $0xd8] sm:$0xff]
      %v4255 = vld [vmem:[#allocation11 + $0xe0] sm:$0xff]
      %v4256 = vld [vmem:[#allocation11 + $0xe8] sm:$0xff]
      %v4257 = vld [vmem:[#allocation11 + $0xf0] sm:$0xff]
      %v4258 = vld [vmem:[#allocation11 + $0xf8] sm:$0xff]
      %v4259 = vld [vmem:[%s4] sm:$0x3]
      %v4261 = vlaneseq
      %v4262 = vshrl.u32 %v4261, 7
      %v4263 = vsub.s32 0, %v4262
      %v4264 = vrot.slane %v4259, %v4263
      %v4265 = vlaneseq
      %v4266 = vshrl.u32 %v4265, 7
      %v4267 = vsub.s32 1, %v4266
      %v4268 = vrot.slane %v4259, %v4267
      %4271 = vmatprep.subr.mxu0 %v4228
      %4272 = vmatpush1.msra.mxu0 %v4227
      %4273 = vmatprep.subr.mxu0 %v4230
      %4274 = vmatpush1.msra.mxu0 %v4229
      %4275 = vmatprep.subr.mxu0 %v4232
      %4276 = vmatpush1.msra.mxu0 %v4231
      %4277 = vmatprep.subr.mxu0 %v4234
      %4278 = vmatpush1.msra.mxu0 %v4233
      %4279 = vmatprep.subr.mxu0 %v4236
      %4280 = vmatpush1.msra.mxu0 %v4235
      %4281 = vmatprep.subr.mxu0 %v4238
      %4282 = vmatpush1.msra.mxu0 %v4237
      %4283 = vmatprep.subr.mxu0 %v4240
      %4284 = vmatpush1.msra.mxu0 %v4239
      %4285 = vmatprep.subr.mxu0 %v4242
      %4286 = vmatpush1.msra.mxu0 %v4241
      %4287 = vmatprep.subr.mxu0 %v4244
      %4288 = vmatpush1.msra.mxu0 %v4243
      %4289 = vmatprep.subr.mxu0 %v4246
      %4290 = vmatpush1.msra.mxu0 %v4245
      %4291 = vmatprep.subr.mxu0 %v4248
      %4292 = vmatpush1.msra.mxu0 %v4247
      %4293 = vmatprep.subr.mxu0 %v4250
      %4294 = vmatpush1.msra.mxu0 %v4249
      %4295 = vmatprep.subr.mxu0 %v4252
      %4296 = vmatpush1.msra.mxu0 %v4251
      %4297 = vmatprep.subr.mxu0 %v4254
      %4298 = vmatpush1.msra.mxu0 %v4253
      %4299 = vmatprep.subr.mxu0 %v4256
      %4300 = vmatpush1.msra.mxu0 %v4255
      %4301 = vmatprep.subr.mxu0 %v4258
      %4302 = vmatpush1.msra.mxu0 %v4257
      %4303 = vmatprep.subr.mxu0 0.0
      %4304 = vmatpush1.msra.mxu0 0.0
      %4305 = vmatprep.subr.mxu0 0.0
      %4306 = vmatpush1.msra.mxu0 0.0
      %4307 = vmatprep.subr.mxu0 0.0
      %4308 = vmatpush1.msra.mxu0 0.0
      %4309 = vmatprep.subr.mxu0 0.0
      %4310 = vmatpush1.msra.mxu0 0.0
      %4311 = vmatprep.subr.mxu0 0.0
      %4312 = vmatpush1.msra.mxu0 0.0
      %4313 = vmatprep.subr.mxu0 0.0
      %4314 = vmatpush1.msra.mxu0 0.0
      %4315 = vmatprep.subr.mxu0 0.0
      %4316 = vmatpush1.msra.mxu0 0.0
      %4317 = vmatprep.subr.mxu0 0.0
      %4318 = vmatpush1.msra.mxu0 0.0
      %4319 = vmatprep.subr.mxu0 0.0
      %4320 = vmatpush1.msra.mxu0 0.0
      %4321 = vmatprep.subr.mxu0 0.0
      %4322 = vmatpush1.msra.mxu0 0.0
      %4323 = vmatprep.subr.mxu0 0.0
      %4324 = vmatpush1.msra.mxu0 0.0
      %4325 = vmatprep.subr.mxu0 0.0
      %4326 = vmatpush1.msra.mxu0 0.0
      %4327 = vmatprep.subr.mxu0 0.0
      %4328 = vmatpush1.msra.mxu0 0.0
      %4329 = vmatprep.subr.mxu0 0.0
      %4330 = vmatpush1.msra.mxu0 0.0
      %4331 = vmatprep.subr.mxu0 0.0
      %4332 = vmatpush1.msra.mxu0 0.0
      %4333 = vmatprep.subr.mxu0 0.0
      %4334 = vmatpush1.msra.mxu0 0.0
      %4335 = vmatprep.mubr.f32.mxu0 0.0
      %4336 = vmatmul.mubr.f32.gmra.mrb[0].mxu0 %v4224
      %v4337 = vpop.f32.mrb[0].mxu0
      %v4338 = vadd.f32 %v4264, %v4337
      %v4339 = vpop.f32.mrb[0].mxu0
      %v4340 = vadd.f32 %v4268, %v4339
      %4341 = vdwg.mxu0
      %v4342 = vsel %vm453, %v4338, -inf
      %v4343 = vsel %vm453, %v4340, -inf
      %v4344 = vmax.f32 %v4342, %v4343
      %4345 = vmax.xlane.f32.xlu0 %v4344
      %v4346 = vpop.xlane.xlu0 %4345
      %v4347 = vrot.slane %v4346, 4
      %v4348 = vmax.f32 %v4346, %v4347
      %v4349 = vrot.slane %v4348, 2
      %v4350 = vmax.f32 %v4348, %v4349
      %v4351 = vrot.slane %v4350, 1
      %v4352 = vmax.f32 %v4350, %v4351
      %s4353 = vtos %v4352
      %v4354 = vstv %s4353
      %vm4355 = vcmp.eq.f32.partialorder %v4338, %v4354
      %vm4356 = vcmp.eq.f32.partialorder %v4340, %v4354
      %v4357 = vsel %vm4355, %v72, 256
      %v4358 = vsel %vm4356, %v73, 256
      %v4359 = vsel %vm453, %v4357, 2147483647
      %v4360 = vsel %vm453, %v4358, 2147483647
      %vm4361 = vcmp.lt.s32.totalorder %v4359, %v4360
      %v4362 = vsel %vm4361, %v4359, %v4360
      %v4363 = vand.u32 %v4362, 65535
      %v4364 = vshra.s32 %v4362, 16
      %v4365 = vcvt.s32.f32 %v4363
      %v4366 = vcvt.s32.f32 %v4364
      %4367 = vmin.xlane.f32.xlu0 %v4366
      %v4368 = vpop.xlane.xlu0 %4367
      %vm4369 = vcmp.eq.f32.partialorder %v4366, %v4368
      %v4370 = vsel %vm4369, %v4365, inf
      %4371 = vmin.xlane.f32.xlu0 %v4370
      %v4372 = vpop.xlane.xlu0 %4371
      %v4373 = vcvt.f32.s32 %v4372
      %v4374 = vcvt.f32.s32 %v4368
      %v4375 = vshll.u32 %v4374, 16
      %v4376 = vadd.s32 %v4375, %v4373
      %v4377 = vrot.slane %v4376, 4
      %vm4378 = vcmp.lt.s32.totalorder %v4376, %v4377
      %v4379 = vsel %vm4378, %v4376, %v4377
      %v4380 = vrot.slane %v4379, 2
      %vm4381 = vcmp.lt.s32.totalorder %v4379, %v4380
      %v4382 = vsel %vm4381, %v4379, %v4380
      %v4383 = vrot.slane %v4382, 1
      %vm4384 = vcmp.lt.s32.totalorder %v4382, %v4383
      %v4385 = vsel %vm4384, %v4382, %v4383
      %s4386 = vtos %v4385
      %4387 = sst [smem:[%s66]] %s4386
    $region69: #{tpu_custom_call.1} parent=1 // pred_fallthru
      _
    %s4388 = sld [smem:[#allocation4]]
    %s4389 = scalar_lea.smem [#allocation12], 10
    %4390 = sst [smem:[%s4389]] %s4388
    %s4391 = sld [smem:[#allocation4]]
    %p4392 = scmp.ne.s32.totalorder %s4391, 0
    // Predicated region
    $region70: #{tpu_custom_call.1} parent=1 // pred_check
      %p4393 = pneg %p4392
    $region71: #{tpu_custom_call.1} parent=1 // pred_check_branch
      %4395 = sbr.rel (%p4393) target = $region73
    $region72: #{tpu_custom_call.1} parent=1 // pred_region
      %s4396 = smul.u32 %s4391, 4
      %s4397 = scalar_lea.vmem [#allocation6], %s4396
      %v4398 = vld [vmem:[%s4397] sm:$0xf]
      %v4399 = vld [vmem:[#allocation2] sm:$0x1]
      %v4400 = vld [vmem:[#allocation9] sm:$0xff]
      %v4401 = vld [vmem:[#allocation9 + $0x8] sm:$0xff]
      %v4402 = vld [vmem:[#allocation9 + $0x10] sm:$0xff]
      %v4403 = vld [vmem:[#allocation9 + $0x18] sm:$0xff]
      %v4404 = vld [vmem:[#allocation9 + $0x20] sm:$0xff]
      %v4405 = vld [vmem:[#allocation9 + $0x28] sm:$0xff]
      %v4406 = vld [vmem:[#allocation9 + $0x30] sm:$0xff]
      %v4407 = vld [vmem:[#allocation9 + $0x38] sm:$0xff]
      %v4408 = vld [vmem:[#allocation9 + $0x40] sm:$0xff]
      %v4409 = vld [vmem:[#allocation9 + $0x48] sm:$0xff]
      %v4410 = vld [vmem:[#allocation9 + $0x50] sm:$0xff]
      %v4411 = vld [vmem:[#allocation9 + $0x58] sm:$0xff]
      %v4412 = vld [vmem:[#allocation9 + $0x60] sm:$0xff]
      %v4413 = vld [vmem:[#allocation9 + $0x68] sm:$0xff]
      %v4414 = vld [vmem:[#allocation9 + $0x70] sm:$0xff]
      %v4415 = vld [vmem:[#allocation9 + $0x78] sm:$0xff]
      %v4416 = vld [vmem:[#allocation9 + $0x80] sm:$0xff]
      %v4417 = vld [vmem:[#allocation9 + $0x88] sm:$0xff]
      %v4418 = vld [vmem:[#allocation9 + $0x90] sm:$0xff]
      %v4419 = vld [vmem:[#allocation9 + $0x98] sm:$0xff]
      %v4420 = vld [vmem:[#allocation9 + $0xa0] sm:$0xff]
      %v4421 = vld [vmem:[#allocation9 + $0xa8] sm:$0xff]
      %v4422 = vld [vmem:[#allocation9 + $0xb0] sm:$0xff]
      %v4423 = vld [vmem:[#allocation9 + $0xb8] sm:$0xff]
      %v4424 = vld [vmem:[#allocation9 + $0xc0] sm:$0xff]
      %v4425 = vld [vmem:[#allocation9 + $0xc8] sm:$0xff]
      %v4426 = vld [vmem:[#allocation9 + $0xd0] sm:$0xff]
      %v4427 = vld [vmem:[#allocation9 + $0xd8] sm:$0xff]
      %v4428 = vld [vmem:[#allocation9 + $0xe0] sm:$0xff]
      %v4429 = vld [vmem:[#allocation9 + $0xe8] sm:$0xff]
      %v4430 = vld [vmem:[#allocation9 + $0xf0] sm:$0xff]
      %v4431 = vld [vmem:[#allocation9 + $0xf8] sm:$0xff]
      %v4432 = vld [vmem:[#allocation9 + $0x100] sm:$0xff]
      %v4433 = vld [vmem:[#allocation9 + $0x108] sm:$0xff]
      %v4434 = vld [vmem:[#allocation9 + $0x110] sm:$0xff]
      %v4435 = vld [vmem:[#allocation9 + $0x118] sm:$0xff]
      %v4436 = vld [vmem:[#allocation9 + $0x120] sm:$0xff]
      %v4437 = vld [vmem:[#allocation9 + $0x128] sm:$0xff]
      %v4438 = vld [vmem:[#allocation9 + $0x130] sm:$0xff]
      %v4439 = vld [vmem:[#allocation9 + $0x138] sm:$0xff]
      %v4440 = vld [vmem:[#allocation9 + $0x140] sm:$0xff]
      %v4441 = vld [vmem:[#allocation9 + $0x148] sm:$0xff]
      %v4442 = vld [vmem:[#allocation9 + $0x150] sm:$0xff]
      %v4443 = vld [vmem:[#allocation9 + $0x158] sm:$0xff]
      %v4444 = vld [vmem:[#allocation9 + $0x160] sm:$0xff]
      %v4445 = vld [vmem:[#allocation9 + $0x168] sm:$0xff]
      %v4446 = vld [vmem:[#allocation9 + $0x170] sm:$0xff]
      %v4447 = vld [vmem:[#allocation9 + $0x178] sm:$0xff]
      %v4448 = vld [vmem:[#allocation9 + $0x180] sm:$0xff]
      %v4449 = vld [vmem:[#allocation9 + $0x188] sm:$0xff]
      %v4450 = vld [vmem:[#allocation9 + $0x190] sm:$0xff]
      %v4451 = vld [vmem:[#allocation9 + $0x198] sm:$0xff]
      %v4452 = vld [vmem:[#allocation9 + $0x1a0] sm:$0xff]
      %v4453 = vld [vmem:[#allocation9 + $0x1a8] sm:$0xff]
      %v4454 = vld [vmem:[#allocation9 + $0x1b0] sm:$0xff]
      %v4455 = vld [vmem:[#allocation9 + $0x1b8] sm:$0xff]
      %v4456 = vld [vmem:[#allocation9 + $0x1c0] sm:$0xff]
      %v4457 = vld [vmem:[#allocation9 + $0x1c8] sm:$0xff]
      %v4458 = vld [vmem:[#allocation9 + $0x1d0] sm:$0xff]
      %v4459 = vld [vmem:[#allocation9 + $0x1d8] sm:$0xff]
      %v4460 = vld [vmem:[#allocation9 + $0x1e0] sm:$0xff]
      %v4461 = vld [vmem:[#allocation9 + $0x1e8] sm:$0xff]
      %v4462 = vld [vmem:[#allocation9 + $0x1f0] sm:$0xff]
      %v4463 = vld [vmem:[#allocation9 + $0x1f8] sm:$0xff]
      %4464 = vmatprep.subr.mxu0 %v4401
      %4465 = vmatpush1.msra.mxu0 %v4400
      %4466 = vmatprep.subr.mxu0 %v4405
      %4467 = vmatpush1.msra.mxu0 %v4404
      %4468 = vmatprep.subr.mxu0 %v4409
      %4469 = vmatpush1.msra.mxu0 %v4408
      %4470 = vmatprep.subr.mxu0 %v4413
      %4471 = vmatpush1.msra.mxu0 %v4412
      %4472 = vmatprep.subr.mxu0 %v4417
      %4473 = vmatpush1.msra.mxu0 %v4416
      %4474 = vmatprep.subr.mxu0 %v4421
      %4475 = vmatpush1.msra.mxu0 %v4420
      %4476 = vmatprep.subr.mxu0 %v4425
      %4477 = vmatpush1.msra.mxu0 %v4424
      %4478 = vmatprep.subr.mxu0 %v4429
      %4479 = vmatpush1.msra.mxu0 %v4428
      %4480 = vmatprep.subr.mxu0 %v4433
      %4481 = vmatpush1.msra.mxu0 %v4432
      %4482 = vmatprep.subr.mxu0 %v4437
      %4483 = vmatpush1.msra.mxu0 %v4436
      %4484 = vmatprep.subr.mxu0 %v4441
      %4485 = vmatpush1.msra.mxu0 %v4440
      %4486 = vmatprep.subr.mxu0 %v4445
      %4487 = vmatpush1.msra.mxu0 %v4444
      %4488 = vmatprep.subr.mxu0 %v4449
      %4489 = vmatpush1.msra.mxu0 %v4448
      %4490 = vmatprep.subr.mxu0 %v4453
      %4491 = vmatpush1.msra.mxu0 %v4452
      %4492 = vmatprep.subr.mxu0 %v4457
      %4493 = vmatpush1.msra.mxu0 %v4456
      %4494 = vmatprep.subr.mxu0 %v4461
      %4495 = vmatpush1.msra.mxu0 %v4460
      %4496 = vmatprep.subr.mxu0 0.0
      %4497 = vmatpush1.msra.mxu0 0.0
      %4498 = vmatprep.subr.mxu0 0.0
      %4499 = vmatpush1.msra.mxu0 0.0
      %4500 = vmatprep.subr.mxu0 0.0
      %4501 = vmatpush1.msra.mxu0 0.0
      %4502 = vmatprep.subr.mxu0 0.0
      %4503 = vmatpush1.msra.mxu0 0.0
      %4504 = vmatprep.subr.mxu0 0.0
      %4505 = vmatpush1.msra.mxu0 0.0
      %4506 = vmatprep.subr.mxu0 0.0
      %4507 = vmatpush1.msra.mxu0 0.0
      %4508 = vmatprep.subr.mxu0 0.0
      %4509 = vmatpush1.msra.mxu0 0.0
      %4510 = vmatprep.subr.mxu0 0.0
      %4511 = vmatpush1.msra.mxu0 0.0
      %4512 = vmatprep.subr.mxu0 0.0
      %4513 = vmatpush1.msra.mxu0 0.0
      %4514 = vmatprep.subr.mxu0 0.0
      %4515 = vmatpush1.msra.mxu0 0.0
      %4516 = vmatprep.subr.mxu0 0.0
      %4517 = vmatpush1.msra.mxu0 0.0
      %4518 = vmatprep.subr.mxu0 0.0
      %4519 = vmatpush1.msra.mxu0 0.0
      %4520 = vmatprep.subr.mxu0 0.0
      %4521 = vmatpush1.msra.mxu0 0.0
      %4522 = vmatprep.subr.mxu0 0.0
      %4523 = vmatpush1.msra.mxu0 0.0
      %4524 = vmatprep.subr.mxu0 0.0
      %4525 = vmatpush1.msra.mxu0 0.0
      %4526 = vmatprep.subr.mxu0 0.0
      %4527 = vmatpush1.msra.mxu0 0.0
      %4528 = vmatprep.mubr.f32.mxu0 0.0
      %4529 = vmatmul.mubr.f32.gmra.mrb[0].mxu0 %v4399
      %v4530 = vpop.f32.mrb[0].mxu0
      %v4531 = vadd.f32 0.0, %v4530
      %v4532 = vpop.f32.mrb[0].mxu0
      %v4533 = vadd.f32 0.0, %v4532
      %4534 = vdwg.mxu0
      %4535 = vmatprep.subr.mxu0 %v4403
      %4536 = vmatpush1.msra.mxu0 %v4402
      %4537 = vmatprep.subr.mxu0 %v4407
      %4538 = vmatpush1.msra.mxu0 %v4406
      %4539 = vmatprep.subr.mxu0 %v4411
      %4540 = vmatpush1.msra.mxu0 %v4410
      %4541 = vmatprep.subr.mxu0 %v4415
      %4542 = vmatpush1.msra.mxu0 %v4414
      %4543 = vmatprep.subr.mxu0 %v4419
      %4544 = vmatpush1.msra.mxu0 %v4418
      %4545 = vmatprep.subr.mxu0 %v4423
      %4546 = vmatpush1.msra.mxu0 %v4422
      %4547 = vmatprep.subr.mxu0 %v4427
      %4548 = vmatpush1.msra.mxu0 %v4426
      %4549 = vmatprep.subr.mxu0 %v4431
      %4550 = vmatpush1.msra.mxu0 %v4430
      %4551 = vmatprep.subr.mxu0 %v4435
      %4552 = vmatpush1.msra.mxu0 %v4434
      %4553 = vmatprep.subr.mxu0 %v4439
      %4554 = vmatpush1.msra.mxu0 %v4438
      %4555 = vmatprep.subr.mxu0 %v4443
      %4556 = vmatpush1.msra.mxu0 %v4442
      %4557 = vmatprep.subr.mxu0 %v4447
      %4558 = vmatpush1.msra.mxu0 %v4446
      %4559 = vmatprep.subr.mxu0 %v4451
      %4560 = vmatpush1.msra.mxu0 %v4450
      %4561 = vmatprep.subr.mxu0 %v4455
      %4562 = vmatpush1.msra.mxu0 %v4454
      %4563 = vmatprep.subr.mxu0 %v4459
      %4564 = vmatpush1.msra.mxu0 %v4458
      %4565 = vmatprep.subr.mxu0 %v4463
      %4566 = vmatpush1.msra.mxu0 %v4462
      %4567 = vmatprep.subr.mxu0 0.0
      %4568 = vmatpush1.msra.mxu0 0.0
      %4569 = vmatprep.subr.mxu0 0.0
      %4570 = vmatpush1.msra.mxu0 0.0
      %4571 = vmatprep.subr.mxu0 0.0
      %4572 = vmatpush1.msra.mxu0 0.0
      %4573 = vmatprep.subr.mxu0 0.0
      %4574 = vmatpush1.msra.mxu0 0.0
      %4575 = vmatprep.subr.mxu0 0.0
      %4576 = vmatpush1.msra.mxu0 0.0
      %4577 = vmatprep.subr.mxu0 0.0
      %4578 = vmatpush1.msra.mxu0 0.0
      %4579 = vmatprep.subr.mxu0 0.0
      %4580 = vmatpush1.msra.mxu0 0.0
      %4581 = vmatprep.subr.mxu0 0.0
      %4582 = vmatpush1.msra.mxu0 0.0
      %4583 = vmatprep.subr.mxu0 0.0
      %4584 = vmatpush1.msra.mxu0 0.0
      %4585 = vmatprep.subr.mxu0 0.0
      %4586 = vmatpush1.msra.mxu0 0.0
      %4587 = vmatprep.subr.mxu0 0.0
      %4588 = vmatpush1.msra.mxu0 0.0
      %4589 = vmatprep.subr.mxu0 0.0
      %4590 = vmatpush1.msra.mxu0 0.0
      %4591 = vmatprep.subr.mxu0 0.0
      %4592 = vmatpush1.msra.mxu0 0.0
      %4593 = vmatprep.subr.mxu0 0.0
      %4594 = vmatpush1.msra.mxu0 0.0
      %4595 = vmatprep.subr.mxu0 0.0
      %4596 = vmatpush1.msra.mxu0 0.0
      %4597 = vmatprep.subr.mxu0 0.0
      %4598 = vmatpush1.msra.mxu0 0.0
      %4599 = vmatprep.mubr.f32.mxu0 0.0
      %4600 = vmatmul.mubr.f32.gmra.mrb[0].mxu0 %v4399
      %v4601 = vpop.f32.mrb[0].mxu0
      %v4602 = vadd.f32 0.0, %v4601
      %v4603 = vpop.f32.mrb[0].mxu0
      %v4604 = vadd.f32 0.0, %v4603
      %4605 = vdwg.mxu0
      %v4610 = vcombine.low %v4531, %v4533
      %v4611 = vcombine.low %v4602, %v4604
      %v4613 = vunpack.c.l.s4 1966171168
      %v4614 = vunpack.c.0.s8 %v4613
      %v4615 = vlaneseq
      %v4616 = vshrl.u32 %v4615, 7
      %v4617 = vsub.s32 %v4614, %v4616
      %v4618 = vrot.slane %v4610, %v4617
      %v4620 = vunpack.c.l.s4 1966171168
      %v4621 = vunpack.c.0.s8 %v4620
      %v4622 = vlaneseq
      %v4623 = vshrl.u32 %v4622, 7
      %v4624 = vsub.s32 %v4621, %v4623
      %v4625 = vrot.slane %v4611, %v4624
      %v4626 = vcombine.low %v4618, %v4625
      %v4628 = vunpack.c.l.s4 1966171168
      %v4629 = vunpack.c.0.s8 %v4628
      %v4630 = vlaneseq
      %v4631 = vshrl.u32 %v4630, 7
      %v4632 = vsub.s32 %v4629, %v4631
      %v4633 = vrot.slane %v4626, %v4632
      %v4635 = vadd.f32 %v4398, %v4633
      %v4636 = vxor.u32 %v4635, 2147483648
      %v4637 = vmul.f32 %v4636, 1.442695
      %v4638 = vpow.pop %v4637
      %v4639 = vadd.f32 %v4638, 1.0
      %v4640 = vrcp.pop %v4639
      %v4641 = vmul.f32 1.0, %v4640
      %v4643 = vrot.slane %v4635, 3
      %v4645 = vtanh.pop %v4643
      %v4646 = vld [vmem:[#allocation3] sm:$0x1]
      %v4648 = vrot.slane %v4641, 1
      %v4650 = vmul.f32 %v4648, %v4646
      %v4651 = vmul.f32 %v4641, %v4645
      %v4652 = vadd.f32 %v4650, %v4651
      %v4653 = vtanh.pop %v4652
      %v4654 = vrot.slane %v4641, 2
      %v4656 = vmul.f32 %v4654, %v4653
      %4657 = vst [vmem:[#allocation3] sm:$0x1] %v4652
      %4658 = vst [vmem:[#allocation2] sm:$0x1] %v4656
      %v4659 = vld [vmem:[#allocation11] sm:$0xff]
      %v4660 = vld [vmem:[#allocation11 + $0x8] sm:$0xff]
      %v4661 = vld [vmem:[#allocation11 + $0x10] sm:$0xff]
      %v4662 = vld [vmem:[#allocation11 + $0x18] sm:$0xff]
      %v4663 = vld [vmem:[#allocation11 + $0x20] sm:$0xff]
      %v4664 = vld [vmem:[#allocation11 + $0x28] sm:$0xff]
      %v4665 = vld [vmem:[#allocation11 + $0x30] sm:$0xff]
      %v4666 = vld [vmem:[#allocation11 + $0x38] sm:$0xff]
      %v4667 = vld [vmem:[#allocation11 + $0x40] sm:$0xff]
      %v4668 = vld [vmem:[#allocation11 + $0x48] sm:$0xff]
      %v4669 = vld [vmem:[#allocation11 + $0x50] sm:$0xff]
      %v4670 = vld [vmem:[#allocation11 + $0x58] sm:$0xff]
      %v4671 = vld [vmem:[#allocation11 + $0x60] sm:$0xff]
      %v4672 = vld [vmem:[#allocation11 + $0x68] sm:$0xff]
      %v4673 = vld [vmem:[#allocation11 + $0x70] sm:$0xff]
      %v4674 = vld [vmem:[#allocation11 + $0x78] sm:$0xff]
      %v4675 = vld [vmem:[#allocation11 + $0x80] sm:$0xff]
      %v4676 = vld [vmem:[#allocation11 + $0x88] sm:$0xff]
      %v4677 = vld [vmem:[#allocation11 + $0x90] sm:$0xff]
      %v4678 = vld [vmem:[#allocation11 + $0x98] sm:$0xff]
      %v4679 = vld [vmem:[#allocation11 + $0xa0] sm:$0xff]
      %v4680 = vld [vmem:[#allocation11 + $0xa8] sm:$0xff]
      %v4681 = vld [vmem:[#allocation11 + $0xb0] sm:$0xff]
      %v4682 = vld [vmem:[#allocation11 + $0xb8] sm:$0xff]
      %v4683 = vld [vmem:[#allocation11 + $0xc0] sm:$0xff]
      %v4684 = vld [vmem:[#allocation11 + $0xc8] sm:$0xff]
      %v4685 = vld [vmem:[#allocation11 + $0xd0] sm:$0xff]
      %v4686 = vld [vmem:[#allocation11 + $0xd8] sm:$0xff]
      %v4687 = vld [vmem:[#allocation11 + $0xe0] sm:$0xff]
      %v4688 = vld [vmem:[#allocation11 + $0xe8] sm:$0xff]
      %v4689 = vld [vmem:[#allocation11 + $0xf0] sm:$0xff]
      %v4690 = vld [vmem:[#allocation11 + $0xf8] sm:$0xff]
      %v4691 = vld [vmem:[%s4] sm:$0x3]
      %v4693 = vlaneseq
      %v4694 = vshrl.u32 %v4693, 7
      %v4695 = vsub.s32 0, %v4694
      %v4696 = vrot.slane %v4691, %v4695
      %v4697 = vlaneseq
      %v4698 = vshrl.u32 %v4697, 7
      %v4699 = vsub.s32 1, %v4698
      %v4700 = vrot.slane %v4691, %v4699
      %4703 = vmatprep.subr.mxu0 %v4660
      %4704 = vmatpush1.msra.mxu0 %v4659
      %4705 = vmatprep.subr.mxu0 %v4662
      %4706 = vmatpush1.msra.mxu0 %v4661
      %4707 = vmatprep.subr.mxu0 %v4664
      %4708 = vmatpush1.msra.mxu0 %v4663
      %4709 = vmatprep.subr.mxu0 %v4666
      %4710 = vmatpush1.msra.mxu0 %v4665
      %4711 = vmatprep.subr.mxu0 %v4668
      %4712 = vmatpush1.msra.mxu0 %v4667
      %4713 = vmatprep.subr.mxu0 %v4670
      %4714 = vmatpush1.msra.mxu0 %v4669
      %4715 = vmatprep.subr.mxu0 %v4672
      %4716 = vmatpush1.msra.mxu0 %v4671
      %4717 = vmatprep.subr.mxu0 %v4674
      %4718 = vmatpush1.msra.mxu0 %v4673
      %4719 = vmatprep.subr.mxu0 %v4676
      %4720 = vmatpush1.msra.mxu0 %v4675
      %4721 = vmatprep.subr.mxu0 %v4678
      %4722 = vmatpush1.msra.mxu0 %v4677
      %4723 = vmatprep.subr.mxu0 %v4680
      %4724 = vmatpush1.msra.mxu0 %v4679
      %4725 = vmatprep.subr.mxu0 %v4682
      %4726 = vmatpush1.msra.mxu0 %v4681
      %4727 = vmatprep.subr.mxu0 %v4684
      %4728 = vmatpush1.msra.mxu0 %v4683
      %4729 = vmatprep.subr.mxu0 %v4686
      %4730 = vmatpush1.msra.mxu0 %v4685
      %4731 = vmatprep.subr.mxu0 %v4688
      %4732 = vmatpush1.msra.mxu0 %v4687
      %4733 = vmatprep.subr.mxu0 %v4690
      %4734 = vmatpush1.msra.mxu0 %v4689
      %4735 = vmatprep.subr.mxu0 0.0
      %4736 = vmatpush1.msra.mxu0 0.0
      %4737 = vmatprep.subr.mxu0 0.0
      %4738 = vmatpush1.msra.mxu0 0.0
      %4739 = vmatprep.subr.mxu0 0.0
      %4740 = vmatpush1.msra.mxu0 0.0
      %4741 = vmatprep.subr.mxu0 0.0
      %4742 = vmatpush1.msra.mxu0 0.0
      %4743 = vmatprep.subr.mxu0 0.0
      %4744 = vmatpush1.msra.mxu0 0.0
      %4745 = vmatprep.subr.mxu0 0.0
      %4746 = vmatpush1.msra.mxu0 0.0
      %4747 = vmatprep.subr.mxu0 0.0
      %4748 = vmatpush1.msra.mxu0 0.0
      %4749 = vmatprep.subr.mxu0 0.0
      %4750 = vmatpush1.msra.mxu0 0.0
      %4751 = vmatprep.subr.mxu0 0.0
      %4752 = vmatpush1.msra.mxu0 0.0
      %4753 = vmatprep.subr.mxu0 0.0
      %4754 = vmatpush1.msra.mxu0 0.0
      %4755 = vmatprep.subr.mxu0 0.0
      %4756 = vmatpush1.msra.mxu0 0.0
      %4757 = vmatprep.subr.mxu0 0.0
      %4758 = vmatpush1.msra.mxu0 0.0
      %4759 = vmatprep.subr.mxu0 0.0
      %4760 = vmatpush1.msra.mxu0 0.0
      %4761 = vmatprep.subr.mxu0 0.0
      %4762 = vmatpush1.msra.mxu0 0.0
      %4763 = vmatprep.subr.mxu0 0.0
      %4764 = vmatpush1.msra.mxu0 0.0
      %4765 = vmatprep.subr.mxu0 0.0
      %4766 = vmatpush1.msra.mxu0 0.0
      %4767 = vmatprep.mubr.f32.mxu0 0.0
      %4768 = vmatmul.mubr.f32.gmra.mrb[0].mxu0 %v4656
      %v4769 = vpop.f32.mrb[0].mxu0
      %v4770 = vadd.f32 %v4696, %v4769
      %v4771 = vpop.f32.mrb[0].mxu0
      %v4772 = vadd.f32 %v4700, %v4771
      %4773 = vdwg.mxu0
      %v4774 = vsel %vm453, %v4770, -inf
      %v4775 = vsel %vm453, %v4772, -inf
      %v4776 = vmax.f32 %v4774, %v4775
      %4777 = vmax.xlane.f32.xlu0 %v4776
      %v4778 = vpop.xlane.xlu0 %4777
      %v4779 = vrot.slane %v4778, 4
      %v4780 = vmax.f32 %v4778, %v4779
      %v4781 = vrot.slane %v4780, 2
      %v4782 = vmax.f32 %v4780, %v4781
      %v4783 = vrot.slane %v4782, 1
      %v4784 = vmax.f32 %v4782, %v4783
      %s4785 = vtos %v4784
      %v4786 = vstv %s4785
      %vm4787 = vcmp.eq.f32.partialorder %v4770, %v4786
      %vm4788 = vcmp.eq.f32.partialorder %v4772, %v4786
      %v4789 = vsel %vm4787, %v72, 256
      %v4790 = vsel %vm4788, %v73, 256
      %v4791 = vsel %vm453, %v4789, 2147483647
      %v4792 = vsel %vm453, %v4790, 2147483647
      %vm4793 = vcmp.lt.s32.totalorder %v4791, %v4792
      %v4794 = vsel %vm4793, %v4791, %v4792
      %v4795 = vand.u32 %v4794, 65535
      %v4796 = vshra.s32 %v4794, 16
      %v4797 = vcvt.s32.f32 %v4795
      %v4798 = vcvt.s32.f32 %v4796
      %4799 = vmin.xlane.f32.xlu0 %v4798
      %v4800 = vpop.xlane.xlu0 %4799
      %vm4801 = vcmp.eq.f32.partialorder %v4798, %v4800
      %v4802 = vsel %vm4801, %v4797, inf
      %4803 = vmin.xlane.f32.xlu0 %v4802
      %v4804 = vpop.xlane.xlu0 %4803
      %v4805 = vcvt.f32.s32 %v4804
      %v4806 = vcvt.f32.s32 %v4800
      %v4807 = vshll.u32 %v4806, 16
      %v4808 = vadd.s32 %v4807, %v4805
      %v4809 = vrot.slane %v4808, 4
      %vm4810 = vcmp.lt.s32.totalorder %v4808, %v4809
      %v4811 = vsel %vm4810, %v4808, %v4809
      %v4812 = vrot.slane %v4811, 2
      %vm4813 = vcmp.lt.s32.totalorder %v4811, %v4812
      %v4814 = vsel %vm4813, %v4811, %v4812
      %v4815 = vrot.slane %v4814, 1
      %vm4816 = vcmp.lt.s32.totalorder %v4814, %v4815
      %v4817 = vsel %vm4816, %v4814, %v4815
      %s4818 = vtos %v4817
      %4819 = sst [smem:[%s66]] %s4818
    $region73: #{tpu_custom_call.1} parent=1 // pred_fallthru
      _
    %s4820 = sld [smem:[#allocation4]]
    %s4821 = scalar_lea.smem [#allocation12], 11
    %4822 = sst [smem:[%s4821]] %s4820
    %s4823 = sld [smem:[#allocation4]]
    %p4824 = scmp.ne.s32.totalorder %s4823, 0
    // Predicated region
    $region74: #{tpu_custom_call.1} parent=1 // pred_check
      %p4825 = pneg %p4824
    $region75: #{tpu_custom_call.1} parent=1 // pred_check_branch
      %4827 = sbr.rel (%p4825) target = $region77
    $region76: #{tpu_custom_call.1} parent=1 // pred_region
      %s4828 = smul.u32 %s4823, 4
      %s4829 = scalar_lea.vmem [#allocation6], %s4828
      %v4830 = vld [vmem:[%s4829] sm:$0xf]
      %v4831 = vld [vmem:[#allocation2] sm:$0x1]
      %v4832 = vld [vmem:[#allocation9] sm:$0xff]
      %v4833 = vld [vmem:[#allocation9 + $0x8] sm:$0xff]
      %v4834 = vld [vmem:[#allocation9 + $0x10] sm:$0xff]
      %v4835 = vld [vmem:[#allocation9 + $0x18] sm:$0xff]
      %v4836 = vld [vmem:[#allocation9 + $0x20] sm:$0xff]
      %v4837 = vld [vmem:[#allocation9 + $0x28] sm:$0xff]
      %v4838 = vld [vmem:[#allocation9 + $0x30] sm:$0xff]
      %v4839 = vld [vmem:[#allocation9 + $0x38] sm:$0xff]
      %v4840 = vld [vmem:[#allocation9 + $0x40] sm:$0xff]
      %v4841 = vld [vmem:[#allocation9 + $0x48] sm:$0xff]
      %v4842 = vld [vmem:[#allocation9 + $0x50] sm:$0xff]
      %v4843 = vld [vmem:[#allocation9 + $0x58] sm:$0xff]
      %v4844 = vld [vmem:[#allocation9 + $0x60] sm:$0xff]
      %v4845 = vld [vmem:[#allocation9 + $0x68] sm:$0xff]
      %v4846 = vld [vmem:[#allocation9 + $0x70] sm:$0xff]
      %v4847 = vld [vmem:[#allocation9 + $0x78] sm:$0xff]
      %v4848 = vld [vmem:[#allocation9 + $0x80] sm:$0xff]
      %v4849 = vld [vmem:[#allocation9 + $0x88] sm:$0xff]
      %v4850 = vld [vmem:[#allocation9 + $0x90] sm:$0xff]
      %v4851 = vld [vmem:[#allocation9 + $0x98] sm:$0xff]
      %v4852 = vld [vmem:[#allocation9 + $0xa0] sm:$0xff]
      %v4853 = vld [vmem:[#allocation9 + $0xa8] sm:$0xff]
      %v4854 = vld [vmem:[#allocation9 + $0xb0] sm:$0xff]
      %v4855 = vld [vmem:[#allocation9 + $0xb8] sm:$0xff]
      %v4856 = vld [vmem:[#allocation9 + $0xc0] sm:$0xff]
      %v4857 = vld [vmem:[#allocation9 + $0xc8] sm:$0xff]
      %v4858 = vld [vmem:[#allocation9 + $0xd0] sm:$0xff]
      %v4859 = vld [vmem:[#allocation9 + $0xd8] sm:$0xff]
      %v4860 = vld [vmem:[#allocation9 + $0xe0] sm:$0xff]
      %v4861 = vld [vmem:[#allocation9 + $0xe8] sm:$0xff]
      %v4862 = vld [vmem:[#allocation9 + $0xf0] sm:$0xff]
      %v4863 = vld [vmem:[#allocation9 + $0xf8] sm:$0xff]
      %v4864 = vld [vmem:[#allocation9 + $0x100] sm:$0xff]
      %v4865 = vld [vmem:[#allocation9 + $0x108] sm:$0xff]
      %v4866 = vld [vmem:[#allocation9 + $0x110] sm:$0xff]
      %v4867 = vld [vmem:[#allocation9 + $0x118] sm:$0xff]
      %v4868 = vld [vmem:[#allocation9 + $0x120] sm:$0xff]
      %v4869 = vld [vmem:[#allocation9 + $0x128] sm:$0xff]
      %v4870 = vld [vmem:[#allocation9 + $0x130] sm:$0xff]
      %v4871 = vld [vmem:[#allocation9 + $0x138] sm:$0xff]
      %v4872 = vld [vmem:[#allocation9 + $0x140] sm:$0xff]
      %v4873 = vld [vmem:[#allocation9 + $0x148] sm:$0xff]
      %v4874 = vld [vmem:[#allocation9 + $0x150] sm:$0xff]
      %v4875 = vld [vmem:[#allocation9 + $0x158] sm:$0xff]
      %v4876 = vld [vmem:[#allocation9 + $0x160] sm:$0xff]
      %v4877 = vld [vmem:[#allocation9 + $0x168] sm:$0xff]
      %v4878 = vld [vmem:[#allocation9 + $0x170] sm:$0xff]
      %v4879 = vld [vmem:[#allocation9 + $0x178] sm:$0xff]
      %v4880 = vld [vmem:[#allocation9 + $0x180] sm:$0xff]
      %v4881 = vld [vmem:[#allocation9 + $0x188] sm:$0xff]
      %v4882 = vld [vmem:[#allocation9 + $0x190] sm:$0xff]
      %v4883 = vld [vmem:[#allocation9 + $0x198] sm:$0xff]
      %v4884 = vld [vmem:[#allocation9 + $0x1a0] sm:$0xff]
      %v4885 = vld [vmem:[#allocation9 + $0x1a8] sm:$0xff]
      %v4886 = vld [vmem:[#allocation9 + $0x1b0] sm:$0xff]
      %v4887 = vld [vmem:[#allocation9 + $0x1b8] sm:$0xff]
      %v4888 = vld [vmem:[#allocation9 + $0x1c0] sm:$0xff]
      %v4889 = vld [vmem:[#allocation9 + $0x1c8] sm:$0xff]
      %v4890 = vld [vmem:[#allocation9 + $0x1d0] sm:$0xff]
      %v4891 = vld [vmem:[#allocation9 + $0x1d8] sm:$0xff]
      %v4892 = vld [vmem:[#allocation9 + $0x1e0] sm:$0xff]
      %v4893 = vld [vmem:[#allocation9 + $0x1e8] sm:$0xff]
      %v4894 = vld [vmem:[#allocation9 + $0x1f0] sm:$0xff]
      %v4895 = vld [vmem:[#allocation9 + $0x1f8] sm:$0xff]
      %4896 = vmatprep.subr.mxu0 %v4833
      %4897 = vmatpush1.msra.mxu0 %v4832
      %4898 = vmatprep.subr.mxu0 %v4837
      %4899 = vmatpush1.msra.mxu0 %v4836
      %4900 = vmatprep.subr.mxu0 %v4841
      %4901 = vmatpush1.msra.mxu0 %v4840
      %4902 = vmatprep.subr.mxu0 %v4845
      %4903 = vmatpush1.msra.mxu0 %v4844
      %4904 = vmatprep.subr.mxu0 %v4849
      %4905 = vmatpush1.msra.mxu0 %v4848
      %4906 = vmatprep.subr.mxu0 %v4853
      %4907 = vmatpush1.msra.mxu0 %v4852
      %4908 = vmatprep.subr.mxu0 %v4857
      %4909 = vmatpush1.msra.mxu0 %v4856
      %4910 = vmatprep.subr.mxu0 %v4861
      %4911 = vmatpush1.msra.mxu0 %v4860
      %4912 = vmatprep.subr.mxu0 %v4865
      %4913 = vmatpush1.msra.mxu0 %v4864
      %4914 = vmatprep.subr.mxu0 %v4869
      %4915 = vmatpush1.msra.mxu0 %v4868
      %4916 = vmatprep.subr.mxu0 %v4873
      %4917 = vmatpush1.msra.mxu0 %v4872
      %4918 = vmatprep.subr.mxu0 %v4877
      %4919 = vmatpush1.msra.mxu0 %v4876
      %4920 = vmatprep.subr.mxu0 %v4881
      %4921 = vmatpush1.msra.mxu0 %v4880
      %4922 = vmatprep.subr.mxu0 %v4885
      %4923 = vmatpush1.msra.mxu0 %v4884
      %4924 = vmatprep.subr.mxu0 %v4889
      %4925 = vmatpush1.msra.mxu0 %v4888
      %4926 = vmatprep.subr.mxu0 %v4893
      %4927 = vmatpush1.msra.mxu0 %v4892
      %4928 = vmatprep.subr.mxu0 0.0
      %4929 = vmatpush1.msra.mxu0 0.0
      %4930 = vmatprep.subr.mxu0 0.0
      %4931 = vmatpush1.msra.mxu0 0.0
      %4932 = vmatprep.subr.mxu0 0.0
      %4933 = vmatpush1.msra.mxu0 0.0
      %4934 = vmatprep.subr.mxu0 0.0
      %4935 = vmatpush1.msra.mxu0 0.0
      %4936 = vmatprep.subr.mxu0 0.0
      %4937 = vmatpush1.msra.mxu0 0.0
      %4938 = vmatprep.subr.mxu0 0.0
      %4939 = vmatpush1.msra.mxu0 0.0
      %4940 = vmatprep.subr.mxu0 0.0
      %4941 = vmatpush1.msra.mxu0 0.0
      %4942 = vmatprep.subr.mxu0 0.0
      %4943 = vmatpush1.msra.mxu0 0.0
      %4944 = vmatprep.subr.mxu0 0.0
      %4945 = vmatpush1.msra.mxu0 0.0
      %4946 = vmatprep.subr.mxu0 0.0
      %4947 = vmatpush1.msra.mxu0 0.0
      %4948 = vmatprep.subr.mxu0 0.0
      %4949 = vmatpush1.msra.mxu0 0.0
      %4950 = vmatprep.subr.mxu0 0.0
      %4951 = vmatpush1.msra.mxu0 0.0
      %4952 = vmatprep.subr.mxu0 0.0
      %4953 = vmatpush1.msra.mxu0 0.0
      %4954 = vmatprep.subr.mxu0 0.0
      %4955 = vmatpush1.msra.mxu0 0.0
      %4956 = vmatprep.subr.mxu0 0.0
      %4957 = vmatpush1.msra.mxu0 0.0
      %4958 = vmatprep.subr.mxu0 0.0
      %4959 = vmatpush1.msra.mxu0 0.0
      %4960 = vmatprep.mubr.f32.mxu0 0.0
      %4961 = vmatmul.mubr.f32.gmra.mrb[0].mxu0 %v4831
      %v4962 = vpop.f32.mrb[0].mxu0
      %v4963 = vadd.f32 0.0, %v4962
      %v4964 = vpop.f32.mrb[0].mxu0
      %v4965 = vadd.f32 0.0, %v4964
      %4966 = vdwg.mxu0
      %4967 = vmatprep.subr.mxu0 %v4835
      %4968 = vmatpush1.msra.mxu0 %v4834
      %4969 = vmatprep.subr.mxu0 %v4839
      %4970 = vmatpush1.msra.mxu0 %v4838
      %4971 = vmatprep.subr.mxu0 %v4843
      %4972 = vmatpush1.msra.mxu0 %v4842
      %4973 = vmatprep.subr.mxu0 %v4847
      %4974 = vmatpush1.msra.mxu0 %v4846
      %4975 = vmatprep.subr.mxu0 %v4851
      %4976 = vmatpush1.msra.mxu0 %v4850
      %4977 = vmatprep.subr.mxu0 %v4855
      %4978 = vmatpush1.msra.mxu0 %v4854
      %4979 = vmatprep.subr.mxu0 %v4859
      %4980 = vmatpush1.msra.mxu0 %v4858
      %4981 = vmatprep.subr.mxu0 %v4863
      %4982 = vmatpush1.msra.mxu0 %v4862
      %4983 = vmatprep.subr.mxu0 %v4867
      %4984 = vmatpush1.msra.mxu0 %v4866
      %4985 = vmatprep.subr.mxu0 %v4871
      %4986 = vmatpush1.msra.mxu0 %v4870
      %4987 = vmatprep.subr.mxu0 %v4875
      %4988 = vmatpush1.msra.mxu0 %v4874
      %4989 = vmatprep.subr.mxu0 %v4879
      %4990 = vmatpush1.msra.mxu0 %v4878
      %4991 = vmatprep.subr.mxu0 %v4883
      %4992 = vmatpush1.msra.mxu0 %v4882
      %4993 = vmatprep.subr.mxu0 %v4887
      %4994 = vmatpush1.msra.mxu0 %v4886
      %4995 = vmatprep.subr.mxu0 %v4891
      %4996 = vmatpush1.msra.mxu0 %v4890
      %4997 = vmatprep.subr.mxu0 %v4895
      %4998 = vmatpush1.msra.mxu0 %v4894
      %4999 = vmatprep.subr.mxu0 0.0
      %5000 = vmatpush1.msra.mxu0 0.0
      %5001 = vmatprep.subr.mxu0 0.0
      %5002 = vmatpush1.msra.mxu0 0.0
      %5003 = vmatprep.subr.mxu0 0.0
      %5004 = vmatpush1.msra.mxu0 0.0
      %5005 = vmatprep.subr.mxu0 0.0
      %5006 = vmatpush1.msra.mxu0 0.0
      %5007 = vmatprep.subr.mxu0 0.0
      %5008 = vmatpush1.msra.mxu0 0.0
      %5009 = vmatprep.subr.mxu0 0.0
      %5010 = vmatpush1.msra.mxu0 0.0
      %5011 = vmatprep.subr.mxu0 0.0
      %5012 = vmatpush1.msra.mxu0 0.0
      %5013 = vmatprep.subr.mxu0 0.0
      %5014 = vmatpush1.msra.mxu0 0.0
      %5015 = vmatprep.subr.mxu0 0.0
      %5016 = vmatpush1.msra.mxu0 0.0
      %5017 = vmatprep.subr.mxu0 0.0
      %5018 = vmatpush1.msra.mxu0 0.0
      %5019 = vmatprep.subr.mxu0 0.0
      %5020 = vmatpush1.msra.mxu0 0.0
      %5021 = vmatprep.subr.mxu0 0.0
      %5022 = vmatpush1.msra.mxu0 0.0
      %5023 = vmatprep.subr.mxu0 0.0
      %5024 = vmatpush1.msra.mxu0 0.0
      %5025 = vmatprep.subr.mxu0 0.0
      %5026 = vmatpush1.msra.mxu0 0.0
      %5027 = vmatprep.subr.mxu0 0.0
      %5028 = vmatpush1.msra.mxu0 0.0
      %5029 = vmatprep.subr.mxu0 0.0
      %5030 = vmatpush1.msra.mxu0 0.0
      %5031 = vmatprep.mubr.f32.mxu0 0.0
      %5032 = vmatmul.mubr.f32.gmra.mrb[0].mxu0 %v4831
      %v5033 = vpop.f32.mrb[0].mxu0
      %v5034 = vadd.f32 0.0, %v5033
      %v5035 = vpop.f32.mrb[0].mxu0
      %v5036 = vadd.f32 0.0, %v5035
      %5037 = vdwg.mxu0
      %v5042 = vcombine.low %v4963, %v4965
      %v5043 = vcombine.low %v5034, %v5036
      %v5045 = vunpack.c.l.s4 1966171168
      %v5046 = vunpack.c.0.s8 %v5045
      %v5047 = vlaneseq
      %v5048 = vshrl.u32 %v5047, 7
      %v5049 = vsub.s32 %v5046, %v5048
      %v5050 = vrot.slane %v5042, %v5049
      %v5052 = vunpack.c.l.s4 1966171168
      %v5053 = vunpack.c.0.s8 %v5052
      %v5054 = vlaneseq
      %v5055 = vshrl.u32 %v5054, 7
      %v5056 = vsub.s32 %v5053, %v5055
      %v5057 = vrot.slane %v5043, %v5056
      %v5058 = vcombine.low %v5050, %v5057
      %v5060 = vunpack.c.l.s4 1966171168
      %v5061 = vunpack.c.0.s8 %v5060
      %v5062 = vlaneseq
      %v5063 = vshrl.u32 %v5062, 7
      %v5064 = vsub.s32 %v5061, %v5063
      %v5065 = vrot.slane %v5058, %v5064
      %v5067 = vadd.f32 %v4830, %v5065
      %v5068 = vxor.u32 %v5067, 2147483648
      %v5069 = vmul.f32 %v5068, 1.442695
      %v5070 = vpow.pop %v5069
      %v5071 = vadd.f32 %v5070, 1.0
      %v5072 = vrcp.pop %v5071
      %v5073 = vmul.f32 1.0, %v5072
      %v5075 = vrot.slane %v5067, 3
      %v5077 = vtanh.pop %v5075
      %v5078 = vld [vmem:[#allocation3] sm:$0x1]
      %v5080 = vrot.slane %v5073, 1
      %v5082 = vmul.f32 %v5080, %v5078
      %v5083 = vmul.f32 %v5073, %v5077
      %v5084 = vadd.f32 %v5082, %v5083
      %v5085 = vtanh.pop %v5084
      %v5086 = vrot.slane %v5073, 2
      %v5088 = vmul.f32 %v5086, %v5085
      %5089 = vst [vmem:[#allocation3] sm:$0x1] %v5084
      %5090 = vst [vmem:[#allocation2] sm:$0x1] %v5088
      %v5091 = vld [vmem:[#allocation11] sm:$0xff]
      %v5092 = vld [vmem:[#allocation11 + $0x8] sm:$0xff]
      %v5093 = vld [vmem:[#allocation11 + $0x10] sm:$0xff]
      %v5094 = vld [vmem:[#allocation11 + $0x18] sm:$0xff]
      %v5095 = vld [vmem:[#allocation11 + $0x20] sm:$0xff]
      %v5096 = vld [vmem:[#allocation11 + $0x28] sm:$0xff]
      %v5097 = vld [vmem:[#allocation11 + $0x30] sm:$0xff]
      %v5098 = vld [vmem:[#allocation11 + $0x38] sm:$0xff]
      %v5099 = vld [vmem:[#allocation11 + $0x40] sm:$0xff]
      %v5100 = vld [vmem:[#allocation11 + $0x48] sm:$0xff]
      %v5101 = vld [vmem:[#allocation11 + $0x50] sm:$0xff]
      %v5102 = vld [vmem:[#allocation11 + $0x58] sm:$0xff]
      %v5103 = vld [vmem:[#allocation11 + $0x60] sm:$0xff]
      %v5104 = vld [vmem:[#allocation11 + $0x68] sm:$0xff]
      %v5105 = vld [vmem:[#allocation11 + $0x70] sm:$0xff]
      %v5106 = vld [vmem:[#allocation11 + $0x78] sm:$0xff]
      %v5107 = vld [vmem:[#allocation11 + $0x80] sm:$0xff]
      %v5108 = vld [vmem:[#allocation11 + $0x88] sm:$0xff]
      %v5109 = vld [vmem:[#allocation11 + $0x90] sm:$0xff]
      %v5110 = vld [vmem:[#allocation11 + $0x98] sm:$0xff]
      %v5111 = vld [vmem:[#allocation11 + $0xa0] sm:$0xff]
      %v5112 = vld [vmem:[#allocation11 + $0xa8] sm:$0xff]
      %v5113 = vld [vmem:[#allocation11 + $0xb0] sm:$0xff]
      %v5114 = vld [vmem:[#allocation11 + $0xb8] sm:$0xff]
      %v5115 = vld [vmem:[#allocation11 + $0xc0] sm:$0xff]
      %v5116 = vld [vmem:[#allocation11 + $0xc8] sm:$0xff]
      %v5117 = vld [vmem:[#allocation11 + $0xd0] sm:$0xff]
      %v5118 = vld [vmem:[#allocation11 + $0xd8] sm:$0xff]
      %v5119 = vld [vmem:[#allocation11 + $0xe0] sm:$0xff]
      %v5120 = vld [vmem:[#allocation11 + $0xe8] sm:$0xff]
      %v5121 = vld [vmem:[#allocation11 + $0xf0] sm:$0xff]
      %v5122 = vld [vmem:[#allocation11 + $0xf8] sm:$0xff]
      %v5123 = vld [vmem:[%s4] sm:$0x3]
      %v5125 = vlaneseq
      %v5126 = vshrl.u32 %v5125, 7
      %v5127 = vsub.s32 0, %v5126
      %v5128 = vrot.slane %v5123, %v5127
      %v5129 = vlaneseq
      %v5130 = vshrl.u32 %v5129, 7
      %v5131 = vsub.s32 1, %v5130
      %v5132 = vrot.slane %v5123, %v5131
      %5135 = vmatprep.subr.mxu0 %v5092
      %5136 = vmatpush1.msra.mxu0 %v5091
      %5137 = vmatprep.subr.mxu0 %v5094
      %5138 = vmatpush1.msra.mxu0 %v5093
      %5139 = vmatprep.subr.mxu0 %v5096
      %5140 = vmatpush1.msra.mxu0 %v5095
      %5141 = vmatprep.subr.mxu0 %v5098
      %5142 = vmatpush1.msra.mxu0 %v5097
      %5143 = vmatprep.subr.mxu0 %v5100
      %5144 = vmatpush1.msra.mxu0 %v5099
      %5145 = vmatprep.subr.mxu0 %v5102
      %5146 = vmatpush1.msra.mxu0 %v5101
      %5147 = vmatprep.subr.mxu0 %v5104
      %5148 = vmatpush1.msra.mxu0 %v5103
      %5149 = vmatprep.subr.mxu0 %v5106
      %5150 = vmatpush1.msra.mxu0 %v5105
      %5151 = vmatprep.subr.mxu0 %v5108
      %5152 = vmatpush1.msra.mxu0 %v5107
      %5153 = vmatprep.subr.mxu0 %v5110
      %5154 = vmatpush1.msra.mxu0 %v5109
      %5155 = vmatprep.subr.mxu0 %v5112
      %5156 = vmatpush1.msra.mxu0 %v5111
      %5157 = vmatprep.subr.mxu0 %v5114
      %5158 = vmatpush1.msra.mxu0 %v5113
      %5159 = vmatprep.subr.mxu0 %v5116
      %5160 = vmatpush1.msra.mxu0 %v5115
      %5161 = vmatprep.subr.mxu0 %v5118
      %5162 = vmatpush1.msra.mxu0 %v5117
      %5163 = vmatprep.subr.mxu0 %v5120
      %5164 = vmatpush1.msra.mxu0 %v5119
      %5165 = vmatprep.subr.mxu0 %v5122
      %5166 = vmatpush1.msra.mxu0 %v5121
      %5167 = vmatprep.subr.mxu0 0.0
      %5168 = vmatpush1.msra.mxu0 0.0
      %5169 = vmatprep.subr.mxu0 0.0
      %5170 = vmatpush1.msra.mxu0 0.0
      %5171 = vmatprep.subr.mxu0 0.0
      %5172 = vmatpush1.msra.mxu0 0.0
      %5173 = vmatprep.subr.mxu0 0.0
      %5174 = vmatpush1.msra.mxu0 0.0
      %5175 = vmatprep.subr.mxu0 0.0
      %5176 = vmatpush1.msra.mxu0 0.0
      %5177 = vmatprep.subr.mxu0 0.0
      %5178 = vmatpush1.msra.mxu0 0.0
      %5179 = vmatprep.subr.mxu0 0.0
      %5180 = vmatpush1.msra.mxu0 0.0
      %5181 = vmatprep.subr.mxu0 0.0
      %5182 = vmatpush1.msra.mxu0 0.0
      %5183 = vmatprep.subr.mxu0 0.0
      %5184 = vmatpush1.msra.mxu0 0.0
      %5185 = vmatprep.subr.mxu0 0.0
      %5186 = vmatpush1.msra.mxu0 0.0
      %5187 = vmatprep.subr.mxu0 0.0
      %5188 = vmatpush1.msra.mxu0 0.0
      %5189 = vmatprep.subr.mxu0 0.0
      %5190 = vmatpush1.msra.mxu0 0.0
      %5191 = vmatprep.subr.mxu0 0.0
      %5192 = vmatpush1.msra.mxu0 0.0
      %5193 = vmatprep.subr.mxu0 0.0
      %5194 = vmatpush1.msra.mxu0 0.0
      %5195 = vmatprep.subr.mxu0 0.0
      %5196 = vmatpush1.msra.mxu0 0.0
      %5197 = vmatprep.subr.mxu0 0.0
      %5198 = vmatpush1.msra.mxu0 0.0
      %5199 = vmatprep.mubr.f32.mxu0 0.0
      %5200 = vmatmul.mubr.f32.gmra.mrb[0].mxu0 %v5088
      %v5201 = vpop.f32.mrb[0].mxu0
      %v5202 = vadd.f32 %v5128, %v5201
      %v5203 = vpop.f32.mrb[0].mxu0
      %v5204 = vadd.f32 %v5132, %v5203
      %5205 = vdwg.mxu0
      %v5206 = vsel %vm453, %v5202, -inf
      %v5207 = vsel %vm453, %v5204, -inf
      %v5208 = vmax.f32 %v5206, %v5207
      %5209 = vmax.xlane.f32.xlu0 %v5208
      %v5210 = vpop.xlane.xlu0 %5209
      %v5211 = vrot.slane %v5210, 4
      %v5212 = vmax.f32 %v5210, %v5211
      %v5213 = vrot.slane %v5212, 2
      %v5214 = vmax.f32 %v5212, %v5213
      %v5215 = vrot.slane %v5214, 1
      %v5216 = vmax.f32 %v5214, %v5215
      %s5217 = vtos %v5216
      %v5218 = vstv %s5217
      %vm5219 = vcmp.eq.f32.partialorder %v5202, %v5218
      %vm5220 = vcmp.eq.f32.partialorder %v5204, %v5218
      %v5221 = vsel %vm5219, %v72, 256
      %v5222 = vsel %vm5220, %v73, 256
      %v5223 = vsel %vm453, %v5221, 2147483647
      %v5224 = vsel %vm453, %v5222, 2147483647
      %vm5225 = vcmp.lt.s32.totalorder %v5223, %v5224
      %v5226 = vsel %vm5225, %v5223, %v5224
      %v5227 = vand.u32 %v5226, 65535
      %v5228 = vshra.s32 %v5226, 16
      %v5229 = vcvt.s32.f32 %v5227
      %v5230 = vcvt.s32.f32 %v5228
      %5231 = vmin.xlane.f32.xlu0 %v5230
      %v5232 = vpop.xlane.xlu0 %5231
      %vm5233 = vcmp.eq.f32.partialorder %v5230, %v5232
      %v5234 = vsel %vm5233, %v5229, inf
      %5235 = vmin.xlane.f32.xlu0 %v5234
      %v5236 = vpop.xlane.xlu0 %5235
      %v5237 = vcvt.f32.s32 %v5236
      %v5238 = vcvt.f32.s32 %v5232
      %v5239 = vshll.u32 %v5238, 16
      %v5240 = vadd.s32 %v5239, %v5237
      %v5241 = vrot.slane %v5240, 4
      %vm5242 = vcmp.lt.s32.totalorder %v5240, %v5241
      %v5243 = vsel %vm5242, %v5240, %v5241
      %v5244 = vrot.slane %v5243, 2
      %vm5245 = vcmp.lt.s32.totalorder %v5243, %v5244
      %v5246 = vsel %vm5245, %v5243, %v5244
      %v5247 = vrot.slane %v5246, 1
      %vm5248 = vcmp.lt.s32.totalorder %v5246, %v5247
      %v5249 = vsel %vm5248, %v5246, %v5247
      %s5250 = vtos %v5249
      %5251 = sst [smem:[%s66]] %s5250
    $region77: #{tpu_custom_call.1} parent=1 // pred_fallthru
      _
    %s5252 = sld [smem:[#allocation4]]
    %s5253 = scalar_lea.smem [#allocation12], 12
    %5254 = sst [smem:[%s5253]] %s5252
    %s5255 = sld [smem:[#allocation4]]
    %p5256 = scmp.ne.s32.totalorder %s5255, 0
    // Predicated region
    $region78: #{tpu_custom_call.1} parent=1 // pred_check
      %p5257 = pneg %p5256
    $region79: #{tpu_custom_call.1} parent=1 // pred_check_branch
      %5259 = sbr.rel (%p5257) target = $region81
    $region80: #{tpu_custom_call.1} parent=1 // pred_region
      %s5260 = smul.u32 %s5255, 4
      %s5261 = scalar_lea.vmem [#allocation6], %s5260
      %v5262 = vld [vmem:[%s5261] sm:$0xf]
      %v5263 = vld [vmem:[#allocation2] sm:$0x1]
      %v5264 = vld [vmem:[#allocation9] sm:$0xff]
      %v5265 = vld [vmem:[#allocation9 + $0x8] sm:$0xff]
      %v5266 = vld [vmem:[#allocation9 + $0x10] sm:$0xff]
      %v5267 = vld [vmem:[#allocation9 + $0x18] sm:$0xff]
      %v5268 = vld [vmem:[#allocation9 + $0x20] sm:$0xff]
      %v5269 = vld [vmem:[#allocation9 + $0x28] sm:$0xff]
      %v5270 = vld [vmem:[#allocation9 + $0x30] sm:$0xff]
      %v5271 = vld [vmem:[#allocation9 + $0x38] sm:$0xff]
      %v5272 = vld [vmem:[#allocation9 + $0x40] sm:$0xff]
      %v5273 = vld [vmem:[#allocation9 + $0x48] sm:$0xff]
      %v5274 = vld [vmem:[#allocation9 + $0x50] sm:$0xff]
      %v5275 = vld [vmem:[#allocation9 + $0x58] sm:$0xff]
      %v5276 = vld [vmem:[#allocation9 + $0x60] sm:$0xff]
      %v5277 = vld [vmem:[#allocation9 + $0x68] sm:$0xff]
      %v5278 = vld [vmem:[#allocation9 + $0x70] sm:$0xff]
      %v5279 = vld [vmem:[#allocation9 + $0x78] sm:$0xff]
      %v5280 = vld [vmem:[#allocation9 + $0x80] sm:$0xff]
      %v5281 = vld [vmem:[#allocation9 + $0x88] sm:$0xff]
      %v5282 = vld [vmem:[#allocation9 + $0x90] sm:$0xff]
      %v5283 = vld [vmem:[#allocation9 + $0x98] sm:$0xff]
      %v5284 = vld [vmem:[#allocation9 + $0xa0] sm:$0xff]
      %v5285 = vld [vmem:[#allocation9 + $0xa8] sm:$0xff]
      %v5286 = vld [vmem:[#allocation9 + $0xb0] sm:$0xff]
      %v5287 = vld [vmem:[#allocation9 + $0xb8] sm:$0xff]
      %v5288 = vld [vmem:[#allocation9 + $0xc0] sm:$0xff]
      %v5289 = vld [vmem:[#allocation9 + $0xc8] sm:$0xff]
      %v5290 = vld [vmem:[#allocation9 + $0xd0] sm:$0xff]
      %v5291 = vld [vmem:[#allocation9 + $0xd8] sm:$0xff]
      %v5292 = vld [vmem:[#allocation9 + $0xe0] sm:$0xff]
      %v5293 = vld [vmem:[#allocation9 + $0xe8] sm:$0xff]
      %v5294 = vld [vmem:[#allocation9 + $0xf0] sm:$0xff]
      %v5295 = vld [vmem:[#allocation9 + $0xf8] sm:$0xff]
      %v5296 = vld [vmem:[#allocation9 + $0x100] sm:$0xff]
      %v5297 = vld [vmem:[#allocation9 + $0x108] sm:$0xff]
      %v5298 = vld [vmem:[#allocation9 + $0x110] sm:$0xff]
      %v5299 = vld [vmem:[#allocation9 + $0x118] sm:$0xff]
      %v5300 = vld [vmem:[#allocation9 + $0x120] sm:$0xff]
      %v5301 = vld [vmem:[#allocation9 + $0x128] sm:$0xff]
      %v5302 = vld [vmem:[#allocation9 + $0x130] sm:$0xff]
      %v5303 = vld [vmem:[#allocation9 + $0x138] sm:$0xff]
      %v5304 = vld [vmem:[#allocation9 + $0x140] sm:$0xff]
      %v5305 = vld [vmem:[#allocation9 + $0x148] sm:$0xff]
      %v5306 = vld [vmem:[#allocation9 + $0x150] sm:$0xff]
      %v5307 = vld [vmem:[#allocation9 + $0x158] sm:$0xff]
      %v5308 = vld [vmem:[#allocation9 + $0x160] sm:$0xff]
      %v5309 = vld [vmem:[#allocation9 + $0x168] sm:$0xff]
      %v5310 = vld [vmem:[#allocation9 + $0x170] sm:$0xff]
      %v5311 = vld [vmem:[#allocation9 + $0x178] sm:$0xff]
      %v5312 = vld [vmem:[#allocation9 + $0x180] sm:$0xff]
      %v5313 = vld [vmem:[#allocation9 + $0x188] sm:$0xff]
      %v5314 = vld [vmem:[#allocation9 + $0x190] sm:$0xff]
      %v5315 = vld [vmem:[#allocation9 + $0x198] sm:$0xff]
      %v5316 = vld [vmem:[#allocation9 + $0x1a0] sm:$0xff]
      %v5317 = vld [vmem:[#allocation9 + $0x1a8] sm:$0xff]
      %v5318 = vld [vmem:[#allocation9 + $0x1b0] sm:$0xff]
      %v5319 = vld [vmem:[#allocation9 + $0x1b8] sm:$0xff]
      %v5320 = vld [vmem:[#allocation9 + $0x1c0] sm:$0xff]
      %v5321 = vld [vmem:[#allocation9 + $0x1c8] sm:$0xff]
      %v5322 = vld [vmem:[#allocation9 + $0x1d0] sm:$0xff]
      %v5323 = vld [vmem:[#allocation9 + $0x1d8] sm:$0xff]
      %v5324 = vld [vmem:[#allocation9 + $0x1e0] sm:$0xff]
      %v5325 = vld [vmem:[#allocation9 + $0x1e8] sm:$0xff]
      %v5326 = vld [vmem:[#allocation9 + $0x1f0] sm:$0xff]
      %v5327 = vld [vmem:[#allocation9 + $0x1f8] sm:$0xff]
      %5328 = vmatprep.subr.mxu0 %v5265
      %5329 = vmatpush1.msra.mxu0 %v5264
      %5330 = vmatprep.subr.mxu0 %v5269
      %5331 = vmatpush1.msra.mxu0 %v5268
      %5332 = vmatprep.subr.mxu0 %v5273
      %5333 = vmatpush1.msra.mxu0 %v5272
      %5334 = vmatprep.subr.mxu0 %v5277
      %5335 = vmatpush1.msra.mxu0 %v5276
      %5336 = vmatprep.subr.mxu0 %v5281
      %5337 = vmatpush1.msra.mxu0 %v5280
      %5338 = vmatprep.subr.mxu0 %v5285
      %5339 = vmatpush1.msra.mxu0 %v5284
      %5340 = vmatprep.subr.mxu0 %v5289
      %5341 = vmatpush1.msra.mxu0 %v5288
      %5342 = vmatprep.subr.mxu0 %v5293
      %5343 = vmatpush1.msra.mxu0 %v5292
      %5344 = vmatprep.subr.mxu0 %v5297
      %5345 = vmatpush1.msra.mxu0 %v5296
      %5346 = vmatprep.subr.mxu0 %v5301
      %5347 = vmatpush1.msra.mxu0 %v5300
      %5348 = vmatprep.subr.mxu0 %v5305
      %5349 = vmatpush1.msra.mxu0 %v5304
      %5350 = vmatprep.subr.mxu0 %v5309
      %5351 = vmatpush1.msra.mxu0 %v5308
      %5352 = vmatprep.subr.mxu0 %v5313
      %5353 = vmatpush1.msra.mxu0 %v5312
      %5354 = vmatprep.subr.mxu0 %v5317
      %5355 = vmatpush1.msra.mxu0 %v5316
      %5356 = vmatprep.subr.mxu0 %v5321
      %5357 = vmatpush1.msra.mxu0 %v5320
      %5358 = vmatprep.subr.mxu0 %v5325
      %5359 = vmatpush1.msra.mxu0 %v5324
      %5360 = vmatprep.subr.mxu0 0.0
      %5361 = vmatpush1.msra.mxu0 0.0
      %5362 = vmatprep.subr.mxu0 0.0
      %5363 = vmatpush1.msra.mxu0 0.0
      %5364 = vmatprep.subr.mxu0 0.0
      %5365 = vmatpush1.msra.mxu0 0.0
      %5366 = vmatprep.subr.mxu0 0.0
      %5367 = vmatpush1.msra.mxu0 0.0
      %5368 = vmatprep.subr.mxu0 0.0
      %5369 = vmatpush1.msra.mxu0 0.0
      %5370 = vmatprep.subr.mxu0 0.0
      %5371 = vmatpush1.msra.mxu0 0.0
      %5372 = vmatprep.subr.mxu0 0.0
      %5373 = vmatpush1.msra.mxu0 0.0
      %5374 = vmatprep.subr.mxu0 0.0
      %5375 = vmatpush1.msra.mxu0 0.0
      %5376 = vmatprep.subr.mxu0 0.0
      %5377 = vmatpush1.msra.mxu0 0.0
      %5378 = vmatprep.subr.mxu0 0.0
      %5379 = vmatpush1.msra.mxu0 0.0
      %5380 = vmatprep.subr.mxu0 0.0
      %5381 = vmatpush1.msra.mxu0 0.0
      %5382 = vmatprep.subr.mxu0 0.0
      %5383 = vmatpush1.msra.mxu0 0.0
      %5384 = vmatprep.subr.mxu0 0.0
      %5385 = vmatpush1.msra.mxu0 0.0
      %5386 = vmatprep.subr.mxu0 0.0
      %5387 = vmatpush1.msra.mxu0 0.0
      %5388 = vmatprep.subr.mxu0 0.0
      %5389 = vmatpush1.msra.mxu0 0.0
      %5390 = vmatprep.subr.mxu0 0.0
      %5391 = vmatpush1.msra.mxu0 0.0
      %5392 = vmatprep.mubr.f32.mxu0 0.0
      %5393 = vmatmul.mubr.f32.gmra.mrb[0].mxu0 %v5263
      %v5394 = vpop.f32.mrb[0].mxu0
      %v5395 = vadd.f32 0.0, %v5394
      %v5396 = vpop.f32.mrb[0].mxu0
      %v5397 = vadd.f32 0.0, %v5396
      %5398 = vdwg.mxu0
      %5399 = vmatprep.subr.mxu0 %v5267
      %5400 = vmatpush1.msra.mxu0 %v5266
      %5401 = vmatprep.subr.mxu0 %v5271
      %5402 = vmatpush1.msra.mxu0 %v5270
      %5403 = vmatprep.subr.mxu0 %v5275
      %5404 = vmatpush1.msra.mxu0 %v5274
      %5405 = vmatprep.subr.mxu0 %v5279
      %5406 = vmatpush1.msra.mxu0 %v5278
      %5407 = vmatprep.subr.mxu0 %v5283
      %5408 = vmatpush1.msra.mxu0 %v5282
      %5409 = vmatprep.subr.mxu0 %v5287
      %5410 = vmatpush1.msra.mxu0 %v5286
      %5411 = vmatprep.subr.mxu0 %v5291
      %5412 = vmatpush1.msra.mxu0 %v5290
      %5413 = vmatprep.subr.mxu0 %v5295
      %5414 = vmatpush1.msra.mxu0 %v5294
      %5415 = vmatprep.subr.mxu0 %v5299
      %5416 = vmatpush1.msra.mxu0 %v5298
      %5417 = vmatprep.subr.mxu0 %v5303
      %5418 = vmatpush1.msra.mxu0 %v5302
      %5419 = vmatprep.subr.mxu0 %v5307
      %5420 = vmatpush1.msra.mxu0 %v5306
      %5421 = vmatprep.subr.mxu0 %v5311
      %5422 = vmatpush1.msra.mxu0 %v5310
      %5423 = vmatprep.subr.mxu0 %v5315
      %5424 = vmatpush1.msra.mxu0 %v5314
      %5425 = vmatprep.subr.mxu0 %v5319
      %5426 = vmatpush1.msra.mxu0 %v5318
      %5427 = vmatprep.subr.mxu0 %v5323
      %5428 = vmatpush1.msra.mxu0 %v5322
      %5429 = vmatprep.subr.mxu0 %v5327
      %5430 = vmatpush1.msra.mxu0 %v5326
      %5431 = vmatprep.subr.mxu0 0.0
      %5432 = vmatpush1.msra.mxu0 0.0
      %5433 = vmatprep.subr.mxu0 0.0
      %5434 = vmatpush1.msra.mxu0 0.0
      %5435 = vmatprep.subr.mxu0 0.0
      %5436 = vmatpush1.msra.mxu0 0.0
      %5437 = vmatprep.subr.mxu0 0.0
      %5438 = vmatpush1.msra.mxu0 0.0
      %5439 = vmatprep.subr.mxu0 0.0
      %5440 = vmatpush1.msra.mxu0 0.0
      %5441 = vmatprep.subr.mxu0 0.0
      %5442 = vmatpush1.msra.mxu0 0.0
      %5443 = vmatprep.subr.mxu0 0.0
      %5444 = vmatpush1.msra.mxu0 0.0
      %5445 = vmatprep.subr.mxu0 0.0
      %5446 = vmatpush1.msra.mxu0 0.0
      %5447 = vmatprep.subr.mxu0 0.0
      %5448 = vmatpush1.msra.mxu0 0.0
      %5449 = vmatprep.subr.mxu0 0.0
      %5450 = vmatpush1.msra.mxu0 0.0
      %5451 = vmatprep.subr.mxu0 0.0
      %5452 = vmatpush1.msra.mxu0 0.0
      %5453 = vmatprep.subr.mxu0 0.0
      %5454 = vmatpush1.msra.mxu0 0.0
      %5455 = vmatprep.subr.mxu0 0.0
      %5456 = vmatpush1.msra.mxu0 0.0
      %5457 = vmatprep.subr.mxu0 0.0
      %5458 = vmatpush1.msra.mxu0 0.0
      %5459 = vmatprep.subr.mxu0 0.0
      %5460 = vmatpush1.msra.mxu0 0.0
      %5461 = vmatprep.subr.mxu0 0.0
      %5462 = vmatpush1.msra.mxu0 0.0
      %5463 = vmatprep.mubr.f32.mxu0 0.0
      %5464 = vmatmul.mubr.f32.gmra.mrb[0].mxu0 %v5263
      %v5465 = vpop.f32.mrb[0].mxu0
      %v5466 = vadd.f32 0.0, %v5465
      %v5467 = vpop.f32.mrb[0].mxu0
      %v5468 = vadd.f32 0.0, %v5467
      %5469 = vdwg.mxu0
      %v5474 = vcombine.low %v5395, %v5397
      %v5475 = vcombine.low %v5466, %v5468
      %v5477 = vunpack.c.l.s4 1966171168
      %v5478 = vunpack.c.0.s8 %v5477
      %v5479 = vlaneseq
      %v5480 = vshrl.u32 %v5479, 7
      %v5481 = vsub.s32 %v5478, %v5480
      %v5482 = vrot.slane %v5474, %v5481
      %v5484 = vunpack.c.l.s4 1966171168
      %v5485 = vunpack.c.0.s8 %v5484
      %v5486 = vlaneseq
      %v5487 = vshrl.u32 %v5486, 7
      %v5488 = vsub.s32 %v5485, %v5487
      %v5489 = vrot.slane %v5475, %v5488
      %v5490 = vcombine.low %v5482, %v5489
      %v5492 = vunpack.c.l.s4 1966171168
      %v5493 = vunpack.c.0.s8 %v5492
      %v5494 = vlaneseq
      %v5495 = vshrl.u32 %v5494, 7
      %v5496 = vsub.s32 %v5493, %v5495
      %v5497 = vrot.slane %v5490, %v5496
      %v5499 = vadd.f32 %v5262, %v5497
      %v5500 = vxor.u32 %v5499, 2147483648
      %v5501 = vmul.f32 %v5500, 1.442695
      %v5502 = vpow.pop %v5501
      %v5503 = vadd.f32 %v5502, 1.0
      %v5504 = vrcp.pop %v5503
      %v5505 = vmul.f32 1.0, %v5504
      %v5507 = vrot.slane %v5499, 3
      %v5509 = vtanh.pop %v5507
      %v5510 = vld [vmem:[#allocation3] sm:$0x1]
      %v5512 = vrot.slane %v5505, 1
      %v5514 = vmul.f32 %v5512, %v5510
      %v5515 = vmul.f32 %v5505, %v5509
      %v5516 = vadd.f32 %v5514, %v5515
      %v5517 = vtanh.pop %v5516
      %v5518 = vrot.slane %v5505, 2
      %v5520 = vmul.f32 %v5518, %v5517
      %5521 = vst [vmem:[#allocation3] sm:$0x1] %v5516
      %5522 = vst [vmem:[#allocation2] sm:$0x1] %v5520
      %v5523 = vld [vmem:[#allocation11] sm:$0xff]
      %v5524 = vld [vmem:[#allocation11 + $0x8] sm:$0xff]
      %v5525 = vld [vmem:[#allocation11 + $0x10] sm:$0xff]
      %v5526 = vld [vmem:[#allocation11 + $0x18] sm:$0xff]
      %v5527 = vld [vmem:[#allocation11 + $0x20] sm:$0xff]
      %v5528 = vld [vmem:[#allocation11 + $0x28] sm:$0xff]
      %v5529 = vld [vmem:[#allocation11 + $0x30] sm:$0xff]
      %v5530 = vld [vmem:[#allocation11 + $0x38] sm:$0xff]
      %v5531 = vld [vmem:[#allocation11 + $0x40] sm:$0xff]
      %v5532 = vld [vmem:[#allocation11 + $0x48] sm:$0xff]
      %v5533 = vld [vmem:[#allocation11 + $0x50] sm:$0xff]
      %v5534 = vld [vmem:[#allocation11 + $0x58] sm:$0xff]
      %v5535 = vld [vmem:[#allocation11 + $0x60] sm:$0xff]
      %v5536 = vld [vmem:[#allocation11 + $0x68] sm:$0xff]
      %v5537 = vld [vmem:[#allocation11 + $0x70] sm:$0xff]
      %v5538 = vld [vmem:[#allocation11 + $0x78] sm:$0xff]
      %v5539 = vld [vmem:[#allocation11 + $0x80] sm:$0xff]
      %v5540 = vld [vmem:[#allocation11 + $0x88] sm:$0xff]
      %v5541 = vld [vmem:[#allocation11 + $0x90] sm:$0xff]
      %v5542 = vld [vmem:[#allocation11 + $0x98] sm:$0xff]
      %v5543 = vld [vmem:[#allocation11 + $0xa0] sm:$0xff]
      %v5544 = vld [vmem:[#allocation11 + $0xa8] sm:$0xff]
      %v5545 = vld [vmem:[#allocation11 + $0xb0] sm:$0xff]
      %v5546 = vld [vmem:[#allocation11 + $0xb8] sm:$0xff]
      %v5547 = vld [vmem:[#allocation11 + $0xc0] sm:$0xff]
      %v5548 = vld [vmem:[#allocation11 + $0xc8] sm:$0xff]
      %v5549 = vld [vmem:[#allocation11 + $0xd0] sm:$0xff]
      %v5550 = vld [vmem:[#allocation11 + $0xd8] sm:$0xff]
      %v5551 = vld [vmem:[#allocation11 + $0xe0] sm:$0xff]
      %v5552 = vld [vmem:[#allocation11 + $0xe8] sm:$0xff]
      %v5553 = vld [vmem:[#allocation11 + $0xf0] sm:$0xff]
      %v5554 = vld [vmem:[#allocation11 + $0xf8] sm:$0xff]
      %v5555 = vld [vmem:[%s4] sm:$0x3]
      %v5557 = vlaneseq
      %v5558 = vshrl.u32 %v5557, 7
      %v5559 = vsub.s32 0, %v5558
      %v5560 = vrot.slane %v5555, %v5559
      %v5561 = vlaneseq
      %v5562 = vshrl.u32 %v5561, 7
      %v5563 = vsub.s32 1, %v5562
      %v5564 = vrot.slane %v5555, %v5563
      %5567 = vmatprep.subr.mxu0 %v5524
      %5568 = vmatpush1.msra.mxu0 %v5523
      %5569 = vmatprep.subr.mxu0 %v5526
      %5570 = vmatpush1.msra.mxu0 %v5525
      %5571 = vmatprep.subr.mxu0 %v5528
      %5572 = vmatpush1.msra.mxu0 %v5527
      %5573 = vmatprep.subr.mxu0 %v5530
      %5574 = vmatpush1.msra.mxu0 %v5529
      %5575 = vmatprep.subr.mxu0 %v5532
      %5576 = vmatpush1.msra.mxu0 %v5531
      %5577 = vmatprep.subr.mxu0 %v5534
      %5578 = vmatpush1.msra.mxu0 %v5533
      %5579 = vmatprep.subr.mxu0 %v5536
      %5580 = vmatpush1.msra.mxu0 %v5535
      %5581 = vmatprep.subr.mxu0 %v5538
      %5582 = vmatpush1.msra.mxu0 %v5537
      %5583 = vmatprep.subr.mxu0 %v5540
      %5584 = vmatpush1.msra.mxu0 %v5539
      %5585 = vmatprep.subr.mxu0 %v5542
      %5586 = vmatpush1.msra.mxu0 %v5541
      %5587 = vmatprep.subr.mxu0 %v5544
      %5588 = vmatpush1.msra.mxu0 %v5543
      %5589 = vmatprep.subr.mxu0 %v5546
      %5590 = vmatpush1.msra.mxu0 %v5545
      %5591 = vmatprep.subr.mxu0 %v5548
      %5592 = vmatpush1.msra.mxu0 %v5547
      %5593 = vmatprep.subr.mxu0 %v5550
      %5594 = vmatpush1.msra.mxu0 %v5549
      %5595 = vmatprep.subr.mxu0 %v5552
      %5596 = vmatpush1.msra.mxu0 %v5551
      %5597 = vmatprep.subr.mxu0 %v5554
      %5598 = vmatpush1.msra.mxu0 %v5553
      %5599 = vmatprep.subr.mxu0 0.0
      %5600 = vmatpush1.msra.mxu0 0.0
      %5601 = vmatprep.subr.mxu0 0.0
      %5602 = vmatpush1.msra.mxu0 0.0
      %5603 = vmatprep.subr.mxu0 0.0
      %5604 = vmatpush1.msra.mxu0 0.0
      %5605 = vmatprep.subr.mxu0 0.0
      %5606 = vmatpush1.msra.mxu0 0.0
      %5607 = vmatprep.subr.mxu0 0.0
      %5608 = vmatpush1.msra.mxu0 0.0
      %5609 = vmatprep.subr.mxu0 0.0
      %5610 = vmatpush1.msra.mxu0 0.0
      %5611 = vmatprep.subr.mxu0 0.0
      %5612 = vmatpush1.msra.mxu0 0.0
      %5613 = vmatprep.subr.mxu0 0.0
      %5614 = vmatpush1.msra.mxu0 0.0
      %5615 = vmatprep.subr.mxu0 0.0
      %5616 = vmatpush1.msra.mxu0 0.0
      %5617 = vmatprep.subr.mxu0 0.0
      %5618 = vmatpush1.msra.mxu0 0.0
      %5619 = vmatprep.subr.mxu0 0.0
      %5620 = vmatpush1.msra.mxu0 0.0
      %5621 = vmatprep.subr.mxu0 0.0
      %5622 = vmatpush1.msra.mxu0 0.0
      %5623 = vmatprep.subr.mxu0 0.0
      %5624 = vmatpush1.msra.mxu0 0.0
      %5625 = vmatprep.subr.mxu0 0.0
      %5626 = vmatpush1.msra.mxu0 0.0
      %5627 = vmatprep.subr.mxu0 0.0
      %5628 = vmatpush1.msra.mxu0 0.0
      %5629 = vmatprep.subr.mxu0 0.0
      %5630 = vmatpush1.msra.mxu0 0.0
      %5631 = vmatprep.mubr.f32.mxu0 0.0
      %5632 = vmatmul.mubr.f32.gmra.mrb[0].mxu0 %v5520
      %v5633 = vpop.f32.mrb[0].mxu0
      %v5634 = vadd.f32 %v5560, %v5633
      %v5635 = vpop.f32.mrb[0].mxu0
      %v5636 = vadd.f32 %v5564, %v5635
      %5637 = vdwg.mxu0
      %v5638 = vsel %vm453, %v5634, -inf
      %v5639 = vsel %vm453, %v5636, -inf
      %v5640 = vmax.f32 %v5638, %v5639
      %5641 = vmax.xlane.f32.xlu0 %v5640
      %v5642 = vpop.xlane.xlu0 %5641
      %v5643 = vrot.slane %v5642, 4
      %v5644 = vmax.f32 %v5642, %v5643
      %v5645 = vrot.slane %v5644, 2
      %v5646 = vmax.f32 %v5644, %v5645
      %v5647 = vrot.slane %v5646, 1
      %v5648 = vmax.f32 %v5646, %v5647
      %s5649 = vtos %v5648
      %v5650 = vstv %s5649
      %vm5651 = vcmp.eq.f32.partialorder %v5634, %v5650
      %vm5652 = vcmp.eq.f32.partialorder %v5636, %v5650
      %v5653 = vsel %vm5651, %v72, 256
      %v5654 = vsel %vm5652, %v73, 256
      %v5655 = vsel %vm453, %v5653, 2147483647
      %v5656 = vsel %vm453, %v5654, 2147483647
      %vm5657 = vcmp.lt.s32.totalorder %v5655, %v5656
      %v5658 = vsel %vm5657, %v5655, %v5656
      %v5659 = vand.u32 %v5658, 65535
      %v5660 = vshra.s32 %v5658, 16
      %v5661 = vcvt.s32.f32 %v5659
      %v5662 = vcvt.s32.f32 %v5660
      %5663 = vmin.xlane.f32.xlu0 %v5662
      %v5664 = vpop.xlane.xlu0 %5663
      %vm5665 = vcmp.eq.f32.partialorder %v5662, %v5664
      %v5666 = vsel %vm5665, %v5661, inf
      %5667 = vmin.xlane.f32.xlu0 %v5666
      %v5668 = vpop.xlane.xlu0 %5667
      %v5669 = vcvt.f32.s32 %v5668
      %v5670 = vcvt.f32.s32 %v5664
      %v5671 = vshll.u32 %v5670, 16
      %v5672 = vadd.s32 %v5671, %v5669
      %v5673 = vrot.slane %v5672, 4
      %vm5674 = vcmp.lt.s32.totalorder %v5672, %v5673
      %v5675 = vsel %vm5674, %v5672, %v5673
      %v5676 = vrot.slane %v5675, 2
      %vm5677 = vcmp.lt.s32.totalorder %v5675, %v5676
      %v5678 = vsel %vm5677, %v5675, %v5676
      %v5679 = vrot.slane %v5678, 1
      %vm5680 = vcmp.lt.s32.totalorder %v5678, %v5679
      %v5681 = vsel %vm5680, %v5678, %v5679
      %s5682 = vtos %v5681
      %5683 = sst [smem:[%s66]] %s5682
    $region81: #{tpu_custom_call.1} parent=1 // pred_fallthru
      _
    %s5684 = sld [smem:[#allocation4]]
    %s5685 = scalar_lea.smem [#allocation12], 13
    %5686 = sst [smem:[%s5685]] %s5684
    %s5687 = sld [smem:[#allocation4]]
    %p5688 = scmp.ne.s32.totalorder %s5687, 0
    // Predicated region
    $region82: #{tpu_custom_call.1} parent=1 // pred_check
      %p5689 = pneg %p5688
    $region83: #{tpu_custom_call.1} parent=1 // pred_check_branch
      %5691 = sbr.rel (%p5689) target = $region85
    $region84: #{tpu_custom_call.1} parent=1 // pred_region
      %s5692 = smul.u32 %s5687, 4
      %s5693 = scalar_lea.vmem [#allocation6], %s5692
      %v5694 = vld [vmem:[%s5693] sm:$0xf]
      %v5695 = vld [vmem:[#allocation2] sm:$0x1]
      %v5696 = vld [vmem:[#allocation9] sm:$0xff]
      %v5697 = vld [vmem:[#allocation9 + $0x8] sm:$0xff]
      %v5698 = vld [vmem:[#allocation9 + $0x10] sm:$0xff]
      %v5699 = vld [vmem:[#allocation9 + $0x18] sm:$0xff]
      %v5700 = vld [vmem:[#allocation9 + $0x20] sm:$0xff]
      %v5701 = vld [vmem:[#allocation9 + $0x28] sm:$0xff]
      %v5702 = vld [vmem:[#allocation9 + $0x30] sm:$0xff]
      %v5703 = vld [vmem:[#allocation9 + $0x38] sm:$0xff]
      %v5704 = vld [vmem:[#allocation9 + $0x40] sm:$0xff]
      %v5705 = vld [vmem:[#allocation9 + $0x48] sm:$0xff]
      %v5706 = vld [vmem:[#allocation9 + $0x50] sm:$0xff]
      %v5707 = vld [vmem:[#allocation9 + $0x58] sm:$0xff]
      %v5708 = vld [vmem:[#allocation9 + $0x60] sm:$0xff]
      %v5709 = vld [vmem:[#allocation9 + $0x68] sm:$0xff]
      %v5710 = vld [vmem:[#allocation9 + $0x70] sm:$0xff]
      %v5711 = vld [vmem:[#allocation9 + $0x78] sm:$0xff]
      %v5712 = vld [vmem:[#allocation9 + $0x80] sm:$0xff]
      %v5713 = vld [vmem:[#allocation9 + $0x88] sm:$0xff]
      %v5714 = vld [vmem:[#allocation9 + $0x90] sm:$0xff]
      %v5715 = vld [vmem:[#allocation9 + $0x98] sm:$0xff]
      %v5716 = vld [vmem:[#allocation9 + $0xa0] sm:$0xff]
      %v5717 = vld [vmem:[#allocation9 + $0xa8] sm:$0xff]
      %v5718 = vld [vmem:[#allocation9 + $0xb0] sm:$0xff]
      %v5719 = vld [vmem:[#allocation9 + $0xb8] sm:$0xff]
      %v5720 = vld [vmem:[#allocation9 + $0xc0] sm:$0xff]
      %v5721 = vld [vmem:[#allocation9 + $0xc8] sm:$0xff]
      %v5722 = vld [vmem:[#allocation9 + $0xd0] sm:$0xff]
      %v5723 = vld [vmem:[#allocation9 + $0xd8] sm:$0xff]
      %v5724 = vld [vmem:[#allocation9 + $0xe0] sm:$0xff]
      %v5725 = vld [vmem:[#allocation9 + $0xe8] sm:$0xff]
      %v5726 = vld [vmem:[#allocation9 + $0xf0] sm:$0xff]
      %v5727 = vld [vmem:[#allocation9 + $0xf8] sm:$0xff]
      %v5728 = vld [vmem:[#allocation9 + $0x100] sm:$0xff]
      %v5729 = vld [vmem:[#allocation9 + $0x108] sm:$0xff]
      %v5730 = vld [vmem:[#allocation9 + $0x110] sm:$0xff]
      %v5731 = vld [vmem:[#allocation9 + $0x118] sm:$0xff]
      %v5732 = vld [vmem:[#allocation9 + $0x120] sm:$0xff]
      %v5733 = vld [vmem:[#allocation9 + $0x128] sm:$0xff]
      %v5734 = vld [vmem:[#allocation9 + $0x130] sm:$0xff]
      %v5735 = vld [vmem:[#allocation9 + $0x138] sm:$0xff]
      %v5736 = vld [vmem:[#allocation9 + $0x140] sm:$0xff]
      %v5737 = vld [vmem:[#allocation9 + $0x148] sm:$0xff]
      %v5738 = vld [vmem:[#allocation9 + $0x150] sm:$0xff]
      %v5739 = vld [vmem:[#allocation9 + $0x158] sm:$0xff]
      %v5740 = vld [vmem:[#allocation9 + $0x160] sm:$0xff]
      %v5741 = vld [vmem:[#allocation9 + $0x168] sm:$0xff]
      %v5742 = vld [vmem:[#allocation9 + $0x170] sm:$0xff]
      %v5743 = vld [vmem:[#allocation9 + $0x178] sm:$0xff]
      %v5744 = vld [vmem:[#allocation9 + $0x180] sm:$0xff]
      %v5745 = vld [vmem:[#allocation9 + $0x188] sm:$0xff]
      %v5746 = vld [vmem:[#allocation9 + $0x190] sm:$0xff]
      %v5747 = vld [vmem:[#allocation9 + $0x198] sm:$0xff]
      %v5748 = vld [vmem:[#allocation9 + $0x1a0] sm:$0xff]
      %v5749 = vld [vmem:[#allocation9 + $0x1a8] sm:$0xff]
      %v5750 = vld [vmem:[#allocation9 + $0x1b0] sm:$0xff]
      %v5751 = vld [vmem:[#allocation9 + $0x1b8] sm:$0xff]
      %v5752 = vld [vmem:[#allocation9 + $0x1c0] sm:$0xff]
      %v5753 = vld [vmem:[#allocation9 + $0x1c8] sm:$0xff]
      %v5754 = vld [vmem:[#allocation9 + $0x1d0] sm:$0xff]
      %v5755 = vld [vmem:[#allocation9 + $0x1d8] sm:$0xff]
      %v5756 = vld [vmem:[#allocation9 + $0x1e0] sm:$0xff]
      %v5757 = vld [vmem:[#allocation9 + $0x1e8] sm:$0xff]
      %v5758 = vld [vmem:[#allocation9 + $0x1f0] sm:$0xff]
      %v5759 = vld [vmem:[#allocation9 + $0x1f8] sm:$0xff]
      %5760 = vmatprep.subr.mxu0 %v5697
      %5761 = vmatpush1.msra.mxu0 %v5696
      %5762 = vmatprep.subr.mxu0 %v5701
      %5763 = vmatpush1.msra.mxu0 %v5700
      %5764 = vmatprep.subr.mxu0 %v5705
      %5765 = vmatpush1.msra.mxu0 %v5704
      %5766 = vmatprep.subr.mxu0 %v5709
      %5767 = vmatpush1.msra.mxu0 %v5708
      %5768 = vmatprep.subr.mxu0 %v5713
      %5769 = vmatpush1.msra.mxu0 %v5712
      %5770 = vmatprep.subr.mxu0 %v5717
      %5771 = vmatpush1.msra.mxu0 %v5716
      %5772 = vmatprep.subr.mxu0 %v5721
      %5773 = vmatpush1.msra.mxu0 %v5720
      %5774 = vmatprep.subr.mxu0 %v5725
      %5775 = vmatpush1.msra.mxu0 %v5724
      %5776 = vmatprep.subr.mxu0 %v5729
      %5777 = vmatpush1.msra.mxu0 %v5728
      %5778 = vmatprep.subr.mxu0 %v5733
      %5779 = vmatpush1.msra.mxu0 %v5732
      %5780 = vmatprep.subr.mxu0 %v5737
      %5781 = vmatpush1.msra.mxu0 %v5736
      %5782 = vmatprep.subr.mxu0 %v5741
      %5783 = vmatpush1.msra.mxu0 %v5740
      %5784 = vmatprep.subr.mxu0 %v5745
      %5785 = vmatpush1.msra.mxu0 %v5744
      %5786 = vmatprep.subr.mxu0 %v5749
      %5787 = vmatpush1.msra.mxu0 %v5748
      %5788 = vmatprep.subr.mxu0 %v5753
      %5789 = vmatpush1.msra.mxu0 %v5752
      %5790 = vmatprep.subr.mxu0 %v5757
      %5791 = vmatpush1.msra.mxu0 %v5756
      %5792 = vmatprep.subr.mxu0 0.0
      %5793 = vmatpush1.msra.mxu0 0.0
      %5794 = vmatprep.subr.mxu0 0.0
      %5795 = vmatpush1.msra.mxu0 0.0
      %5796 = vmatprep.subr.mxu0 0.0
      %5797 = vmatpush1.msra.mxu0 0.0
      %5798 = vmatprep.subr.mxu0 0.0
      %5799 = vmatpush1.msra.mxu0 0.0
      %5800 = vmatprep.subr.mxu0 0.0
      %5801 = vmatpush1.msra.mxu0 0.0
      %5802 = vmatprep.subr.mxu0 0.0
      %5803 = vmatpush1.msra.mxu0 0.0
      %5804 = vmatprep.subr.mxu0 0.0
      %5805 = vmatpush1.msra.mxu0 0.0
      %5806 = vmatprep.subr.mxu0 0.0
      %5807 = vmatpush1.msra.mxu0 0.0
      %5808 = vmatprep.subr.mxu0 0.0
      %5809 = vmatpush1.msra.mxu0 0.0
      %5810 = vmatprep.subr.mxu0 0.0
      %5811 = vmatpush1.msra.mxu0 0.0
      %5812 = vmatprep.subr.mxu0 0.0
      %5813 = vmatpush1.msra.mxu0 0.0
      %5814 = vmatprep.subr.mxu0 0.0
      %5815 = vmatpush1.msra.mxu0 0.0
      %5816 = vmatprep.subr.mxu0 0.0
      %5817 = vmatpush1.msra.mxu0 0.0
      %5818 = vmatprep.subr.mxu0 0.0
      %5819 = vmatpush1.msra.mxu0 0.0
      %5820 = vmatprep.subr.mxu0 0.0
      %5821 = vmatpush1.msra.mxu0 0.0
      %5822 = vmatprep.subr.mxu0 0.0
      %5823 = vmatpush1.msra.mxu0 0.0
      %5824 = vmatprep.mubr.f32.mxu0 0.0
      %5825 = vmatmul.mubr.f32.gmra.mrb[0].mxu0 %v5695
      %v5826 = vpop.f32.mrb[0].mxu0
      %v5827 = vadd.f32 0.0, %v5826
      %v5828 = vpop.f32.mrb[0].mxu0
      %v5829 = vadd.f32 0.0, %v5828
      %5830 = vdwg.mxu0
      %5831 = vmatprep.subr.mxu0 %v5699
      %5832 = vmatpush1.msra.mxu0 %v5698
      %5833 = vmatprep.subr.mxu0 %v5703
      %5834 = vmatpush1.msra.mxu0 %v5702
      %5835 = vmatprep.subr.mxu0 %v5707
      %5836 = vmatpush1.msra.mxu0 %v5706
      %5837 = vmatprep.subr.mxu0 %v5711
      %5838 = vmatpush1.msra.mxu0 %v5710
      %5839 = vmatprep.subr.mxu0 %v5715
      %5840 = vmatpush1.msra.mxu0 %v5714
      %5841 = vmatprep.subr.mxu0 %v5719
      %5842 = vmatpush1.msra.mxu0 %v5718
      %5843 = vmatprep.subr.mxu0 %v5723
      %5844 = vmatpush1.msra.mxu0 %v5722
      %5845 = vmatprep.subr.mxu0 %v5727
      %5846 = vmatpush1.msra.mxu0 %v5726
      %5847 = vmatprep.subr.mxu0 %v5731
      %5848 = vmatpush1.msra.mxu0 %v5730
      %5849 = vmatprep.subr.mxu0 %v5735
      %5850 = vmatpush1.msra.mxu0 %v5734
      %5851 = vmatprep.subr.mxu0 %v5739
      %5852 = vmatpush1.msra.mxu0 %v5738
      %5853 = vmatprep.subr.mxu0 %v5743
      %5854 = vmatpush1.msra.mxu0 %v5742
      %5855 = vmatprep.subr.mxu0 %v5747
      %5856 = vmatpush1.msra.mxu0 %v5746
      %5857 = vmatprep.subr.mxu0 %v5751
      %5858 = vmatpush1.msra.mxu0 %v5750
      %5859 = vmatprep.subr.mxu0 %v5755
      %5860 = vmatpush1.msra.mxu0 %v5754
      %5861 = vmatprep.subr.mxu0 %v5759
      %5862 = vmatpush1.msra.mxu0 %v5758
      %5863 = vmatprep.subr.mxu0 0.0
      %5864 = vmatpush1.msra.mxu0 0.0
      %5865 = vmatprep.subr.mxu0 0.0
      %5866 = vmatpush1.msra.mxu0 0.0
      %5867 = vmatprep.subr.mxu0 0.0
      %5868 = vmatpush1.msra.mxu0 0.0
      %5869 = vmatprep.subr.mxu0 0.0
      %5870 = vmatpush1.msra.mxu0 0.0
      %5871 = vmatprep.subr.mxu0 0.0
      %5872 = vmatpush1.msra.mxu0 0.0
      %5873 = vmatprep.subr.mxu0 0.0
      %5874 = vmatpush1.msra.mxu0 0.0
      %5875 = vmatprep.subr.mxu0 0.0
      %5876 = vmatpush1.msra.mxu0 0.0
      %5877 = vmatprep.subr.mxu0 0.0
      %5878 = vmatpush1.msra.mxu0 0.0
      %5879 = vmatprep.subr.mxu0 0.0
      %5880 = vmatpush1.msra.mxu0 0.0
      %5881 = vmatprep.subr.mxu0 0.0
      %5882 = vmatpush1.msra.mxu0 0.0
      %5883 = vmatprep.subr.mxu0 0.0
      %5884 = vmatpush1.msra.mxu0 0.0
      %5885 = vmatprep.subr.mxu0 0.0
      %5886 = vmatpush1.msra.mxu0 0.0
      %5887 = vmatprep.subr.mxu0 0.0
      %5888 = vmatpush1.msra.mxu0 0.0
      %5889 = vmatprep.subr.mxu0 0.0
      %5890 = vmatpush1.msra.mxu0 0.0
      %5891 = vmatprep.subr.mxu0 0.0
      %5892 = vmatpush1.msra.mxu0 0.0
      %5893 = vmatprep.subr.mxu0 0.0
      %5894 = vmatpush1.msra.mxu0 0.0
      %5895 = vmatprep.mubr.f32.mxu0 0.0
      %5896 = vmatmul.mubr.f32.gmra.mrb[0].mxu0 %v5695
      %v5897 = vpop.f32.mrb[0].mxu0
      %v5898 = vadd.f32 0.0, %v5897
      %v5899 = vpop.f32.mrb[0].mxu0
      %v5900 = vadd.f32 0.0, %v5899
      %5901 = vdwg.mxu0
      %v5906 = vcombine.low %v5827, %v5829
      %v5907 = vcombine.low %v5898, %v5900
      %v5909 = vunpack.c.l.s4 1966171168
      %v5910 = vunpack.c.0.s8 %v5909
      %v5911 = vlaneseq
      %v5912 = vshrl.u32 %v5911, 7
      %v5913 = vsub.s32 %v5910, %v5912
      %v5914 = vrot.slane %v5906, %v5913
      %v5916 = vunpack.c.l.s4 1966171168
      %v5917 = vunpack.c.0.s8 %v5916
      %v5918 = vlaneseq
      %v5919 = vshrl.u32 %v5918, 7
      %v5920 = vsub.s32 %v5917, %v5919
      %v5921 = vrot.slane %v5907, %v5920
      %v5922 = vcombine.low %v5914, %v5921
      %v5924 = vunpack.c.l.s4 1966171168
      %v5925 = vunpack.c.0.s8 %v5924
      %v5926 = vlaneseq
      %v5927 = vshrl.u32 %v5926, 7
      %v5928 = vsub.s32 %v5925, %v5927
      %v5929 = vrot.slane %v5922, %v5928
      %v5931 = vadd.f32 %v5694, %v5929
      %v5932 = vxor.u32 %v5931, 2147483648
      %v5933 = vmul.f32 %v5932, 1.442695
      %v5934 = vpow.pop %v5933
      %v5935 = vadd.f32 %v5934, 1.0
      %v5936 = vrcp.pop %v5935
      %v5937 = vmul.f32 1.0, %v5936
      %v5939 = vrot.slane %v5931, 3
      %v5941 = vtanh.pop %v5939
      %v5942 = vld [vmem:[#allocation3] sm:$0x1]
      %v5944 = vrot.slane %v5937, 1
      %v5946 = vmul.f32 %v5944, %v5942
      %v5947 = vmul.f32 %v5937, %v5941
      %v5948 = vadd.f32 %v5946, %v5947
      %v5949 = vtanh.pop %v5948
      %v5950 = vrot.slane %v5937, 2
      %v5952 = vmul.f32 %v5950, %v5949
      %5953 = vst [vmem:[#allocation3] sm:$0x1] %v5948
      %5954 = vst [vmem:[#allocation2] sm:$0x1] %v5952
      %v5955 = vld [vmem:[#allocation11] sm:$0xff]
      %v5956 = vld [vmem:[#allocation11 + $0x8] sm:$0xff]
      %v5957 = vld [vmem:[#allocation11 + $0x10] sm:$0xff]
      %v5958 = vld [vmem:[#allocation11 + $0x18] sm:$0xff]
      %v5959 = vld [vmem:[#allocation11 + $0x20] sm:$0xff]
      %v5960 = vld [vmem:[#allocation11 + $0x28] sm:$0xff]
      %v5961 = vld [vmem:[#allocation11 + $0x30] sm:$0xff]
      %v5962 = vld [vmem:[#allocation11 + $0x38] sm:$0xff]
      %v5963 = vld [vmem:[#allocation11 + $0x40] sm:$0xff]
      %v5964 = vld [vmem:[#allocation11 + $0x48] sm:$0xff]
      %v5965 = vld [vmem:[#allocation11 + $0x50] sm:$0xff]
      %v5966 = vld [vmem:[#allocation11 + $0x58] sm:$0xff]
      %v5967 = vld [vmem:[#allocation11 + $0x60] sm:$0xff]
      %v5968 = vld [vmem:[#allocation11 + $0x68] sm:$0xff]
      %v5969 = vld [vmem:[#allocation11 + $0x70] sm:$0xff]
      %v5970 = vld [vmem:[#allocation11 + $0x78] sm:$0xff]
      %v5971 = vld [vmem:[#allocation11 + $0x80] sm:$0xff]
      %v5972 = vld [vmem:[#allocation11 + $0x88] sm:$0xff]
      %v5973 = vld [vmem:[#allocation11 + $0x90] sm:$0xff]
      %v5974 = vld [vmem:[#allocation11 + $0x98] sm:$0xff]
      %v5975 = vld [vmem:[#allocation11 + $0xa0] sm:$0xff]
      %v5976 = vld [vmem:[#allocation11 + $0xa8] sm:$0xff]
      %v5977 = vld [vmem:[#allocation11 + $0xb0] sm:$0xff]
      %v5978 = vld [vmem:[#allocation11 + $0xb8] sm:$0xff]
      %v5979 = vld [vmem:[#allocation11 + $0xc0] sm:$0xff]
      %v5980 = vld [vmem:[#allocation11 + $0xc8] sm:$0xff]
      %v5981 = vld [vmem:[#allocation11 + $0xd0] sm:$0xff]
      %v5982 = vld [vmem:[#allocation11 + $0xd8] sm:$0xff]
      %v5983 = vld [vmem:[#allocation11 + $0xe0] sm:$0xff]
      %v5984 = vld [vmem:[#allocation11 + $0xe8] sm:$0xff]
      %v5985 = vld [vmem:[#allocation11 + $0xf0] sm:$0xff]
      %v5986 = vld [vmem:[#allocation11 + $0xf8] sm:$0xff]
      %v5987 = vld [vmem:[%s4] sm:$0x3]
      %v5989 = vlaneseq
      %v5990 = vshrl.u32 %v5989, 7
      %v5991 = vsub.s32 0, %v5990
      %v5992 = vrot.slane %v5987, %v5991
      %v5993 = vlaneseq
      %v5994 = vshrl.u32 %v5993, 7
      %v5995 = vsub.s32 1, %v5994
      %v5996 = vrot.slane %v5987, %v5995
      %5999 = vmatprep.subr.mxu0 %v5956
      %6000 = vmatpush1.msra.mxu0 %v5955
      %6001 = vmatprep.subr.mxu0 %v5958
      %6002 = vmatpush1.msra.mxu0 %v5957
      %6003 = vmatprep.subr.mxu0 %v5960
      %6004 = vmatpush1.msra.mxu0 %v5959
      %6005 = vmatprep.subr.mxu0 %v5962
      %6006 = vmatpush1.msra.mxu0 %v5961
      %6007 = vmatprep.subr.mxu0 %v5964
      %6008 = vmatpush1.msra.mxu0 %v5963
      %6009 = vmatprep.subr.mxu0 %v5966
      %6010 = vmatpush1.msra.mxu0 %v5965
      %6011 = vmatprep.subr.mxu0 %v5968
      %6012 = vmatpush1.msra.mxu0 %v5967
      %6013 = vmatprep.subr.mxu0 %v5970
      %6014 = vmatpush1.msra.mxu0 %v5969
      %6015 = vmatprep.subr.mxu0 %v5972
      %6016 = vmatpush1.msra.mxu0 %v5971
      %6017 = vmatprep.subr.mxu0 %v5974
      %6018 = vmatpush1.msra.mxu0 %v5973
      %6019 = vmatprep.subr.mxu0 %v5976
      %6020 = vmatpush1.msra.mxu0 %v5975
      %6021 = vmatprep.subr.mxu0 %v5978
      %6022 = vmatpush1.msra.mxu0 %v5977
      %6023 = vmatprep.subr.mxu0 %v5980
      %6024 = vmatpush1.msra.mxu0 %v5979
      %6025 = vmatprep.subr.mxu0 %v5982
      %6026 = vmatpush1.msra.mxu0 %v5981
      %6027 = vmatprep.subr.mxu0 %v5984
      %6028 = vmatpush1.msra.mxu0 %v5983
      %6029 = vmatprep.subr.mxu0 %v5986
      %6030 = vmatpush1.msra.mxu0 %v5985
      %6031 = vmatprep.subr.mxu0 0.0
      %6032 = vmatpush1.msra.mxu0 0.0
      %6033 = vmatprep.subr.mxu0 0.0
      %6034 = vmatpush1.msra.mxu0 0.0
      %6035 = vmatprep.subr.mxu0 0.0
      %6036 = vmatpush1.msra.mxu0 0.0
      %6037 = vmatprep.subr.mxu0 0.0
      %6038 = vmatpush1.msra.mxu0 0.0
      %6039 = vmatprep.subr.mxu0 0.0
      %6040 = vmatpush1.msra.mxu0 0.0
      %6041 = vmatprep.subr.mxu0 0.0
      %6042 = vmatpush1.msra.mxu0 0.0
      %6043 = vmatprep.subr.mxu0 0.0
      %6044 = vmatpush1.msra.mxu0 0.0
      %6045 = vmatprep.subr.mxu0 0.0
      %6046 = vmatpush1.msra.mxu0 0.0
      %6047 = vmatprep.subr.mxu0 0.0
      %6048 = vmatpush1.msra.mxu0 0.0
      %6049 = vmatprep.subr.mxu0 0.0
      %6050 = vmatpush1.msra.mxu0 0.0
      %6051 = vmatprep.subr.mxu0 0.0
      %6052 = vmatpush1.msra.mxu0 0.0
      %6053 = vmatprep.subr.mxu0 0.0
      %6054 = vmatpush1.msra.mxu0 0.0
      %6055 = vmatprep.subr.mxu0 0.0
      %6056 = vmatpush1.msra.mxu0 0.0
      %6057 = vmatprep.subr.mxu0 0.0
      %6058 = vmatpush1.msra.mxu0 0.0
      %6059 = vmatprep.subr.mxu0 0.0
      %6060 = vmatpush1.msra.mxu0 0.0
      %6061 = vmatprep.subr.mxu0 0.0
      %6062 = vmatpush1.msra.mxu0 0.0
      %6063 = vmatprep.mubr.f32.mxu0 0.0
      %6064 = vmatmul.mubr.f32.gmra.mrb[0].mxu0 %v5952
      %v6065 = vpop.f32.mrb[0].mxu0
      %v6066 = vadd.f32 %v5992, %v6065
      %v6067 = vpop.f32.mrb[0].mxu0
      %v6068 = vadd.f32 %v5996, %v6067
      %6069 = vdwg.mxu0
      %v6070 = vsel %vm453, %v6066, -inf
      %v6071 = vsel %vm453, %v6068, -inf
      %v6072 = vmax.f32 %v6070, %v6071
      %6073 = vmax.xlane.f32.xlu0 %v6072
      %v6074 = vpop.xlane.xlu0 %6073
      %v6075 = vrot.slane %v6074, 4
      %v6076 = vmax.f32 %v6074, %v6075
      %v6077 = vrot.slane %v6076, 2
      %v6078 = vmax.f32 %v6076, %v6077
      %v6079 = vrot.slane %v6078, 1
      %v6080 = vmax.f32 %v6078, %v6079
      %s6081 = vtos %v6080
      %v6082 = vstv %s6081
      %vm6083 = vcmp.eq.f32.partialorder %v6066, %v6082
      %vm6084 = vcmp.eq.f32.partialorder %v6068, %v6082
      %v6085 = vsel %vm6083, %v72, 256
      %v6086 = vsel %vm6084, %v73, 256
      %v6087 = vsel %vm453, %v6085, 2147483647
      %v6088 = vsel %vm453, %v6086, 2147483647
      %vm6089 = vcmp.lt.s32.totalorder %v6087, %v6088
      %v6090 = vsel %vm6089, %v6087, %v6088
      %v6091 = vand.u32 %v6090, 65535
      %v6092 = vshra.s32 %v6090, 16
      %v6093 = vcvt.s32.f32 %v6091
      %v6094 = vcvt.s32.f32 %v6092
      %6095 = vmin.xlane.f32.xlu0 %v6094
      %v6096 = vpop.xlane.xlu0 %6095
      %vm6097 = vcmp.eq.f32.partialorder %v6094, %v6096
      %v6098 = vsel %vm6097, %v6093, inf
      %6099 = vmin.xlane.f32.xlu0 %v6098
      %v6100 = vpop.xlane.xlu0 %6099
      %v6101 = vcvt.f32.s32 %v6100
      %v6102 = vcvt.f32.s32 %v6096
      %v6103 = vshll.u32 %v6102, 16
      %v6104 = vadd.s32 %v6103, %v6101
      %v6105 = vrot.slane %v6104, 4
      %vm6106 = vcmp.lt.s32.totalorder %v6104, %v6105
      %v6107 = vsel %vm6106, %v6104, %v6105
      %v6108 = vrot.slane %v6107, 2
      %vm6109 = vcmp.lt.s32.totalorder %v6107, %v6108
      %v6110 = vsel %vm6109, %v6107, %v6108
      %v6111 = vrot.slane %v6110, 1
      %vm6112 = vcmp.lt.s32.totalorder %v6110, %v6111
      %v6113 = vsel %vm6112, %v6110, %v6111
      %s6114 = vtos %v6113
      %6115 = sst [smem:[%s66]] %s6114
    $region85: #{tpu_custom_call.1} parent=1 // pred_fallthru
      _
    %s6116 = sld [smem:[#allocation4]]
    %s6117 = scalar_lea.smem [#allocation12], 14
    %6118 = sst [smem:[%s6117]] %s6116
    %s6119 = sld [smem:[#allocation4]]
    %p6120 = scmp.ne.s32.totalorder %s6119, 0
    // Predicated region
    $region86: #{tpu_custom_call.1} parent=1 // pred_check
      %p6121 = pneg %p6120
    $region87: #{tpu_custom_call.1} parent=1 // pred_check_branch
      %6123 = sbr.rel (%p6121) target = $region89
    $region88: #{tpu_custom_call.1} parent=1 // pred_region
      %s6124 = smul.u32 %s6119, 4
      %s6125 = scalar_lea.vmem [#allocation6], %s6124
      %v6126 = vld [vmem:[%s6125] sm:$0xf]
      %v6127 = vld [vmem:[#allocation2] sm:$0x1]
      %v6128 = vld [vmem:[#allocation9] sm:$0xff]
      %v6129 = vld [vmem:[#allocation9 + $0x8] sm:$0xff]
      %v6130 = vld [vmem:[#allocation9 + $0x10] sm:$0xff]
      %v6131 = vld [vmem:[#allocation9 + $0x18] sm:$0xff]
      %v6132 = vld [vmem:[#allocation9 + $0x20] sm:$0xff]
      %v6133 = vld [vmem:[#allocation9 + $0x28] sm:$0xff]
      %v6134 = vld [vmem:[#allocation9 + $0x30] sm:$0xff]
      %v6135 = vld [vmem:[#allocation9 + $0x38] sm:$0xff]
      %v6136 = vld [vmem:[#allocation9 + $0x40] sm:$0xff]
      %v6137 = vld [vmem:[#allocation9 + $0x48] sm:$0xff]
      %v6138 = vld [vmem:[#allocation9 + $0x50] sm:$0xff]
      %v6139 = vld [vmem:[#allocation9 + $0x58] sm:$0xff]
      %v6140 = vld [vmem:[#allocation9 + $0x60] sm:$0xff]
      %v6141 = vld [vmem:[#allocation9 + $0x68] sm:$0xff]
      %v6142 = vld [vmem:[#allocation9 + $0x70] sm:$0xff]
      %v6143 = vld [vmem:[#allocation9 + $0x78] sm:$0xff]
      %v6144 = vld [vmem:[#allocation9 + $0x80] sm:$0xff]
      %v6145 = vld [vmem:[#allocation9 + $0x88] sm:$0xff]
      %v6146 = vld [vmem:[#allocation9 + $0x90] sm:$0xff]
      %v6147 = vld [vmem:[#allocation9 + $0x98] sm:$0xff]
      %v6148 = vld [vmem:[#allocation9 + $0xa0] sm:$0xff]
      %v6149 = vld [vmem:[#allocation9 + $0xa8] sm:$0xff]
      %v6150 = vld [vmem:[#allocation9 + $0xb0] sm:$0xff]
      %v6151 = vld [vmem:[#allocation9 + $0xb8] sm:$0xff]
      %v6152 = vld [vmem:[#allocation9 + $0xc0] sm:$0xff]
      %v6153 = vld [vmem:[#allocation9 + $0xc8] sm:$0xff]
      %v6154 = vld [vmem:[#allocation9 + $0xd0] sm:$0xff]
      %v6155 = vld [vmem:[#allocation9 + $0xd8] sm:$0xff]
      %v6156 = vld [vmem:[#allocation9 + $0xe0] sm:$0xff]
      %v6157 = vld [vmem:[#allocation9 + $0xe8] sm:$0xff]
      %v6158 = vld [vmem:[#allocation9 + $0xf0] sm:$0xff]
      %v6159 = vld [vmem:[#allocation9 + $0xf8] sm:$0xff]
      %v6160 = vld [vmem:[#allocation9 + $0x100] sm:$0xff]
      %v6161 = vld [vmem:[#allocation9 + $0x108] sm:$0xff]
      %v6162 = vld [vmem:[#allocation9 + $0x110] sm:$0xff]
      %v6163 = vld [vmem:[#allocation9 + $0x118] sm:$0xff]
      %v6164 = vld [vmem:[#allocation9 + $0x120] sm:$0xff]
      %v6165 = vld [vmem:[#allocation9 + $0x128] sm:$0xff]
      %v6166 = vld [vmem:[#allocation9 + $0x130] sm:$0xff]
      %v6167 = vld [vmem:[#allocation9 + $0x138] sm:$0xff]
      %v6168 = vld [vmem:[#allocation9 + $0x140] sm:$0xff]
      %v6169 = vld [vmem:[#allocation9 + $0x148] sm:$0xff]
      %v6170 = vld [vmem:[#allocation9 + $0x150] sm:$0xff]
      %v6171 = vld [vmem:[#allocation9 + $0x158] sm:$0xff]
      %v6172 = vld [vmem:[#allocation9 + $0x160] sm:$0xff]
      %v6173 = vld [vmem:[#allocation9 + $0x168] sm:$0xff]
      %v6174 = vld [vmem:[#allocation9 + $0x170] sm:$0xff]
      %v6175 = vld [vmem:[#allocation9 + $0x178] sm:$0xff]
      %v6176 = vld [vmem:[#allocation9 + $0x180] sm:$0xff]
      %v6177 = vld [vmem:[#allocation9 + $0x188] sm:$0xff]
      %v6178 = vld [vmem:[#allocation9 + $0x190] sm:$0xff]
      %v6179 = vld [vmem:[#allocation9 + $0x198] sm:$0xff]
      %v6180 = vld [vmem:[#allocation9 + $0x1a0] sm:$0xff]
      %v6181 = vld [vmem:[#allocation9 + $0x1a8] sm:$0xff]
      %v6182 = vld [vmem:[#allocation9 + $0x1b0] sm:$0xff]
      %v6183 = vld [vmem:[#allocation9 + $0x1b8] sm:$0xff]
      %v6184 = vld [vmem:[#allocation9 + $0x1c0] sm:$0xff]
      %v6185 = vld [vmem:[#allocation9 + $0x1c8] sm:$0xff]
      %v6186 = vld [vmem:[#allocation9 + $0x1d0] sm:$0xff]
      %v6187 = vld [vmem:[#allocation9 + $0x1d8] sm:$0xff]
      %v6188 = vld [vmem:[#allocation9 + $0x1e0] sm:$0xff]
      %v6189 = vld [vmem:[#allocation9 + $0x1e8] sm:$0xff]
      %v6190 = vld [vmem:[#allocation9 + $0x1f0] sm:$0xff]
      %v6191 = vld [vmem:[#allocation9 + $0x1f8] sm:$0xff]
      %6192 = vmatprep.subr.mxu0 %v6129
      %6193 = vmatpush1.msra.mxu0 %v6128
      %6194 = vmatprep.subr.mxu0 %v6133
      %6195 = vmatpush1.msra.mxu0 %v6132
      %6196 = vmatprep.subr.mxu0 %v6137
      %6197 = vmatpush1.msra.mxu0 %v6136
      %6198 = vmatprep.subr.mxu0 %v6141
      %6199 = vmatpush1.msra.mxu0 %v6140
      %6200 = vmatprep.subr.mxu0 %v6145
      %6201 = vmatpush1.msra.mxu0 %v6144
      %6202 = vmatprep.subr.mxu0 %v6149
      %6203 = vmatpush1.msra.mxu0 %v6148
      %6204 = vmatprep.subr.mxu0 %v6153
      %6205 = vmatpush1.msra.mxu0 %v6152
      %6206 = vmatprep.subr.mxu0 %v6157
      %6207 = vmatpush1.msra.mxu0 %v6156
      %6208 = vmatprep.subr.mxu0 %v6161
      %6209 = vmatpush1.msra.mxu0 %v6160
      %6210 = vmatprep.subr.mxu0 %v6165
      %6211 = vmatpush1.msra.mxu0 %v6164
      %6212 = vmatprep.subr.mxu0 %v6169
      %6213 = vmatpush1.msra.mxu0 %v6168
      %6214 = vmatprep.subr.mxu0 %v6173
      %6215 = vmatpush1.msra.mxu0 %v6172
      %6216 = vmatprep.subr.mxu0 %v6177
      %6217 = vmatpush1.msra.mxu0 %v6176
      %6218 = vmatprep.subr.mxu0 %v6181
      %6219 = vmatpush1.msra.mxu0 %v6180
      %6220 = vmatprep.subr.mxu0 %v6185
      %6221 = vmatpush1.msra.mxu0 %v6184
      %6222 = vmatprep.subr.mxu0 %v6189
      %6223 = vmatpush1.msra.mxu0 %v6188
      %6224 = vmatprep.subr.mxu0 0.0
      %6225 = vmatpush1.msra.mxu0 0.0
      %6226 = vmatprep.subr.mxu0 0.0
      %6227 = vmatpush1.msra.mxu0 0.0
      %6228 = vmatprep.subr.mxu0 0.0
      %6229 = vmatpush1.msra.mxu0 0.0
      %6230 = vmatprep.subr.mxu0 0.0
      %6231 = vmatpush1.msra.mxu0 0.0
      %6232 = vmatprep.subr.mxu0 0.0
      %6233 = vmatpush1.msra.mxu0 0.0
      %6234 = vmatprep.subr.mxu0 0.0
      %6235 = vmatpush1.msra.mxu0 0.0
      %6236 = vmatprep.subr.mxu0 0.0
      %6237 = vmatpush1.msra.mxu0 0.0
      %6238 = vmatprep.subr.mxu0 0.0
      %6239 = vmatpush1.msra.mxu0 0.0
      %6240 = vmatprep.subr.mxu0 0.0
      %6241 = vmatpush1.msra.mxu0 0.0
      %6242 = vmatprep.subr.mxu0 0.0
      %6243 = vmatpush1.msra.mxu0 0.0
      %6244 = vmatprep.subr.mxu0 0.0
      %6245 = vmatpush1.msra.mxu0 0.0
      %6246 = vmatprep.subr.mxu0 0.0
      %6247 = vmatpush1.msra.mxu0 0.0
      %6248 = vmatprep.subr.mxu0 0.0
      %6249 = vmatpush1.msra.mxu0 0.0
      %6250 = vmatprep.subr.mxu0 0.0
      %6251 = vmatpush1.msra.mxu0 0.0
      %6252 = vmatprep.subr.mxu0 0.0
      %6253 = vmatpush1.msra.mxu0 0.0
      %6254 = vmatprep.subr.mxu0 0.0
      %6255 = vmatpush1.msra.mxu0 0.0
      %6256 = vmatprep.mubr.f32.mxu0 0.0
      %6257 = vmatmul.mubr.f32.gmra.mrb[0].mxu0 %v6127
      %v6258 = vpop.f32.mrb[0].mxu0
      %v6259 = vadd.f32 0.0, %v6258
      %v6260 = vpop.f32.mrb[0].mxu0
      %v6261 = vadd.f32 0.0, %v6260
      %6262 = vdwg.mxu0
      %6263 = vmatprep.subr.mxu0 %v6131
      %6264 = vmatpush1.msra.mxu0 %v6130
      %6265 = vmatprep.subr.mxu0 %v6135
      %6266 = vmatpush1.msra.mxu0 %v6134
      %6267 = vmatprep.subr.mxu0 %v6139
      %6268 = vmatpush1.msra.mxu0 %v6138
      %6269 = vmatprep.subr.mxu0 %v6143
      %6270 = vmatpush1.msra.mxu0 %v6142
      %6271 = vmatprep.subr.mxu0 %v6147
      %6272 = vmatpush1.msra.mxu0 %v6146
      %6273 = vmatprep.subr.mxu0 %v6151
      %6274 = vmatpush1.msra.mxu0 %v6150
      %6275 = vmatprep.subr.mxu0 %v6155
      %6276 = vmatpush1.msra.mxu0 %v6154
      %6277 = vmatprep.subr.mxu0 %v6159
      %6278 = vmatpush1.msra.mxu0 %v6158
      %6279 = vmatprep.subr.mxu0 %v6163
      %6280 = vmatpush1.msra.mxu0 %v6162
      %6281 = vmatprep.subr.mxu0 %v6167
      %6282 = vmatpush1.msra.mxu0 %v6166
      %6283 = vmatprep.subr.mxu0 %v6171
      %6284 = vmatpush1.msra.mxu0 %v6170
      %6285 = vmatprep.subr.mxu0 %v6175
      %6286 = vmatpush1.msra.mxu0 %v6174
      %6287 = vmatprep.subr.mxu0 %v6179
      %6288 = vmatpush1.msra.mxu0 %v6178
      %6289 = vmatprep.subr.mxu0 %v6183
      %6290 = vmatpush1.msra.mxu0 %v6182
      %6291 = vmatprep.subr.mxu0 %v6187
      %6292 = vmatpush1.msra.mxu0 %v6186
      %6293 = vmatprep.subr.mxu0 %v6191
      %6294 = vmatpush1.msra.mxu0 %v6190
      %6295 = vmatprep.subr.mxu0 0.0
      %6296 = vmatpush1.msra.mxu0 0.0
      %6297 = vmatprep.subr.mxu0 0.0
      %6298 = vmatpush1.msra.mxu0 0.0
      %6299 = vmatprep.subr.mxu0 0.0
      %6300 = vmatpush1.msra.mxu0 0.0
      %6301 = vmatprep.subr.mxu0 0.0
      %6302 = vmatpush1.msra.mxu0 0.0
      %6303 = vmatprep.subr.mxu0 0.0
      %6304 = vmatpush1.msra.mxu0 0.0
      %6305 = vmatprep.subr.mxu0 0.0
      %6306 = vmatpush1.msra.mxu0 0.0
      %6307 = vmatprep.subr.mxu0 0.0
      %6308 = vmatpush1.msra.mxu0 0.0
      %6309 = vmatprep.subr.mxu0 0.0
      %6310 = vmatpush1.msra.mxu0 0.0
      %6311 = vmatprep.subr.mxu0 0.0
      %6312 = vmatpush1.msra.mxu0 0.0
      %6313 = vmatprep.subr.mxu0 0.0
      %6314 = vmatpush1.msra.mxu0 0.0
      %6315 = vmatprep.subr.mxu0 0.0
      %6316 = vmatpush1.msra.mxu0 0.0
      %6317 = vmatprep.subr.mxu0 0.0
      %6318 = vmatpush1.msra.mxu0 0.0
      %6319 = vmatprep.subr.mxu0 0.0
      %6320 = vmatpush1.msra.mxu0 0.0
      %6321 = vmatprep.subr.mxu0 0.0
      %6322 = vmatpush1.msra.mxu0 0.0
      %6323 = vmatprep.subr.mxu0 0.0
      %6324 = vmatpush1.msra.mxu0 0.0
      %6325 = vmatprep.subr.mxu0 0.0
      %6326 = vmatpush1.msra.mxu0 0.0
      %6327 = vmatprep.mubr.f32.mxu0 0.0
      %6328 = vmatmul.mubr.f32.gmra.mrb[0].mxu0 %v6127
      %v6329 = vpop.f32.mrb[0].mxu0
      %v6330 = vadd.f32 0.0, %v6329
      %v6331 = vpop.f32.mrb[0].mxu0
      %v6332 = vadd.f32 0.0, %v6331
      %6333 = vdwg.mxu0
      %v6338 = vcombine.low %v6259, %v6261
      %v6339 = vcombine.low %v6330, %v6332
      %v6341 = vunpack.c.l.s4 1966171168
      %v6342 = vunpack.c.0.s8 %v6341
      %v6343 = vlaneseq
      %v6344 = vshrl.u32 %v6343, 7
      %v6345 = vsub.s32 %v6342, %v6344
      %v6346 = vrot.slane %v6338, %v6345
      %v6348 = vunpack.c.l.s4 1966171168
      %v6349 = vunpack.c.0.s8 %v6348
      %v6350 = vlaneseq
      %v6351 = vshrl.u32 %v6350, 7
      %v6352 = vsub.s32 %v6349, %v6351
      %v6353 = vrot.slane %v6339, %v6352
      %v6354 = vcombine.low %v6346, %v6353
      %v6356 = vunpack.c.l.s4 1966171168
      %v6357 = vunpack.c.0.s8 %v6356
      %v6358 = vlaneseq
      %v6359 = vshrl.u32 %v6358, 7
      %v6360 = vsub.s32 %v6357, %v6359
      %v6361 = vrot.slane %v6354, %v6360
      %v6363 = vadd.f32 %v6126, %v6361
      %v6364 = vxor.u32 %v6363, 2147483648
      %v6365 = vmul.f32 %v6364, 1.442695
      %v6366 = vpow.pop %v6365
      %v6367 = vadd.f32 %v6366, 1.0
      %v6368 = vrcp.pop %v6367
      %v6369 = vmul.f32 1.0, %v6368
      %v6371 = vrot.slane %v6363, 3
      %v6373 = vtanh.pop %v6371
      %v6374 = vld [vmem:[#allocation3] sm:$0x1]
      %v6376 = vrot.slane %v6369, 1
      %v6378 = vmul.f32 %v6376, %v6374
      %v6379 = vmul.f32 %v6369, %v6373
      %v6380 = vadd.f32 %v6378, %v6379
      %v6381 = vtanh.pop %v6380
      %v6382 = vrot.slane %v6369, 2
      %v6384 = vmul.f32 %v6382, %v6381
      %6385 = vst [vmem:[#allocation3] sm:$0x1] %v6380
      %6386 = vst [vmem:[#allocation2] sm:$0x1] %v6384
      %v6387 = vld [vmem:[#allocation11] sm:$0xff]
      %v6388 = vld [vmem:[#allocation11 + $0x8] sm:$0xff]
      %v6389 = vld [vmem:[#allocation11 + $0x10] sm:$0xff]
      %v6390 = vld [vmem:[#allocation11 + $0x18] sm:$0xff]
      %v6391 = vld [vmem:[#allocation11 + $0x20] sm:$0xff]
      %v6392 = vld [vmem:[#allocation11 + $0x28] sm:$0xff]
      %v6393 = vld [vmem:[#allocation11 + $0x30] sm:$0xff]
      %v6394 = vld [vmem:[#allocation11 + $0x38] sm:$0xff]
      %v6395 = vld [vmem:[#allocation11 + $0x40] sm:$0xff]
      %v6396 = vld [vmem:[#allocation11 + $0x48] sm:$0xff]
      %v6397 = vld [vmem:[#allocation11 + $0x50] sm:$0xff]
      %v6398 = vld [vmem:[#allocation11 + $0x58] sm:$0xff]
      %v6399 = vld [vmem:[#allocation11 + $0x60] sm:$0xff]
      %v6400 = vld [vmem:[#allocation11 + $0x68] sm:$0xff]
      %v6401 = vld [vmem:[#allocation11 + $0x70] sm:$0xff]
      %v6402 = vld [vmem:[#allocation11 + $0x78] sm:$0xff]
      %v6403 = vld [vmem:[#allocation11 + $0x80] sm:$0xff]
      %v6404 = vld [vmem:[#allocation11 + $0x88] sm:$0xff]
      %v6405 = vld [vmem:[#allocation11 + $0x90] sm:$0xff]
      %v6406 = vld [vmem:[#allocation11 + $0x98] sm:$0xff]
      %v6407 = vld [vmem:[#allocation11 + $0xa0] sm:$0xff]
      %v6408 = vld [vmem:[#allocation11 + $0xa8] sm:$0xff]
      %v6409 = vld [vmem:[#allocation11 + $0xb0] sm:$0xff]
      %v6410 = vld [vmem:[#allocation11 + $0xb8] sm:$0xff]
      %v6411 = vld [vmem:[#allocation11 + $0xc0] sm:$0xff]
      %v6412 = vld [vmem:[#allocation11 + $0xc8] sm:$0xff]
      %v6413 = vld [vmem:[#allocation11 + $0xd0] sm:$0xff]
      %v6414 = vld [vmem:[#allocation11 + $0xd8] sm:$0xff]
      %v6415 = vld [vmem:[#allocation11 + $0xe0] sm:$0xff]
      %v6416 = vld [vmem:[#allocation11 + $0xe8] sm:$0xff]
      %v6417 = vld [vmem:[#allocation11 + $0xf0] sm:$0xff]
      %v6418 = vld [vmem:[#allocation11 + $0xf8] sm:$0xff]
      %v6419 = vld [vmem:[%s4] sm:$0x3]
      %v6421 = vlaneseq
      %v6422 = vshrl.u32 %v6421, 7
      %v6423 = vsub.s32 0, %v6422
      %v6424 = vrot.slane %v6419, %v6423
      %v6425 = vlaneseq
      %v6426 = vshrl.u32 %v6425, 7
      %v6427 = vsub.s32 1, %v6426
      %v6428 = vrot.slane %v6419, %v6427
      %6431 = vmatprep.subr.mxu0 %v6388
      %6432 = vmatpush1.msra.mxu0 %v6387
      %6433 = vmatprep.subr.mxu0 %v6390
      %6434 = vmatpush1.msra.mxu0 %v6389
      %6435 = vmatprep.subr.mxu0 %v6392
      %6436 = vmatpush1.msra.mxu0 %v6391
      %6437 = vmatprep.subr.mxu0 %v6394
      %6438 = vmatpush1.msra.mxu0 %v6393
      %6439 = vmatprep.subr.mxu0 %v6396
      %6440 = vmatpush1.msra.mxu0 %v6395
      %6441 = vmatprep.subr.mxu0 %v6398
      %6442 = vmatpush1.msra.mxu0 %v6397
      %6443 = vmatprep.subr.mxu0 %v6400
      %6444 = vmatpush1.msra.mxu0 %v6399
      %6445 = vmatprep.subr.mxu0 %v6402
      %6446 = vmatpush1.msra.mxu0 %v6401
      %6447 = vmatprep.subr.mxu0 %v6404
      %6448 = vmatpush1.msra.mxu0 %v6403
      %6449 = vmatprep.subr.mxu0 %v6406
      %6450 = vmatpush1.msra.mxu0 %v6405
      %6451 = vmatprep.subr.mxu0 %v6408
      %6452 = vmatpush1.msra.mxu0 %v6407
      %6453 = vmatprep.subr.mxu0 %v6410
      %6454 = vmatpush1.msra.mxu0 %v6409
      %6455 = vmatprep.subr.mxu0 %v6412
      %6456 = vmatpush1.msra.mxu0 %v6411
      %6457 = vmatprep.subr.mxu0 %v6414
      %6458 = vmatpush1.msra.mxu0 %v6413
      %6459 = vmatprep.subr.mxu0 %v6416
      %6460 = vmatpush1.msra.mxu0 %v6415
      %6461 = vmatprep.subr.mxu0 %v6418
      %6462 = vmatpush1.msra.mxu0 %v6417
      %6463 = vmatprep.subr.mxu0 0.0
      %6464 = vmatpush1.msra.mxu0 0.0
      %6465 = vmatprep.subr.mxu0 0.0
      %6466 = vmatpush1.msra.mxu0 0.0
      %6467 = vmatprep.subr.mxu0 0.0
      %6468 = vmatpush1.msra.mxu0 0.0
      %6469 = vmatprep.subr.mxu0 0.0
      %6470 = vmatpush1.msra.mxu0 0.0
      %6471 = vmatprep.subr.mxu0 0.0
      %6472 = vmatpush1.msra.mxu0 0.0
      %6473 = vmatprep.subr.mxu0 0.0
      %6474 = vmatpush1.msra.mxu0 0.0
      %6475 = vmatprep.subr.mxu0 0.0
      %6476 = vmatpush1.msra.mxu0 0.0
      %6477 = vmatprep.subr.mxu0 0.0
      %6478 = vmatpush1.msra.mxu0 0.0
      %6479 = vmatprep.subr.mxu0 0.0
      %6480 = vmatpush1.msra.mxu0 0.0
      %6481 = vmatprep.subr.mxu0 0.0
      %6482 = vmatpush1.msra.mxu0 0.0
      %6483 = vmatprep.subr.mxu0 0.0
      %6484 = vmatpush1.msra.mxu0 0.0
      %6485 = vmatprep.subr.mxu0 0.0
      %6486 = vmatpush1.msra.mxu0 0.0
      %6487 = vmatprep.subr.mxu0 0.0
      %6488 = vmatpush1.msra.mxu0 0.0
      %6489 = vmatprep.subr.mxu0 0.0
      %6490 = vmatpush1.msra.mxu0 0.0
      %6491 = vmatprep.subr.mxu0 0.0
      %6492 = vmatpush1.msra.mxu0 0.0
      %6493 = vmatprep.subr.mxu0 0.0
      %6494 = vmatpush1.msra.mxu0 0.0
      %6495 = vmatprep.mubr.f32.mxu0 0.0
      %6496 = vmatmul.mubr.f32.gmra.mrb[0].mxu0 %v6384
      %v6497 = vpop.f32.mrb[0].mxu0
      %v6498 = vadd.f32 %v6424, %v6497
      %v6499 = vpop.f32.mrb[0].mxu0
      %v6500 = vadd.f32 %v6428, %v6499
      %6501 = vdwg.mxu0
      %v6502 = vsel %vm453, %v6498, -inf
      %v6503 = vsel %vm453, %v6500, -inf
      %v6504 = vmax.f32 %v6502, %v6503
      %6505 = vmax.xlane.f32.xlu0 %v6504
      %v6506 = vpop.xlane.xlu0 %6505
      %v6507 = vrot.slane %v6506, 4
      %v6508 = vmax.f32 %v6506, %v6507
      %v6509 = vrot.slane %v6508, 2
      %v6510 = vmax.f32 %v6508, %v6509
      %v6511 = vrot.slane %v6510, 1
      %v6512 = vmax.f32 %v6510, %v6511
      %s6513 = vtos %v6512
      %v6514 = vstv %s6513
      %vm6515 = vcmp.eq.f32.partialorder %v6498, %v6514
      %vm6516 = vcmp.eq.f32.partialorder %v6500, %v6514
      %v6517 = vsel %vm6515, %v72, 256
      %v6518 = vsel %vm6516, %v73, 256
      %v6519 = vsel %vm453, %v6517, 2147483647
      %v6520 = vsel %vm453, %v6518, 2147483647
      %vm6521 = vcmp.lt.s32.totalorder %v6519, %v6520
      %v6522 = vsel %vm6521, %v6519, %v6520
      %v6523 = vand.u32 %v6522, 65535
      %v6524 = vshra.s32 %v6522, 16
      %v6525 = vcvt.s32.f32 %v6523
      %v6526 = vcvt.s32.f32 %v6524
      %6527 = vmin.xlane.f32.xlu0 %v6526
      %v6528 = vpop.xlane.xlu0 %6527
      %vm6529 = vcmp.eq.f32.partialorder %v6526, %v6528
      %v6530 = vsel %vm6529, %v6525, inf
      %6531 = vmin.xlane.f32.xlu0 %v6530
      %v6532 = vpop.xlane.xlu0 %6531
      %v6533 = vcvt.f32.s32 %v6532
      %v6534 = vcvt.f32.s32 %v6528
      %v6535 = vshll.u32 %v6534, 16
      %v6536 = vadd.s32 %v6535, %v6533
      %v6537 = vrot.slane %v6536, 4
      %vm6538 = vcmp.lt.s32.totalorder %v6536, %v6537
      %v6539 = vsel %vm6538, %v6536, %v6537
      %v6540 = vrot.slane %v6539, 2
      %vm6541 = vcmp.lt.s32.totalorder %v6539, %v6540
      %v6542 = vsel %vm6541, %v6539, %v6540
      %v6543 = vrot.slane %v6542, 1
      %vm6544 = vcmp.lt.s32.totalorder %v6542, %v6543
      %v6545 = vsel %vm6544, %v6542, %v6543
      %s6546 = vtos %v6545
      %6547 = sst [smem:[%s66]] %s6546
    $region89: #{tpu_custom_call.1} parent=1 // pred_fallthru
      _
    %s6548 = sld [smem:[#allocation4]]
    %s6549 = scalar_lea.smem [#allocation12], 15
    %6550 = sst [smem:[%s6549]] %s6548
    // Predicated region
    $region90: #{tpu_custom_call.1} parent=1 // pred_check
      _
    $region91: #{tpu_custom_call.1} parent=1 // pred_check_branch
      %6552 = sbr.rel (0) target = $region93
    $region92: #{tpu_custom_call.1} parent=1 // pred_region
      %s6554 = ssub.s32 16, 16
      %6555 = vsyncadd [#allocation8], %s6554
      %6558 = dma.smem_to_hbm [#allocation12], 16, %s5, [#allocation8]
    $region93: #{tpu_custom_call.1} parent=1 // pred_fallthru
      _
    // Predicated region
    $region94: #{tpu_custom_call.1} parent=1 // pred_check
      _
    $region95: #{tpu_custom_call.1} parent=1 // pred_check_branch
      %6560 = sbr.rel (0) target = $region97
    $region96: #{tpu_custom_call.1} parent=1 // pred_region
      %6561 = dma.done [#allocation8], 16
    $region97: #{tpu_custom_call.1} parent=1 // pred_fallthru
      _
    %6562 = sfence
    %6563 = vsyncpa [#allocation7], 1
    %6564 = vsyncpa [#allocation10], 1
    %6565 = vsyncpa [#allocation8], 1

</llo_original>
